<compile_context>
chip_gen: v6e
topology: v6e:2x2x1
jax: 0.10.0
libtpu: 0.0.40
codegen_flags: <defaults>
</compile_context>

<pallas_src>
import math

import jax
import jax.numpy as jnp
from jax import lax
from jax.experimental import pallas as pl
from jax.experimental.pallas import tpu as pltpu

F32 = jnp.float32


# ----------------------------------------------------------------------------
# Fused PFP kernel (one grid step == Bt batch elements, flattened to rows)
# ----------------------------------------------------------------------------
def make_pfp_kernel(*, depth, k_sizes, dim_model, seq_p, seq_d, bt, ln_eps,
                    pad_max, conv_impl):
    D = dim_model
    S_p, S_d, Bt = seq_p, seq_d, bt
    Np = Bt * S_p
    inv_sqrt_d = 1.0 / math.sqrt(D)

    def kernel(*refs):
        (xp_ref, xd_ref, pm_ref, dm_ref, pos_ref, bid_ref,
         segp_ref, segd_ref, expp_ref, wp_ref, ws_ref,
         adaw_ref, adab_ref) = refs[:13]
        cw_refs = refs[13:13 + depth]
        (cb_ref, outw_ref, outb_ref,
         w1_ref, b1_ref, w2_ref, b2_ref) = refs[13 + depth:20 + depth]
        o_ref = refs[20 + depth]
        halo_ref = refs[21 + depth] if conv_impl == "halo" else None

        x = xp_ref[...]                      # (Np, D)  flattened (batch, seq) rows
        xd = xd_ref[...]                     # (Nd, D)
        pm = pm_ref[...]                     # (Np, 1)  1.0 = padding token
        dm = dm_ref[...]                     # (Nd, 1)
        pos = pos_ref[...]                   # (Np, 1)  within-batch seq position
        bid = bid_ref[...]                   # (Np, 1)  within-block batch index

        # ---- projections: batched over all Bt*S_p rows (MXU M-dim filled) ----
        g_p = jnp.dot(x, wp_ref[...], preferred_element_type=F32)    # w_p(x_p)
        q = jnp.dot(x, ws_ref[...], preferred_element_type=F32)      # x_p @ (w_p @ w_d.T)

        # ---- masked average pool of x_d (pool-then-project; w_d lives in w_s) ----
        keep = 1.0 - dm                                               # (Nd, 1)
        pooled = jnp.dot(segd_ref[...], xd * keep,
                         preferred_element_type=F32)                  # (Bt, D) per-batch sums
        pooled = jnp.dot(expp_ref[...], pooled,
                         preferred_element_type=F32)                  # (Np, D) expanded to rows

        # per-batch valid length of the d-sequence, expanded onto the p rows
        sel = [(bid == float(bb)).astype(F32) for bb in range(Bt)]    # (Np, 1) selectors
        len_full = jnp.zeros((Np, 1), F32)
        for bb in range(Bt):
            l_bb = jnp.sum(keep[bb * S_d:(bb + 1) * S_d, :], axis=0, keepdims=True)
            len_full = len_full + sel[bb] * l_bb
        inv_len = pl.reciprocal(jnp.maximum(len_full, 1.0), approx=True)
        pooled = pooled * inv_len

        # ---- attention over the p sequence (softmax along seq, per batch) ----
        scores = jnp.sum(q * pooled, axis=-1, keepdims=True) * inv_sqrt_d
        scores = jnp.where(pm > 0.5, -1.0e9, scores)                  # masked_fill(-1e9)
        m_full = jnp.zeros((Np, 1), F32)
        for bb in range(Bt):
            m_bb = jnp.max(scores[bb * S_p:(bb + 1) * S_p, :], axis=0, keepdims=True)
            m_full = m_full + sel[bb] * m_bb
        e = jnp.exp(scores - m_full)
        den_full = jnp.zeros((Np, 1), F32)
        for bb in range(Bt):
            d_bb = jnp.sum(e[bb * S_p:(bb + 1) * S_p, :], axis=0, keepdims=True)
            den_full = den_full + sel[bb] * d_bb
        attn = e * pl.reciprocal(den_full, approx=True)

        # ---- context + adaLN modulation (per batch, expanded back to all rows) ----
        c = jnp.dot(segp_ref[...], attn * g_p, preferred_element_type=F32)   # (Bt, D)
        mod = jnp.dot(jnp.maximum(c, 0.0), adaw_ref[...],
                      preferred_element_type=F32) + adab_ref[...]            # (Bt, 4D)
        mod = jnp.dot(expp_ref[...], mod, preferred_element_type=F32)        # (Np, 4D)
        shift_msa = mod[:, 0 * D:1 * D]
        scale_msa = mod[:, 1 * D:2 * D]
        shift_mlp = mod[:, 2 * D:3 * D]
        scale_mlp = mod[:, 3 * D:4 * D]

        def layer_norm(v):                    # LayerNorm(eps=1e-6), no affine
            mu = jnp.mean(v, axis=-1, keepdims=True)
            var = jnp.mean((v - mu) ** 2, axis=-1, keepdims=True)
            return (v - mu) * lax.rsqrt(var + ln_eps)

        # ---- PKA branch: 4 chained depthwise convs (+ folded eval-BN) + ReLU ----
        h = layer_norm(x) * (1.0 + scale_msa) + shift_msa

        # boundary masks per shift offset: zero any tap that would read across
        # the torch conv zero padding (and hence also across a batch boundary
        # on the flattened sequence axis).  Cached and reused by all layers.
        mask_cache = {}

        def boundary_mask(off):
            if off not in mask_cache:
                src = pos + float(off)
                mask_cache[off] = ((src >= 0.0) & (src <= float(S_p - 1))).astype(F32)
            return mask_cache[off]

        if conv_impl == "halo":
            halo_ref[...] = jnp.zeros_like(halo_ref)

        x_all = jnp.zeros((Np, D), F32)
        for i in range(depth):                 # static unroll over layers
            k = k_sizes[i]
            pad = k // 2
            if conv_impl == "roll":
                w_l = cw_refs[i][...]          # hoisted (k, D) tap table
            else:
                halo_ref[pl.ds(pad_max, Np), :] = h
            acc = jnp.zeros((Np, D), F32)
            for t in range(k):                 # static unroll over taps
                off = t - pad
                if off <= -S_p or off >= S_p:
                    continue                   # tap never overlaps the sequence
                if conv_impl == "roll":
                    shifted = h if off == 0 else pltpu.roll(h, (-off) % Np, axis=0)
                    w_row = w_l[t:t + 1, :]
                else:
                    shifted = halo_ref[pl.ds(pad_max + off, Np), :]
                    w_row = cw_refs[i][pl.ds(t, 1), :]
                if off == 0:
                    acc = acc + shifted * w_row
                else:
                    acc = acc + (shifted * boundary_mask(off)) * w_row
            acc = acc + cb_ref[pl.ds(i, 1), :]   # folded eval-BN bias (0 here)
            h = jnp.maximum(acc, 0.0)            # ReLU
            x_all = x_all + h
        attn_out = jnp.dot(x_all, outw_ref[...],
                           preferred_element_type=F32) + outb_ref[...]
        x = x + attn_out                          # residual (fused)

        # ---- FFN (MLP) branch; Dropout == identity in eval mode ----
        h2 = layer_norm(x) * (1.0 + scale_mlp) + shift_mlp
        h2 = jnp.maximum(jnp.dot(h2, w1_ref[...],
                                 preferred_element_type=F32) + b1_ref[...], 0.0)
        h2 = jnp.dot(h2, w2_ref[...], preferred_element_type=F32) + b2_ref[...]
        x = x + h2                                # residual (fused)

        o_ref[...] = x.astype(o_ref.dtype)

    return kernel


# ----------------------------------------------------------------------------
# Wrapper: one pallas_call for the whole PFP forward
# ----------------------------------------------------------------------------
def _choose_batch_tile(B, S_p, S_d, D):
    """Largest batch tile Bt that divides B, keeps rows 8-aligned and fits VMEM."""
    best = 1
    vmem_budget = 8 * 1024 * 1024             # conservative vs v7x 32MiB scoped default
    for bt in range(1, B + 1):
        if B % bt:
            continue
        if bt > 1 and ((bt * S_p) % 8 or (bt * S_d) % 8):
            continue
        rows_p, rows_d = bt * S_p, bt * S_d
        if rows_p > 2048:                      # keep vreg / live-value pressure sane
            continue
        est = 4 * (2 * (2 * rows_p * D + rows_d * D) + rows_p * 4 * D + 8 * rows_p * D)
        if est > vmem_budget:
            continue
        best = bt
    return best


def _pfp_pallas_call(params, x_p, x_d, p_mask, d_mask, conv_impl):
    B, S_p, D = x_p.shape
    S_d = x_d.shape[1]
    # TODO(synk): pad ragged sequence lengths up to a multiple of 8 before the
    # flattened (batch*seq, D) layout; the demo shapes already satisfy this.
    assert S_p % 8 == 0 and S_d % 8 == 0, "seq lengths must be multiples of 8"

    conv_ws = params["conv_w"]                 # list of (k_i, D), eval-BN scale folded
    conv_b = params["conv_b"]                  # (depth, D) folded eval-BN bias
    depth = len(conv_ws)
    k_sizes = tuple(int(w.shape[0]) for w in conv_ws)
    pad_max = max(k_sizes) // 2

    Bt = _choose_batch_tile(B, S_p, S_d, D)
    G = B // Bt
    Np, Nd = Bt * S_p, Bt * S_d

    xp2 = x_p.astype(F32).reshape(B * S_p, D)
    xd2 = x_d.astype(F32).reshape(B * S_d, D)
    pm2 = p_mask.astype(F32).reshape(B * S_p, 1)
    dm2 = d_mask.astype(F32).reshape(B * S_d, 1)

    # Fold w_d into the score projection: scores = (x_p @ w_p @ w_d.T) . pooled(x_d)
    w_s = (params["w_p"] @ params["w_d"].T).astype(F32)

    # Per-block helper constants (identical for every grid step).
    bid_p = jnp.repeat(jnp.arange(Bt, dtype=jnp.int32), S_p)            # (Np,)
    bid_d = jnp.repeat(jnp.arange(Bt, dtype=jnp.int32), S_d)            # (Nd,)
    pos_col = jnp.tile(jnp.arange(S_p, dtype=jnp.int32), Bt).astype(F32).reshape(Np, 1)
    bid_col = bid_p.astype(F32).reshape(Np, 1)
    seg_p = (jnp.arange(Bt)[:, None] == bid_p[None, :]).astype(F32)     # (Bt, Np)
    seg_d = (jnp.arange(Bt)[:, None] == bid_d[None, :]).astype(F32)     # (Bt, Nd)
    exp_p = seg_p.T                                                     # (Np, Bt)

    in_arrays = [
        xp2, xd2, pm2, dm2, pos_col, bid_col, seg_p, seg_d, exp_p,
        params["w_p"], w_s, params["adaLN_w"], params["adaLN_b"],
        *conv_ws,
        conv_b, params["out_ffn_w"], params["out_ffn_b"],
        params["ffn_w1"], params["ffn_b1"], params["ffn_w2"], params["ffn_b2"],
    ]

    def const_spec(a):
        return pl.BlockSpec(a.shape, lambda b, _nd=a.ndim: (0,) * _nd)

    in_specs = [
        pl.BlockSpec((Np, D), lambda b: (b, 0)),   # x_p rows
        pl.BlockSpec((Nd, D), lambda b: (b, 0)),   # x_d rows
        pl.BlockSpec((Np, 1), lambda b: (b, 0)),   # p_mask
        pl.BlockSpec((Nd, 1), lambda b: (b, 0)),   # d_mask
    ] + [const_spec(a) for a in in_arrays[4:]]

    kernel = make_pfp_kernel(
        depth=depth, k_sizes=k_sizes, dim_model=D, seq_p=S_p, seq_d=S_d,
        bt=Bt, ln_eps=1e-6, pad_max=pad_max, conv_impl=conv_impl)

    scratch_shapes = []
    if conv_impl == "halo":
        scratch_shapes.append(pltpu.VMEM((Np + 2 * pad_max, D), F32))

    out2 = pl.pallas_call(
        kernel,
        out_shape=jax.ShapeDtypeStruct((B * S_p, D), F32),
        grid=(G,),
        in_specs=in_specs,
        out_specs=pl.BlockSpec((Np, D), lambda b: (b, 0)),
        scratch_shapes=scratch_shapes,
        compiler_params=pltpu.CompilerParams(
            dimension_semantics=("parallel",)),      # megacore split on v7x when G >= 2
    )(*in_arrays)
    return out2.reshape(B, S_p, D)


def pfp_forward(params, x_p, x_d, p_mask, d_mask):
    # Preferred path keeps the depthwise-conv shifts in vregs (pltpu.roll on the
    # XLU, no VMEM halo round trip).  If the local toolchain rejects that
    # lowering, fall back to the proven VMEM halo-scratch conv so the fused
    # kernel always runs.
    try:
        out = _pfp_pallas_call(params, x_p, x_d, p_mask, d_mask, conv_impl="roll")
        jax.block_until_ready(out)
        return out
    except Exception:  # pragma: no cover - conservative lowering fallback
        out = _pfp_pallas_call(params, x_p, x_d, p_mask, d_mask, conv_impl="halo")
        jax.block_until_ready(out)
        return out


# ----------------------------------------------------------------------------
# Parameters (deterministic, synthetic -- shapes match the PyTorch __init__)
# ----------------------------------------------------------------------------
def init_params(key, dim_model=32, init_k_size=5, depth=4, scale_factor=4):
    D = dim_model
    ks = jax.random.split(key, 6 + depth)

    def tn(k, shape, std=0.02):                        # trunc_normal_(std=0.02)
        return std * jax.random.truncated_normal(k, -2.0, 2.0, shape, F32)

    bn_eps = 1e-5
    bn_scale = 1.0 / math.sqrt(1.0 + bn_eps)           # eval BN, default stats/affine
    conv_w, conv_b = [], []
    for i in range(depth):
        k_size = init_k_size + i * scale_factor        # 5, 9, 13, 17
        kw = jax.random.normal(ks[6 + i], (k_size, D), F32) / math.sqrt(k_size)
        conv_w.append(kw * bn_scale)                   # BN scale folded into taps
        conv_b.append(jnp.zeros((D,), F32))            # beta - mean*scale = 0 (fresh BN)
    # TODO(synk): real checkpoints need the true running mean/var/gamma/beta folded here.

    return {
        "w_d": tn(ks[0], (D, D)),                      # nn.Linear(D, D, bias=False)
        "w_p": tn(ks[1], (D, D)),                      # nn.Linear(D, D, bias=False)
        "adaLN_w": tn(ks[2], (D, 4 * D)),              # adaLN Linear(D, 4D)
        "adaLN_b": jnp.zeros((1, 4 * D), F32),
        "out_ffn_w": tn(ks[3], (D, D)),                # PKA.out_ffn
        "out_ffn_b": jnp.zeros((1, D), F32),
        "ffn_w1": tn(ks[4], (D, 4 * D)),               # MLP Linear(D, 4D)
        "ffn_b1": jnp.zeros((1, 4 * D), F32),
        "ffn_w2": tn(ks[5], (4 * D, D)),               # MLP Linear(4D, D)
        "ffn_b2": jnp.zeros((1, D), F32),
        "conv_w": conv_w,
        "conv_b": jnp.stack(conv_b, axis=0),           # (depth, D)
    }


if __name__ == "__main__":
    key = jax.random.PRNGKey(0)
    kx1, kx2, kp = jax.random.split(key, 3)

    B, S_p, S_d, D = 2, 8, 8, 32
    x_p = jax.random.normal(kx1, (B, S_p, D), F32)
    x_d = jax.random.normal(kx2, (B, S_d, D), F32)
    # padding masks: True = padding token
    p_mask = jnp.arange(S_p)[None, :] >= jnp.array([[6], [8]])    # [B, S_p]
    d_mask = jnp.arange(S_d)[None, :] >= jnp.array([[5], [7]])    # [B, S_d]

    params = init_params(kp, dim_model=D, init_k_size=5, depth=4, scale_factor=4)

    out = pfp_forward(params, x_p, x_d, p_mask, d_mask)
    jax.block_until_ready(out)
    assert out.shape == (B, S_p, D)
    assert bool(jnp.all(jnp.isfinite(out)))
    print("KERNEL_OK")
</pallas_src>

<mosaic_0001>
module attributes {stable_mosaic.version = 11 : i64} {
  func.func @kernel(%arg0: i32, %arg1: memref<16x32xf32, #tpu.memory_space<vmem>>, %arg2: memref<16x32xf32, #tpu.memory_space<vmem>>, %arg3: memref<16x1xf32, #tpu.memory_space<vmem>>, %arg4: memref<16x1xf32, #tpu.memory_space<vmem>>, %arg5: memref<16x1xf32, #tpu.memory_space<vmem>>, %arg6: memref<16x1xf32, #tpu.memory_space<vmem>>, %arg7: memref<2x16xf32, #tpu.memory_space<vmem>>, %arg8: memref<2x16xf32, #tpu.memory_space<vmem>>, %arg9: memref<16x2xf32, #tpu.memory_space<vmem>>, %arg10: memref<32x32xf32, #tpu.memory_space<vmem>>, %arg11: memref<32x32xf32, #tpu.memory_space<vmem>>, %arg12: memref<32x128xf32, #tpu.memory_space<vmem>>, %arg13: memref<1x128xf32, #tpu.memory_space<vmem>>, %arg14: memref<5x32xf32, #tpu.memory_space<vmem>>, %arg15: memref<9x32xf32, #tpu.memory_space<vmem>>, %arg16: memref<13x32xf32, #tpu.memory_space<vmem>>, %arg17: memref<17x32xf32, #tpu.memory_space<vmem>>, %arg18: memref<4x32xf32, #tpu.memory_space<vmem>>, %arg19: memref<32x32xf32, #tpu.memory_space<vmem>>, %arg20: memref<1x32xf32, #tpu.memory_space<vmem>>, %arg21: memref<32x128xf32, #tpu.memory_space<vmem>>, %arg22: memref<1x128xf32, #tpu.memory_space<vmem>>, %arg23: memref<128x32xf32, #tpu.memory_space<vmem>>, %arg24: memref<1x32xf32, #tpu.memory_space<vmem>>, %arg25: memref<16x32xf32, #tpu.memory_space<vmem>>) attributes {dimension_semantics = [#tpu.dimension_semantics<parallel>], iteration_bounds = array<i64: 1>, scalar_prefetch = 0 : i64, scratch_operands = 0 : i64, tpu.core_type = #tpu.core_type<tc>, window_params = [{transform_indices = @transform_0, window_bounds = array<i64: 16, 32>}, {transform_indices = @transform_1, window_bounds = array<i64: 16, 32>}, {transform_indices = @transform_2, window_bounds = array<i64: 16, 1>}, {transform_indices = @transform_3, window_bounds = array<i64: 16, 1>}, {pipeline_mode = #tpu.pipeline_mode<synchronous>, transform_indices = @transform_4, window_bounds = array<i64: 16, 1>}, {pipeline_mode = #tpu.pipeline_mode<synchronous>, transform_indices = @transform_5, window_bounds = array<i64: 16, 1>}, {pipeline_mode = #tpu.pipeline_mode<synchronous>, transform_indices = @transform_6, window_bounds = array<i64: 2, 16>}, {pipeline_mode = #tpu.pipeline_mode<synchronous>, transform_indices = @transform_7, window_bounds = array<i64: 2, 16>}, {pipeline_mode = #tpu.pipeline_mode<synchronous>, transform_indices = @transform_8, window_bounds = array<i64: 16, 2>}, {pipeline_mode = #tpu.pipeline_mode<synchronous>, transform_indices = @transform_9, window_bounds = array<i64: 32, 32>}, {pipeline_mode = #tpu.pipeline_mode<synchronous>, transform_indices = @transform_10, window_bounds = array<i64: 32, 32>}, {pipeline_mode = #tpu.pipeline_mode<synchronous>, transform_indices = @transform_11, window_bounds = array<i64: 32, 128>}, {pipeline_mode = #tpu.pipeline_mode<synchronous>, transform_indices = @transform_12, window_bounds = array<i64: 1, 128>}, {pipeline_mode = #tpu.pipeline_mode<synchronous>, transform_indices = @transform_13, window_bounds = array<i64: 5, 32>}, {pipeline_mode = #tpu.pipeline_mode<synchronous>, transform_indices = @transform_14, window_bounds = array<i64: 9, 32>}, {pipeline_mode = #tpu.pipeline_mode<synchronous>, transform_indices = @transform_15, window_bounds = array<i64: 13, 32>}, {pipeline_mode = #tpu.pipeline_mode<synchronous>, transform_indices = @transform_16, window_bounds = array<i64: 17, 32>}, {pipeline_mode = #tpu.pipeline_mode<synchronous>, transform_indices = @transform_17, window_bounds = array<i64: 4, 32>}, {pipeline_mode = #tpu.pipeline_mode<synchronous>, transform_indices = @transform_18, window_bounds = array<i64: 32, 32>}, {pipeline_mode = #tpu.pipeline_mode<synchronous>, transform_indices = @transform_19, window_bounds = array<i64: 1, 32>}, {pipeline_mode = #tpu.pipeline_mode<synchronous>, transform_indices = @transform_20, window_bounds = array<i64: 32, 128>}, {pipeline_mode = #tpu.pipeline_mode<synchronous>, transform_indices = @transform_21, window_bounds = array<i64: 1, 128>}, {pipeline_mode = #tpu.pipeline_mode<synchronous>, transform_indices = @transform_22, window_bounds = array<i64: 128, 32>}, {pipeline_mode = #tpu.pipeline_mode<synchronous>, transform_indices = @transform_23, window_bounds = array<i64: 1, 32>}, {transform_indices = @transform_24, window_bounds = array<i64: 16, 32>}]} {
    %c0 = arith.constant 0 : index
    %c0_0 = arith.constant 0 : index
    %0 = vector.load %arg1[%c0, %c0_0] : memref<16x32xf32, #tpu.memory_space<vmem>>, vector<16x32xf32>
    %c0_1 = arith.constant 0 : index
    %c0_2 = arith.constant 0 : index
    %1 = vector.load %arg2[%c0_1, %c0_2] : memref<16x32xf32, #tpu.memory_space<vmem>>, vector<16x32xf32>
    %c0_3 = arith.constant 0 : index
    %c0_4 = arith.constant 0 : index
    %2 = vector.load %arg3[%c0_3, %c0_4] : memref<16x1xf32, #tpu.memory_space<vmem>>, vector<16x1xf32>
    %c0_5 = arith.constant 0 : index
    %c0_6 = arith.constant 0 : index
    %3 = vector.load %arg4[%c0_5, %c0_6] : memref<16x1xf32, #tpu.memory_space<vmem>>, vector<16x1xf32>
    %c0_7 = arith.constant 0 : index
    %c0_8 = arith.constant 0 : index
    %4 = vector.load %arg5[%c0_7, %c0_8] : memref<16x1xf32, #tpu.memory_space<vmem>>, vector<16x1xf32>
    %c0_9 = arith.constant 0 : index
    %c0_10 = arith.constant 0 : index
    %5 = vector.load %arg6[%c0_9, %c0_10] : memref<16x1xf32, #tpu.memory_space<vmem>>, vector<16x1xf32>
    %c0_11 = arith.constant 0 : index
    %c0_12 = arith.constant 0 : index
    %6 = vector.load %arg10[%c0_11, %c0_12] : memref<32x32xf32, #tpu.memory_space<vmem>>, vector<32x32xf32>
    %cst = arith.constant dense<0.000000e+00> : vector<16x32xf32>
    %7 = tpu.matmul %0, %6, %cst {dimension_numbers = #tpu.dot_dimension_numbers<[1], [0], [0], [1], [0, 0, 1, 1], [], []>} : vector<16x32xf32>, vector<32x32xf32>, vector<16x32xf32> -> vector<16x32xf32>
    %c0_13 = arith.constant 0 : index
    %c0_14 = arith.constant 0 : index
    %8 = vector.load %arg11[%c0_13, %c0_14] : memref<32x32xf32, #tpu.memory_space<vmem>>, vector<32x32xf32>
    %cst_15 = arith.constant dense<0.000000e+00> : vector<16x32xf32>
    %9 = tpu.matmul %0, %8, %cst_15 {dimension_numbers = #tpu.dot_dimension_numbers<[1], [0], [0], [1], [0, 0, 1, 1], [], []>} : vector<16x32xf32>, vector<32x32xf32>, vector<16x32xf32> -> vector<16x32xf32>
    %cst_16 = arith.constant 1.000000e+00 : f32
    %10 = vector.broadcast %cst_16 : f32 to vector<16x1xf32>
    %11 = arith.subf %10, %3 : vector<16x1xf32>
    %c0_17 = arith.constant 0 : index
    %c0_18 = arith.constant 0 : index
    %12 = vector.load %arg8[%c0_17, %c0_18] : memref<2x16xf32, #tpu.memory_space<vmem>>, vector<2x16xf32>
    %13 = vector.broadcast %11 : vector<16x1xf32> to vector<16x32xf32>
    %14 = arith.mulf %1, %13 : vector<16x32xf32>
    %cst_19 = arith.constant dense<0.000000e+00> : vector<2x32xf32>
    %15 = tpu.matmul %12, %14, %cst_19 {dimension_numbers = #tpu.dot_dimension_numbers<[1], [0], [0], [1], [0, 0, 1, 1], [], []>} : vector<2x16xf32>, vector<16x32xf32>, vector<2x32xf32> -> vector<2x32xf32>
    %c0_20 = arith.constant 0 : index
    %c0_21 = arith.constant 0 : index
    %16 = vector.load %arg9[%c0_20, %c0_21] : memref<16x2xf32, #tpu.memory_space<vmem>>, vector<16x2xf32>
    %cst_22 = arith.constant dense<0.000000e+00> : vector<16x32xf32>
    %17 = tpu.matmul %16, %15, %cst_22 {dimension_numbers = #tpu.dot_dimension_numbers<[1], [0], [0], [1], [0, 0, 1, 1], [], []>} : vector<16x2xf32>, vector<2x32xf32>, vector<16x32xf32> -> vector<16x32xf32>
    %cst_23 = arith.constant 0.000000e+00 : f32
    %18 = vector.broadcast %cst_23 : f32 to vector<16x1xf32>
    %19 = arith.cmpf oeq, %5, %18 : vector<16x1xf32>
    %20 = arith.extui %19 : vector<16x1xi1> to vector<16x1xi32>
    %21 = arith.sitofp %20 : vector<16x1xi32> to vector<16x1xf32>
    %cst_24 = arith.constant 1.000000e+00 : f32
    %22 = vector.broadcast %cst_24 : f32 to vector<16x1xf32>
    %23 = arith.cmpf oeq, %5, %22 : vector<16x1xf32>
    %24 = arith.extui %23 : vector<16x1xi1> to vector<16x1xi32>
    %25 = arith.sitofp %24 : vector<16x1xi32> to vector<16x1xf32>
    %cst_25 = arith.constant 0.000000e+00 : f32
    %26 = vector.broadcast %cst_25 : f32 to vector<16x1xf32>
    %27 = vector.extract_strided_slice %11 {offsets = [0, 0], sizes = [8, 1], strides = [1, 1]} : vector<16x1xf32> to vector<8x1xf32>
    %cst_26 = arith.constant dense<0.000000e+00> : vector<1xf32>
    %28 = vector.multi_reduction <add>, %27, %cst_26 [0] : vector<8x1xf32> to vector<1xf32>
    %29 = vector.shape_cast %28 : vector<1xf32> to vector<1x1xf32>
    %30 = vector.broadcast %29 : vector<1x1xf32> to vector<16x1xf32>
    %31 = arith.mulf %21, %30 : vector<16x1xf32>
    %32 = arith.addf %26, %31 : vector<16x1xf32>
    %33 = vector.extract_strided_slice %11 {offsets = [8, 0], sizes = [8, 1], strides = [1, 1]} : vector<16x1xf32> to vector<8x1xf32>
    %cst_27 = arith.constant dense<0.000000e+00> : vector<1xf32>
    %34 = vector.multi_reduction <add>, %33, %cst_27 [0] : vector<8x1xf32> to vector<1xf32>
    %35 = vector.shape_cast %34 : vector<1xf32> to vector<1x1xf32>
    %36 = vector.broadcast %35 : vector<1x1xf32> to vector<16x1xf32>
    %37 = arith.mulf %25, %36 : vector<16x1xf32>
    %38 = arith.addf %32, %37 : vector<16x1xf32>
    %cst_28 = arith.constant 1.000000e+00 : f32
    %39 = vector.broadcast %cst_28 : f32 to vector<16x1xf32>
    %40 = arith.maximumf %38, %39 : vector<16x1xf32>
    %41 = tpu.reciprocal %40 {approx = true} : vector<16x1xf32> -> vector<16x1xf32>
    %42 = vector.broadcast %41 : vector<16x1xf32> to vector<16x32xf32>
    %43 = arith.mulf %17, %42 : vector<16x32xf32>
    %44 = arith.mulf %9, %43 : vector<16x32xf32>
    %cst_29 = arith.constant dense<0.000000e+00> : vector<16xf32>
    %45 = vector.multi_reduction <add>, %44, %cst_29 [1] : vector<16x32xf32> to vector<16xf32>
    %46 = vector.shape_cast %45 : vector<16xf32> to vector<16x1xf32>
    %cst_30 = arith.constant 0.176776692 : f32
    %47 = vector.broadcast %cst_30 : f32 to vector<16x1xf32>
    %48 = arith.mulf %46, %47 : vector<16x1xf32>
    %cst_31 = arith.constant 5.000000e-01 : f32
    %49 = vector.broadcast %cst_31 : f32 to vector<16x1xf32>
    %50 = arith.cmpf ogt, %2, %49 : vector<16x1xf32>
    %cst_32 = arith.constant -1.000000e+09 : f32
    %51 = vector.broadcast %cst_32 : f32 to vector<16x1xf32>
    %52 = arith.select %50, %51, %48 : vector<16x1xi1>, vector<16x1xf32>
    %cst_33 = arith.constant 0.000000e+00 : f32
    %53 = vector.broadcast %cst_33 : f32 to vector<16x1xf32>
    %54 = vector.extract_strided_slice %52 {offsets = [0, 0], sizes = [8, 1], strides = [1, 1]} : vector<16x1xf32> to vector<8x1xf32>
    %cst_34 = arith.constant dense<0xFF800000> : vector<1xf32>
    %55 = vector.multi_reduction <maximumf>, %54, %cst_34 [0] : vector<8x1xf32> to vector<1xf32>
    %56 = vector.shape_cast %55 : vector<1xf32> to vector<1x1xf32>
    %57 = vector.broadcast %56 : vector<1x1xf32> to vector<16x1xf32>
    %58 = arith.mulf %21, %57 : vector<16x1xf32>
    %59 = arith.addf %53, %58 : vector<16x1xf32>
    %60 = vector.extract_strided_slice %52 {offsets = [8, 0], sizes = [8, 1], strides = [1, 1]} : vector<16x1xf32> to vector<8x1xf32>
    %cst_35 = arith.constant dense<0xFF800000> : vector<1xf32>
    %61 = vector.multi_reduction <maximumf>, %60, %cst_35 [0] : vector<8x1xf32> to vector<1xf32>
    %62 = vector.shape_cast %61 : vector<1xf32> to vector<1x1xf32>
    %63 = vector.broadcast %62 : vector<1x1xf32> to vector<16x1xf32>
    %64 = arith.mulf %25, %63 : vector<16x1xf32>
    %65 = arith.addf %59, %64 : vector<16x1xf32>
    %66 = arith.subf %52, %65 : vector<16x1xf32>
    %67 = math.exp %66 : vector<16x1xf32>
    %cst_36 = arith.constant 0.000000e+00 : f32
    %68 = vector.broadcast %cst_36 : f32 to vector<16x1xf32>
    %69 = vector.extract_strided_slice %67 {offsets = [0, 0], sizes = [8, 1], strides = [1, 1]} : vector<16x1xf32> to vector<8x1xf32>
    %cst_37 = arith.constant dense<0.000000e+00> : vector<1xf32>
    %70 = vector.multi_reduction <add>, %69, %cst_37 [0] : vector<8x1xf32> to vector<1xf32>
    %71 = vector.shape_cast %70 : vector<1xf32> to vector<1x1xf32>
    %72 = vector.broadcast %71 : vector<1x1xf32> to vector<16x1xf32>
    %73 = arith.mulf %21, %72 : vector<16x1xf32>
    %74 = arith.addf %68, %73 : vector<16x1xf32>
    %75 = vector.extract_strided_slice %67 {offsets = [8, 0], sizes = [8, 1], strides = [1, 1]} : vector<16x1xf32> to vector<8x1xf32>
    %cst_38 = arith.constant dense<0.000000e+00> : vector<1xf32>
    %76 = vector.multi_reduction <add>, %75, %cst_38 [0] : vector<8x1xf32> to vector<1xf32>
    %77 = vector.shape_cast %76 : vector<1xf32> to vector<1x1xf32>
    %78 = vector.broadcast %77 : vector<1x1xf32> to vector<16x1xf32>
    %79 = arith.mulf %25, %78 : vector<16x1xf32>
    %80 = arith.addf %74, %79 : vector<16x1xf32>
    %81 = tpu.reciprocal %80 {approx = true} : vector<16x1xf32> -> vector<16x1xf32>
    %82 = arith.mulf %67, %81 : vector<16x1xf32>
    %c0_39 = arith.constant 0 : index
    %c0_40 = arith.constant 0 : index
    %83 = vector.load %arg7[%c0_39, %c0_40] : memref<2x16xf32, #tpu.memory_space<vmem>>, vector<2x16xf32>
    %84 = vector.broadcast %82 : vector<16x1xf32> to vector<16x32xf32>
    %85 = arith.mulf %84, %7 : vector<16x32xf32>
    %cst_41 = arith.constant dense<0.000000e+00> : vector<2x32xf32>
    %86 = tpu.matmul %83, %85, %cst_41 {dimension_numbers = #tpu.dot_dimension_numbers<[1], [0], [0], [1], [0, 0, 1, 1], [], []>} : vector<2x16xf32>, vector<16x32xf32>, vector<2x32xf32> -> vector<2x32xf32>
    %cst_42 = arith.constant 0.000000e+00 : f32
    %87 = vector.broadcast %cst_42 : f32 to vector<2x32xf32>
    %88 = arith.maximumf %86, %87 : vector<2x32xf32>
    %c0_43 = arith.constant 0 : index
    %c0_44 = arith.constant 0 : index
    %89 = vector.load %arg12[%c0_43, %c0_44] : memref<32x128xf32, #tpu.memory_space<vmem>>, vector<32x128xf32>
    %cst_45 = arith.constant dense<0.000000e+00> : vector<2x128xf32>
    %90 = tpu.matmul %88, %89, %cst_45 {dimension_numbers = #tpu.dot_dimension_numbers<[1], [0], [0], [1], [0, 0, 1, 1], [], []>} : vector<2x32xf32>, vector<32x128xf32>, vector<2x128xf32> -> vector<2x128xf32>
    %c0_46 = arith.constant 0 : index
    %c0_47 = arith.constant 0 : index
    %91 = vector.load %arg13[%c0_46, %c0_47] : memref<1x128xf32, #tpu.memory_space<vmem>>, vector<1x128xf32>
    %92 = vector.broadcast %91 : vector<1x128xf32> to vector<2x128xf32>
    %93 = arith.addf %90, %92 : vector<2x128xf32>
    %c0_48 = arith.constant 0 : index
    %c0_49 = arith.constant 0 : index
    %94 = vector.load %arg9[%c0_48, %c0_49] : memref<16x2xf32, #tpu.memory_space<vmem>>, vector<16x2xf32>
    %cst_50 = arith.constant dense<0.000000e+00> : vector<16x128xf32>
    %95 = tpu.matmul %94, %93, %cst_50 {dimension_numbers = #tpu.dot_dimension_numbers<[1], [0], [0], [1], [0, 0, 1, 1], [], []>} : vector<16x2xf32>, vector<2x128xf32>, vector<16x128xf32> -> vector<16x128xf32>
    %96 = vector.extract_strided_slice %95 {offsets = [0, 0], sizes = [16, 32], strides = [1, 1]} : vector<16x128xf32> to vector<16x32xf32>
    %97 = vector.extract_strided_slice %95 {offsets = [0, 32], sizes = [16, 32], strides = [1, 1]} : vector<16x128xf32> to vector<16x32xf32>
    %98 = vector.extract_strided_slice %95 {offsets = [0, 64], sizes = [16, 32], strides = [1, 1]} : vector<16x128xf32> to vector<16x32xf32>
    %99 = vector.extract_strided_slice %95 {offsets = [0, 96], sizes = [16, 32], strides = [1, 1]} : vector<16x128xf32> to vector<16x32xf32>
    %cst_51 = arith.constant dense<0.000000e+00> : vector<16xf32>
    %100 = vector.multi_reduction <add>, %0, %cst_51 [1] : vector<16x32xf32> to vector<16xf32>
    %101 = vector.shape_cast %100 : vector<16xf32> to vector<16x1xf32>
    %cst_52 = arith.constant 3.200000e+01 : f32
    %102 = vector.broadcast %cst_52 : f32 to vector<16x1xf32>
    %103 = arith.divf %101, %102 : vector<16x1xf32>
    %104 = vector.broadcast %103 : vector<16x1xf32> to vector<16x32xf32>
    %105 = arith.subf %0, %104 : vector<16x32xf32>
    %106 = arith.mulf %105, %105 : vector<16x32xf32>
    %cst_53 = arith.constant dense<0.000000e+00> : vector<16xf32>
    %107 = vector.multi_reduction <add>, %106, %cst_53 [1] : vector<16x32xf32> to vector<16xf32>
    %108 = vector.shape_cast %107 : vector<16xf32> to vector<16x1xf32>
    %cst_54 = arith.constant 3.200000e+01 : f32
    %109 = vector.broadcast %cst_54 : f32 to vector<16x1xf32>
    %110 = arith.divf %108, %109 : vector<16x1xf32>
    %111 = vector.broadcast %103 : vector<16x1xf32> to vector<16x32xf32>
    %112 = arith.subf %0, %111 : vector<16x32xf32>
    %cst_55 = arith.constant 9.99999997E-7 : f32
    %113 = vector.broadcast %cst_55 : f32 to vector<16x1xf32>
    %114 = arith.addf %110, %113 : vector<16x1xf32>
    %115 = math.rsqrt %114 : vector<16x1xf32>
    %116 = vector.broadcast %115 : vector<16x1xf32> to vector<16x32xf32>
    %117 = arith.mulf %112, %116 : vector<16x32xf32>
    %cst_56 = arith.constant 1.000000e+00 : f32
    %118 = vector.broadcast %cst_56 : f32 to vector<16x32xf32>
    %119 = arith.addf %118, %97 : vector<16x32xf32>
    %120 = arith.mulf %117, %119 : vector<16x32xf32>
    %121 = arith.addf %120, %96 : vector<16x32xf32>
    %cst_57 = arith.constant 0.000000e+00 : f32
    %122 = vector.broadcast %cst_57 : f32 to vector<16x32xf32>
    %c0_58 = arith.constant 0 : index
    %c0_59 = arith.constant 0 : index
    %123 = vector.load %arg14[%c0_58, %c0_59] : memref<5x32xf32, #tpu.memory_space<vmem>>, vector<5x32xf32>
    %cst_60 = arith.constant 0.000000e+00 : f32
    %124 = vector.broadcast %cst_60 : f32 to vector<16x32xf32>
    %c2_i32 = arith.constant 2 : i32
    %125 = tpu.dynamic_rotate %121 by %c2_i32 dim 0 : vector<16x32xf32>, i32 -> vector<16x32xf32>
    %126 = vector.extract_strided_slice %123 {offsets = [0, 0], sizes = [1, 32], strides = [1, 1]} : vector<5x32xf32> to vector<1x32xf32>
    %cst_61 = arith.constant -2.000000e+00 : f32
    %127 = vector.broadcast %cst_61 : f32 to vector<16x1xf32>
    %128 = arith.addf %4, %127 : vector<16x1xf32>
    %cst_62 = arith.constant 0.000000e+00 : f32
    %129 = vector.broadcast %cst_62 : f32 to vector<16x1xf32>
    %130 = arith.cmpf oge, %128, %129 : vector<16x1xf32>
    %cst_63 = arith.constant 7.000000e+00 : f32
    %131 = vector.broadcast %cst_63 : f32 to vector<16x1xf32>
    %132 = arith.cmpf ole, %128, %131 : vector<16x1xf32>
    %133 = arith.andi %130, %132 : vector<16x1xi1>
    %134 = arith.extui %133 : vector<16x1xi1> to vector<16x1xi32>
    %135 = arith.sitofp %134 : vector<16x1xi32> to vector<16x1xf32>
    %136 = vector.broadcast %135 : vector<16x1xf32> to vector<16x32xf32>
    %137 = arith.mulf %125, %136 : vector<16x32xf32>
    %138 = vector.broadcast %126 : vector<1x32xf32> to vector<16x32xf32>
    %139 = arith.mulf %137, %138 : vector<16x32xf32>
    %140 = arith.addf %124, %139 : vector<16x32xf32>
    %c1_i32 = arith.constant 1 : i32
    %141 = tpu.dynamic_rotate %121 by %c1_i32 dim 0 : vector<16x32xf32>, i32 -> vector<16x32xf32>
    %142 = vector.extract_strided_slice %123 {offsets = [1, 0], sizes = [1, 32], strides = [1, 1]} : vector<5x32xf32> to vector<1x32xf32>
    %cst_64 = arith.constant -1.000000e+00 : f32
    %143 = vector.broadcast %cst_64 : f32 to vector<16x1xf32>
    %144 = arith.addf %4, %143 : vector<16x1xf32>
    %cst_65 = arith.constant 0.000000e+00 : f32
    %145 = vector.broadcast %cst_65 : f32 to vector<16x1xf32>
    %146 = arith.cmpf oge, %144, %145 : vector<16x1xf32>
    %cst_66 = arith.constant 7.000000e+00 : f32
    %147 = vector.broadcast %cst_66 : f32 to vector<16x1xf32>
    %148 = arith.cmpf ole, %144, %147 : vector<16x1xf32>
    %149 = arith.andi %146, %148 : vector<16x1xi1>
    %150 = arith.extui %149 : vector<16x1xi1> to vector<16x1xi32>
    %151 = arith.sitofp %150 : vector<16x1xi32> to vector<16x1xf32>
    %152 = vector.broadcast %151 : vector<16x1xf32> to vector<16x32xf32>
    %153 = arith.mulf %141, %152 : vector<16x32xf32>
    %154 = vector.broadcast %142 : vector<1x32xf32> to vector<16x32xf32>
    %155 = arith.mulf %153, %154 : vector<16x32xf32>
    %156 = arith.addf %140, %155 : vector<16x32xf32>
    %157 = vector.extract_strided_slice %123 {offsets = [2, 0], sizes = [1, 32], strides = [1, 1]} : vector<5x32xf32> to vector<1x32xf32>
    %158 = vector.broadcast %157 : vector<1x32xf32> to vector<16x32xf32>
    %159 = arith.mulf %121, %158 : vector<16x32xf32>
    %160 = arith.addf %156, %159 : vector<16x32xf32>
    %c15_i32 = arith.constant 15 : i32
    %161 = tpu.dynamic_rotate %121 by %c15_i32 dim 0 : vector<16x32xf32>, i32 -> vector<16x32xf32>
    %162 = vector.extract_strided_slice %123 {offsets = [3, 0], sizes = [1, 32], strides = [1, 1]} : vector<5x32xf32> to vector<1x32xf32>
    %cst_67 = arith.constant 1.000000e+00 : f32
    %163 = vector.broadcast %cst_67 : f32 to vector<16x1xf32>
    %164 = arith.addf %4, %163 : vector<16x1xf32>
    %cst_68 = arith.constant 0.000000e+00 : f32
    %165 = vector.broadcast %cst_68 : f32 to vector<16x1xf32>
    %166 = arith.cmpf oge, %164, %165 : vector<16x1xf32>
    %cst_69 = arith.constant 7.000000e+00 : f32
    %167 = vector.broadcast %cst_69 : f32 to vector<16x1xf32>
    %168 = arith.cmpf ole, %164, %167 : vector<16x1xf32>
    %169 = arith.andi %166, %168 : vector<16x1xi1>
    %170 = arith.extui %169 : vector<16x1xi1> to vector<16x1xi32>
    %171 = arith.sitofp %170 : vector<16x1xi32> to vector<16x1xf32>
    %172 = vector.broadcast %171 : vector<16x1xf32> to vector<16x32xf32>
    %173 = arith.mulf %161, %172 : vector<16x32xf32>
    %174 = vector.broadcast %162 : vector<1x32xf32> to vector<16x32xf32>
    %175 = arith.mulf %173, %174 : vector<16x32xf32>
    %176 = arith.addf %160, %175 : vector<16x32xf32>
    %c14_i32 = arith.constant 14 : i32
    %177 = tpu.dynamic_rotate %121 by %c14_i32 dim 0 : vector<16x32xf32>, i32 -> vector<16x32xf32>
    %178 = vector.extract_strided_slice %123 {offsets = [4, 0], sizes = [1, 32], strides = [1, 1]} : vector<5x32xf32> to vector<1x32xf32>
    %cst_70 = arith.constant 2.000000e+00 : f32
    %179 = vector.broadcast %cst_70 : f32 to vector<16x1xf32>
    %180 = arith.addf %4, %179 : vector<16x1xf32>
    %cst_71 = arith.constant 0.000000e+00 : f32
    %181 = vector.broadcast %cst_71 : f32 to vector<16x1xf32>
    %182 = arith.cmpf oge, %180, %181 : vector<16x1xf32>
    %cst_72 = arith.constant 7.000000e+00 : f32
    %183 = vector.broadcast %cst_72 : f32 to vector<16x1xf32>
    %184 = arith.cmpf ole, %180, %183 : vector<16x1xf32>
    %185 = arith.andi %182, %184 : vector<16x1xi1>
    %186 = arith.extui %185 : vector<16x1xi1> to vector<16x1xi32>
    %187 = arith.sitofp %186 : vector<16x1xi32> to vector<16x1xf32>
    %188 = vector.broadcast %187 : vector<16x1xf32> to vector<16x32xf32>
    %189 = arith.mulf %177, %188 : vector<16x32xf32>
    %190 = vector.broadcast %178 : vector<1x32xf32> to vector<16x32xf32>
    %191 = arith.mulf %189, %190 : vector<16x32xf32>
    %192 = arith.addf %176, %191 : vector<16x32xf32>
    %c0_73 = arith.constant 0 : index
    %c0_74 = arith.constant 0 : index
    %193 = vector.load %arg18[%c0_73, %c0_74] : memref<4x32xf32, #tpu.memory_space<vmem>>, vector<1x32xf32>
    %194 = vector.broadcast %193 : vector<1x32xf32> to vector<16x32xf32>
    %195 = arith.addf %192, %194 : vector<16x32xf32>
    %cst_75 = arith.constant 0.000000e+00 : f32
    %196 = vector.broadcast %cst_75 : f32 to vector<16x32xf32>
    %197 = arith.maximumf %195, %196 : vector<16x32xf32>
    %198 = arith.addf %122, %197 : vector<16x32xf32>
    %c0_76 = arith.constant 0 : index
    %c0_77 = arith.constant 0 : index
    %199 = vector.load %arg15[%c0_76, %c0_77] : memref<9x32xf32, #tpu.memory_space<vmem>>, vector<9x32xf32>
    %cst_78 = arith.constant 0.000000e+00 : f32
    %200 = vector.broadcast %cst_78 : f32 to vector<16x32xf32>
    %c4_i32 = arith.constant 4 : i32
    %201 = tpu.dynamic_rotate %197 by %c4_i32 dim 0 : vector<16x32xf32>, i32 -> vector<16x32xf32>
    %202 = vector.extract_strided_slice %199 {offsets = [0, 0], sizes = [1, 32], strides = [1, 1]} : vector<9x32xf32> to vector<1x32xf32>
    %cst_79 = arith.constant -4.000000e+00 : f32
    %203 = vector.broadcast %cst_79 : f32 to vector<16x1xf32>
    %204 = arith.addf %4, %203 : vector<16x1xf32>
    %cst_80 = arith.constant 0.000000e+00 : f32
    %205 = vector.broadcast %cst_80 : f32 to vector<16x1xf32>
    %206 = arith.cmpf oge, %204, %205 : vector<16x1xf32>
    %cst_81 = arith.constant 7.000000e+00 : f32
    %207 = vector.broadcast %cst_81 : f32 to vector<16x1xf32>
    %208 = arith.cmpf ole, %204, %207 : vector<16x1xf32>
    %209 = arith.andi %206, %208 : vector<16x1xi1>
    %210 = arith.extui %209 : vector<16x1xi1> to vector<16x1xi32>
    %211 = arith.sitofp %210 : vector<16x1xi32> to vector<16x1xf32>
    %212 = vector.broadcast %211 : vector<16x1xf32> to vector<16x32xf32>
    %213 = arith.mulf %201, %212 : vector<16x32xf32>
    %214 = vector.broadcast %202 : vector<1x32xf32> to vector<16x32xf32>
    %215 = arith.mulf %213, %214 : vector<16x32xf32>
    %216 = arith.addf %200, %215 : vector<16x32xf32>
    %c3_i32 = arith.constant 3 : i32
    %217 = tpu.dynamic_rotate %197 by %c3_i32 dim 0 : vector<16x32xf32>, i32 -> vector<16x32xf32>
    %218 = vector.extract_strided_slice %199 {offsets = [1, 0], sizes = [1, 32], strides = [1, 1]} : vector<9x32xf32> to vector<1x32xf32>
    %cst_82 = arith.constant -3.000000e+00 : f32
    %219 = vector.broadcast %cst_82 : f32 to vector<16x1xf32>
    %220 = arith.addf %4, %219 : vector<16x1xf32>
    %cst_83 = arith.constant 0.000000e+00 : f32
    %221 = vector.broadcast %cst_83 : f32 to vector<16x1xf32>
    %222 = arith.cmpf oge, %220, %221 : vector<16x1xf32>
    %cst_84 = arith.constant 7.000000e+00 : f32
    %223 = vector.broadcast %cst_84 : f32 to vector<16x1xf32>
    %224 = arith.cmpf ole, %220, %223 : vector<16x1xf32>
    %225 = arith.andi %222, %224 : vector<16x1xi1>
    %226 = arith.extui %225 : vector<16x1xi1> to vector<16x1xi32>
    %227 = arith.sitofp %226 : vector<16x1xi32> to vector<16x1xf32>
    %228 = vector.broadcast %227 : vector<16x1xf32> to vector<16x32xf32>
    %229 = arith.mulf %217, %228 : vector<16x32xf32>
    %230 = vector.broadcast %218 : vector<1x32xf32> to vector<16x32xf32>
    %231 = arith.mulf %229, %230 : vector<16x32xf32>
    %232 = arith.addf %216, %231 : vector<16x32xf32>
    %c2_i32_85 = arith.constant 2 : i32
    %233 = tpu.dynamic_rotate %197 by %c2_i32_85 dim 0 : vector<16x32xf32>, i32 -> vector<16x32xf32>
    %234 = vector.extract_strided_slice %199 {offsets = [2, 0], sizes = [1, 32], strides = [1, 1]} : vector<9x32xf32> to vector<1x32xf32>
    %235 = vector.broadcast %135 : vector<16x1xf32> to vector<16x32xf32>
    %236 = arith.mulf %233, %235 : vector<16x32xf32>
    %237 = vector.broadcast %234 : vector<1x32xf32> to vector<16x32xf32>
    %238 = arith.mulf %236, %237 : vector<16x32xf32>
    %239 = arith.addf %232, %238 : vector<16x32xf32>
    %c1_i32_86 = arith.constant 1 : i32
    %240 = tpu.dynamic_rotate %197 by %c1_i32_86 dim 0 : vector<16x32xf32>, i32 -> vector<16x32xf32>
    %241 = vector.extract_strided_slice %199 {offsets = [3, 0], sizes = [1, 32], strides = [1, 1]} : vector<9x32xf32> to vector<1x32xf32>
    %242 = vector.broadcast %151 : vector<16x1xf32> to vector<16x32xf32>
    %243 = arith.mulf %240, %242 : vector<16x32xf32>
    %244 = vector.broadcast %241 : vector<1x32xf32> to vector<16x32xf32>
    %245 = arith.mulf %243, %244 : vector<16x32xf32>
    %246 = arith.addf %239, %245 : vector<16x32xf32>
    %247 = vector.extract_strided_slice %199 {offsets = [4, 0], sizes = [1, 32], strides = [1, 1]} : vector<9x32xf32> to vector<1x32xf32>
    %248 = vector.broadcast %247 : vector<1x32xf32> to vector<16x32xf32>
    %249 = arith.mulf %197, %248 : vector<16x32xf32>
    %250 = arith.addf %246, %249 : vector<16x32xf32>
    %c15_i32_87 = arith.constant 15 : i32
    %251 = tpu.dynamic_rotate %197 by %c15_i32_87 dim 0 : vector<16x32xf32>, i32 -> vector<16x32xf32>
    %252 = vector.extract_strided_slice %199 {offsets = [5, 0], sizes = [1, 32], strides = [1, 1]} : vector<9x32xf32> to vector<1x32xf32>
    %253 = vector.broadcast %171 : vector<16x1xf32> to vector<16x32xf32>
    %254 = arith.mulf %251, %253 : vector<16x32xf32>
    %255 = vector.broadcast %252 : vector<1x32xf32> to vector<16x32xf32>
    %256 = arith.mulf %254, %255 : vector<16x32xf32>
    %257 = arith.addf %250, %256 : vector<16x32xf32>
    %c14_i32_88 = arith.constant 14 : i32
    %258 = tpu.dynamic_rotate %197 by %c14_i32_88 dim 0 : vector<16x32xf32>, i32 -> vector<16x32xf32>
    %259 = vector.extract_strided_slice %199 {offsets = [6, 0], sizes = [1, 32], strides = [1, 1]} : vector<9x32xf32> to vector<1x32xf32>
    %260 = vector.broadcast %187 : vector<16x1xf32> to vector<16x32xf32>
    %261 = arith.mulf %258, %260 : vector<16x32xf32>
    %262 = vector.broadcast %259 : vector<1x32xf32> to vector<16x32xf32>
    %263 = arith.mulf %261, %262 : vector<16x32xf32>
    %264 = arith.addf %257, %263 : vector<16x32xf32>
    %c13_i32 = arith.constant 13 : i32
    %265 = tpu.dynamic_rotate %197 by %c13_i32 dim 0 : vector<16x32xf32>, i32 -> vector<16x32xf32>
    %266 = vector.extract_strided_slice %199 {offsets = [7, 0], sizes = [1, 32], strides = [1, 1]} : vector<9x32xf32> to vector<1x32xf32>
    %cst_89 = arith.constant 3.000000e+00 : f32
    %267 = vector.broadcast %cst_89 : f32 to vector<16x1xf32>
    %268 = arith.addf %4, %267 : vector<16x1xf32>
    %cst_90 = arith.constant 0.000000e+00 : f32
    %269 = vector.broadcast %cst_90 : f32 to vector<16x1xf32>
    %270 = arith.cmpf oge, %268, %269 : vector<16x1xf32>
    %cst_91 = arith.constant 7.000000e+00 : f32
    %271 = vector.broadcast %cst_91 : f32 to vector<16x1xf32>
    %272 = arith.cmpf ole, %268, %271 : vector<16x1xf32>
    %273 = arith.andi %270, %272 : vector<16x1xi1>
    %274 = arith.extui %273 : vector<16x1xi1> to vector<16x1xi32>
    %275 = arith.sitofp %274 : vector<16x1xi32> to vector<16x1xf32>
    %276 = vector.broadcast %275 : vector<16x1xf32> to vector<16x32xf32>
    %277 = arith.mulf %265, %276 : vector<16x32xf32>
    %278 = vector.broadcast %266 : vector<1x32xf32> to vector<16x32xf32>
    %279 = arith.mulf %277, %278 : vector<16x32xf32>
    %280 = arith.addf %264, %279 : vector<16x32xf32>
    %c12_i32 = arith.constant 12 : i32
    %281 = tpu.dynamic_rotate %197 by %c12_i32 dim 0 : vector<16x32xf32>, i32 -> vector<16x32xf32>
    %282 = vector.extract_strided_slice %199 {offsets = [8, 0], sizes = [1, 32], strides = [1, 1]} : vector<9x32xf32> to vector<1x32xf32>
    %cst_92 = arith.constant 4.000000e+00 : f32
    %283 = vector.broadcast %cst_92 : f32 to vector<16x1xf32>
    %284 = arith.addf %4, %283 : vector<16x1xf32>
    %cst_93 = arith.constant 0.000000e+00 : f32
    %285 = vector.broadcast %cst_93 : f32 to vector<16x1xf32>
    %286 = arith.cmpf oge, %284, %285 : vector<16x1xf32>
    %cst_94 = arith.constant 7.000000e+00 : f32
    %287 = vector.broadcast %cst_94 : f32 to vector<16x1xf32>
    %288 = arith.cmpf ole, %284, %287 : vector<16x1xf32>
    %289 = arith.andi %286, %288 : vector<16x1xi1>
    %290 = arith.extui %289 : vector<16x1xi1> to vector<16x1xi32>
    %291 = arith.sitofp %290 : vector<16x1xi32> to vector<16x1xf32>
    %292 = vector.broadcast %291 : vector<16x1xf32> to vector<16x32xf32>
    %293 = arith.mulf %281, %292 : vector<16x32xf32>
    %294 = vector.broadcast %282 : vector<1x32xf32> to vector<16x32xf32>
    %295 = arith.mulf %293, %294 : vector<16x32xf32>
    %296 = arith.addf %280, %295 : vector<16x32xf32>
    %c1 = arith.constant 1 : index
    %c0_95 = arith.constant 0 : index
    %297 = vector.load %arg18[%c1, %c0_95] : memref<4x32xf32, #tpu.memory_space<vmem>>, vector<1x32xf32>
    %298 = vector.broadcast %297 : vector<1x32xf32> to vector<16x32xf32>
    %299 = arith.addf %296, %298 : vector<16x32xf32>
    %cst_96 = arith.constant 0.000000e+00 : f32
    %300 = vector.broadcast %cst_96 : f32 to vector<16x32xf32>
    %301 = arith.maximumf %299, %300 : vector<16x32xf32>
    %302 = arith.addf %198, %301 : vector<16x32xf32>
    %c0_97 = arith.constant 0 : index
    %c0_98 = arith.constant 0 : index
    %303 = vector.load %arg16[%c0_97, %c0_98] : memref<13x32xf32, #tpu.memory_space<vmem>>, vector<13x32xf32>
    %cst_99 = arith.constant 0.000000e+00 : f32
    %304 = vector.broadcast %cst_99 : f32 to vector<16x32xf32>
    %c6_i32 = arith.constant 6 : i32
    %305 = tpu.dynamic_rotate %301 by %c6_i32 dim 0 : vector<16x32xf32>, i32 -> vector<16x32xf32>
    %306 = vector.extract_strided_slice %303 {offsets = [0, 0], sizes = [1, 32], strides = [1, 1]} : vector<13x32xf32> to vector<1x32xf32>
    %cst_100 = arith.constant -6.000000e+00 : f32
    %307 = vector.broadcast %cst_100 : f32 to vector<16x1xf32>
    %308 = arith.addf %4, %307 : vector<16x1xf32>
    %cst_101 = arith.constant 0.000000e+00 : f32
    %309 = vector.broadcast %cst_101 : f32 to vector<16x1xf32>
    %310 = arith.cmpf oge, %308, %309 : vector<16x1xf32>
    %cst_102 = arith.constant 7.000000e+00 : f32
    %311 = vector.broadcast %cst_102 : f32 to vector<16x1xf32>
    %312 = arith.cmpf ole, %308, %311 : vector<16x1xf32>
    %313 = arith.andi %310, %312 : vector<16x1xi1>
    %314 = arith.extui %313 : vector<16x1xi1> to vector<16x1xi32>
    %315 = arith.sitofp %314 : vector<16x1xi32> to vector<16x1xf32>
    %316 = vector.broadcast %315 : vector<16x1xf32> to vector<16x32xf32>
    %317 = arith.mulf %305, %316 : vector<16x32xf32>
    %318 = vector.broadcast %306 : vector<1x32xf32> to vector<16x32xf32>
    %319 = arith.mulf %317, %318 : vector<16x32xf32>
    %320 = arith.addf %304, %319 : vector<16x32xf32>
    %c5_i32 = arith.constant 5 : i32
    %321 = tpu.dynamic_rotate %301 by %c5_i32 dim 0 : vector<16x32xf32>, i32 -> vector<16x32xf32>
    %322 = vector.extract_strided_slice %303 {offsets = [1, 0], sizes = [1, 32], strides = [1, 1]} : vector<13x32xf32> to vector<1x32xf32>
    %cst_103 = arith.constant -5.000000e+00 : f32
    %323 = vector.broadcast %cst_103 : f32 to vector<16x1xf32>
    %324 = arith.addf %4, %323 : vector<16x1xf32>
    %cst_104 = arith.constant 0.000000e+00 : f32
    %325 = vector.broadcast %cst_104 : f32 to vector<16x1xf32>
    %326 = arith.cmpf oge, %324, %325 : vector<16x1xf32>
    %cst_105 = arith.constant 7.000000e+00 : f32
    %327 = vector.broadcast %cst_105 : f32 to vector<16x1xf32>
    %328 = arith.cmpf ole, %324, %327 : vector<16x1xf32>
    %329 = arith.andi %326, %328 : vector<16x1xi1>
    %330 = arith.extui %329 : vector<16x1xi1> to vector<16x1xi32>
    %331 = arith.sitofp %330 : vector<16x1xi32> to vector<16x1xf32>
    %332 = vector.broadcast %331 : vector<16x1xf32> to vector<16x32xf32>
    %333 = arith.mulf %321, %332 : vector<16x32xf32>
    %334 = vector.broadcast %322 : vector<1x32xf32> to vector<16x32xf32>
    %335 = arith.mulf %333, %334 : vector<16x32xf32>
    %336 = arith.addf %320, %335 : vector<16x32xf32>
    %c4_i32_106 = arith.constant 4 : i32
    %337 = tpu.dynamic_rotate %301 by %c4_i32_106 dim 0 : vector<16x32xf32>, i32 -> vector<16x32xf32>
    %338 = vector.extract_strided_slice %303 {offsets = [2, 0], sizes = [1, 32], strides = [1, 1]} : vector<13x32xf32> to vector<1x32xf32>
    %339 = vector.broadcast %211 : vector<16x1xf32> to vector<16x32xf32>
    %340 = arith.mulf %337, %339 : vector<16x32xf32>
    %341 = vector.broadcast %338 : vector<1x32xf32> to vector<16x32xf32>
    %342 = arith.mulf %340, %341 : vector<16x32xf32>
    %343 = arith.addf %336, %342 : vector<16x32xf32>
    %c3_i32_107 = arith.constant 3 : i32
    %344 = tpu.dynamic_rotate %301 by %c3_i32_107 dim 0 : vector<16x32xf32>, i32 -> vector<16x32xf32>
    %345 = vector.extract_strided_slice %303 {offsets = [3, 0], sizes = [1, 32], strides = [1, 1]} : vector<13x32xf32> to vector<1x32xf32>
    %346 = vector.broadcast %227 : vector<16x1xf32> to vector<16x32xf32>
    %347 = arith.mulf %344, %346 : vector<16x32xf32>
    %348 = vector.broadcast %345 : vector<1x32xf32> to vector<16x32xf32>
    %349 = arith.mulf %347, %348 : vector<16x32xf32>
    %350 = arith.addf %343, %349 : vector<16x32xf32>
    %c2_i32_108 = arith.constant 2 : i32
    %351 = tpu.dynamic_rotate %301 by %c2_i32_108 dim 0 : vector<16x32xf32>, i32 -> vector<16x32xf32>
    %352 = vector.extract_strided_slice %303 {offsets = [4, 0], sizes = [1, 32], strides = [1, 1]} : vector<13x32xf32> to vector<1x32xf32>
    %353 = vector.broadcast %135 : vector<16x1xf32> to vector<16x32xf32>
    %354 = arith.mulf %351, %353 : vector<16x32xf32>
    %355 = vector.broadcast %352 : vector<1x32xf32> to vector<16x32xf32>
    %356 = arith.mulf %354, %355 : vector<16x32xf32>
    %357 = arith.addf %350, %356 : vector<16x32xf32>
    %c1_i32_109 = arith.constant 1 : i32
    %358 = tpu.dynamic_rotate %301 by %c1_i32_109 dim 0 : vector<16x32xf32>, i32 -> vector<16x32xf32>
    %359 = vector.extract_strided_slice %303 {offsets = [5, 0], sizes = [1, 32], strides = [1, 1]} : vector<13x32xf32> to vector<1x32xf32>
    %360 = vector.broadcast %151 : vector<16x1xf32> to vector<16x32xf32>
    %361 = arith.mulf %358, %360 : vector<16x32xf32>
    %362 = vector.broadcast %359 : vector<1x32xf32> to vector<16x32xf32>
    %363 = arith.mulf %361, %362 : vector<16x32xf32>
    %364 = arith.addf %357, %363 : vector<16x32xf32>
    %365 = vector.extract_strided_slice %303 {offsets = [6, 0], sizes = [1, 32], strides = [1, 1]} : vector<13x32xf32> to vector<1x32xf32>
    %366 = vector.broadcast %365 : vector<1x32xf32> to vector<16x32xf32>
    %367 = arith.mulf %301, %366 : vector<16x32xf32>
    %368 = arith.addf %364, %367 : vector<16x32xf32>
    %c15_i32_110 = arith.constant 15 : i32
    %369 = tpu.dynamic_rotate %301 by %c15_i32_110 dim 0 : vector<16x32xf32>, i32 -> vector<16x32xf32>
    %370 = vector.extract_strided_slice %303 {offsets = [7, 0], sizes = [1, 32], strides = [1, 1]} : vector<13x32xf32> to vector<1x32xf32>
    %371 = vector.broadcast %171 : vector<16x1xf32> to vector<16x32xf32>
    %372 = arith.mulf %369, %371 : vector<16x32xf32>
    %373 = vector.broadcast %370 : vector<1x32xf32> to vector<16x32xf32>
    %374 = arith.mulf %372, %373 : vector<16x32xf32>
    %375 = arith.addf %368, %374 : vector<16x32xf32>
    %c14_i32_111 = arith.constant 14 : i32
    %376 = tpu.dynamic_rotate %301 by %c14_i32_111 dim 0 : vector<16x32xf32>, i32 -> vector<16x32xf32>
    %377 = vector.extract_strided_slice %303 {offsets = [8, 0], sizes = [1, 32], strides = [1, 1]} : vector<13x32xf32> to vector<1x32xf32>
    %378 = vector.broadcast %187 : vector<16x1xf32> to vector<16x32xf32>
    %379 = arith.mulf %376, %378 : vector<16x32xf32>
    %380 = vector.broadcast %377 : vector<1x32xf32> to vector<16x32xf32>
    %381 = arith.mulf %379, %380 : vector<16x32xf32>
    %382 = arith.addf %375, %381 : vector<16x32xf32>
    %c13_i32_112 = arith.constant 13 : i32
    %383 = tpu.dynamic_rotate %301 by %c13_i32_112 dim 0 : vector<16x32xf32>, i32 -> vector<16x32xf32>
    %384 = vector.extract_strided_slice %303 {offsets = [9, 0], sizes = [1, 32], strides = [1, 1]} : vector<13x32xf32> to vector<1x32xf32>
    %385 = vector.broadcast %275 : vector<16x1xf32> to vector<16x32xf32>
    %386 = arith.mulf %383, %385 : vector<16x32xf32>
    %387 = vector.broadcast %384 : vector<1x32xf32> to vector<16x32xf32>
    %388 = arith.mulf %386, %387 : vector<16x32xf32>
    %389 = arith.addf %382, %388 : vector<16x32xf32>
    %c12_i32_113 = arith.constant 12 : i32
    %390 = tpu.dynamic_rotate %301 by %c12_i32_113 dim 0 : vector<16x32xf32>, i32 -> vector<16x32xf32>
    %391 = vector.extract_strided_slice %303 {offsets = [10, 0], sizes = [1, 32], strides = [1, 1]} : vector<13x32xf32> to vector<1x32xf32>
    %392 = vector.broadcast %291 : vector<16x1xf32> to vector<16x32xf32>
    %393 = arith.mulf %390, %392 : vector<16x32xf32>
    %394 = vector.broadcast %391 : vector<1x32xf32> to vector<16x32xf32>
    %395 = arith.mulf %393, %394 : vector<16x32xf32>
    %396 = arith.addf %389, %395 : vector<16x32xf32>
    %c11_i32 = arith.constant 11 : i32
    %397 = tpu.dynamic_rotate %301 by %c11_i32 dim 0 : vector<16x32xf32>, i32 -> vector<16x32xf32>
    %398 = vector.extract_strided_slice %303 {offsets = [11, 0], sizes = [1, 32], strides = [1, 1]} : vector<13x32xf32> to vector<1x32xf32>
    %cst_114 = arith.constant 5.000000e+00 : f32
    %399 = vector.broadcast %cst_114 : f32 to vector<16x1xf32>
    %400 = arith.addf %4, %399 : vector<16x1xf32>
    %cst_115 = arith.constant 0.000000e+00 : f32
    %401 = vector.broadcast %cst_115 : f32 to vector<16x1xf32>
    %402 = arith.cmpf oge, %400, %401 : vector<16x1xf32>
    %cst_116 = arith.constant 7.000000e+00 : f32
    %403 = vector.broadcast %cst_116 : f32 to vector<16x1xf32>
    %404 = arith.cmpf ole, %400, %403 : vector<16x1xf32>
    %405 = arith.andi %402, %404 : vector<16x1xi1>
    %406 = arith.extui %405 : vector<16x1xi1> to vector<16x1xi32>
    %407 = arith.sitofp %406 : vector<16x1xi32> to vector<16x1xf32>
    %408 = vector.broadcast %407 : vector<16x1xf32> to vector<16x32xf32>
    %409 = arith.mulf %397, %408 : vector<16x32xf32>
    %410 = vector.broadcast %398 : vector<1x32xf32> to vector<16x32xf32>
    %411 = arith.mulf %409, %410 : vector<16x32xf32>
    %412 = arith.addf %396, %411 : vector<16x32xf32>
    %c10_i32 = arith.constant 10 : i32
    %413 = tpu.dynamic_rotate %301 by %c10_i32 dim 0 : vector<16x32xf32>, i32 -> vector<16x32xf32>
    %414 = vector.extract_strided_slice %303 {offsets = [12, 0], sizes = [1, 32], strides = [1, 1]} : vector<13x32xf32> to vector<1x32xf32>
    %cst_117 = arith.constant 6.000000e+00 : f32
    %415 = vector.broadcast %cst_117 : f32 to vector<16x1xf32>
    %416 = arith.addf %4, %415 : vector<16x1xf32>
    %cst_118 = arith.constant 0.000000e+00 : f32
    %417 = vector.broadcast %cst_118 : f32 to vector<16x1xf32>
    %418 = arith.cmpf oge, %416, %417 : vector<16x1xf32>
    %cst_119 = arith.constant 7.000000e+00 : f32
    %419 = vector.broadcast %cst_119 : f32 to vector<16x1xf32>
    %420 = arith.cmpf ole, %416, %419 : vector<16x1xf32>
    %421 = arith.andi %418, %420 : vector<16x1xi1>
    %422 = arith.extui %421 : vector<16x1xi1> to vector<16x1xi32>
    %423 = arith.sitofp %422 : vector<16x1xi32> to vector<16x1xf32>
    %424 = vector.broadcast %423 : vector<16x1xf32> to vector<16x32xf32>
    %425 = arith.mulf %413, %424 : vector<16x32xf32>
    %426 = vector.broadcast %414 : vector<1x32xf32> to vector<16x32xf32>
    %427 = arith.mulf %425, %426 : vector<16x32xf32>
    %428 = arith.addf %412, %427 : vector<16x32xf32>
    %c2 = arith.constant 2 : index
    %c0_120 = arith.constant 0 : index
    %429 = vector.load %arg18[%c2, %c0_120] : memref<4x32xf32, #tpu.memory_space<vmem>>, vector<1x32xf32>
    %430 = vector.broadcast %429 : vector<1x32xf32> to vector<16x32xf32>
    %431 = arith.addf %428, %430 : vector<16x32xf32>
    %cst_121 = arith.constant 0.000000e+00 : f32
    %432 = vector.broadcast %cst_121 : f32 to vector<16x32xf32>
    %433 = arith.maximumf %431, %432 : vector<16x32xf32>
    %434 = arith.addf %302, %433 : vector<16x32xf32>
    %c0_122 = arith.constant 0 : index
    %c0_123 = arith.constant 0 : index
    %435 = vector.load %arg17[%c0_122, %c0_123] : memref<17x32xf32, #tpu.memory_space<vmem>>, vector<17x32xf32>
    %cst_124 = arith.constant 0.000000e+00 : f32
    %436 = vector.broadcast %cst_124 : f32 to vector<16x32xf32>
    %c7_i32 = arith.constant 7 : i32
    %437 = tpu.dynamic_rotate %433 by %c7_i32 dim 0 : vector<16x32xf32>, i32 -> vector<16x32xf32>
    %438 = vector.extract_strided_slice %435 {offsets = [1, 0], sizes = [1, 32], strides = [1, 1]} : vector<17x32xf32> to vector<1x32xf32>
    %cst_125 = arith.constant -7.000000e+00 : f32
    %439 = vector.broadcast %cst_125 : f32 to vector<16x1xf32>
    %440 = arith.addf %4, %439 : vector<16x1xf32>
    %cst_126 = arith.constant 0.000000e+00 : f32
    %441 = vector.broadcast %cst_126 : f32 to vector<16x1xf32>
    %442 = arith.cmpf oge, %440, %441 : vector<16x1xf32>
    %cst_127 = arith.constant 7.000000e+00 : f32
    %443 = vector.broadcast %cst_127 : f32 to vector<16x1xf32>
    %444 = arith.cmpf ole, %440, %443 : vector<16x1xf32>
    %445 = arith.andi %442, %444 : vector<16x1xi1>
    %446 = arith.extui %445 : vector<16x1xi1> to vector<16x1xi32>
    %447 = arith.sitofp %446 : vector<16x1xi32> to vector<16x1xf32>
    %448 = vector.broadcast %447 : vector<16x1xf32> to vector<16x32xf32>
    %449 = arith.mulf %437, %448 : vector<16x32xf32>
    %450 = vector.broadcast %438 : vector<1x32xf32> to vector<16x32xf32>
    %451 = arith.mulf %449, %450 : vector<16x32xf32>
    %452 = arith.addf %436, %451 : vector<16x32xf32>
    %c6_i32_128 = arith.constant 6 : i32
    %453 = tpu.dynamic_rotate %433 by %c6_i32_128 dim 0 : vector<16x32xf32>, i32 -> vector<16x32xf32>
    %454 = vector.extract_strided_slice %435 {offsets = [2, 0], sizes = [1, 32], strides = [1, 1]} : vector<17x32xf32> to vector<1x32xf32>
    %455 = vector.broadcast %315 : vector<16x1xf32> to vector<16x32xf32>
    %456 = arith.mulf %453, %455 : vector<16x32xf32>
    %457 = vector.broadcast %454 : vector<1x32xf32> to vector<16x32xf32>
    %458 = arith.mulf %456, %457 : vector<16x32xf32>
    %459 = arith.addf %452, %458 : vector<16x32xf32>
    %c5_i32_129 = arith.constant 5 : i32
    %460 = tpu.dynamic_rotate %433 by %c5_i32_129 dim 0 : vector<16x32xf32>, i32 -> vector<16x32xf32>
    %461 = vector.extract_strided_slice %435 {offsets = [3, 0], sizes = [1, 32], strides = [1, 1]} : vector<17x32xf32> to vector<1x32xf32>
    %462 = vector.broadcast %331 : vector<16x1xf32> to vector<16x32xf32>
    %463 = arith.mulf %460, %462 : vector<16x32xf32>
    %464 = vector.broadcast %461 : vector<1x32xf32> to vector<16x32xf32>
    %465 = arith.mulf %463, %464 : vector<16x32xf32>
    %466 = arith.addf %459, %465 : vector<16x32xf32>
    %c4_i32_130 = arith.constant 4 : i32
    %467 = tpu.dynamic_rotate %433 by %c4_i32_130 dim 0 : vector<16x32xf32>, i32 -> vector<16x32xf32>
    %468 = vector.extract_strided_slice %435 {offsets = [4, 0], sizes = [1, 32], strides = [1, 1]} : vector<17x32xf32> to vector<1x32xf32>
    %469 = vector.broadcast %211 : vector<16x1xf32> to vector<16x32xf32>
    %470 = arith.mulf %467, %469 : vector<16x32xf32>
    %471 = vector.broadcast %468 : vector<1x32xf32> to vector<16x32xf32>
    %472 = arith.mulf %470, %471 : vector<16x32xf32>
    %473 = arith.addf %466, %472 : vector<16x32xf32>
    %c3_i32_131 = arith.constant 3 : i32
    %474 = tpu.dynamic_rotate %433 by %c3_i32_131 dim 0 : vector<16x32xf32>, i32 -> vector<16x32xf32>
    %475 = vector.extract_strided_slice %435 {offsets = [5, 0], sizes = [1, 32], strides = [1, 1]} : vector<17x32xf32> to vector<1x32xf32>
    %476 = vector.broadcast %227 : vector<16x1xf32> to vector<16x32xf32>
    %477 = arith.mulf %474, %476 : vector<16x32xf32>
    %478 = vector.broadcast %475 : vector<1x32xf32> to vector<16x32xf32>
    %479 = arith.mulf %477, %478 : vector<16x32xf32>
    %480 = arith.addf %473, %479 : vector<16x32xf32>
    %c2_i32_132 = arith.constant 2 : i32
    %481 = tpu.dynamic_rotate %433 by %c2_i32_132 dim 0 : vector<16x32xf32>, i32 -> vector<16x32xf32>
    %482 = vector.extract_strided_slice %435 {offsets = [6, 0], sizes = [1, 32], strides = [1, 1]} : vector<17x32xf32> to vector<1x32xf32>
    %483 = vector.broadcast %135 : vector<16x1xf32> to vector<16x32xf32>
    %484 = arith.mulf %481, %483 : vector<16x32xf32>
    %485 = vector.broadcast %482 : vector<1x32xf32> to vector<16x32xf32>
    %486 = arith.mulf %484, %485 : vector<16x32xf32>
    %487 = arith.addf %480, %486 : vector<16x32xf32>
    %c1_i32_133 = arith.constant 1 : i32
    %488 = tpu.dynamic_rotate %433 by %c1_i32_133 dim 0 : vector<16x32xf32>, i32 -> vector<16x32xf32>
    %489 = vector.extract_strided_slice %435 {offsets = [7, 0], sizes = [1, 32], strides = [1, 1]} : vector<17x32xf32> to vector<1x32xf32>
    %490 = vector.broadcast %151 : vector<16x1xf32> to vector<16x32xf32>
    %491 = arith.mulf %488, %490 : vector<16x32xf32>
    %492 = vector.broadcast %489 : vector<1x32xf32> to vector<16x32xf32>
    %493 = arith.mulf %491, %492 : vector<16x32xf32>
    %494 = arith.addf %487, %493 : vector<16x32xf32>
    %495 = vector.extract_strided_slice %435 {offsets = [8, 0], sizes = [1, 32], strides = [1, 1]} : vector<17x32xf32> to vector<1x32xf32>
    %496 = vector.broadcast %495 : vector<1x32xf32> to vector<16x32xf32>
    %497 = arith.mulf %433, %496 : vector<16x32xf32>
    %498 = arith.addf %494, %497 : vector<16x32xf32>
    %c15_i32_134 = arith.constant 15 : i32
    %499 = tpu.dynamic_rotate %433 by %c15_i32_134 dim 0 : vector<16x32xf32>, i32 -> vector<16x32xf32>
    %500 = vector.extract_strided_slice %435 {offsets = [9, 0], sizes = [1, 32], strides = [1, 1]} : vector<17x32xf32> to vector<1x32xf32>
    %501 = vector.broadcast %171 : vector<16x1xf32> to vector<16x32xf32>
    %502 = arith.mulf %499, %501 : vector<16x32xf32>
    %503 = vector.broadcast %500 : vector<1x32xf32> to vector<16x32xf32>
    %504 = arith.mulf %502, %503 : vector<16x32xf32>
    %505 = arith.addf %498, %504 : vector<16x32xf32>
    %c14_i32_135 = arith.constant 14 : i32
    %506 = tpu.dynamic_rotate %433 by %c14_i32_135 dim 0 : vector<16x32xf32>, i32 -> vector<16x32xf32>
    %507 = vector.extract_strided_slice %435 {offsets = [10, 0], sizes = [1, 32], strides = [1, 1]} : vector<17x32xf32> to vector<1x32xf32>
    %508 = vector.broadcast %187 : vector<16x1xf32> to vector<16x32xf32>
    %509 = arith.mulf %506, %508 : vector<16x32xf32>
    %510 = vector.broadcast %507 : vector<1x32xf32> to vector<16x32xf32>
    %511 = arith.mulf %509, %510 : vector<16x32xf32>
    %512 = arith.addf %505, %511 : vector<16x32xf32>
    %c13_i32_136 = arith.constant 13 : i32
    %513 = tpu.dynamic_rotate %433 by %c13_i32_136 dim 0 : vector<16x32xf32>, i32 -> vector<16x32xf32>
    %514 = vector.extract_strided_slice %435 {offsets = [11, 0], sizes = [1, 32], strides = [1, 1]} : vector<17x32xf32> to vector<1x32xf32>
    %515 = vector.broadcast %275 : vector<16x1xf32> to vector<16x32xf32>
    %516 = arith.mulf %513, %515 : vector<16x32xf32>
    %517 = vector.broadcast %514 : vector<1x32xf32> to vector<16x32xf32>
    %518 = arith.mulf %516, %517 : vector<16x32xf32>
    %519 = arith.addf %512, %518 : vector<16x32xf32>
    %c12_i32_137 = arith.constant 12 : i32
    %520 = tpu.dynamic_rotate %433 by %c12_i32_137 dim 0 : vector<16x32xf32>, i32 -> vector<16x32xf32>
    %521 = vector.extract_strided_slice %435 {offsets = [12, 0], sizes = [1, 32], strides = [1, 1]} : vector<17x32xf32> to vector<1x32xf32>
    %522 = vector.broadcast %291 : vector<16x1xf32> to vector<16x32xf32>
    %523 = arith.mulf %520, %522 : vector<16x32xf32>
    %524 = vector.broadcast %521 : vector<1x32xf32> to vector<16x32xf32>
    %525 = arith.mulf %523, %524 : vector<16x32xf32>
    %526 = arith.addf %519, %525 : vector<16x32xf32>
    %c11_i32_138 = arith.constant 11 : i32
    %527 = tpu.dynamic_rotate %433 by %c11_i32_138 dim 0 : vector<16x32xf32>, i32 -> vector<16x32xf32>
    %528 = vector.extract_strided_slice %435 {offsets = [13, 0], sizes = [1, 32], strides = [1, 1]} : vector<17x32xf32> to vector<1x32xf32>
    %529 = vector.broadcast %407 : vector<16x1xf32> to vector<16x32xf32>
    %530 = arith.mulf %527, %529 : vector<16x32xf32>
    %531 = vector.broadcast %528 : vector<1x32xf32> to vector<16x32xf32>
    %532 = arith.mulf %530, %531 : vector<16x32xf32>
    %533 = arith.addf %526, %532 : vector<16x32xf32>
    %c10_i32_139 = arith.constant 10 : i32
    %534 = tpu.dynamic_rotate %433 by %c10_i32_139 dim 0 : vector<16x32xf32>, i32 -> vector<16x32xf32>
    %535 = vector.extract_strided_slice %435 {offsets = [14, 0], sizes = [1, 32], strides = [1, 1]} : vector<17x32xf32> to vector<1x32xf32>
    %536 = vector.broadcast %423 : vector<16x1xf32> to vector<16x32xf32>
    %537 = arith.mulf %534, %536 : vector<16x32xf32>
    %538 = vector.broadcast %535 : vector<1x32xf32> to vector<16x32xf32>
    %539 = arith.mulf %537, %538 : vector<16x32xf32>
    %540 = arith.addf %533, %539 : vector<16x32xf32>
    %c9_i32 = arith.constant 9 : i32
    %541 = tpu.dynamic_rotate %433 by %c9_i32 dim 0 : vector<16x32xf32>, i32 -> vector<16x32xf32>
    %542 = vector.extract_strided_slice %435 {offsets = [15, 0], sizes = [1, 32], strides = [1, 1]} : vector<17x32xf32> to vector<1x32xf32>
    %cst_140 = arith.constant 7.000000e+00 : f32
    %543 = vector.broadcast %cst_140 : f32 to vector<16x1xf32>
    %544 = arith.addf %4, %543 : vector<16x1xf32>
    %cst_141 = arith.constant 0.000000e+00 : f32
    %545 = vector.broadcast %cst_141 : f32 to vector<16x1xf32>
    %546 = arith.cmpf oge, %544, %545 : vector<16x1xf32>
    %cst_142 = arith.constant 7.000000e+00 : f32
    %547 = vector.broadcast %cst_142 : f32 to vector<16x1xf32>
    %548 = arith.cmpf ole, %544, %547 : vector<16x1xf32>
    %549 = arith.andi %546, %548 : vector<16x1xi1>
    %550 = arith.extui %549 : vector<16x1xi1> to vector<16x1xi32>
    %551 = arith.sitofp %550 : vector<16x1xi32> to vector<16x1xf32>
    %552 = vector.broadcast %551 : vector<16x1xf32> to vector<16x32xf32>
    %553 = arith.mulf %541, %552 : vector<16x32xf32>
    %554 = vector.broadcast %542 : vector<1x32xf32> to vector<16x32xf32>
    %555 = arith.mulf %553, %554 : vector<16x32xf32>
    %556 = arith.addf %540, %555 : vector<16x32xf32>
    %c3 = arith.constant 3 : index
    %c0_143 = arith.constant 0 : index
    %557 = vector.load %arg18[%c3, %c0_143] : memref<4x32xf32, #tpu.memory_space<vmem>>, vector<1x32xf32>
    %558 = vector.broadcast %557 : vector<1x32xf32> to vector<16x32xf32>
    %559 = arith.addf %556, %558 : vector<16x32xf32>
    %cst_144 = arith.constant 0.000000e+00 : f32
    %560 = vector.broadcast %cst_144 : f32 to vector<16x32xf32>
    %561 = arith.maximumf %559, %560 : vector<16x32xf32>
    %562 = arith.addf %434, %561 : vector<16x32xf32>
    %c0_145 = arith.constant 0 : index
    %c0_146 = arith.constant 0 : index
    %563 = vector.load %arg19[%c0_145, %c0_146] : memref<32x32xf32, #tpu.memory_space<vmem>>, vector<32x32xf32>
    %cst_147 = arith.constant dense<0.000000e+00> : vector<16x32xf32>
    %564 = tpu.matmul %562, %563, %cst_147 {dimension_numbers = #tpu.dot_dimension_numbers<[1], [0], [0], [1], [0, 0, 1, 1], [], []>} : vector<16x32xf32>, vector<32x32xf32>, vector<16x32xf32> -> vector<16x32xf32>
    %c0_148 = arith.constant 0 : index
    %c0_149 = arith.constant 0 : index
    %565 = vector.load %arg20[%c0_148, %c0_149] : memref<1x32xf32, #tpu.memory_space<vmem>>, vector<1x32xf32>
    %566 = vector.broadcast %565 : vector<1x32xf32> to vector<16x32xf32>
    %567 = arith.addf %564, %566 : vector<16x32xf32>
    %568 = arith.addf %0, %567 : vector<16x32xf32>
    %cst_150 = arith.constant dense<0.000000e+00> : vector<16xf32>
    %569 = vector.multi_reduction <add>, %568, %cst_150 [1] : vector<16x32xf32> to vector<16xf32>
    %570 = vector.shape_cast %569 : vector<16xf32> to vector<16x1xf32>
    %cst_151 = arith.constant 3.200000e+01 : f32
    %571 = vector.broadcast %cst_151 : f32 to vector<16x1xf32>
    %572 = arith.divf %570, %571 : vector<16x1xf32>
    %573 = vector.broadcast %572 : vector<16x1xf32> to vector<16x32xf32>
    %574 = arith.subf %568, %573 : vector<16x32xf32>
    %575 = arith.mulf %574, %574 : vector<16x32xf32>
    %cst_152 = arith.constant dense<0.000000e+00> : vector<16xf32>
    %576 = vector.multi_reduction <add>, %575, %cst_152 [1] : vector<16x32xf32> to vector<16xf32>
    %577 = vector.shape_cast %576 : vector<16xf32> to vector<16x1xf32>
    %cst_153 = arith.constant 3.200000e+01 : f32
    %578 = vector.broadcast %cst_153 : f32 to vector<16x1xf32>
    %579 = arith.divf %577, %578 : vector<16x1xf32>
    %580 = vector.broadcast %572 : vector<16x1xf32> to vector<16x32xf32>
    %581 = arith.subf %568, %580 : vector<16x32xf32>
    %cst_154 = arith.constant 9.99999997E-7 : f32
    %582 = vector.broadcast %cst_154 : f32 to vector<16x1xf32>
    %583 = arith.addf %579, %582 : vector<16x1xf32>
    %584 = math.rsqrt %583 : vector<16x1xf32>
    %585 = vector.broadcast %584 : vector<16x1xf32> to vector<16x32xf32>
    %586 = arith.mulf %581, %585 : vector<16x32xf32>
    %cst_155 = arith.constant 1.000000e+00 : f32
    %587 = vector.broadcast %cst_155 : f32 to vector<16x32xf32>
    %588 = arith.addf %587, %99 : vector<16x32xf32>
    %589 = arith.mulf %586, %588 : vector<16x32xf32>
    %590 = arith.addf %589, %98 : vector<16x32xf32>
    %c0_156 = arith.constant 0 : index
    %c0_157 = arith.constant 0 : index
    %591 = vector.load %arg21[%c0_156, %c0_157] : memref<32x128xf32, #tpu.memory_space<vmem>>, vector<32x128xf32>
    %cst_158 = arith.constant dense<0.000000e+00> : vector<16x128xf32>
    %592 = tpu.matmul %590, %591, %cst_158 {dimension_numbers = #tpu.dot_dimension_numbers<[1], [0], [0], [1], [0, 0, 1, 1], [], []>} : vector<16x32xf32>, vector<32x128xf32>, vector<16x128xf32> -> vector<16x128xf32>
    %c0_159 = arith.constant 0 : index
    %c0_160 = arith.constant 0 : index
    %593 = vector.load %arg22[%c0_159, %c0_160] : memref<1x128xf32, #tpu.memory_space<vmem>>, vector<1x128xf32>
    %594 = vector.broadcast %593 : vector<1x128xf32> to vector<16x128xf32>
    %595 = arith.addf %592, %594 : vector<16x128xf32>
    %cst_161 = arith.constant 0.000000e+00 : f32
    %596 = vector.broadcast %cst_161 : f32 to vector<16x128xf32>
    %597 = arith.maximumf %595, %596 : vector<16x128xf32>
    %c0_162 = arith.constant 0 : index
    %c0_163 = arith.constant 0 : index
    %598 = vector.load %arg23[%c0_162, %c0_163] : memref<128x32xf32, #tpu.memory_space<vmem>>, vector<128x32xf32>
    %cst_164 = arith.constant dense<0.000000e+00> : vector<16x32xf32>
    %599 = tpu.matmul %597, %598, %cst_164 {dimension_numbers = #tpu.dot_dimension_numbers<[1], [0], [0], [1], [0, 0, 1, 1], [], []>} : vector<16x128xf32>, vector<128x32xf32>, vector<16x32xf32> -> vector<16x32xf32>
    %c0_165 = arith.constant 0 : index
    %c0_166 = arith.constant 0 : index
    %600 = vector.load %arg24[%c0_165, %c0_166] : memref<1x32xf32, #tpu.memory_space<vmem>>, vector<1x32xf32>
    %601 = vector.broadcast %600 : vector<1x32xf32> to vector<16x32xf32>
    %602 = arith.addf %599, %601 : vector<16x32xf32>
    %603 = arith.addf %568, %602 : vector<16x32xf32>
    %c0_167 = arith.constant 0 : index
    %c0_168 = arith.constant 0 : index
    %604 = vector.load %arg25[%c0_167, %c0_168] : memref<16x32xf32, #tpu.memory_space<vmem>>, vector<16x32xf32>
    tpu.vector_store %arg25[%c0_167, %c0_168], %603 {strides = array<i32>} : memref<16x32xf32, #tpu.memory_space<vmem>>, vector<16x32xf32>,
    return
  }
  func.func @transform_0(%arg0: i32) -> (i32, i32) {
    %c0_i32 = arith.constant 0 : i32
    %c0_i32_0 = arith.constant 0 : i32
    return %arg0, %c0_i32 : i32, i32
  }
  func.func @transform_1(%arg0: i32) -> (i32, i32) {
    %c0_i32 = arith.constant 0 : i32
    %c0_i32_0 = arith.constant 0 : i32
    return %arg0, %c0_i32 : i32, i32
  }
  func.func @transform_2(%arg0: i32) -> (i32, i32) {
    %c0_i32 = arith.constant 0 : i32
    %c0_i32_0 = arith.constant 0 : i32
    return %arg0, %c0_i32 : i32, i32
  }
  func.func @transform_3(%arg0: i32) -> (i32, i32) {
    %c0_i32 = arith.constant 0 : i32
    %c0_i32_0 = arith.constant 0 : i32
    return %arg0, %c0_i32 : i32, i32
  }
  func.func @transform_4(%arg0: i32) -> (i32, i32) {
    %c0_i32 = arith.constant 0 : i32
    %c0_i32_0 = arith.constant 0 : i32
    %c0_i32_1 = arith.constant 0 : i32
    return %c0_i32, %c0_i32_0 : i32, i32
  }
  func.func @transform_5(%arg0: i32) -> (i32, i32) {
    %c0_i32 = arith.constant 0 : i32
    %c0_i32_0 = arith.constant 0 : i32
    %c0_i32_1 = arith.constant 0 : i32
    return %c0_i32, %c0_i32_0 : i32, i32
  }
  func.func @transform_6(%arg0: i32) -> (i32, i32) {
    %c0_i32 = arith.constant 0 : i32
    %c0_i32_0 = arith.constant 0 : i32
    %c0_i32_1 = arith.constant 0 : i32
    return %c0_i32, %c0_i32_0 : i32, i32
  }
  func.func @transform_7(%arg0: i32) -> (i32, i32) {
    %c0_i32 = arith.constant 0 : i32
    %c0_i32_0 = arith.constant 0 : i32
    %c0_i32_1 = arith.constant 0 : i32
    return %c0_i32, %c0_i32_0 : i32, i32
  }
  func.func @transform_8(%arg0: i32) -> (i32, i32) {
    %c0_i32 = arith.constant 0 : i32
    %c0_i32_0 = arith.constant 0 : i32
    %c0_i32_1 = arith.constant 0 : i32
    return %c0_i32, %c0_i32_0 : i32, i32
  }
  func.func @transform_9(%arg0: i32) -> (i32, i32) {
    %c0_i32 = arith.constant 0 : i32
    %c0_i32_0 = arith.constant 0 : i32
    %c0_i32_1 = arith.constant 0 : i32
    return %c0_i32, %c0_i32_0 : i32, i32
  }
  func.func @transform_10(%arg0: i32) -> (i32, i32) {
    %c0_i32 = arith.constant 0 : i32
    %c0_i32_0 = arith.constant 0 : i32
    %c0_i32_1 = arith.constant 0 : i32
    return %c0_i32, %c0_i32_0 : i32, i32
  }
  func.func @transform_11(%arg0: i32) -> (i32, i32) {
    %c0_i32 = arith.constant 0 : i32
    %c0_i32_0 = arith.constant 0 : i32
    %c0_i32_1 = arith.constant 0 : i32
    return %c0_i32, %c0_i32_0 : i32, i32
  }
  func.func @transform_12(%arg0: i32) -> (i32, i32) {
    %c0_i32 = arith.constant 0 : i32
    %c0_i32_0 = arith.constant 0 : i32
    %c0_i32_1 = arith.constant 0 : i32
    return %c0_i32, %c0_i32_0 : i32, i32
  }
  func.func @transform_13(%arg0: i32) -> (i32, i32) {
    %c0_i32 = arith.constant 0 : i32
    %c0_i32_0 = arith.constant 0 : i32
    %c0_i32_1 = arith.constant 0 : i32
    return %c0_i32, %c0_i32_0 : i32, i32
  }
  func.func @transform_14(%arg0: i32) -> (i32, i32) {
    %c0_i32 = arith.constant 0 : i32
    %c0_i32_0 = arith.constant 0 : i32
    %c0_i32_1 = arith.constant 0 : i32
    return %c0_i32, %c0_i32_0 : i32, i32
  }
  func.func @transform_15(%arg0: i32) -> (i32, i32) {
    %c0_i32 = arith.constant 0 : i32
    %c0_i32_0 = arith.constant 0 : i32
    %c0_i32_1 = arith.constant 0 : i32
    return %c0_i32, %c0_i32_0 : i32, i32
  }
  func.func @transform_16(%arg0: i32) -> (i32, i32) {
    %c0_i32 = arith.constant 0 : i32
    %c0_i32_0 = arith.constant 0 : i32
    %c0_i32_1 = arith.constant 0 : i32
    return %c0_i32, %c0_i32_0 : i32, i32
  }
  func.func @transform_17(%arg0: i32) -> (i32, i32) {
    %c0_i32 = arith.constant 0 : i32
    %c0_i32_0 = arith.constant 0 : i32
    %c0_i32_1 = arith.constant 0 : i32
    return %c0_i32, %c0_i32_0 : i32, i32
  }
  func.func @transform_18(%arg0: i32) -> (i32, i32) {
    %c0_i32 = arith.constant 0 : i32
    %c0_i32_0 = arith.constant 0 : i32
    %c0_i32_1 = arith.constant 0 : i32
    return %c0_i32, %c0_i32_0 : i32, i32
  }
  func.func @transform_19(%arg0: i32) -> (i32, i32) {
    %c0_i32 = arith.constant 0 : i32
    %c0_i32_0 = arith.constant 0 : i32
    %c0_i32_1 = arith.constant 0 : i32
    return %c0_i32, %c0_i32_0 : i32, i32
  }
  func.func @transform_20(%arg0: i32) -> (i32, i32) {
    %c0_i32 = arith.constant 0 : i32
    %c0_i32_0 = arith.constant 0 : i32
    %c0_i32_1 = arith.constant 0 : i32
    return %c0_i32, %c0_i32_0 : i32, i32
  }
  func.func @transform_21(%arg0: i32) -> (i32, i32) {
    %c0_i32 = arith.constant 0 : i32
    %c0_i32_0 = arith.constant 0 : i32
    %c0_i32_1 = arith.constant 0 : i32
    return %c0_i32, %c0_i32_0 : i32, i32
  }
  func.func @transform_22(%arg0: i32) -> (i32, i32) {
    %c0_i32 = arith.constant 0 : i32
    %c0_i32_0 = arith.constant 0 : i32
    %c0_i32_1 = arith.constant 0 : i32
    return %c0_i32, %c0_i32_0 : i32, i32
  }
  func.func @transform_23(%arg0: i32) -> (i32, i32) {
    %c0_i32 = arith.constant 0 : i32
    %c0_i32_0 = arith.constant 0 : i32
    %c0_i32_1 = arith.constant 0 : i32
    return %c0_i32, %c0_i32_0 : i32, i32
  }
  func.func @transform_24(%arg0: i32) -> (i32, i32) {
    %c0_i32 = arith.constant 0 : i32
    %c0_i32_0 = arith.constant 0 : i32
    return %arg0, %c0_i32 : i32, i32
  }
}

module attributes {stable_mosaic.version = 11 : i64} {
  func.func @kernel(%arg0: i32, %arg1: memref<16x32xf32, #tpu.memory_space<vmem>>, %arg2: memref<16x32xf32, #tpu.memory_space<vmem>>, %arg3: memref<16x1xf32, #tpu.memory_space<vmem>>, %arg4: memref<16x1xf32, #tpu.memory_space<vmem>>, %arg5: memref<16x1xf32, #tpu.memory_space<vmem>>, %arg6: memref<16x1xf32, #tpu.memory_space<vmem>>, %arg7: memref<2x16xf32, #tpu.memory_space<vmem>>, %arg8: memref<2x16xf32, #tpu.memory_space<vmem>>, %arg9: memref<16x2xf32, #tpu.memory_space<vmem>>, %arg10: memref<32x32xf32, #tpu.memory_space<vmem>>, %arg11: memref<32x32xf32, #tpu.memory_space<vmem>>, %arg12: memref<32x128xf32, #tpu.memory_space<vmem>>, %arg13: memref<1x128xf32, #tpu.memory_space<vmem>>, %arg14: memref<5x32xf32, #tpu.memory_space<vmem>>, %arg15: memref<9x32xf32, #tpu.memory_space<vmem>>, %arg16: memref<13x32xf32, #tpu.memory_space<vmem>>, %arg17: memref<17x32xf32, #tpu.memory_space<vmem>>, %arg18: memref<4x32xf32, #tpu.memory_space<vmem>>, %arg19: memref<32x32xf32, #tpu.memory_space<vmem>>, %arg20: memref<1x32xf32, #tpu.memory_space<vmem>>, %arg21: memref<32x128xf32, #tpu.memory_space<vmem>>, %arg22: memref<1x128xf32, #tpu.memory_space<vmem>>, %arg23: memref<128x32xf32, #tpu.memory_space<vmem>>, %arg24: memref<1x32xf32, #tpu.memory_space<vmem>>, %arg25: memref<16x32xf32, #tpu.memory_space<vmem>>, %arg26: memref<32x32xf32, #tpu.memory_space<vmem>>) attributes {dimension_semantics = [#tpu.dimension_semantics<parallel>], iteration_bounds = array<i64: 1>, scalar_prefetch = 0 : i64, scratch_operands = 1 : i64, tpu.core_type = #tpu.core_type<tc>, window_params = [{transform_indices = @transform_0, window_bounds = array<i64: 16, 32>}, {transform_indices = @transform_1, window_bounds = array<i64: 16, 32>}, {transform_indices = @transform_2, window_bounds = array<i64: 16, 1>}, {transform_indices = @transform_3, window_bounds = array<i64: 16, 1>}, {pipeline_mode = #tpu.pipeline_mode<synchronous>, transform_indices = @transform_4, window_bounds = array<i64: 16, 1>}, {pipeline_mode = #tpu.pipeline_mode<synchronous>, transform_indices = @transform_5, window_bounds = array<i64: 16, 1>}, {pipeline_mode = #tpu.pipeline_mode<synchronous>, transform_indices = @transform_6, window_bounds = array<i64: 2, 16>}, {pipeline_mode = #tpu.pipeline_mode<synchronous>, transform_indices = @transform_7, window_bounds = array<i64: 2, 16>}, {pipeline_mode = #tpu.pipeline_mode<synchronous>, transform_indices = @transform_8, window_bounds = array<i64: 16, 2>}, {pipeline_mode = #tpu.pipeline_mode<synchronous>, transform_indices = @transform_9, window_bounds = array<i64: 32, 32>}, {pipeline_mode = #tpu.pipeline_mode<synchronous>, transform_indices = @transform_10, window_bounds = array<i64: 32, 32>}, {pipeline_mode = #tpu.pipeline_mode<synchronous>, transform_indices = @transform_11, window_bounds = array<i64: 32, 128>}, {pipeline_mode = #tpu.pipeline_mode<synchronous>, transform_indices = @transform_12, window_bounds = array<i64: 1, 128>}, {pipeline_mode = #tpu.pipeline_mode<synchronous>, transform_indices = @transform_13, window_bounds = array<i64: 5, 32>}, {pipeline_mode = #tpu.pipeline_mode<synchronous>, transform_indices = @transform_14, window_bounds = array<i64: 9, 32>}, {pipeline_mode = #tpu.pipeline_mode<synchronous>, transform_indices = @transform_15, window_bounds = array<i64: 13, 32>}, {pipeline_mode = #tpu.pipeline_mode<synchronous>, transform_indices = @transform_16, window_bounds = array<i64: 17, 32>}, {pipeline_mode = #tpu.pipeline_mode<synchronous>, transform_indices = @transform_17, window_bounds = array<i64: 4, 32>}, {pipeline_mode = #tpu.pipeline_mode<synchronous>, transform_indices = @transform_18, window_bounds = array<i64: 32, 32>}, {pipeline_mode = #tpu.pipeline_mode<synchronous>, transform_indices = @transform_19, window_bounds = array<i64: 1, 32>}, {pipeline_mode = #tpu.pipeline_mode<synchronous>, transform_indices = @transform_20, window_bounds = array<i64: 32, 128>}, {pipeline_mode = #tpu.pipeline_mode<synchronous>, transform_indices = @transform_21, window_bounds = array<i64: 1, 128>}, {pipeline_mode = #tpu.pipeline_mode<synchronous>, transform_indices = @transform_22, window_bounds = array<i64: 128, 32>}, {pipeline_mode = #tpu.pipeline_mode<synchronous>, transform_indices = @transform_23, window_bounds = array<i64: 1, 32>}, {transform_indices = @transform_24, window_bounds = array<i64: 16, 32>}]} {
    %c0 = arith.constant 0 : index
    %c0_0 = arith.constant 0 : index
    %0 = vector.load %arg1[%c0, %c0_0] : memref<16x32xf32, #tpu.memory_space<vmem>>, vector<16x32xf32>
    %c0_1 = arith.constant 0 : index
    %c0_2 = arith.constant 0 : index
    %1 = vector.load %arg2[%c0_1, %c0_2] : memref<16x32xf32, #tpu.memory_space<vmem>>, vector<16x32xf32>
    %c0_3 = arith.constant 0 : index
    %c0_4 = arith.constant 0 : index
    %2 = vector.load %arg3[%c0_3, %c0_4] : memref<16x1xf32, #tpu.memory_space<vmem>>, vector<16x1xf32>
    %c0_5 = arith.constant 0 : index
    %c0_6 = arith.constant 0 : index
    %3 = vector.load %arg4[%c0_5, %c0_6] : memref<16x1xf32, #tpu.memory_space<vmem>>, vector<16x1xf32>
    %c0_7 = arith.constant 0 : index
    %c0_8 = arith.constant 0 : index
    %4 = vector.load %arg5[%c0_7, %c0_8] : memref<16x1xf32, #tpu.memory_space<vmem>>, vector<16x1xf32>
    %c0_9 = arith.constant 0 : index
    %c0_10 = arith.constant 0 : index
    %5 = vector.load %arg6[%c0_9, %c0_10] : memref<16x1xf32, #tpu.memory_space<vmem>>, vector<16x1xf32>
    %c0_11 = arith.constant 0 : index
    %c0_12 = arith.constant 0 : index
    %6 = vector.load %arg10[%c0_11, %c0_12] : memref<32x32xf32, #tpu.memory_space<vmem>>, vector<32x32xf32>
    %cst = arith.constant dense<0.000000e+00> : vector<16x32xf32>
    %7 = tpu.matmul %0, %6, %cst {dimension_numbers = #tpu.dot_dimension_numbers<[1], [0], [0], [1], [0, 0, 1, 1], [], []>} : vector<16x32xf32>, vector<32x32xf32>, vector<16x32xf32> -> vector<16x32xf32>
    %c0_13 = arith.constant 0 : index
    %c0_14 = arith.constant 0 : index
    %8 = vector.load %arg11[%c0_13, %c0_14] : memref<32x32xf32, #tpu.memory_space<vmem>>, vector<32x32xf32>
    %cst_15 = arith.constant dense<0.000000e+00> : vector<16x32xf32>
    %9 = tpu.matmul %0, %8, %cst_15 {dimension_numbers = #tpu.dot_dimension_numbers<[1], [0], [0], [1], [0, 0, 1, 1], [], []>} : vector<16x32xf32>, vector<32x32xf32>, vector<16x32xf32> -> vector<16x32xf32>
    %cst_16 = arith.constant 1.000000e+00 : f32
    %10 = vector.broadcast %cst_16 : f32 to vector<16x1xf32>
    %11 = arith.subf %10, %3 : vector<16x1xf32>
    %c0_17 = arith.constant 0 : index
    %c0_18 = arith.constant 0 : index
    %12 = vector.load %arg8[%c0_17, %c0_18] : memref<2x16xf32, #tpu.memory_space<vmem>>, vector<2x16xf32>
    %13 = vector.broadcast %11 : vector<16x1xf32> to vector<16x32xf32>
    %14 = arith.mulf %1, %13 : vector<16x32xf32>
    %cst_19 = arith.constant dense<0.000000e+00> : vector<2x32xf32>
    %15 = tpu.matmul %12, %14, %cst_19 {dimension_numbers = #tpu.dot_dimension_numbers<[1], [0], [0], [1], [0, 0, 1, 1], [], []>} : vector<2x16xf32>, vector<16x32xf32>, vector<2x32xf32> -> vector<2x32xf32>
    %c0_20 = arith.constant 0 : index
    %c0_21 = arith.constant 0 : index
    %16 = vector.load %arg9[%c0_20, %c0_21] : memref<16x2xf32, #tpu.memory_space<vmem>>, vector<16x2xf32>
    %cst_22 = arith.constant dense<0.000000e+00> : vector<16x32xf32>
    %17 = tpu.matmul %16, %15, %cst_22 {dimension_numbers = #tpu.dot_dimension_numbers<[1], [0], [0], [1], [0, 0, 1, 1], [], []>} : vector<16x2xf32>, vector<2x32xf32>, vector<16x32xf32> -> vector<16x32xf32>
    %cst_23 = arith.constant 0.000000e+00 : f32
    %18 = vector.broadcast %cst_23 : f32 to vector<16x1xf32>
    %19 = arith.cmpf oeq, %5, %18 : vector<16x1xf32>
    %20 = arith.extui %19 : vector<16x1xi1> to vector<16x1xi32>
    %21 = arith.sitofp %20 : vector<16x1xi32> to vector<16x1xf32>
    %cst_24 = arith.constant 1.000000e+00 : f32
    %22 = vector.broadcast %cst_24 : f32 to vector<16x1xf32>
    %23 = arith.cmpf oeq, %5, %22 : vector<16x1xf32>
    %24 = arith.extui %23 : vector<16x1xi1> to vector<16x1xi32>
    %25 = arith.sitofp %24 : vector<16x1xi32> to vector<16x1xf32>
    %cst_25 = arith.constant 0.000000e+00 : f32
    %26 = vector.broadcast %cst_25 : f32 to vector<16x1xf32>
    %27 = vector.extract_strided_slice %11 {offsets = [0, 0], sizes = [8, 1], strides = [1, 1]} : vector<16x1xf32> to vector<8x1xf32>
    %cst_26 = arith.constant dense<0.000000e+00> : vector<1xf32>
    %28 = vector.multi_reduction <add>, %27, %cst_26 [0] : vector<8x1xf32> to vector<1xf32>
    %29 = vector.shape_cast %28 : vector<1xf32> to vector<1x1xf32>
    %30 = vector.broadcast %29 : vector<1x1xf32> to vector<16x1xf32>
    %31 = arith.mulf %21, %30 : vector<16x1xf32>
    %32 = arith.addf %26, %31 : vector<16x1xf32>
    %33 = vector.extract_strided_slice %11 {offsets = [8, 0], sizes = [8, 1], strides = [1, 1]} : vector<16x1xf32> to vector<8x1xf32>
    %cst_27 = arith.constant dense<0.000000e+00> : vector<1xf32>
    %34 = vector.multi_reduction <add>, %33, %cst_27 [0] : vector<8x1xf32> to vector<1xf32>
    %35 = vector.shape_cast %34 : vector<1xf32> to vector<1x1xf32>
    %36 = vector.broadcast %35 : vector<1x1xf32> to vector<16x1xf32>
    %37 = arith.mulf %25, %36 : vector<16x1xf32>
    %38 = arith.addf %32, %37 : vector<16x1xf32>
    %cst_28 = arith.constant 1.000000e+00 : f32
    %39 = vector.broadcast %cst_28 : f32 to vector<16x1xf32>
    %40 = arith.maximumf %38, %39 : vector<16x1xf32>
    %41 = tpu.reciprocal %40 {approx = true} : vector<16x1xf32> -> vector<16x1xf32>
    %42 = vector.broadcast %41 : vector<16x1xf32> to vector<16x32xf32>
    %43 = arith.mulf %17, %42 : vector<16x32xf32>
    %44 = arith.mulf %9, %43 : vector<16x32xf32>
    %cst_29 = arith.constant dense<0.000000e+00> : vector<16xf32>
    %45 = vector.multi_reduction <add>, %44, %cst_29 [1] : vector<16x32xf32> to vector<16xf32>
    %46 = vector.shape_cast %45 : vector<16xf32> to vector<16x1xf32>
    %cst_30 = arith.constant 0.176776692 : f32
    %47 = vector.broadcast %cst_30 : f32 to vector<16x1xf32>
    %48 = arith.mulf %46, %47 : vector<16x1xf32>
    %cst_31 = arith.constant 5.000000e-01 : f32
    %49 = vector.broadcast %cst_31 : f32 to vector<16x1xf32>
    %50 = arith.cmpf ogt, %2, %49 : vector<16x1xf32>
    %cst_32 = arith.constant -1.000000e+09 : f32
    %51 = vector.broadcast %cst_32 : f32 to vector<16x1xf32>
    %52 = arith.select %50, %51, %48 : vector<16x1xi1>, vector<16x1xf32>
    %cst_33 = arith.constant 0.000000e+00 : f32
    %53 = vector.broadcast %cst_33 : f32 to vector<16x1xf32>
    %54 = vector.extract_strided_slice %52 {offsets = [0, 0], sizes = [8, 1], strides = [1, 1]} : vector<16x1xf32> to vector<8x1xf32>
    %cst_34 = arith.constant dense<0xFF800000> : vector<1xf32>
    %55 = vector.multi_reduction <maximumf>, %54, %cst_34 [0] : vector<8x1xf32> to vector<1xf32>
    %56 = vector.shape_cast %55 : vector<1xf32> to vector<1x1xf32>
    %57 = vector.broadcast %56 : vector<1x1xf32> to vector<16x1xf32>
    %58 = arith.mulf %21, %57 : vector<16x1xf32>
    %59 = arith.addf %53, %58 : vector<16x1xf32>
    %60 = vector.extract_strided_slice %52 {offsets = [8, 0], sizes = [8, 1], strides = [1, 1]} : vector<16x1xf32> to vector<8x1xf32>
    %cst_35 = arith.constant dense<0xFF800000> : vector<1xf32>
    %61 = vector.multi_reduction <maximumf>, %60, %cst_35 [0] : vector<8x1xf32> to vector<1xf32>
    %62 = vector.shape_cast %61 : vector<1xf32> to vector<1x1xf32>
    %63 = vector.broadcast %62 : vector<1x1xf32> to vector<16x1xf32>
    %64 = arith.mulf %25, %63 : vector<16x1xf32>
    %65 = arith.addf %59, %64 : vector<16x1xf32>
    %66 = arith.subf %52, %65 : vector<16x1xf32>
    %67 = math.exp %66 : vector<16x1xf32>
    %cst_36 = arith.constant 0.000000e+00 : f32
    %68 = vector.broadcast %cst_36 : f32 to vector<16x1xf32>
    %69 = vector.extract_strided_slice %67 {offsets = [0, 0], sizes = [8, 1], strides = [1, 1]} : vector<16x1xf32> to vector<8x1xf32>
    %cst_37 = arith.constant dense<0.000000e+00> : vector<1xf32>
    %70 = vector.multi_reduction <add>, %69, %cst_37 [0] : vector<8x1xf32> to vector<1xf32>
    %71 = vector.shape_cast %70 : vector<1xf32> to vector<1x1xf32>
    %72 = vector.broadcast %71 : vector<1x1xf32> to vector<16x1xf32>
    %73 = arith.mulf %21, %72 : vector<16x1xf32>
    %74 = arith.addf %68, %73 : vector<16x1xf32>
    %75 = vector.extract_strided_slice %67 {offsets = [8, 0], sizes = [8, 1], strides = [1, 1]} : vector<16x1xf32> to vector<8x1xf32>
    %cst_38 = arith.constant dense<0.000000e+00> : vector<1xf32>
    %76 = vector.multi_reduction <add>, %75, %cst_38 [0] : vector<8x1xf32> to vector<1xf32>
    %77 = vector.shape_cast %76 : vector<1xf32> to vector<1x1xf32>
    %78 = vector.broadcast %77 : vector<1x1xf32> to vector<16x1xf32>
    %79 = arith.mulf %25, %78 : vector<16x1xf32>
    %80 = arith.addf %74, %79 : vector<16x1xf32>
    %81 = tpu.reciprocal %80 {approx = true} : vector<16x1xf32> -> vector<16x1xf32>
    %82 = arith.mulf %67, %81 : vector<16x1xf32>
    %c0_39 = arith.constant 0 : index
    %c0_40 = arith.constant 0 : index
    %83 = vector.load %arg7[%c0_39, %c0_40] : memref<2x16xf32, #tpu.memory_space<vmem>>, vector<2x16xf32>
    %84 = vector.broadcast %82 : vector<16x1xf32> to vector<16x32xf32>
    %85 = arith.mulf %84, %7 : vector<16x32xf32>
    %cst_41 = arith.constant dense<0.000000e+00> : vector<2x32xf32>
    %86 = tpu.matmul %83, %85, %cst_41 {dimension_numbers = #tpu.dot_dimension_numbers<[1], [0], [0], [1], [0, 0, 1, 1], [], []>} : vector<2x16xf32>, vector<16x32xf32>, vector<2x32xf32> -> vector<2x32xf32>
    %cst_42 = arith.constant 0.000000e+00 : f32
    %87 = vector.broadcast %cst_42 : f32 to vector<2x32xf32>
    %88 = arith.maximumf %86, %87 : vector<2x32xf32>
    %c0_43 = arith.constant 0 : index
    %c0_44 = arith.constant 0 : index
    %89 = vector.load %arg12[%c0_43, %c0_44] : memref<32x128xf32, #tpu.memory_space<vmem>>, vector<32x128xf32>
    %cst_45 = arith.constant dense<0.000000e+00> : vector<2x128xf32>
    %90 = tpu.matmul %88, %89, %cst_45 {dimension_numbers = #tpu.dot_dimension_numbers<[1], [0], [0], [1], [0, 0, 1, 1], [], []>} : vector<2x32xf32>, vector<32x128xf32>, vector<2x128xf32> -> vector<2x128xf32>
    %c0_46 = arith.constant 0 : index
    %c0_47 = arith.constant 0 : index
    %91 = vector.load %arg13[%c0_46, %c0_47] : memref<1x128xf32, #tpu.memory_space<vmem>>, vector<1x128xf32>
    %92 = vector.broadcast %91 : vector<1x128xf32> to vector<2x128xf32>
    %93 = arith.addf %90, %92 : vector<2x128xf32>
    %c0_48 = arith.constant 0 : index
    %c0_49 = arith.constant 0 : index
    %94 = vector.load %arg9[%c0_48, %c0_49] : memref<16x2xf32, #tpu.memory_space<vmem>>, vector<16x2xf32>
    %cst_50 = arith.constant dense<0.000000e+00> : vector<16x128xf32>
    %95 = tpu.matmul %94, %93, %cst_50 {dimension_numbers = #tpu.dot_dimension_numbers<[1], [0], [0], [1], [0, 0, 1, 1], [], []>} : vector<16x2xf32>, vector<2x128xf32>, vector<16x128xf32> -> vector<16x128xf32>
    %96 = vector.extract_strided_slice %95 {offsets = [0, 0], sizes = [16, 32], strides = [1, 1]} : vector<16x128xf32> to vector<16x32xf32>
    %97 = vector.extract_strided_slice %95 {offsets = [0, 32], sizes = [16, 32], strides = [1, 1]} : vector<16x128xf32> to vector<16x32xf32>
    %98 = vector.extract_strided_slice %95 {offsets = [0, 64], sizes = [16, 32], strides = [1, 1]} : vector<16x128xf32> to vector<16x32xf32>
    %99 = vector.extract_strided_slice %95 {offsets = [0, 96], sizes = [16, 32], strides = [1, 1]} : vector<16x128xf32> to vector<16x32xf32>
    %cst_51 = arith.constant dense<0.000000e+00> : vector<16xf32>
    %100 = vector.multi_reduction <add>, %0, %cst_51 [1] : vector<16x32xf32> to vector<16xf32>
    %101 = vector.shape_cast %100 : vector<16xf32> to vector<16x1xf32>
    %cst_52 = arith.constant 3.200000e+01 : f32
    %102 = vector.broadcast %cst_52 : f32 to vector<16x1xf32>
    %103 = arith.divf %101, %102 : vector<16x1xf32>
    %104 = vector.broadcast %103 : vector<16x1xf32> to vector<16x32xf32>
    %105 = arith.subf %0, %104 : vector<16x32xf32>
    %106 = arith.mulf %105, %105 : vector<16x32xf32>
    %cst_53 = arith.constant dense<0.000000e+00> : vector<16xf32>
    %107 = vector.multi_reduction <add>, %106, %cst_53 [1] : vector<16x32xf32> to vector<16xf32>
    %108 = vector.shape_cast %107 : vector<16xf32> to vector<16x1xf32>
    %cst_54 = arith.constant 3.200000e+01 : f32
    %109 = vector.broadcast %cst_54 : f32 to vector<16x1xf32>
    %110 = arith.divf %108, %109 : vector<16x1xf32>
    %111 = vector.broadcast %103 : vector<16x1xf32> to vector<16x32xf32>
    %112 = arith.subf %0, %111 : vector<16x32xf32>
    %cst_55 = arith.constant 9.99999997E-7 : f32
    %113 = vector.broadcast %cst_55 : f32 to vector<16x1xf32>
    %114 = arith.addf %110, %113 : vector<16x1xf32>
    %115 = math.rsqrt %114 : vector<16x1xf32>
    %116 = vector.broadcast %115 : vector<16x1xf32> to vector<16x32xf32>
    %117 = arith.mulf %112, %116 : vector<16x32xf32>
    %cst_56 = arith.constant 1.000000e+00 : f32
    %118 = vector.broadcast %cst_56 : f32 to vector<16x32xf32>
    %119 = arith.addf %118, %97 : vector<16x32xf32>
    %120 = arith.mulf %117, %119 : vector<16x32xf32>
    %121 = arith.addf %120, %96 : vector<16x32xf32>
    %cst_57 = arith.constant 0.000000e+00 : f32
    %122 = vector.broadcast %cst_57 : f32 to vector<32x32xf32>
    %c0_58 = arith.constant 0 : index
    %c0_59 = arith.constant 0 : index
    %123 = vector.load %arg26[%c0_58, %c0_59] : memref<32x32xf32, #tpu.memory_space<vmem>>, vector<32x32xf32>
    tpu.vector_store %arg26[%c0_58, %c0_59], %122 {strides = array<i32>} : memref<32x32xf32, #tpu.memory_space<vmem>>, vector<32x32xf32>,
    %cst_60 = arith.constant 0.000000e+00 : f32
    %124 = vector.broadcast %cst_60 : f32 to vector<16x32xf32>
    %c8 = arith.constant 8 : index
    %c0_61 = arith.constant 0 : index
    %125 = vector.load %arg26[%c8, %c0_61] : memref<32x32xf32, #tpu.memory_space<vmem>>, vector<16x32xf32>
    tpu.vector_store %arg26[%c8, %c0_61], %121 {strides = array<i32>} : memref<32x32xf32, #tpu.memory_space<vmem>>, vector<16x32xf32>,
    %cst_62 = arith.constant 0.000000e+00 : f32
    %126 = vector.broadcast %cst_62 : f32 to vector<16x32xf32>
    %c6 = arith.constant 6 : index
    %c0_63 = arith.constant 0 : index
    %127 = vector.load %arg26[%c6, %c0_63] : memref<32x32xf32, #tpu.memory_space<vmem>>, vector<16x32xf32>
    %c0_64 = arith.constant 0 : index
    %c0_65 = arith.constant 0 : index
    %128 = vector.load %arg14[%c0_64, %c0_65] : memref<5x32xf32, #tpu.memory_space<vmem>>, vector<1x32xf32>
    %cst_66 = arith.constant -2.000000e+00 : f32
    %129 = vector.broadcast %cst_66 : f32 to vector<16x1xf32>
    %130 = arith.addf %4, %129 : vector<16x1xf32>
    %cst_67 = arith.constant 0.000000e+00 : f32
    %131 = vector.broadcast %cst_67 : f32 to vector<16x1xf32>
    %132 = arith.cmpf oge, %130, %131 : vector<16x1xf32>
    %cst_68 = arith.constant 7.000000e+00 : f32
    %133 = vector.broadcast %cst_68 : f32 to vector<16x1xf32>
    %134 = arith.cmpf ole, %130, %133 : vector<16x1xf32>
    %135 = arith.andi %132, %134 : vector<16x1xi1>
    %136 = arith.extui %135 : vector<16x1xi1> to vector<16x1xi32>
    %137 = arith.sitofp %136 : vector<16x1xi32> to vector<16x1xf32>
    %138 = vector.broadcast %137 : vector<16x1xf32> to vector<16x32xf32>
    %139 = arith.mulf %127, %138 : vector<16x32xf32>
    %140 = vector.broadcast %128 : vector<1x32xf32> to vector<16x32xf32>
    %141 = arith.mulf %139, %140 : vector<16x32xf32>
    %142 = arith.addf %126, %141 : vector<16x32xf32>
    %c7 = arith.constant 7 : index
    %c0_69 = arith.constant 0 : index
    %143 = vector.load %arg26[%c7, %c0_69] : memref<32x32xf32, #tpu.memory_space<vmem>>, vector<16x32xf32>
    %c1 = arith.constant 1 : index
    %c0_70 = arith.constant 0 : index
    %144 = vector.load %arg14[%c1, %c0_70] : memref<5x32xf32, #tpu.memory_space<vmem>>, vector<1x32xf32>
    %cst_71 = arith.constant -1.000000e+00 : f32
    %145 = vector.broadcast %cst_71 : f32 to vector<16x1xf32>
    %146 = arith.addf %4, %145 : vector<16x1xf32>
    %cst_72 = arith.constant 0.000000e+00 : f32
    %147 = vector.broadcast %cst_72 : f32 to vector<16x1xf32>
    %148 = arith.cmpf oge, %146, %147 : vector<16x1xf32>
    %cst_73 = arith.constant 7.000000e+00 : f32
    %149 = vector.broadcast %cst_73 : f32 to vector<16x1xf32>
    %150 = arith.cmpf ole, %146, %149 : vector<16x1xf32>
    %151 = arith.andi %148, %150 : vector<16x1xi1>
    %152 = arith.extui %151 : vector<16x1xi1> to vector<16x1xi32>
    %153 = arith.sitofp %152 : vector<16x1xi32> to vector<16x1xf32>
    %154 = vector.broadcast %153 : vector<16x1xf32> to vector<16x32xf32>
    %155 = arith.mulf %143, %154 : vector<16x32xf32>
    %156 = vector.broadcast %144 : vector<1x32xf32> to vector<16x32xf32>
    %157 = arith.mulf %155, %156 : vector<16x32xf32>
    %158 = arith.addf %142, %157 : vector<16x32xf32>
    %c8_74 = arith.constant 8 : index
    %c0_75 = arith.constant 0 : index
    %159 = vector.load %arg26[%c8_74, %c0_75] : memref<32x32xf32, #tpu.memory_space<vmem>>, vector<16x32xf32>
    %c2 = arith.constant 2 : index
    %c0_76 = arith.constant 0 : index
    %160 = vector.load %arg14[%c2, %c0_76] : memref<5x32xf32, #tpu.memory_space<vmem>>, vector<1x32xf32>
    %161 = vector.broadcast %160 : vector<1x32xf32> to vector<16x32xf32>
    %162 = arith.mulf %159, %161 : vector<16x32xf32>
    %163 = arith.addf %158, %162 : vector<16x32xf32>
    %c9 = arith.constant 9 : index
    %c0_77 = arith.constant 0 : index
    %164 = vector.load %arg26[%c9, %c0_77] : memref<32x32xf32, #tpu.memory_space<vmem>>, vector<16x32xf32>
    %c3 = arith.constant 3 : index
    %c0_78 = arith.constant 0 : index
    %165 = vector.load %arg14[%c3, %c0_78] : memref<5x32xf32, #tpu.memory_space<vmem>>, vector<1x32xf32>
    %cst_79 = arith.constant 1.000000e+00 : f32
    %166 = vector.broadcast %cst_79 : f32 to vector<16x1xf32>
    %167 = arith.addf %4, %166 : vector<16x1xf32>
    %cst_80 = arith.constant 0.000000e+00 : f32
    %168 = vector.broadcast %cst_80 : f32 to vector<16x1xf32>
    %169 = arith.cmpf oge, %167, %168 : vector<16x1xf32>
    %cst_81 = arith.constant 7.000000e+00 : f32
    %170 = vector.broadcast %cst_81 : f32 to vector<16x1xf32>
    %171 = arith.cmpf ole, %167, %170 : vector<16x1xf32>
    %172 = arith.andi %169, %171 : vector<16x1xi1>
    %173 = arith.extui %172 : vector<16x1xi1> to vector<16x1xi32>
    %174 = arith.sitofp %173 : vector<16x1xi32> to vector<16x1xf32>
    %175 = vector.broadcast %174 : vector<16x1xf32> to vector<16x32xf32>
    %176 = arith.mulf %164, %175 : vector<16x32xf32>
    %177 = vector.broadcast %165 : vector<1x32xf32> to vector<16x32xf32>
    %178 = arith.mulf %176, %177 : vector<16x32xf32>
    %179 = arith.addf %163, %178 : vector<16x32xf32>
    %c10 = arith.constant 10 : index
    %c0_82 = arith.constant 0 : index
    %180 = vector.load %arg26[%c10, %c0_82] : memref<32x32xf32, #tpu.memory_space<vmem>>, vector<16x32xf32>
    %c4 = arith.constant 4 : index
    %c0_83 = arith.constant 0 : index
    %181 = vector.load %arg14[%c4, %c0_83] : memref<5x32xf32, #tpu.memory_space<vmem>>, vector<1x32xf32>
    %cst_84 = arith.constant 2.000000e+00 : f32
    %182 = vector.broadcast %cst_84 : f32 to vector<16x1xf32>
    %183 = arith.addf %4, %182 : vector<16x1xf32>
    %cst_85 = arith.constant 0.000000e+00 : f32
    %184 = vector.broadcast %cst_85 : f32 to vector<16x1xf32>
    %185 = arith.cmpf oge, %183, %184 : vector<16x1xf32>
    %cst_86 = arith.constant 7.000000e+00 : f32
    %186 = vector.broadcast %cst_86 : f32 to vector<16x1xf32>
    %187 = arith.cmpf ole, %183, %186 : vector<16x1xf32>
    %188 = arith.andi %185, %187 : vector<16x1xi1>
    %189 = arith.extui %188 : vector<16x1xi1> to vector<16x1xi32>
    %190 = arith.sitofp %189 : vector<16x1xi32> to vector<16x1xf32>
    %191 = vector.broadcast %190 : vector<16x1xf32> to vector<16x32xf32>
    %192 = arith.mulf %180, %191 : vector<16x32xf32>
    %193 = vector.broadcast %181 : vector<1x32xf32> to vector<16x32xf32>
    %194 = arith.mulf %192, %193 : vector<16x32xf32>
    %195 = arith.addf %179, %194 : vector<16x32xf32>
    %c0_87 = arith.constant 0 : index
    %c0_88 = arith.constant 0 : index
    %196 = vector.load %arg18[%c0_87, %c0_88] : memref<4x32xf32, #tpu.memory_space<vmem>>, vector<1x32xf32>
    %197 = vector.broadcast %196 : vector<1x32xf32> to vector<16x32xf32>
    %198 = arith.addf %195, %197 : vector<16x32xf32>
    %cst_89 = arith.constant 0.000000e+00 : f32
    %199 = vector.broadcast %cst_89 : f32 to vector<16x32xf32>
    %200 = arith.maximumf %198, %199 : vector<16x32xf32>
    %201 = arith.addf %124, %200 : vector<16x32xf32>
    %c8_90 = arith.constant 8 : index
    %c0_91 = arith.constant 0 : index
    %202 = vector.load %arg26[%c8_90, %c0_91] : memref<32x32xf32, #tpu.memory_space<vmem>>, vector<16x32xf32>
    tpu.vector_store %arg26[%c8_90, %c0_91], %200 {strides = array<i32>} : memref<32x32xf32, #tpu.memory_space<vmem>>, vector<16x32xf32>,
    %cst_92 = arith.constant 0.000000e+00 : f32
    %203 = vector.broadcast %cst_92 : f32 to vector<16x32xf32>
    %c4_93 = arith.constant 4 : index
    %c0_94 = arith.constant 0 : index
    %204 = vector.load %arg26[%c4_93, %c0_94] : memref<32x32xf32, #tpu.memory_space<vmem>>, vector<16x32xf32>
    %c0_95 = arith.constant 0 : index
    %c0_96 = arith.constant 0 : index
    %205 = vector.load %arg15[%c0_95, %c0_96] : memref<9x32xf32, #tpu.memory_space<vmem>>, vector<1x32xf32>
    %cst_97 = arith.constant -4.000000e+00 : f32
    %206 = vector.broadcast %cst_97 : f32 to vector<16x1xf32>
    %207 = arith.addf %4, %206 : vector<16x1xf32>
    %cst_98 = arith.constant 0.000000e+00 : f32
    %208 = vector.broadcast %cst_98 : f32 to vector<16x1xf32>
    %209 = arith.cmpf oge, %207, %208 : vector<16x1xf32>
    %cst_99 = arith.constant 7.000000e+00 : f32
    %210 = vector.broadcast %cst_99 : f32 to vector<16x1xf32>
    %211 = arith.cmpf ole, %207, %210 : vector<16x1xf32>
    %212 = arith.andi %209, %211 : vector<16x1xi1>
    %213 = arith.extui %212 : vector<16x1xi1> to vector<16x1xi32>
    %214 = arith.sitofp %213 : vector<16x1xi32> to vector<16x1xf32>
    %215 = vector.broadcast %214 : vector<16x1xf32> to vector<16x32xf32>
    %216 = arith.mulf %204, %215 : vector<16x32xf32>
    %217 = vector.broadcast %205 : vector<1x32xf32> to vector<16x32xf32>
    %218 = arith.mulf %216, %217 : vector<16x32xf32>
    %219 = arith.addf %203, %218 : vector<16x32xf32>
    %c5 = arith.constant 5 : index
    %c0_100 = arith.constant 0 : index
    %220 = vector.load %arg26[%c5, %c0_100] : memref<32x32xf32, #tpu.memory_space<vmem>>, vector<16x32xf32>
    %c1_101 = arith.constant 1 : index
    %c0_102 = arith.constant 0 : index
    %221 = vector.load %arg15[%c1_101, %c0_102] : memref<9x32xf32, #tpu.memory_space<vmem>>, vector<1x32xf32>
    %cst_103 = arith.constant -3.000000e+00 : f32
    %222 = vector.broadcast %cst_103 : f32 to vector<16x1xf32>
    %223 = arith.addf %4, %222 : vector<16x1xf32>
    %cst_104 = arith.constant 0.000000e+00 : f32
    %224 = vector.broadcast %cst_104 : f32 to vector<16x1xf32>
    %225 = arith.cmpf oge, %223, %224 : vector<16x1xf32>
    %cst_105 = arith.constant 7.000000e+00 : f32
    %226 = vector.broadcast %cst_105 : f32 to vector<16x1xf32>
    %227 = arith.cmpf ole, %223, %226 : vector<16x1xf32>
    %228 = arith.andi %225, %227 : vector<16x1xi1>
    %229 = arith.extui %228 : vector<16x1xi1> to vector<16x1xi32>
    %230 = arith.sitofp %229 : vector<16x1xi32> to vector<16x1xf32>
    %231 = vector.broadcast %230 : vector<16x1xf32> to vector<16x32xf32>
    %232 = arith.mulf %220, %231 : vector<16x32xf32>
    %233 = vector.broadcast %221 : vector<1x32xf32> to vector<16x32xf32>
    %234 = arith.mulf %232, %233 : vector<16x32xf32>
    %235 = arith.addf %219, %234 : vector<16x32xf32>
    %c6_106 = arith.constant 6 : index
    %c0_107 = arith.constant 0 : index
    %236 = vector.load %arg26[%c6_106, %c0_107] : memref<32x32xf32, #tpu.memory_space<vmem>>, vector<16x32xf32>
    %c2_108 = arith.constant 2 : index
    %c0_109 = arith.constant 0 : index
    %237 = vector.load %arg15[%c2_108, %c0_109] : memref<9x32xf32, #tpu.memory_space<vmem>>, vector<1x32xf32>
    %238 = vector.broadcast %137 : vector<16x1xf32> to vector<16x32xf32>
    %239 = arith.mulf %236, %238 : vector<16x32xf32>
    %240 = vector.broadcast %237 : vector<1x32xf32> to vector<16x32xf32>
    %241 = arith.mulf %239, %240 : vector<16x32xf32>
    %242 = arith.addf %235, %241 : vector<16x32xf32>
    %c7_110 = arith.constant 7 : index
    %c0_111 = arith.constant 0 : index
    %243 = vector.load %arg26[%c7_110, %c0_111] : memref<32x32xf32, #tpu.memory_space<vmem>>, vector<16x32xf32>
    %c3_112 = arith.constant 3 : index
    %c0_113 = arith.constant 0 : index
    %244 = vector.load %arg15[%c3_112, %c0_113] : memref<9x32xf32, #tpu.memory_space<vmem>>, vector<1x32xf32>
    %245 = vector.broadcast %153 : vector<16x1xf32> to vector<16x32xf32>
    %246 = arith.mulf %243, %245 : vector<16x32xf32>
    %247 = vector.broadcast %244 : vector<1x32xf32> to vector<16x32xf32>
    %248 = arith.mulf %246, %247 : vector<16x32xf32>
    %249 = arith.addf %242, %248 : vector<16x32xf32>
    %c8_114 = arith.constant 8 : index
    %c0_115 = arith.constant 0 : index
    %250 = vector.load %arg26[%c8_114, %c0_115] : memref<32x32xf32, #tpu.memory_space<vmem>>, vector<16x32xf32>
    %c4_116 = arith.constant 4 : index
    %c0_117 = arith.constant 0 : index
    %251 = vector.load %arg15[%c4_116, %c0_117] : memref<9x32xf32, #tpu.memory_space<vmem>>, vector<1x32xf32>
    %252 = vector.broadcast %251 : vector<1x32xf32> to vector<16x32xf32>
    %253 = arith.mulf %250, %252 : vector<16x32xf32>
    %254 = arith.addf %249, %253 : vector<16x32xf32>
    %c9_118 = arith.constant 9 : index
    %c0_119 = arith.constant 0 : index
    %255 = vector.load %arg26[%c9_118, %c0_119] : memref<32x32xf32, #tpu.memory_space<vmem>>, vector<16x32xf32>
    %c5_120 = arith.constant 5 : index
    %c0_121 = arith.constant 0 : index
    %256 = vector.load %arg15[%c5_120, %c0_121] : memref<9x32xf32, #tpu.memory_space<vmem>>, vector<1x32xf32>
    %257 = vector.broadcast %174 : vector<16x1xf32> to vector<16x32xf32>
    %258 = arith.mulf %255, %257 : vector<16x32xf32>
    %259 = vector.broadcast %256 : vector<1x32xf32> to vector<16x32xf32>
    %260 = arith.mulf %258, %259 : vector<16x32xf32>
    %261 = arith.addf %254, %260 : vector<16x32xf32>
    %c10_122 = arith.constant 10 : index
    %c0_123 = arith.constant 0 : index
    %262 = vector.load %arg26[%c10_122, %c0_123] : memref<32x32xf32, #tpu.memory_space<vmem>>, vector<16x32xf32>
    %c6_124 = arith.constant 6 : index
    %c0_125 = arith.constant 0 : index
    %263 = vector.load %arg15[%c6_124, %c0_125] : memref<9x32xf32, #tpu.memory_space<vmem>>, vector<1x32xf32>
    %264 = vector.broadcast %190 : vector<16x1xf32> to vector<16x32xf32>
    %265 = arith.mulf %262, %264 : vector<16x32xf32>
    %266 = vector.broadcast %263 : vector<1x32xf32> to vector<16x32xf32>
    %267 = arith.mulf %265, %266 : vector<16x32xf32>
    %268 = arith.addf %261, %267 : vector<16x32xf32>
    %c11 = arith.constant 11 : index
    %c0_126 = arith.constant 0 : index
    %269 = vector.load %arg26[%c11, %c0_126] : memref<32x32xf32, #tpu.memory_space<vmem>>, vector<16x32xf32>
    %c7_127 = arith.constant 7 : index
    %c0_128 = arith.constant 0 : index
    %270 = vector.load %arg15[%c7_127, %c0_128] : memref<9x32xf32, #tpu.memory_space<vmem>>, vector<1x32xf32>
    %cst_129 = arith.constant 3.000000e+00 : f32
    %271 = vector.broadcast %cst_129 : f32 to vector<16x1xf32>
    %272 = arith.addf %4, %271 : vector<16x1xf32>
    %cst_130 = arith.constant 0.000000e+00 : f32
    %273 = vector.broadcast %cst_130 : f32 to vector<16x1xf32>
    %274 = arith.cmpf oge, %272, %273 : vector<16x1xf32>
    %cst_131 = arith.constant 7.000000e+00 : f32
    %275 = vector.broadcast %cst_131 : f32 to vector<16x1xf32>
    %276 = arith.cmpf ole, %272, %275 : vector<16x1xf32>
    %277 = arith.andi %274, %276 : vector<16x1xi1>
    %278 = arith.extui %277 : vector<16x1xi1> to vector<16x1xi32>
    %279 = arith.sitofp %278 : vector<16x1xi32> to vector<16x1xf32>
    %280 = vector.broadcast %279 : vector<16x1xf32> to vector<16x32xf32>
    %281 = arith.mulf %269, %280 : vector<16x32xf32>
    %282 = vector.broadcast %270 : vector<1x32xf32> to vector<16x32xf32>
    %283 = arith.mulf %281, %282 : vector<16x32xf32>
    %284 = arith.addf %268, %283 : vector<16x32xf32>
    %c12 = arith.constant 12 : index
    %c0_132 = arith.constant 0 : index
    %285 = vector.load %arg26[%c12, %c0_132] : memref<32x32xf32, #tpu.memory_space<vmem>>, vector<16x32xf32>
    %c8_133 = arith.constant 8 : index
    %c0_134 = arith.constant 0 : index
    %286 = vector.load %arg15[%c8_133, %c0_134] : memref<9x32xf32, #tpu.memory_space<vmem>>, vector<1x32xf32>
    %cst_135 = arith.constant 4.000000e+00 : f32
    %287 = vector.broadcast %cst_135 : f32 to vector<16x1xf32>
    %288 = arith.addf %4, %287 : vector<16x1xf32>
    %cst_136 = arith.constant 0.000000e+00 : f32
    %289 = vector.broadcast %cst_136 : f32 to vector<16x1xf32>
    %290 = arith.cmpf oge, %288, %289 : vector<16x1xf32>
    %cst_137 = arith.constant 7.000000e+00 : f32
    %291 = vector.broadcast %cst_137 : f32 to vector<16x1xf32>
    %292 = arith.cmpf ole, %288, %291 : vector<16x1xf32>
    %293 = arith.andi %290, %292 : vector<16x1xi1>
    %294 = arith.extui %293 : vector<16x1xi1> to vector<16x1xi32>
    %295 = arith.sitofp %294 : vector<16x1xi32> to vector<16x1xf32>
    %296 = vector.broadcast %295 : vector<16x1xf32> to vector<16x32xf32>
    %297 = arith.mulf %285, %296 : vector<16x32xf32>
    %298 = vector.broadcast %286 : vector<1x32xf32> to vector<16x32xf32>
    %299 = arith.mulf %297, %298 : vector<16x32xf32>
    %300 = arith.addf %284, %299 : vector<16x32xf32>
    %c1_138 = arith.constant 1 : index
    %c0_139 = arith.constant 0 : index
    %301 = vector.load %arg18[%c1_138, %c0_139] : memref<4x32xf32, #tpu.memory_space<vmem>>, vector<1x32xf32>
    %302 = vector.broadcast %301 : vector<1x32xf32> to vector<16x32xf32>
    %303 = arith.addf %300, %302 : vector<16x32xf32>
    %cst_140 = arith.constant 0.000000e+00 : f32
    %304 = vector.broadcast %cst_140 : f32 to vector<16x32xf32>
    %305 = arith.maximumf %303, %304 : vector<16x32xf32>
    %306 = arith.addf %201, %305 : vector<16x32xf32>
    %c8_141 = arith.constant 8 : index
    %c0_142 = arith.constant 0 : index
    %307 = vector.load %arg26[%c8_141, %c0_142] : memref<32x32xf32, #tpu.memory_space<vmem>>, vector<16x32xf32>
    tpu.vector_store %arg26[%c8_141, %c0_142], %305 {strides = array<i32>} : memref<32x32xf32, #tpu.memory_space<vmem>>, vector<16x32xf32>,
    %cst_143 = arith.constant 0.000000e+00 : f32
    %308 = vector.broadcast %cst_143 : f32 to vector<16x32xf32>
    %c2_144 = arith.constant 2 : index
    %c0_145 = arith.constant 0 : index
    %309 = vector.load %arg26[%c2_144, %c0_145] : memref<32x32xf32, #tpu.memory_space<vmem>>, vector<16x32xf32>
    %c0_146 = arith.constant 0 : index
    %c0_147 = arith.constant 0 : index
    %310 = vector.load %arg16[%c0_146, %c0_147] : memref<13x32xf32, #tpu.memory_space<vmem>>, vector<1x32xf32>
    %cst_148 = arith.constant -6.000000e+00 : f32
    %311 = vector.broadcast %cst_148 : f32 to vector<16x1xf32>
    %312 = arith.addf %4, %311 : vector<16x1xf32>
    %cst_149 = arith.constant 0.000000e+00 : f32
    %313 = vector.broadcast %cst_149 : f32 to vector<16x1xf32>
    %314 = arith.cmpf oge, %312, %313 : vector<16x1xf32>
    %cst_150 = arith.constant 7.000000e+00 : f32
    %315 = vector.broadcast %cst_150 : f32 to vector<16x1xf32>
    %316 = arith.cmpf ole, %312, %315 : vector<16x1xf32>
    %317 = arith.andi %314, %316 : vector<16x1xi1>
    %318 = arith.extui %317 : vector<16x1xi1> to vector<16x1xi32>
    %319 = arith.sitofp %318 : vector<16x1xi32> to vector<16x1xf32>
    %320 = vector.broadcast %319 : vector<16x1xf32> to vector<16x32xf32>
    %321 = arith.mulf %309, %320 : vector<16x32xf32>
    %322 = vector.broadcast %310 : vector<1x32xf32> to vector<16x32xf32>
    %323 = arith.mulf %321, %322 : vector<16x32xf32>
    %324 = arith.addf %308, %323 : vector<16x32xf32>
    %c3_151 = arith.constant 3 : index
    %c0_152 = arith.constant 0 : index
    %325 = vector.load %arg26[%c3_151, %c0_152] : memref<32x32xf32, #tpu.memory_space<vmem>>, vector<16x32xf32>
    %c1_153 = arith.constant 1 : index
    %c0_154 = arith.constant 0 : index
    %326 = vector.load %arg16[%c1_153, %c0_154] : memref<13x32xf32, #tpu.memory_space<vmem>>, vector<1x32xf32>
    %cst_155 = arith.constant -5.000000e+00 : f32
    %327 = vector.broadcast %cst_155 : f32 to vector<16x1xf32>
    %328 = arith.addf %4, %327 : vector<16x1xf32>
    %cst_156 = arith.constant 0.000000e+00 : f32
    %329 = vector.broadcast %cst_156 : f32 to vector<16x1xf32>
    %330 = arith.cmpf oge, %328, %329 : vector<16x1xf32>
    %cst_157 = arith.constant 7.000000e+00 : f32
    %331 = vector.broadcast %cst_157 : f32 to vector<16x1xf32>
    %332 = arith.cmpf ole, %328, %331 : vector<16x1xf32>
    %333 = arith.andi %330, %332 : vector<16x1xi1>
    %334 = arith.extui %333 : vector<16x1xi1> to vector<16x1xi32>
    %335 = arith.sitofp %334 : vector<16x1xi32> to vector<16x1xf32>
    %336 = vector.broadcast %335 : vector<16x1xf32> to vector<16x32xf32>
    %337 = arith.mulf %325, %336 : vector<16x32xf32>
    %338 = vector.broadcast %326 : vector<1x32xf32> to vector<16x32xf32>
    %339 = arith.mulf %337, %338 : vector<16x32xf32>
    %340 = arith.addf %324, %339 : vector<16x32xf32>
    %c4_158 = arith.constant 4 : index
    %c0_159 = arith.constant 0 : index
    %341 = vector.load %arg26[%c4_158, %c0_159] : memref<32x32xf32, #tpu.memory_space<vmem>>, vector<16x32xf32>
    %c2_160 = arith.constant 2 : index
    %c0_161 = arith.constant 0 : index
    %342 = vector.load %arg16[%c2_160, %c0_161] : memref<13x32xf32, #tpu.memory_space<vmem>>, vector<1x32xf32>
    %343 = vector.broadcast %214 : vector<16x1xf32> to vector<16x32xf32>
    %344 = arith.mulf %341, %343 : vector<16x32xf32>
    %345 = vector.broadcast %342 : vector<1x32xf32> to vector<16x32xf32>
    %346 = arith.mulf %344, %345 : vector<16x32xf32>
    %347 = arith.addf %340, %346 : vector<16x32xf32>
    %c5_162 = arith.constant 5 : index
    %c0_163 = arith.constant 0 : index
    %348 = vector.load %arg26[%c5_162, %c0_163] : memref<32x32xf32, #tpu.memory_space<vmem>>, vector<16x32xf32>
    %c3_164 = arith.constant 3 : index
    %c0_165 = arith.constant 0 : index
    %349 = vector.load %arg16[%c3_164, %c0_165] : memref<13x32xf32, #tpu.memory_space<vmem>>, vector<1x32xf32>
    %350 = vector.broadcast %230 : vector<16x1xf32> to vector<16x32xf32>
    %351 = arith.mulf %348, %350 : vector<16x32xf32>
    %352 = vector.broadcast %349 : vector<1x32xf32> to vector<16x32xf32>
    %353 = arith.mulf %351, %352 : vector<16x32xf32>
    %354 = arith.addf %347, %353 : vector<16x32xf32>
    %c6_166 = arith.constant 6 : index
    %c0_167 = arith.constant 0 : index
    %355 = vector.load %arg26[%c6_166, %c0_167] : memref<32x32xf32, #tpu.memory_space<vmem>>, vector<16x32xf32>
    %c4_168 = arith.constant 4 : index
    %c0_169 = arith.constant 0 : index
    %356 = vector.load %arg16[%c4_168, %c0_169] : memref<13x32xf32, #tpu.memory_space<vmem>>, vector<1x32xf32>
    %357 = vector.broadcast %137 : vector<16x1xf32> to vector<16x32xf32>
    %358 = arith.mulf %355, %357 : vector<16x32xf32>
    %359 = vector.broadcast %356 : vector<1x32xf32> to vector<16x32xf32>
    %360 = arith.mulf %358, %359 : vector<16x32xf32>
    %361 = arith.addf %354, %360 : vector<16x32xf32>
    %c7_170 = arith.constant 7 : index
    %c0_171 = arith.constant 0 : index
    %362 = vector.load %arg26[%c7_170, %c0_171] : memref<32x32xf32, #tpu.memory_space<vmem>>, vector<16x32xf32>
    %c5_172 = arith.constant 5 : index
    %c0_173 = arith.constant 0 : index
    %363 = vector.load %arg16[%c5_172, %c0_173] : memref<13x32xf32, #tpu.memory_space<vmem>>, vector<1x32xf32>
    %364 = vector.broadcast %153 : vector<16x1xf32> to vector<16x32xf32>
    %365 = arith.mulf %362, %364 : vector<16x32xf32>
    %366 = vector.broadcast %363 : vector<1x32xf32> to vector<16x32xf32>
    %367 = arith.mulf %365, %366 : vector<16x32xf32>
    %368 = arith.addf %361, %367 : vector<16x32xf32>
    %c8_174 = arith.constant 8 : index
    %c0_175 = arith.constant 0 : index
    %369 = vector.load %arg26[%c8_174, %c0_175] : memref<32x32xf32, #tpu.memory_space<vmem>>, vector<16x32xf32>
    %c6_176 = arith.constant 6 : index
    %c0_177 = arith.constant 0 : index
    %370 = vector.load %arg16[%c6_176, %c0_177] : memref<13x32xf32, #tpu.memory_space<vmem>>, vector<1x32xf32>
    %371 = vector.broadcast %370 : vector<1x32xf32> to vector<16x32xf32>
    %372 = arith.mulf %369, %371 : vector<16x32xf32>
    %373 = arith.addf %368, %372 : vector<16x32xf32>
    %c9_178 = arith.constant 9 : index
    %c0_179 = arith.constant 0 : index
    %374 = vector.load %arg26[%c9_178, %c0_179] : memref<32x32xf32, #tpu.memory_space<vmem>>, vector<16x32xf32>
    %c7_180 = arith.constant 7 : index
    %c0_181 = arith.constant 0 : index
    %375 = vector.load %arg16[%c7_180, %c0_181] : memref<13x32xf32, #tpu.memory_space<vmem>>, vector<1x32xf32>
    %376 = vector.broadcast %174 : vector<16x1xf32> to vector<16x32xf32>
    %377 = arith.mulf %374, %376 : vector<16x32xf32>
    %378 = vector.broadcast %375 : vector<1x32xf32> to vector<16x32xf32>
    %379 = arith.mulf %377, %378 : vector<16x32xf32>
    %380 = arith.addf %373, %379 : vector<16x32xf32>
    %c10_182 = arith.constant 10 : index
    %c0_183 = arith.constant 0 : index
    %381 = vector.load %arg26[%c10_182, %c0_183] : memref<32x32xf32, #tpu.memory_space<vmem>>, vector<16x32xf32>
    %c8_184 = arith.constant 8 : index
    %c0_185 = arith.constant 0 : index
    %382 = vector.load %arg16[%c8_184, %c0_185] : memref<13x32xf32, #tpu.memory_space<vmem>>, vector<1x32xf32>
    %383 = vector.broadcast %190 : vector<16x1xf32> to vector<16x32xf32>
    %384 = arith.mulf %381, %383 : vector<16x32xf32>
    %385 = vector.broadcast %382 : vector<1x32xf32> to vector<16x32xf32>
    %386 = arith.mulf %384, %385 : vector<16x32xf32>
    %387 = arith.addf %380, %386 : vector<16x32xf32>
    %c11_186 = arith.constant 11 : index
    %c0_187 = arith.constant 0 : index
    %388 = vector.load %arg26[%c11_186, %c0_187] : memref<32x32xf32, #tpu.memory_space<vmem>>, vector<16x32xf32>
    %c9_188 = arith.constant 9 : index
    %c0_189 = arith.constant 0 : index
    %389 = vector.load %arg16[%c9_188, %c0_189] : memref<13x32xf32, #tpu.memory_space<vmem>>, vector<1x32xf32>
    %390 = vector.broadcast %279 : vector<16x1xf32> to vector<16x32xf32>
    %391 = arith.mulf %388, %390 : vector<16x32xf32>
    %392 = vector.broadcast %389 : vector<1x32xf32> to vector<16x32xf32>
    %393 = arith.mulf %391, %392 : vector<16x32xf32>
    %394 = arith.addf %387, %393 : vector<16x32xf32>
    %c12_190 = arith.constant 12 : index
    %c0_191 = arith.constant 0 : index
    %395 = vector.load %arg26[%c12_190, %c0_191] : memref<32x32xf32, #tpu.memory_space<vmem>>, vector<16x32xf32>
    %c10_192 = arith.constant 10 : index
    %c0_193 = arith.constant 0 : index
    %396 = vector.load %arg16[%c10_192, %c0_193] : memref<13x32xf32, #tpu.memory_space<vmem>>, vector<1x32xf32>
    %397 = vector.broadcast %295 : vector<16x1xf32> to vector<16x32xf32>
    %398 = arith.mulf %395, %397 : vector<16x32xf32>
    %399 = vector.broadcast %396 : vector<1x32xf32> to vector<16x32xf32>
    %400 = arith.mulf %398, %399 : vector<16x32xf32>
    %401 = arith.addf %394, %400 : vector<16x32xf32>
    %c13 = arith.constant 13 : index
    %c0_194 = arith.constant 0 : index
    %402 = vector.load %arg26[%c13, %c0_194] : memref<32x32xf32, #tpu.memory_space<vmem>>, vector<16x32xf32>
    %c11_195 = arith.constant 11 : index
    %c0_196 = arith.constant 0 : index
    %403 = vector.load %arg16[%c11_195, %c0_196] : memref<13x32xf32, #tpu.memory_space<vmem>>, vector<1x32xf32>
    %cst_197 = arith.constant 5.000000e+00 : f32
    %404 = vector.broadcast %cst_197 : f32 to vector<16x1xf32>
    %405 = arith.addf %4, %404 : vector<16x1xf32>
    %cst_198 = arith.constant 0.000000e+00 : f32
    %406 = vector.broadcast %cst_198 : f32 to vector<16x1xf32>
    %407 = arith.cmpf oge, %405, %406 : vector<16x1xf32>
    %cst_199 = arith.constant 7.000000e+00 : f32
    %408 = vector.broadcast %cst_199 : f32 to vector<16x1xf32>
    %409 = arith.cmpf ole, %405, %408 : vector<16x1xf32>
    %410 = arith.andi %407, %409 : vector<16x1xi1>
    %411 = arith.extui %410 : vector<16x1xi1> to vector<16x1xi32>
    %412 = arith.sitofp %411 : vector<16x1xi32> to vector<16x1xf32>
    %413 = vector.broadcast %412 : vector<16x1xf32> to vector<16x32xf32>
    %414 = arith.mulf %402, %413 : vector<16x32xf32>
    %415 = vector.broadcast %403 : vector<1x32xf32> to vector<16x32xf32>
    %416 = arith.mulf %414, %415 : vector<16x32xf32>
    %417 = arith.addf %401, %416 : vector<16x32xf32>
    %c14 = arith.constant 14 : index
    %c0_200 = arith.constant 0 : index
    %418 = vector.load %arg26[%c14, %c0_200] : memref<32x32xf32, #tpu.memory_space<vmem>>, vector<16x32xf32>
    %c12_201 = arith.constant 12 : index
    %c0_202 = arith.constant 0 : index
    %419 = vector.load %arg16[%c12_201, %c0_202] : memref<13x32xf32, #tpu.memory_space<vmem>>, vector<1x32xf32>
    %cst_203 = arith.constant 6.000000e+00 : f32
    %420 = vector.broadcast %cst_203 : f32 to vector<16x1xf32>
    %421 = arith.addf %4, %420 : vector<16x1xf32>
    %cst_204 = arith.constant 0.000000e+00 : f32
    %422 = vector.broadcast %cst_204 : f32 to vector<16x1xf32>
    %423 = arith.cmpf oge, %421, %422 : vector<16x1xf32>
    %cst_205 = arith.constant 7.000000e+00 : f32
    %424 = vector.broadcast %cst_205 : f32 to vector<16x1xf32>
    %425 = arith.cmpf ole, %421, %424 : vector<16x1xf32>
    %426 = arith.andi %423, %425 : vector<16x1xi1>
    %427 = arith.extui %426 : vector<16x1xi1> to vector<16x1xi32>
    %428 = arith.sitofp %427 : vector<16x1xi32> to vector<16x1xf32>
    %429 = vector.broadcast %428 : vector<16x1xf32> to vector<16x32xf32>
    %430 = arith.mulf %418, %429 : vector<16x32xf32>
    %431 = vector.broadcast %419 : vector<1x32xf32> to vector<16x32xf32>
    %432 = arith.mulf %430, %431 : vector<16x32xf32>
    %433 = arith.addf %417, %432 : vector<16x32xf32>
    %c2_206 = arith.constant 2 : index
    %c0_207 = arith.constant 0 : index
    %434 = vector.load %arg18[%c2_206, %c0_207] : memref<4x32xf32, #tpu.memory_space<vmem>>, vector<1x32xf32>
    %435 = vector.broadcast %434 : vector<1x32xf32> to vector<16x32xf32>
    %436 = arith.addf %433, %435 : vector<16x32xf32>
    %cst_208 = arith.constant 0.000000e+00 : f32
    %437 = vector.broadcast %cst_208 : f32 to vector<16x32xf32>
    %438 = arith.maximumf %436, %437 : vector<16x32xf32>
    %439 = arith.addf %306, %438 : vector<16x32xf32>
    %c8_209 = arith.constant 8 : index
    %c0_210 = arith.constant 0 : index
    %440 = vector.load %arg26[%c8_209, %c0_210] : memref<32x32xf32, #tpu.memory_space<vmem>>, vector<16x32xf32>
    tpu.vector_store %arg26[%c8_209, %c0_210], %438 {strides = array<i32>} : memref<32x32xf32, #tpu.memory_space<vmem>>, vector<16x32xf32>,
    %cst_211 = arith.constant 0.000000e+00 : f32
    %441 = vector.broadcast %cst_211 : f32 to vector<16x32xf32>
    %c1_212 = arith.constant 1 : index
    %c0_213 = arith.constant 0 : index
    %442 = vector.load %arg26[%c1_212, %c0_213] : memref<32x32xf32, #tpu.memory_space<vmem>>, vector<16x32xf32>
    %c1_214 = arith.constant 1 : index
    %c0_215 = arith.constant 0 : index
    %443 = vector.load %arg17[%c1_214, %c0_215] : memref<17x32xf32, #tpu.memory_space<vmem>>, vector<1x32xf32>
    %cst_216 = arith.constant -7.000000e+00 : f32
    %444 = vector.broadcast %cst_216 : f32 to vector<16x1xf32>
    %445 = arith.addf %4, %444 : vector<16x1xf32>
    %cst_217 = arith.constant 0.000000e+00 : f32
    %446 = vector.broadcast %cst_217 : f32 to vector<16x1xf32>
    %447 = arith.cmpf oge, %445, %446 : vector<16x1xf32>
    %cst_218 = arith.constant 7.000000e+00 : f32
    %448 = vector.broadcast %cst_218 : f32 to vector<16x1xf32>
    %449 = arith.cmpf ole, %445, %448 : vector<16x1xf32>
    %450 = arith.andi %447, %449 : vector<16x1xi1>
    %451 = arith.extui %450 : vector<16x1xi1> to vector<16x1xi32>
    %452 = arith.sitofp %451 : vector<16x1xi32> to vector<16x1xf32>
    %453 = vector.broadcast %452 : vector<16x1xf32> to vector<16x32xf32>
    %454 = arith.mulf %442, %453 : vector<16x32xf32>
    %455 = vector.broadcast %443 : vector<1x32xf32> to vector<16x32xf32>
    %456 = arith.mulf %454, %455 : vector<16x32xf32>
    %457 = arith.addf %441, %456 : vector<16x32xf32>
    %c2_219 = arith.constant 2 : index
    %c0_220 = arith.constant 0 : index
    %458 = vector.load %arg26[%c2_219, %c0_220] : memref<32x32xf32, #tpu.memory_space<vmem>>, vector<16x32xf32>
    %c2_221 = arith.constant 2 : index
    %c0_222 = arith.constant 0 : index
    %459 = vector.load %arg17[%c2_221, %c0_222] : memref<17x32xf32, #tpu.memory_space<vmem>>, vector<1x32xf32>
    %460 = vector.broadcast %319 : vector<16x1xf32> to vector<16x32xf32>
    %461 = arith.mulf %458, %460 : vector<16x32xf32>
    %462 = vector.broadcast %459 : vector<1x32xf32> to vector<16x32xf32>
    %463 = arith.mulf %461, %462 : vector<16x32xf32>
    %464 = arith.addf %457, %463 : vector<16x32xf32>
    %c3_223 = arith.constant 3 : index
    %c0_224 = arith.constant 0 : index
    %465 = vector.load %arg26[%c3_223, %c0_224] : memref<32x32xf32, #tpu.memory_space<vmem>>, vector<16x32xf32>
    %c3_225 = arith.constant 3 : index
    %c0_226 = arith.constant 0 : index
    %466 = vector.load %arg17[%c3_225, %c0_226] : memref<17x32xf32, #tpu.memory_space<vmem>>, vector<1x32xf32>
    %467 = vector.broadcast %335 : vector<16x1xf32> to vector<16x32xf32>
    %468 = arith.mulf %465, %467 : vector<16x32xf32>
    %469 = vector.broadcast %466 : vector<1x32xf32> to vector<16x32xf32>
    %470 = arith.mulf %468, %469 : vector<16x32xf32>
    %471 = arith.addf %464, %470 : vector<16x32xf32>
    %c4_227 = arith.constant 4 : index
    %c0_228 = arith.constant 0 : index
    %472 = vector.load %arg26[%c4_227, %c0_228] : memref<32x32xf32, #tpu.memory_space<vmem>>, vector<16x32xf32>
    %c4_229 = arith.constant 4 : index
    %c0_230 = arith.constant 0 : index
    %473 = vector.load %arg17[%c4_229, %c0_230] : memref<17x32xf32, #tpu.memory_space<vmem>>, vector<1x32xf32>
    %474 = vector.broadcast %214 : vector<16x1xf32> to vector<16x32xf32>
    %475 = arith.mulf %472, %474 : vector<16x32xf32>
    %476 = vector.broadcast %473 : vector<1x32xf32> to vector<16x32xf32>
    %477 = arith.mulf %475, %476 : vector<16x32xf32>
    %478 = arith.addf %471, %477 : vector<16x32xf32>
    %c5_231 = arith.constant 5 : index
    %c0_232 = arith.constant 0 : index
    %479 = vector.load %arg26[%c5_231, %c0_232] : memref<32x32xf32, #tpu.memory_space<vmem>>, vector<16x32xf32>
    %c5_233 = arith.constant 5 : index
    %c0_234 = arith.constant 0 : index
    %480 = vector.load %arg17[%c5_233, %c0_234] : memref<17x32xf32, #tpu.memory_space<vmem>>, vector<1x32xf32>
    %481 = vector.broadcast %230 : vector<16x1xf32> to vector<16x32xf32>
    %482 = arith.mulf %479, %481 : vector<16x32xf32>
    %483 = vector.broadcast %480 : vector<1x32xf32> to vector<16x32xf32>
    %484 = arith.mulf %482, %483 : vector<16x32xf32>
    %485 = arith.addf %478, %484 : vector<16x32xf32>
    %c6_235 = arith.constant 6 : index
    %c0_236 = arith.constant 0 : index
    %486 = vector.load %arg26[%c6_235, %c0_236] : memref<32x32xf32, #tpu.memory_space<vmem>>, vector<16x32xf32>
    %c6_237 = arith.constant 6 : index
    %c0_238 = arith.constant 0 : index
    %487 = vector.load %arg17[%c6_237, %c0_238] : memref<17x32xf32, #tpu.memory_space<vmem>>, vector<1x32xf32>
    %488 = vector.broadcast %137 : vector<16x1xf32> to vector<16x32xf32>
    %489 = arith.mulf %486, %488 : vector<16x32xf32>
    %490 = vector.broadcast %487 : vector<1x32xf32> to vector<16x32xf32>
    %491 = arith.mulf %489, %490 : vector<16x32xf32>
    %492 = arith.addf %485, %491 : vector<16x32xf32>
    %c7_239 = arith.constant 7 : index
    %c0_240 = arith.constant 0 : index
    %493 = vector.load %arg26[%c7_239, %c0_240] : memref<32x32xf32, #tpu.memory_space<vmem>>, vector<16x32xf32>
    %c7_241 = arith.constant 7 : index
    %c0_242 = arith.constant 0 : index
    %494 = vector.load %arg17[%c7_241, %c0_242] : memref<17x32xf32, #tpu.memory_space<vmem>>, vector<1x32xf32>
    %495 = vector.broadcast %153 : vector<16x1xf32> to vector<16x32xf32>
    %496 = arith.mulf %493, %495 : vector<16x32xf32>
    %497 = vector.broadcast %494 : vector<1x32xf32> to vector<16x32xf32>
    %498 = arith.mulf %496, %497 : vector<16x32xf32>
    %499 = arith.addf %492, %498 : vector<16x32xf32>
    %c8_243 = arith.constant 8 : index
    %c0_244 = arith.constant 0 : index
    %500 = vector.load %arg26[%c8_243, %c0_244] : memref<32x32xf32, #tpu.memory_space<vmem>>, vector<16x32xf32>
    %c8_245 = arith.constant 8 : index
    %c0_246 = arith.constant 0 : index
    %501 = vector.load %arg17[%c8_245, %c0_246] : memref<17x32xf32, #tpu.memory_space<vmem>>, vector<1x32xf32>
    %502 = vector.broadcast %501 : vector<1x32xf32> to vector<16x32xf32>
    %503 = arith.mulf %500, %502 : vector<16x32xf32>
    %504 = arith.addf %499, %503 : vector<16x32xf32>
    %c9_247 = arith.constant 9 : index
    %c0_248 = arith.constant 0 : index
    %505 = vector.load %arg26[%c9_247, %c0_248] : memref<32x32xf32, #tpu.memory_space<vmem>>, vector<16x32xf32>
    %c9_249 = arith.constant 9 : index
    %c0_250 = arith.constant 0 : index
    %506 = vector.load %arg17[%c9_249, %c0_250] : memref<17x32xf32, #tpu.memory_space<vmem>>, vector<1x32xf32>
    %507 = vector.broadcast %174 : vector<16x1xf32> to vector<16x32xf32>
    %508 = arith.mulf %505, %507 : vector<16x32xf32>
    %509 = vector.broadcast %506 : vector<1x32xf32> to vector<16x32xf32>
    %510 = arith.mulf %508, %509 : vector<16x32xf32>
    %511 = arith.addf %504, %510 : vector<16x32xf32>
    %c10_251 = arith.constant 10 : index
    %c0_252 = arith.constant 0 : index
    %512 = vector.load %arg26[%c10_251, %c0_252] : memref<32x32xf32, #tpu.memory_space<vmem>>, vector<16x32xf32>
    %c10_253 = arith.constant 10 : index
    %c0_254 = arith.constant 0 : index
    %513 = vector.load %arg17[%c10_253, %c0_254] : memref<17x32xf32, #tpu.memory_space<vmem>>, vector<1x32xf32>
    %514 = vector.broadcast %190 : vector<16x1xf32> to vector<16x32xf32>
    %515 = arith.mulf %512, %514 : vector<16x32xf32>
    %516 = vector.broadcast %513 : vector<1x32xf32> to vector<16x32xf32>
    %517 = arith.mulf %515, %516 : vector<16x32xf32>
    %518 = arith.addf %511, %517 : vector<16x32xf32>
    %c11_255 = arith.constant 11 : index
    %c0_256 = arith.constant 0 : index
    %519 = vector.load %arg26[%c11_255, %c0_256] : memref<32x32xf32, #tpu.memory_space<vmem>>, vector<16x32xf32>
    %c11_257 = arith.constant 11 : index
    %c0_258 = arith.constant 0 : index
    %520 = vector.load %arg17[%c11_257, %c0_258] : memref<17x32xf32, #tpu.memory_space<vmem>>, vector<1x32xf32>
    %521 = vector.broadcast %279 : vector<16x1xf32> to vector<16x32xf32>
    %522 = arith.mulf %519, %521 : vector<16x32xf32>
    %523 = vector.broadcast %520 : vector<1x32xf32> to vector<16x32xf32>
    %524 = arith.mulf %522, %523 : vector<16x32xf32>
    %525 = arith.addf %518, %524 : vector<16x32xf32>
    %c12_259 = arith.constant 12 : index
    %c0_260 = arith.constant 0 : index
    %526 = vector.load %arg26[%c12_259, %c0_260] : memref<32x32xf32, #tpu.memory_space<vmem>>, vector<16x32xf32>
    %c12_261 = arith.constant 12 : index
    %c0_262 = arith.constant 0 : index
    %527 = vector.load %arg17[%c12_261, %c0_262] : memref<17x32xf32, #tpu.memory_space<vmem>>, vector<1x32xf32>
    %528 = vector.broadcast %295 : vector<16x1xf32> to vector<16x32xf32>
    %529 = arith.mulf %526, %528 : vector<16x32xf32>
    %530 = vector.broadcast %527 : vector<1x32xf32> to vector<16x32xf32>
    %531 = arith.mulf %529, %530 : vector<16x32xf32>
    %532 = arith.addf %525, %531 : vector<16x32xf32>
    %c13_263 = arith.constant 13 : index
    %c0_264 = arith.constant 0 : index
    %533 = vector.load %arg26[%c13_263, %c0_264] : memref<32x32xf32, #tpu.memory_space<vmem>>, vector<16x32xf32>
    %c13_265 = arith.constant 13 : index
    %c0_266 = arith.constant 0 : index
    %534 = vector.load %arg17[%c13_265, %c0_266] : memref<17x32xf32, #tpu.memory_space<vmem>>, vector<1x32xf32>
    %535 = vector.broadcast %412 : vector<16x1xf32> to vector<16x32xf32>
    %536 = arith.mulf %533, %535 : vector<16x32xf32>
    %537 = vector.broadcast %534 : vector<1x32xf32> to vector<16x32xf32>
    %538 = arith.mulf %536, %537 : vector<16x32xf32>
    %539 = arith.addf %532, %538 : vector<16x32xf32>
    %c14_267 = arith.constant 14 : index
    %c0_268 = arith.constant 0 : index
    %540 = vector.load %arg26[%c14_267, %c0_268] : memref<32x32xf32, #tpu.memory_space<vmem>>, vector<16x32xf32>
    %c14_269 = arith.constant 14 : index
    %c0_270 = arith.constant 0 : index
    %541 = vector.load %arg17[%c14_269, %c0_270] : memref<17x32xf32, #tpu.memory_space<vmem>>, vector<1x32xf32>
    %542 = vector.broadcast %428 : vector<16x1xf32> to vector<16x32xf32>
    %543 = arith.mulf %540, %542 : vector<16x32xf32>
    %544 = vector.broadcast %541 : vector<1x32xf32> to vector<16x32xf32>
    %545 = arith.mulf %543, %544 : vector<16x32xf32>
    %546 = arith.addf %539, %545 : vector<16x32xf32>
    %c15 = arith.constant 15 : index
    %c0_271 = arith.constant 0 : index
    %547 = vector.load %arg26[%c15, %c0_271] : memref<32x32xf32, #tpu.memory_space<vmem>>, vector<16x32xf32>
    %c15_272 = arith.constant 15 : index
    %c0_273 = arith.constant 0 : index
    %548 = vector.load %arg17[%c15_272, %c0_273] : memref<17x32xf32, #tpu.memory_space<vmem>>, vector<1x32xf32>
    %cst_274 = arith.constant 7.000000e+00 : f32
    %549 = vector.broadcast %cst_274 : f32 to vector<16x1xf32>
    %550 = arith.addf %4, %549 : vector<16x1xf32>
    %cst_275 = arith.constant 0.000000e+00 : f32
    %551 = vector.broadcast %cst_275 : f32 to vector<16x1xf32>
    %552 = arith.cmpf oge, %550, %551 : vector<16x1xf32>
    %cst_276 = arith.constant 7.000000e+00 : f32
    %553 = vector.broadcast %cst_276 : f32 to vector<16x1xf32>
    %554 = arith.cmpf ole, %550, %553 : vector<16x1xf32>
    %555 = arith.andi %552, %554 : vector<16x1xi1>
    %556 = arith.extui %555 : vector<16x1xi1> to vector<16x1xi32>
    %557 = arith.sitofp %556 : vector<16x1xi32> to vector<16x1xf32>
    %558 = vector.broadcast %557 : vector<16x1xf32> to vector<16x32xf32>
    %559 = arith.mulf %547, %558 : vector<16x32xf32>
    %560 = vector.broadcast %548 : vector<1x32xf32> to vector<16x32xf32>
    %561 = arith.mulf %559, %560 : vector<16x32xf32>
    %562 = arith.addf %546, %561 : vector<16x32xf32>
    %c3_277 = arith.constant 3 : index
    %c0_278 = arith.constant 0 : index
    %563 = vector.load %arg18[%c3_277, %c0_278] : memref<4x32xf32, #tpu.memory_space<vmem>>, vector<1x32xf32>
    %564 = vector.broadcast %563 : vector<1x32xf32> to vector<16x32xf32>
    %565 = arith.addf %562, %564 : vector<16x32xf32>
    %cst_279 = arith.constant 0.000000e+00 : f32
    %566 = vector.broadcast %cst_279 : f32 to vector<16x32xf32>
    %567 = arith.maximumf %565, %566 : vector<16x32xf32>
    %568 = arith.addf %439, %567 : vector<16x32xf32>
    %c0_280 = arith.constant 0 : index
    %c0_281 = arith.constant 0 : index
    %569 = vector.load %arg19[%c0_280, %c0_281] : memref<32x32xf32, #tpu.memory_space<vmem>>, vector<32x32xf32>
    %cst_282 = arith.constant dense<0.000000e+00> : vector<16x32xf32>
    %570 = tpu.matmul %568, %569, %cst_282 {dimension_numbers = #tpu.dot_dimension_numbers<[1], [0], [0], [1], [0, 0, 1, 1], [], []>} : vector<16x32xf32>, vector<32x32xf32>, vector<16x32xf32> -> vector<16x32xf32>
    %c0_283 = arith.constant 0 : index
    %c0_284 = arith.constant 0 : index
    %571 = vector.load %arg20[%c0_283, %c0_284] : memref<1x32xf32, #tpu.memory_space<vmem>>, vector<1x32xf32>
    %572 = vector.broadcast %571 : vector<1x32xf32> to vector<16x32xf32>
    %573 = arith.addf %570, %572 : vector<16x32xf32>
    %574 = arith.addf %0, %573 : vector<16x32xf32>
    %cst_285 = arith.constant dense<0.000000e+00> : vector<16xf32>
    %575 = vector.multi_reduction <add>, %574, %cst_285 [1] : vector<16x32xf32> to vector<16xf32>
    %576 = vector.shape_cast %575 : vector<16xf32> to vector<16x1xf32>
    %cst_286 = arith.constant 3.200000e+01 : f32
    %577 = vector.broadcast %cst_286 : f32 to vector<16x1xf32>
    %578 = arith.divf %576, %577 : vector<16x1xf32>
    %579 = vector.broadcast %578 : vector<16x1xf32> to vector<16x32xf32>
    %580 = arith.subf %574, %579 : vector<16x32xf32>
    %581 = arith.mulf %580, %580 : vector<16x32xf32>
    %cst_287 = arith.constant dense<0.000000e+00> : vector<16xf32>
    %582 = vector.multi_reduction <add>, %581, %cst_287 [1] : vector<16x32xf32> to vector<16xf32>
    %583 = vector.shape_cast %582 : vector<16xf32> to vector<16x1xf32>
    %cst_288 = arith.constant 3.200000e+01 : f32
    %584 = vector.broadcast %cst_288 : f32 to vector<16x1xf32>
    %585 = arith.divf %583, %584 : vector<16x1xf32>
    %586 = vector.broadcast %578 : vector<16x1xf32> to vector<16x32xf32>
    %587 = arith.subf %574, %586 : vector<16x32xf32>
    %cst_289 = arith.constant 9.99999997E-7 : f32
    %588 = vector.broadcast %cst_289 : f32 to vector<16x1xf32>
    %589 = arith.addf %585, %588 : vector<16x1xf32>
    %590 = math.rsqrt %589 : vector<16x1xf32>
    %591 = vector.broadcast %590 : vector<16x1xf32> to vector<16x32xf32>
    %592 = arith.mulf %587, %591 : vector<16x32xf32>
    %cst_290 = arith.constant 1.000000e+00 : f32
    %593 = vector.broadcast %cst_290 : f32 to vector<16x32xf32>
    %594 = arith.addf %593, %99 : vector<16x32xf32>
    %595 = arith.mulf %592, %594 : vector<16x32xf32>
    %596 = arith.addf %595, %98 : vector<16x32xf32>
    %c0_291 = arith.constant 0 : index
    %c0_292 = arith.constant 0 : index
    %597 = vector.load %arg21[%c0_291, %c0_292] : memref<32x128xf32, #tpu.memory_space<vmem>>, vector<32x128xf32>
    %cst_293 = arith.constant dense<0.000000e+00> : vector<16x128xf32>
    %598 = tpu.matmul %596, %597, %cst_293 {dimension_numbers = #tpu.dot_dimension_numbers<[1], [0], [0], [1], [0, 0, 1, 1], [], []>} : vector<16x32xf32>, vector<32x128xf32>, vector<16x128xf32> -> vector<16x128xf32>
    %c0_294 = arith.constant 0 : index
    %c0_295 = arith.constant 0 : index
    %599 = vector.load %arg22[%c0_294, %c0_295] : memref<1x128xf32, #tpu.memory_space<vmem>>, vector<1x128xf32>
    %600 = vector.broadcast %599 : vector<1x128xf32> to vector<16x128xf32>
    %601 = arith.addf %598, %600 : vector<16x128xf32>
    %cst_296 = arith.constant 0.000000e+00 : f32
    %602 = vector.broadcast %cst_296 : f32 to vector<16x128xf32>
    %603 = arith.maximumf %601, %602 : vector<16x128xf32>
    %c0_297 = arith.constant 0 : index
    %c0_298 = arith.constant 0 : index
    %604 = vector.load %arg23[%c0_297, %c0_298] : memref<128x32xf32, #tpu.memory_space<vmem>>, vector<128x32xf32>
    %cst_299 = arith.constant dense<0.000000e+00> : vector<16x32xf32>
    %605 = tpu.matmul %603, %604, %cst_299 {dimension_numbers = #tpu.dot_dimension_numbers<[1], [0], [0], [1], [0, 0, 1, 1], [], []>} : vector<16x128xf32>, vector<128x32xf32>, vector<16x32xf32> -> vector<16x32xf32>
    %c0_300 = arith.constant 0 : index
    %c0_301 = arith.constant 0 : index
    %606 = vector.load %arg24[%c0_300, %c0_301] : memref<1x32xf32, #tpu.memory_space<vmem>>, vector<1x32xf32>
    %607 = vector.broadcast %606 : vector<1x32xf32> to vector<16x32xf32>
    %608 = arith.addf %605, %607 : vector<16x32xf32>
    %609 = arith.addf %574, %608 : vector<16x32xf32>
    %c0_302 = arith.constant 0 : index
    %c0_303 = arith.constant 0 : index
    %610 = vector.load %arg25[%c0_302, %c0_303] : memref<16x32xf32, #tpu.memory_space<vmem>>, vector<16x32xf32>
    tpu.vector_store %arg25[%c0_302, %c0_303], %609 {strides = array<i32>} : memref<16x32xf32, #tpu.memory_space<vmem>>, vector<16x32xf32>,
    return
  }
  func.func @transform_0(%arg0: i32) -> (i32, i32) {
    %c0_i32 = arith.constant 0 : i32
    %c0_i32_0 = arith.constant 0 : i32
    return %arg0, %c0_i32 : i32, i32
  }
  func.func @transform_1(%arg0: i32) -> (i32, i32) {
    %c0_i32 = arith.constant 0 : i32
    %c0_i32_0 = arith.constant 0 : i32
    return %arg0, %c0_i32 : i32, i32
  }
  func.func @transform_2(%arg0: i32) -> (i32, i32) {
    %c0_i32 = arith.constant 0 : i32
    %c0_i32_0 = arith.constant 0 : i32
    return %arg0, %c0_i32 : i32, i32
  }
  func.func @transform_3(%arg0: i32) -> (i32, i32) {
    %c0_i32 = arith.constant 0 : i32
    %c0_i32_0 = arith.constant 0 : i32
    return %arg0, %c0_i32 : i32, i32
  }
  func.func @transform_4(%arg0: i32) -> (i32, i32) {
    %c0_i32 = arith.constant 0 : i32
    %c0_i32_0 = arith.constant 0 : i32
    %c0_i32_1 = arith.constant 0 : i32
    return %c0_i32, %c0_i32_0 : i32, i32
  }
  func.func @transform_5(%arg0: i32) -> (i32, i32) {
    %c0_i32 = arith.constant 0 : i32
    %c0_i32_0 = arith.constant 0 : i32
    %c0_i32_1 = arith.constant 0 : i32
    return %c0_i32, %c0_i32_0 : i32, i32
  }
  func.func @transform_6(%arg0: i32) -> (i32, i32) {
    %c0_i32 = arith.constant 0 : i32
    %c0_i32_0 = arith.constant 0 : i32
    %c0_i32_1 = arith.constant 0 : i32
    return %c0_i32, %c0_i32_0 : i32, i32
  }
  func.func @transform_7(%arg0: i32) -> (i32, i32) {
    %c0_i32 = arith.constant 0 : i32
    %c0_i32_0 = arith.constant 0 : i32
    %c0_i32_1 = arith.constant 0 : i32
    return %c0_i32, %c0_i32_0 : i32, i32
  }
  func.func @transform_8(%arg0: i32) -> (i32, i32) {
    %c0_i32 = arith.constant 0 : i32
    %c0_i32_0 = arith.constant 0 : i32
    %c0_i32_1 = arith.constant 0 : i32
    return %c0_i32, %c0_i32_0 : i32, i32
  }
  func.func @transform_9(%arg0: i32) -> (i32, i32) {
    %c0_i32 = arith.constant 0 : i32
    %c0_i32_0 = arith.constant 0 : i32
    %c0_i32_1 = arith.constant 0 : i32
    return %c0_i32, %c0_i32_0 : i32, i32
  }
  func.func @transform_10(%arg0: i32) -> (i32, i32) {
    %c0_i32 = arith.constant 0 : i32
    %c0_i32_0 = arith.constant 0 : i32
    %c0_i32_1 = arith.constant 0 : i32
    return %c0_i32, %c0_i32_0 : i32, i32
  }
  func.func @transform_11(%arg0: i32) -> (i32, i32) {
    %c0_i32 = arith.constant 0 : i32
    %c0_i32_0 = arith.constant 0 : i32
    %c0_i32_1 = arith.constant 0 : i32
    return %c0_i32, %c0_i32_0 : i32, i32
  }
  func.func @transform_12(%arg0: i32) -> (i32, i32) {
    %c0_i32 = arith.constant 0 : i32
    %c0_i32_0 = arith.constant 0 : i32
    %c0_i32_1 = arith.constant 0 : i32
    return %c0_i32, %c0_i32_0 : i32, i32
  }
  func.func @transform_13(%arg0: i32) -> (i32, i32) {
    %c0_i32 = arith.constant 0 : i32
    %c0_i32_0 = arith.constant 0 : i32
    %c0_i32_1 = arith.constant 0 : i32
    return %c0_i32, %c0_i32_0 : i32, i32
  }
  func.func @transform_14(%arg0: i32) -> (i32, i32) {
    %c0_i32 = arith.constant 0 : i32
    %c0_i32_0 = arith.constant 0 : i32
    %c0_i32_1 = arith.constant 0 : i32
    return %c0_i32, %c0_i32_0 : i32, i32
  }
  func.func @transform_15(%arg0: i32) -> (i32, i32) {
    %c0_i32 = arith.constant 0 : i32
    %c0_i32_0 = arith.constant 0 : i32
    %c0_i32_1 = arith.constant 0 : i32
    return %c0_i32, %c0_i32_0 : i32, i32
  }
  func.func @transform_16(%arg0: i32) -> (i32, i32) {
    %c0_i32 = arith.constant 0 : i32
    %c0_i32_0 = arith.constant 0 : i32
    %c0_i32_1 = arith.constant 0 : i32
    return %c0_i32, %c0_i32_0 : i32, i32
  }
  func.func @transform_17(%arg0: i32) -> (i32, i32) {
    %c0_i32 = arith.constant 0 : i32
    %c0_i32_0 = arith.constant 0 : i32
    %c0_i32_1 = arith.constant 0 : i32
    return %c0_i32, %c0_i32_0 : i32, i32
  }
  func.func @transform_18(%arg0: i32) -> (i32, i32) {
    %c0_i32 = arith.constant 0 : i32
    %c0_i32_0 = arith.constant 0 : i32
    %c0_i32_1 = arith.constant 0 : i32
    return %c0_i32, %c0_i32_0 : i32, i32
  }
  func.func @transform_19(%arg0: i32) -> (i32, i32) {
    %c0_i32 = arith.constant 0 : i32
    %c0_i32_0 = arith.constant 0 : i32
    %c0_i32_1 = arith.constant 0 : i32
    return %c0_i32, %c0_i32_0 : i32, i32
  }
  func.func @transform_20(%arg0: i32) -> (i32, i32) {
    %c0_i32 = arith.constant 0 : i32
    %c0_i32_0 = arith.constant 0 : i32
    %c0_i32_1 = arith.constant 0 : i32
    return %c0_i32, %c0_i32_0 : i32, i32
  }
  func.func @transform_21(%arg0: i32) -> (i32, i32) {
    %c0_i32 = arith.constant 0 : i32
    %c0_i32_0 = arith.constant 0 : i32
    %c0_i32_1 = arith.constant 0 : i32
    return %c0_i32, %c0_i32_0 : i32, i32
  }
  func.func @transform_22(%arg0: i32) -> (i32, i32) {
    %c0_i32 = arith.constant 0 : i32
    %c0_i32_0 = arith.constant 0 : i32
    %c0_i32_1 = arith.constant 0 : i32
    return %c0_i32, %c0_i32_0 : i32, i32
  }
  func.func @transform_23(%arg0: i32) -> (i32, i32) {
    %c0_i32 = arith.constant 0 : i32
    %c0_i32_0 = arith.constant 0 : i32
    %c0_i32_1 = arith.constant 0 : i32
    return %c0_i32, %c0_i32_0 : i32, i32
  }
  func.func @transform_24(%arg0: i32) -> (i32, i32) {
    %c0_i32 = arith.constant 0 : i32
    %c0_i32_0 = arith.constant 0 : i32
    return %arg0, %c0_i32 : i32, i32
  }
}

</mosaic_0001>

<llo_original>
// kernel: tpu_custom_call.1
$region0: #{tpu_custom_call.1}
  #allocation0 [shape = 'u32[]', space=smem, size = 0x4, offset = 0x4, fixed_abs, tag = 'smem constant byte address 0x4 - core index']
  #allocation1 [shape = 'u32[144,128]{1,0:T(1,128)}', space=vmem, size = 0x12000, scoped, tag = 'internal scratch']
  %s0 = inlined_call_operand.vmem [shape: f32[16,32], index: 0, kind: input, shape index: {}]
  %s1 = inlined_call_operand.hbm [shape: f32[16,32], index: 1, kind: input, shape index: {}]
  %s2 = inlined_call_operand.vmem [shape: f32[16,1], index: 2, kind: input, shape index: {}]
  %s3 = inlined_call_operand.vmem [shape: f32[16,1], index: 3, kind: input, shape index: {}]
  %s4 = inlined_call_operand.vmem [shape: f32[16,1], index: 4, kind: input, shape index: {}]
  %s5 = inlined_call_operand.vmem [shape: f32[16,1], index: 5, kind: input, shape index: {}]
  %s6 = inlined_call_operand.hbm [shape: f32[2,16], index: 6, kind: input, shape index: {}]
  %s7 = inlined_call_operand.hbm [shape: f32[2,16], index: 7, kind: input, shape index: {}]
  %s8 = inlined_call_operand.vmem [shape: f32[16,2], index: 8, kind: input, shape index: {}]
  %s9 = inlined_call_operand.vmem [shape: f32[32,32], index: 9, kind: input, shape index: {}]
  %s10 = inlined_call_operand.vmem [shape: f32[32,32], index: 10, kind: input, shape index: {}]
  %s11 = inlined_call_operand.vmem [shape: f32[32,128], index: 11, kind: input, shape index: {}]
  %s12 = inlined_call_operand.vmem [shape: f32[1,128], index: 12, kind: input, shape index: {}]
  %s13 = inlined_call_operand.hbm [shape: f32[5,32], index: 13, kind: input, shape index: {}]
  %s14 = inlined_call_operand.vmem [shape: f32[9,32], index: 14, kind: input, shape index: {}]
  %s15 = inlined_call_operand.vmem [shape: f32[13,32], index: 15, kind: input, shape index: {}]
  %s16 = inlined_call_operand.vmem [shape: f32[17,32], index: 16, kind: input, shape index: {}]
  %s17 = inlined_call_operand.vmem [shape: f32[4,32], index: 17, kind: input, shape index: {}]
  %s18 = inlined_call_operand.vmem [shape: f32[32,32], index: 18, kind: input, shape index: {}]
  %s19 = inlined_call_operand.vmem [shape: f32[1,32], index: 19, kind: input, shape index: {}]
  %s20 = inlined_call_operand.vmem [shape: f32[32,128], index: 20, kind: input, shape index: {}]
  %s21 = inlined_call_operand.vmem [shape: f32[1,128], index: 21, kind: input, shape index: {}]
  %s22 = inlined_call_operand.vmem [shape: f32[128,32], index: 22, kind: input, shape index: {}]
  %s23 = inlined_call_operand.vmem [shape: f32[1,32], index: 23, kind: input, shape index: {}]
  %s24 = inlined_call_operand.hbm [shape: f32[16,32], index: 24, kind: output, shape index: {}]
  %s25 = sld [smem:[#allocation0]]
  $region122: #{tpu_custom_call.1} parent=0
    _
  %s27 = ssub.s32 1, %s25
  %s28 = scalar_select 0, %s27, %s25
  $region1: #{tpu_custom_call.1} parent=0
    #allocation2 [shape = 'u8[8192]{0}', space=vmem, size = 0x2000, scoped, tag = 'input window, operand 1, single buffered']
    #allocation3 [shape = 's32[1]{0}', space=sflag, size = 0x4, scoped, tag = 'scoped memory for tpu_custom_call.1']
    #allocation4 [shape = 's32[1]{0}', space=sflag, size = 0x4, scoped, tag = 'scoped memory for tpu_custom_call.1']
    #allocation5 [shape = 'u8[1024]{0}', space=vmem, size = 0x400, scoped, tag = 'input window, operand 6, single buffered']
    #allocation6 [shape = 's32[1]{0}', space=sflag, size = 0x4, scoped, tag = 'scoped memory for tpu_custom_call.1']
    #allocation7 [shape = 'u8[1024]{0}', space=vmem, size = 0x400, scoped, tag = 'input window, operand 7, single buffered']
    #allocation8 [shape = 'u8[4096]{0}', space=vmem, size = 0x1000, scoped, tag = 'input window, operand 13, single buffered']
    #allocation9 [shape = 's32[1]{0}', space=sflag, size = 0x4, scoped, tag = 'scoped memory for tpu_custom_call.1']
    #allocation10 [shape = 'u8[8192]{0}', space=vmem, size = 0x2000, scoped, tag = 'output window, operand 0, single buffered']
    %29 = vsyncpa [#allocation3], 0
    %30 = vsyncpa [#allocation6], 0
    %31 = vsyncpa [#allocation9], 0
    %32 = vsyncpa [#allocation4], 0
    // Predicated region
    $region2: #{tpu_custom_call.1} parent=1 // pred_check
      _
    $region3: #{tpu_custom_call.1} parent=1 // pred_check_branch
      %34 = sbr.rel (0) target = $region5
    $region4: #{tpu_custom_call.1} parent=1 // pred_region
      _
    $region5: #{tpu_custom_call.1} parent=1 // pred_fallthru
      _
    // Predicated region
    $region6: #{tpu_custom_call.1} parent=1 // pred_check
      _
    $region7: #{tpu_custom_call.1} parent=1 // pred_check_branch
      %36 = sbr.rel (0) target = $region9
    $region8: #{tpu_custom_call.1} parent=1 // pred_region
      %s38 = ssub.s32 256, 256
      %39 = vsyncadd [#allocation3], %s38
      %s40 = sshll.u32 [#allocation2], 4
      %s41 = int_to_ptr.vmem [resolvable:$true] %s40
      %46 = dma.hbm_to_vmem [thread:$0]  %s1, 256, %s41, [#allocation3], 128, 128, 8
    $region9: #{tpu_custom_call.1} parent=1 // pred_fallthru
      _
    // Predicated region
    $region10: #{tpu_custom_call.1} parent=1 // pred_check
      _
    $region11: #{tpu_custom_call.1} parent=1 // pred_check_branch
      %48 = sbr.rel (0) target = $region13
    $region12: #{tpu_custom_call.1} parent=1 // pred_region
      _
    $region13: #{tpu_custom_call.1} parent=1 // pred_fallthru
      _
    // Predicated region
    $region14: #{tpu_custom_call.1} parent=1 // pred_check
      _
    $region15: #{tpu_custom_call.1} parent=1 // pred_check_branch
      %50 = sbr.rel (0) target = $region17
    $region16: #{tpu_custom_call.1} parent=1 // pred_region
      _
    $region17: #{tpu_custom_call.1} parent=1 // pred_fallthru
      _
    // Predicated region
    $region18: #{tpu_custom_call.1} parent=1 // pred_check
      _
    $region19: #{tpu_custom_call.1} parent=1 // pred_check_branch
      %52 = sbr.rel (0) target = $region21
    $region20: #{tpu_custom_call.1} parent=1 // pred_region
      _
    $region21: #{tpu_custom_call.1} parent=1 // pred_fallthru
      _
    // Predicated region
    $region22: #{tpu_custom_call.1} parent=1 // pred_check
      _
    $region23: #{tpu_custom_call.1} parent=1 // pred_check_branch
      %54 = sbr.rel (0) target = $region25
    $region24: #{tpu_custom_call.1} parent=1 // pred_region
      _
    $region25: #{tpu_custom_call.1} parent=1 // pred_fallthru
      _
    // Predicated region
    $region26: #{tpu_custom_call.1} parent=1 // pred_check
      _
    $region27: #{tpu_custom_call.1} parent=1 // pred_check_branch
      %56 = sbr.rel (0) target = $region29
    $region28: #{tpu_custom_call.1} parent=1 // pred_region
      %s58 = ssub.s32 32, 32
      %59 = vsyncadd [#allocation6], %s58
      %s61 = sshll.u32 [#allocation5], 4
      %s62 = int_to_ptr.vmem [resolvable:$true] %s61
      %64 = dma.hbm_to_vmem [thread:$0]  %s6, 32, %s62, [#allocation6]
    $region29: #{tpu_custom_call.1} parent=1 // pred_fallthru
      _
    // Predicated region
    $region30: #{tpu_custom_call.1} parent=1 // pred_check
      _
    $region31: #{tpu_custom_call.1} parent=1 // pred_check_branch
      %66 = sbr.rel (0) target = $region33
    $region32: #{tpu_custom_call.1} parent=1 // pred_region
      %s68 = ssub.s32 32, 32
      %69 = vsyncadd [#allocation6], %s68
      %s71 = sshll.u32 [#allocation7], 4
      %s72 = int_to_ptr.vmem [resolvable:$true] %s71
      %74 = dma.hbm_to_vmem [thread:$0]  %s7, 32, %s72, [#allocation6]
    $region33: #{tpu_custom_call.1} parent=1 // pred_fallthru
      _
    // Predicated region
    $region34: #{tpu_custom_call.1} parent=1 // pred_check
      _
    $region35: #{tpu_custom_call.1} parent=1 // pred_check_branch
      %76 = sbr.rel (0) target = $region37
    $region36: #{tpu_custom_call.1} parent=1 // pred_region
      _
    $region37: #{tpu_custom_call.1} parent=1 // pred_fallthru
      _
    // Predicated region
    $region38: #{tpu_custom_call.1} parent=1 // pred_check
      _
    $region39: #{tpu_custom_call.1} parent=1 // pred_check_branch
      %78 = sbr.rel (0) target = $region41
    $region40: #{tpu_custom_call.1} parent=1 // pred_region
      _
    $region41: #{tpu_custom_call.1} parent=1 // pred_fallthru
      _
    // Predicated region
    $region42: #{tpu_custom_call.1} parent=1 // pred_check
      _
    $region43: #{tpu_custom_call.1} parent=1 // pred_check_branch
      %80 = sbr.rel (0) target = $region45
    $region44: #{tpu_custom_call.1} parent=1 // pred_region
      _
    $region45: #{tpu_custom_call.1} parent=1 // pred_fallthru
      _
    // Predicated region
    $region46: #{tpu_custom_call.1} parent=1 // pred_check
      _
    $region47: #{tpu_custom_call.1} parent=1 // pred_check_branch
      %82 = sbr.rel (0) target = $region49
    $region48: #{tpu_custom_call.1} parent=1 // pred_region
      _
    $region49: #{tpu_custom_call.1} parent=1 // pred_fallthru
      _
    // Predicated region
    $region50: #{tpu_custom_call.1} parent=1 // pred_check
      _
    $region51: #{tpu_custom_call.1} parent=1 // pred_check_branch
      %84 = sbr.rel (0) target = $region53
    $region52: #{tpu_custom_call.1} parent=1 // pred_region
      _
    $region53: #{tpu_custom_call.1} parent=1 // pred_fallthru
      _
    // Predicated region
    $region54: #{tpu_custom_call.1} parent=1 // pred_check
      _
    $region55: #{tpu_custom_call.1} parent=1 // pred_check_branch
      %86 = sbr.rel (0) target = $region57
    $region56: #{tpu_custom_call.1} parent=1 // pred_region
      %s88 = ssub.s32 128, 128
      %89 = vsyncadd [#allocation9], %s88
      %s91 = sshll.u32 [#allocation8], 4
      %s92 = int_to_ptr.vmem [resolvable:$true] %s91
      %94 = dma.hbm_to_vmem [thread:$0]  %s13, 128, %s92, [#allocation9]
    $region57: #{tpu_custom_call.1} parent=1 // pred_fallthru
      _
    // Predicated region
    $region58: #{tpu_custom_call.1} parent=1 // pred_check
      _
    $region59: #{tpu_custom_call.1} parent=1 // pred_check_branch
      %96 = sbr.rel (0) target = $region61
    $region60: #{tpu_custom_call.1} parent=1 // pred_region
      _
    $region61: #{tpu_custom_call.1} parent=1 // pred_fallthru
      _
    // Predicated region
    $region62: #{tpu_custom_call.1} parent=1 // pred_check
      _
    $region63: #{tpu_custom_call.1} parent=1 // pred_check_branch
      %98 = sbr.rel (0) target = $region65
    $region64: #{tpu_custom_call.1} parent=1 // pred_region
      _
    $region65: #{tpu_custom_call.1} parent=1 // pred_fallthru
      _
    // Predicated region
    $region66: #{tpu_custom_call.1} parent=1 // pred_check
      _
    $region67: #{tpu_custom_call.1} parent=1 // pred_check_branch
      %100 = sbr.rel (0) target = $region69
    $region68: #{tpu_custom_call.1} parent=1 // pred_region
      _
    $region69: #{tpu_custom_call.1} parent=1 // pred_fallthru
      _
    // Predicated region
    $region70: #{tpu_custom_call.1} parent=1 // pred_check
      _
    $region71: #{tpu_custom_call.1} parent=1 // pred_check_branch
      %102 = sbr.rel (0) target = $region73
    $region72: #{tpu_custom_call.1} parent=1 // pred_region
      _
    $region73: #{tpu_custom_call.1} parent=1 // pred_fallthru
      _
    // Predicated region
    $region74: #{tpu_custom_call.1} parent=1 // pred_check
      _
    $region75: #{tpu_custom_call.1} parent=1 // pred_check_branch
      %104 = sbr.rel (0) target = $region77
    $region76: #{tpu_custom_call.1} parent=1 // pred_region
      _
    $region77: #{tpu_custom_call.1} parent=1 // pred_fallthru
      _
    // Predicated region
    $region78: #{tpu_custom_call.1} parent=1 // pred_check
      _
    $region79: #{tpu_custom_call.1} parent=1 // pred_check_branch
      %106 = sbr.rel (0) target = $region81
    $region80: #{tpu_custom_call.1} parent=1 // pred_region
      _
    $region81: #{tpu_custom_call.1} parent=1 // pred_fallthru
      _
    // Predicated region
    $region82: #{tpu_custom_call.1} parent=1 // pred_check
      _
    $region83: #{tpu_custom_call.1} parent=1 // pred_check_branch
      %108 = sbr.rel (0) target = $region85
    $region84: #{tpu_custom_call.1} parent=1 // pred_region
      _
    $region85: #{tpu_custom_call.1} parent=1 // pred_fallthru
      _
    // Predicated region
    $region86: #{tpu_custom_call.1} parent=1 // pred_check
      _
    $region87: #{tpu_custom_call.1} parent=1 // pred_check_branch
      %110 = sbr.rel (0) target = $region89
    $region88: #{tpu_custom_call.1} parent=1 // pred_region
      _
    $region89: #{tpu_custom_call.1} parent=1 // pred_fallthru
      _
    // Predicated region
    $region90: #{tpu_custom_call.1} parent=1 // pred_check
      _
    $region91: #{tpu_custom_call.1} parent=1 // pred_check_branch
      %112 = sbr.rel (0) target = $region93
    $region92: #{tpu_custom_call.1} parent=1 // pred_region
      _
    $region93: #{tpu_custom_call.1} parent=1 // pred_fallthru
      _
    // Predicated region
    $region94: #{tpu_custom_call.1} parent=1 // pred_check
      _
    $region95: #{tpu_custom_call.1} parent=1 // pred_check_branch
      %114 = sbr.rel (0) target = $region97
    $region96: #{tpu_custom_call.1} parent=1 // pred_region
      _
    $region97: #{tpu_custom_call.1} parent=1 // pred_fallthru
      _
    // Predicated region
    $region98: #{tpu_custom_call.1} parent=1 // pred_check
      _
    $region99: #{tpu_custom_call.1} parent=1 // pred_check_branch
      %116 = sbr.rel (0) target = $region101
    $region100: #{tpu_custom_call.1} parent=1 // pred_region
      %117 = dma.done [#allocation3], 256
    $region101: #{tpu_custom_call.1} parent=1 // pred_fallthru
      _
    // Predicated region
    $region102: #{tpu_custom_call.1} parent=1 // pred_check
      _
    $region103: #{tpu_custom_call.1} parent=1 // pred_check_branch
      %119 = sbr.rel (0) target = $region105
    $region104: #{tpu_custom_call.1} parent=1 // pred_region
      %120 = dma.done [#allocation6], 32
    $region105: #{tpu_custom_call.1} parent=1 // pred_fallthru
      _
    // Predicated region
    $region106: #{tpu_custom_call.1} parent=1 // pred_check
      _
    $region107: #{tpu_custom_call.1} parent=1 // pred_check_branch
      %122 = sbr.rel (0) target = $region109
    $region108: #{tpu_custom_call.1} parent=1 // pred_region
      %123 = dma.done [#allocation6], 32
    $region109: #{tpu_custom_call.1} parent=1 // pred_fallthru
      _
    // Predicated region
    $region110: #{tpu_custom_call.1} parent=1 // pred_check
      _
    $region111: #{tpu_custom_call.1} parent=1 // pred_check_branch
      %125 = sbr.rel (0) target = $region113
    $region112: #{tpu_custom_call.1} parent=1 // pred_region
      %126 = dma.done [#allocation9], 128
    $region113: #{tpu_custom_call.1} parent=1 // pred_fallthru
      _
    %v127 = vld [vmem:[%s0] sm:$0xff]
    %v128 = vld [vmem:[%s0 + $0x8] sm:$0xff]
    %v129 = vld [vmem:[#allocation2] sm:$0xff]
    %v130 = vld [vmem:[#allocation2 + $0x8] sm:$0xff]
    %v131 = vld [vmem:[%s2] sm:$0xff]
    %v132 = vld [vmem:[%s2 + $0x8] sm:$0xff]
    %v133 = vld [vmem:[%s3] sm:$0xff]
    %v134 = vld [vmem:[%s3 + $0x8] sm:$0xff]
    %v135 = vld [vmem:[%s4] sm:$0xff]
    %v136 = vld [vmem:[%s4 + $0x8] sm:$0xff]
    %v137 = vld [vmem:[%s5] sm:$0xff]
    %v138 = vld [vmem:[%s5 + $0x8] sm:$0xff]
    %v139 = vld [vmem:[%s9] sm:$0xff]
    %v140 = vld [vmem:[%s9 + $0x8] sm:$0xff]
    %v141 = vld [vmem:[%s9 + $0x10] sm:$0xff]
    %v142 = vld [vmem:[%s9 + $0x18] sm:$0xff]
    %vm143 = vcmask 261120
    %v145 = vsel %vm143, %v127, 0
    %v148 = vsel %vm143, %v128, 0
    %150 = vmatprep.subr.mxu0 0.0
    %151 = vmatpush1.msra.mxu0 0.0
    %152 = vmatprep.subr.mxu0 0.0
    %153 = vmatpush1.msra.mxu0 0.0
    %154 = vmatprep.subr.mxu0 0.0
    %155 = vmatpush1.msra.mxu0 0.0
    %156 = vmatprep.subr.mxu0 0.0
    %157 = vmatpush1.msra.mxu0 0.0
    %158 = vmatprep.subr.mxu0 0.0
    %159 = vmatpush1.msra.mxu0 0.0
    %160 = vmatprep.subr.mxu0 0.0
    %161 = vmatpush1.msra.mxu0 0.0
    %162 = vmatprep.subr.mxu0 0.0
    %163 = vmatpush1.msra.mxu0 0.0
    %164 = vmatprep.subr.mxu0 0.0
    %165 = vmatpush1.msra.mxu0 0.0
    %166 = vmatprep.subr.mxu0 0.0
    %167 = vmatpush1.msra.mxu0 0.0
    %168 = vmatprep.subr.mxu0 0.0
    %169 = vmatpush1.msra.mxu0 0.0
    %170 = vmatprep.subr.mxu0 0.0
    %171 = vmatpush1.msra.mxu0 0.0
    %172 = vmatprep.subr.mxu0 0.0
    %173 = vmatpush1.msra.mxu0 0.0
    %174 = vmatprep.subr.mxu0 0.0
    %175 = vmatpush1.msra.mxu0 %v142
    %176 = vmatprep.subr.mxu0 0.0
    %177 = vmatpush1.msra.mxu0 %v141
    %178 = vmatprep.subr.mxu0 0.0
    %179 = vmatpush1.msra.mxu0 %v140
    %180 = vmatprep.subr.mxu0 0.0
    %181 = vmatpush1.msra.mxu0 %v139
    %182 = vmatprep.subr.mxu0 0.0
    %183 = vmatpush2.msra.mxu0 0.0
    %184 = vmatprep.subr.mxu0 0.0
    %185 = vmatpush2.msra.mxu0 0.0
    %186 = vmatprep.subr.mxu0 0.0
    %187 = vmatpush2.msra.mxu0 0.0
    %188 = vmatprep.subr.mxu0 0.0
    %189 = vmatpush2.msra.mxu0 0.0
    %190 = vmatprep.subr.mxu0 0.0
    %191 = vmatpush2.msra.mxu0 0.0
    %192 = vmatprep.subr.mxu0 0.0
    %193 = vmatpush2.msra.mxu0 0.0
    %194 = vmatprep.subr.mxu0 0.0
    %195 = vmatpush2.msra.mxu0 0.0
    %196 = vmatprep.subr.mxu0 0.0
    %197 = vmatpush2.msra.mxu0 0.0
    %198 = vmatprep.subr.mxu0 0.0
    %199 = vmatpush2.msra.mxu0 0.0
    %200 = vmatprep.subr.mxu0 0.0
    %201 = vmatpush2.msra.mxu0 0.0
    %202 = vmatprep.subr.mxu0 0.0
    %203 = vmatpush2.msra.mxu0 0.0
    %204 = vmatprep.subr.mxu0 0.0
    %205 = vmatpush2.msra.mxu0 0.0
    %206 = vmatprep.subr.mxu0 0.0
    %207 = vmatpush2.msra.mxu0 0.0
    %208 = vmatprep.subr.mxu0 0.0
    %209 = vmatpush2.msra.mxu0 0.0
    %210 = vmatprep.subr.mxu0 0.0
    %211 = vmatpush2.msra.mxu0 0.0
    %212 = vmatprep.subr.mxu0 0.0
    %213 = vmatpush2.msra.mxu0 0.0
    %214 = vmatprep.mubr.f32.mxu0 0.0
    %215 = vmatmul.mubr.f32.gmra.mxu0 %v145
    %v216 = vpop.f32.mrf.mxu0
    %v217 = vadd.f32 0.0, %v216
    %v218 = vpop.f32.mrf.mxu0
    %219 = vmatprep.mubr.f32.mxu0 0.0
    %220 = vmatmul.mubr.f32.gmra.mxu0 %v148
    %v221 = vpop.f32.mrf.mxu0
    %v222 = vadd.f32 0.0, %v221
    %v223 = vpop.f32.mrf.mxu0
    %224 = vdwg.mxu0
    %v225 = vld [vmem:[%s10] sm:$0xff]
    %v226 = vld [vmem:[%s10 + $0x8] sm:$0xff]
    %v227 = vld [vmem:[%s10 + $0x10] sm:$0xff]
    %v228 = vld [vmem:[%s10 + $0x18] sm:$0xff]
    %229 = vmatprep.subr.mxu0 0.0
    %230 = vmatpush1.msra.mxu0 0.0
    %231 = vmatprep.subr.mxu0 0.0
    %232 = vmatpush1.msra.mxu0 0.0
    %233 = vmatprep.subr.mxu0 0.0
    %234 = vmatpush1.msra.mxu0 0.0
    %235 = vmatprep.subr.mxu0 0.0
    %236 = vmatpush1.msra.mxu0 0.0
    %237 = vmatprep.subr.mxu0 0.0
    %238 = vmatpush1.msra.mxu0 0.0
    %239 = vmatprep.subr.mxu0 0.0
    %240 = vmatpush1.msra.mxu0 0.0
    %241 = vmatprep.subr.mxu0 0.0
    %242 = vmatpush1.msra.mxu0 0.0
    %243 = vmatprep.subr.mxu0 0.0
    %244 = vmatpush1.msra.mxu0 0.0
    %245 = vmatprep.subr.mxu0 0.0
    %246 = vmatpush1.msra.mxu0 0.0
    %247 = vmatprep.subr.mxu0 0.0
    %248 = vmatpush1.msra.mxu0 0.0
    %249 = vmatprep.subr.mxu0 0.0
    %250 = vmatpush1.msra.mxu0 0.0
    %251 = vmatprep.subr.mxu0 0.0
    %252 = vmatpush1.msra.mxu0 0.0
    %253 = vmatprep.subr.mxu0 0.0
    %254 = vmatpush1.msra.mxu0 %v228
    %255 = vmatprep.subr.mxu0 0.0
    %256 = vmatpush1.msra.mxu0 %v227
    %257 = vmatprep.subr.mxu0 0.0
    %258 = vmatpush1.msra.mxu0 %v226
    %259 = vmatprep.subr.mxu0 0.0
    %260 = vmatpush1.msra.mxu0 %v225
    %261 = vmatprep.subr.mxu0 0.0
    %262 = vmatpush2.msra.mxu0 0.0
    %263 = vmatprep.subr.mxu0 0.0
    %264 = vmatpush2.msra.mxu0 0.0
    %265 = vmatprep.subr.mxu0 0.0
    %266 = vmatpush2.msra.mxu0 0.0
    %267 = vmatprep.subr.mxu0 0.0
    %268 = vmatpush2.msra.mxu0 0.0
    %269 = vmatprep.subr.mxu0 0.0
    %270 = vmatpush2.msra.mxu0 0.0
    %271 = vmatprep.subr.mxu0 0.0
    %272 = vmatpush2.msra.mxu0 0.0
    %273 = vmatprep.subr.mxu0 0.0
    %274 = vmatpush2.msra.mxu0 0.0
    %275 = vmatprep.subr.mxu0 0.0
    %276 = vmatpush2.msra.mxu0 0.0
    %277 = vmatprep.subr.mxu0 0.0
    %278 = vmatpush2.msra.mxu0 0.0
    %279 = vmatprep.subr.mxu0 0.0
    %280 = vmatpush2.msra.mxu0 0.0
    %281 = vmatprep.subr.mxu0 0.0
    %282 = vmatpush2.msra.mxu0 0.0
    %283 = vmatprep.subr.mxu0 0.0
    %284 = vmatpush2.msra.mxu0 0.0
    %285 = vmatprep.subr.mxu0 0.0
    %286 = vmatpush2.msra.mxu0 0.0
    %287 = vmatprep.subr.mxu0 0.0
    %288 = vmatpush2.msra.mxu0 0.0
    %289 = vmatprep.subr.mxu0 0.0
    %290 = vmatpush2.msra.mxu0 0.0
    %291 = vmatprep.subr.mxu0 0.0
    %292 = vmatpush2.msra.mxu0 0.0
    %293 = vmatprep.mubr.f32.mxu0 0.0
    %294 = vmatmul.mubr.f32.gmra.mxu0 %v145
    %v295 = vpop.f32.mrf.mxu0
    %v296 = vadd.f32 0.0, %v295
    %v297 = vpop.f32.mrf.mxu0
    %298 = vmatprep.mubr.f32.mxu0 0.0
    %299 = vmatmul.mubr.f32.gmra.mxu0 %v148
    %v300 = vpop.f32.mrf.mxu0
    %v301 = vadd.f32 0.0, %v300
    %v302 = vpop.f32.mrf.mxu0
    %303 = vdwg.mxu0
    %v304 = vsub.f32 1.0, %v133
    %v305 = vsub.f32 1.0, %v134
    %v306 = vld [vmem:[#allocation7] sm:$0x3]
    %308 = vset.pattern.permute.xlu0 0
    %309 = vperm.xlu0 %308, %v304
    %v310 = vpop.permute.xlu0 %309
    %313 = vset.pattern.permute.xlu0 0
    %314 = vperm.xlu0 %313, %v305
    %v315 = vpop.permute.xlu0 %314
    %v317 = vmul.f32 %v129, %v310
    %v318 = vmul.f32 %v130, %v315
    %vm319 = vcmask 130048
    %v321 = vsel %vm319, %v306, 0
    %323 = vmatprep.subr.mxu0 0.0
    %324 = vmatpush1.msra.mxu0 0.0
    %325 = vmatprep.subr.mxu0 0.0
    %326 = vmatpush1.msra.mxu0 0.0
    %327 = vmatprep.subr.mxu0 0.0
    %328 = vmatpush1.msra.mxu0 0.0
    %329 = vmatprep.subr.mxu0 0.0
    %330 = vmatpush1.msra.mxu0 0.0
    %331 = vmatprep.subr.mxu0 0.0
    %332 = vmatpush1.msra.mxu0 0.0
    %333 = vmatprep.subr.mxu0 0.0
    %334 = vmatpush1.msra.mxu0 0.0
    %335 = vmatprep.subr.mxu0 0.0
    %336 = vmatpush1.msra.mxu0 0.0
    %337 = vmatprep.subr.mxu0 0.0
    %338 = vmatpush1.msra.mxu0 0.0
    %339 = vmatprep.subr.mxu0 0.0
    %340 = vmatpush1.msra.mxu0 0.0
    %341 = vmatprep.subr.mxu0 0.0
    %342 = vmatpush1.msra.mxu0 0.0
    %343 = vmatprep.subr.mxu0 0.0
    %344 = vmatpush1.msra.mxu0 0.0
    %345 = vmatprep.subr.mxu0 0.0
    %346 = vmatpush1.msra.mxu0 0.0
    %347 = vmatprep.subr.mxu0 0.0
    %348 = vmatpush1.msra.mxu0 0.0
    %349 = vmatprep.subr.mxu0 0.0
    %350 = vmatpush1.msra.mxu0 0.0
    %351 = vmatprep.subr.mxu0 0.0
    %352 = vmatpush1.msra.mxu0 %v318
    %353 = vmatprep.subr.mxu0 0.0
    %354 = vmatpush1.msra.mxu0 %v317
    %355 = vmatprep.subr.mxu0 0.0
    %356 = vmatpush2.msra.mxu0 0.0
    %357 = vmatprep.subr.mxu0 0.0
    %358 = vmatpush2.msra.mxu0 0.0
    %359 = vmatprep.subr.mxu0 0.0
    %360 = vmatpush2.msra.mxu0 0.0
    %361 = vmatprep.subr.mxu0 0.0
    %362 = vmatpush2.msra.mxu0 0.0
    %363 = vmatprep.subr.mxu0 0.0
    %364 = vmatpush2.msra.mxu0 0.0
    %365 = vmatprep.subr.mxu0 0.0
    %366 = vmatpush2.msra.mxu0 0.0
    %367 = vmatprep.subr.mxu0 0.0
    %368 = vmatpush2.msra.mxu0 0.0
    %369 = vmatprep.subr.mxu0 0.0
    %370 = vmatpush2.msra.mxu0 0.0
    %371 = vmatprep.subr.mxu0 0.0
    %372 = vmatpush2.msra.mxu0 0.0
    %373 = vmatprep.subr.mxu0 0.0
    %374 = vmatpush2.msra.mxu0 0.0
    %375 = vmatprep.subr.mxu0 0.0
    %376 = vmatpush2.msra.mxu0 0.0
    %377 = vmatprep.subr.mxu0 0.0
    %378 = vmatpush2.msra.mxu0 0.0
    %379 = vmatprep.subr.mxu0 0.0
    %380 = vmatpush2.msra.mxu0 0.0
    %381 = vmatprep.subr.mxu0 0.0
    %382 = vmatpush2.msra.mxu0 0.0
    %383 = vmatprep.subr.mxu0 0.0
    %384 = vmatpush2.msra.mxu0 0.0
    %385 = vmatprep.subr.mxu0 0.0
    %386 = vmatpush2.msra.mxu0 0.0
    %387 = vmatprep.mubr.f32.mxu0 0.0
    %388 = vmatmul.mubr.f32.gmra.mxu0 %v321
    %v389 = vpop.f32.mrf.mxu0
    %v390 = vadd.f32 0.0, %v389
    %v391 = vpop.f32.mrf.mxu0
    %392 = vdwg.mxu0
    %v393 = vld [vmem:[%s8] sm:$0xff]
    %v394 = vld [vmem:[%s8 + $0x8] sm:$0xff]
    %vm395 = vcmask 15360
    %v397 = vsel %vm395, %v393, 0
    %v400 = vsel %vm395, %v394, 0
    %vm402 = vcmask 1041408
    %v404 = vsel %vm402, %v390, 0
    %406 = vmatprep.subr.mxu0 0.0
    %407 = vmatpush1.msra.mxu0 0.0
    %408 = vmatprep.subr.mxu0 0.0
    %409 = vmatpush1.msra.mxu0 0.0
    %410 = vmatprep.subr.mxu0 0.0
    %411 = vmatpush1.msra.mxu0 0.0
    %412 = vmatprep.subr.mxu0 0.0
    %413 = vmatpush1.msra.mxu0 0.0
    %414 = vmatprep.subr.mxu0 0.0
    %415 = vmatpush1.msra.mxu0 0.0
    %416 = vmatprep.subr.mxu0 0.0
    %417 = vmatpush1.msra.mxu0 0.0
    %418 = vmatprep.subr.mxu0 0.0
    %419 = vmatpush1.msra.mxu0 0.0
    %420 = vmatprep.subr.mxu0 0.0
    %421 = vmatpush1.msra.mxu0 0.0
    %422 = vmatprep.subr.mxu0 0.0
    %423 = vmatpush1.msra.mxu0 0.0
    %424 = vmatprep.subr.mxu0 0.0
    %425 = vmatpush1.msra.mxu0 0.0
    %426 = vmatprep.subr.mxu0 0.0
    %427 = vmatpush1.msra.mxu0 0.0
    %428 = vmatprep.subr.mxu0 0.0
    %429 = vmatpush1.msra.mxu0 0.0
    %430 = vmatprep.subr.mxu0 0.0
    %431 = vmatpush1.msra.mxu0 0.0
    %432 = vmatprep.subr.mxu0 0.0
    %433 = vmatpush1.msra.mxu0 0.0
    %434 = vmatprep.subr.mxu0 0.0
    %435 = vmatpush1.msra.mxu0 0.0
    %436 = vmatprep.subr.mxu0 0.0
    %437 = vmatpush1.msra.mxu0 %v404
    %438 = vmatprep.subr.mxu0 0.0
    %439 = vmatpush2.msra.mxu0 0.0
    %440 = vmatprep.subr.mxu0 0.0
    %441 = vmatpush2.msra.mxu0 0.0
    %442 = vmatprep.subr.mxu0 0.0
    %443 = vmatpush2.msra.mxu0 0.0
    %444 = vmatprep.subr.mxu0 0.0
    %445 = vmatpush2.msra.mxu0 0.0
    %446 = vmatprep.subr.mxu0 0.0
    %447 = vmatpush2.msra.mxu0 0.0
    %448 = vmatprep.subr.mxu0 0.0
    %449 = vmatpush2.msra.mxu0 0.0
    %450 = vmatprep.subr.mxu0 0.0
    %451 = vmatpush2.msra.mxu0 0.0
    %452 = vmatprep.subr.mxu0 0.0
    %453 = vmatpush2.msra.mxu0 0.0
    %454 = vmatprep.subr.mxu0 0.0
    %455 = vmatpush2.msra.mxu0 0.0
    %456 = vmatprep.subr.mxu0 0.0
    %457 = vmatpush2.msra.mxu0 0.0
    %458 = vmatprep.subr.mxu0 0.0
    %459 = vmatpush2.msra.mxu0 0.0
    %460 = vmatprep.subr.mxu0 0.0
    %461 = vmatpush2.msra.mxu0 0.0
    %462 = vmatprep.subr.mxu0 0.0
    %463 = vmatpush2.msra.mxu0 0.0
    %464 = vmatprep.subr.mxu0 0.0
    %465 = vmatpush2.msra.mxu0 0.0
    %466 = vmatprep.subr.mxu0 0.0
    %467 = vmatpush2.msra.mxu0 0.0
    %468 = vmatprep.subr.mxu0 0.0
    %469 = vmatpush2.msra.mxu0 0.0
    %470 = vmatprep.mubr.f32.mxu0 0.0
    %471 = vmatmul.mubr.f32.gmra.mxu0 %v397
    %v472 = vpop.f32.mrf.mxu0
    %v473 = vadd.f32 0.0, %v472
    %v474 = vpop.f32.mrf.mxu0
    %475 = vmatprep.mubr.f32.mxu0 0.0
    %476 = vmatmul.mubr.f32.gmra.mxu0 %v400
    %v477 = vpop.f32.mrf.mxu0
    %v478 = vadd.f32 0.0, %v477
    %v479 = vpop.f32.mrf.mxu0
    %480 = vdwg.mxu0
    %vm481 = vcmp.eq.f32.partialorder %v137, 0.0
    %vm482 = vcmp.eq.f32.partialorder %v138, 0.0
    %v483 = vsel %vm481, 1, 0
    %v484 = vsel %vm482, 1, 0
    %v485 = vcvt.s32.f32 %v483
    %v486 = vcvt.s32.f32 %v484
    %vm487 = vcmp.eq.f32.partialorder %v137, 1.0
    %vm488 = vcmp.eq.f32.partialorder %v138, 1.0
    %v489 = vsel %vm487, 1, 0
    %v490 = vsel %vm488, 1, 0
    %v491 = vcvt.s32.f32 %v489
    %v492 = vcvt.s32.f32 %v490
    %vm493 = vcmask 7168
    %v494 = vsel %vm493, %v304, 0.0
    %v495 = vrot.slane %v494, 4
    %v496 = vadd.f32 %v494, %v495
    %v497 = vrot.slane %v496, 2
    %v498 = vadd.f32 %v496, %v497
    %v499 = vrot.slane %v498, 1
    %v500 = vadd.f32 %v498, %v499
    %v501 = vmul.f32 %v485, %v500
    %v502 = vmul.f32 %v486, %v500
    %v503 = vadd.f32 %v501, 0.0
    %v504 = vadd.f32 %v502, 0.0
    %v505 = vsel %vm493, %v305, 0.0
    %v506 = vrot.slane %v505, 4
    %v507 = vadd.f32 %v505, %v506
    %v508 = vrot.slane %v507, 2
    %v509 = vadd.f32 %v507, %v508
    %v510 = vrot.slane %v509, 1
    %v511 = vadd.f32 %v509, %v510
    %v512 = vmul.f32 %v491, %v511
    %v513 = vmul.f32 %v492, %v511
    %v514 = vadd.f32 %v503, %v512
    %v515 = vadd.f32 %v504, %v513
    %v516 = vmax.f32 %v514, 1.0
    %v517 = vmax.f32 %v515, 1.0
    %v518 = vrcp.pop %v516
    %v519 = vrcp.pop %v517
    %521 = vset.pattern.permute.xlu0 0
    %522 = vperm.xlu0 %521, %v518
    %v523 = vpop.permute.xlu0 %522
    %526 = vset.pattern.permute.xlu0 0
    %527 = vperm.xlu0 %526, %v519
    %v528 = vpop.permute.xlu0 %527
    %v530 = vmul.f32 %v473, %v523
    %v531 = vmul.f32 %v478, %v528
    %v532 = vmul.f32 %v296, %v530
    %v533 = vmul.f32 %v301, %v531
    %v534 = vsel %vm143, %v532, 0.0
    %535 = vadd.xlane.f32.xlu0 %v534
    %v536 = vpop.xlane.xlu0 %535
    %v537 = vsel %vm143, %v533, 0.0
    %538 = vadd.xlane.f32.xlu0 %v537
    %v539 = vpop.xlane.xlu0 %538
    %v540 = vmul.f32 %v536, 0.17677669
    %v541 = vmul.f32 %v539, 0.17677669
    %vm542 = vcmp.gt.f32.partialorder %v131, 0.5
    %vm543 = vcmp.gt.f32.partialorder %v132, 0.5
    %v544 = vsel %vm542, -1e+09, %v540
    %v545 = vsel %vm543, -1e+09, %v541
    %v546 = vsel %vm493, %v544, -inf
    %v547 = vrot.slane %v546, 4
    %v548 = vmax.f32 %v546, %v547
    %v549 = vrot.slane %v548, 2
    %v550 = vmax.f32 %v548, %v549
    %v551 = vrot.slane %v550, 1
    %v552 = vmax.f32 %v550, %v551
    %v553 = vmul.f32 %v485, %v552
    %v554 = vmul.f32 %v486, %v552
    %v555 = vadd.f32 %v553, 0.0
    %v556 = vadd.f32 %v554, 0.0
    %v557 = vsel %vm493, %v545, -inf
    %v558 = vrot.slane %v557, 4
    %v559 = vmax.f32 %v557, %v558
    %v560 = vrot.slane %v559, 2
    %v561 = vmax.f32 %v559, %v560
    %v562 = vrot.slane %v561, 1
    %v563 = vmax.f32 %v561, %v562
    %v564 = vmul.f32 %v491, %v563
    %v565 = vmul.f32 %v492, %v563
    %v566 = vadd.f32 %v555, %v564
    %v567 = vadd.f32 %v556, %v565
    %v568 = vsub.f32 %v544, %v566
    %v569 = vsub.f32 %v545, %v567
    %v570 = vmul.f32 %v568, 1.442695
    %v571 = vpow.pop %v570
    %v572 = vmul.f32 %v569, 1.442695
    %v573 = vpow.pop %v572
    %v574 = vsel %vm493, %v571, 0.0
    %v575 = vrot.slane %v574, 4
    %v576 = vadd.f32 %v574, %v575
    %v577 = vrot.slane %v576, 2
    %v578 = vadd.f32 %v576, %v577
    %v579 = vrot.slane %v578, 1
    %v580 = vadd.f32 %v578, %v579
    %v581 = vmul.f32 %v485, %v580
    %v582 = vmul.f32 %v486, %v580
    %v583 = vadd.f32 %v581, 0.0
    %v584 = vadd.f32 %v582, 0.0
    %v585 = vsel %vm493, %v573, 0.0
    %v586 = vrot.slane %v585, 4
    %v587 = vadd.f32 %v585, %v586
    %v588 = vrot.slane %v587, 2
    %v589 = vadd.f32 %v587, %v588
    %v590 = vrot.slane %v589, 1
    %v591 = vadd.f32 %v589, %v590
    %v592 = vmul.f32 %v491, %v591
    %v593 = vmul.f32 %v492, %v591
    %v594 = vadd.f32 %v583, %v592
    %v595 = vadd.f32 %v584, %v593
    %v596 = vrcp.pop %v594
    %v597 = vrcp.pop %v595
    %v598 = vmul.f32 %v571, %v596
    %v599 = vmul.f32 %v573, %v597
    %v600 = vld [vmem:[#allocation5] sm:$0x3]
    %602 = vset.pattern.permute.xlu0 0
    %603 = vperm.xlu0 %602, %v598
    %v604 = vpop.permute.xlu0 %603
    %607 = vset.pattern.permute.xlu0 0
    %608 = vperm.xlu0 %607, %v599
    %v609 = vpop.permute.xlu0 %608
    %v611 = vmul.f32 %v604, %v217
    %v612 = vmul.f32 %v609, %v222
    %v614 = vsel %vm319, %v600, 0
    %616 = vmatprep.subr.mxu0 0.0
    %617 = vmatpush1.msra.mxu0 0.0
    %618 = vmatprep.subr.mxu0 0.0
    %619 = vmatpush1.msra.mxu0 0.0
    %620 = vmatprep.subr.mxu0 0.0
    %621 = vmatpush1.msra.mxu0 0.0
    %622 = vmatprep.subr.mxu0 0.0
    %623 = vmatpush1.msra.mxu0 0.0
    %624 = vmatprep.subr.mxu0 0.0
    %625 = vmatpush1.msra.mxu0 0.0
    %626 = vmatprep.subr.mxu0 0.0
    %627 = vmatpush1.msra.mxu0 0.0
    %628 = vmatprep.subr.mxu0 0.0
    %629 = vmatpush1.msra.mxu0 0.0
    %630 = vmatprep.subr.mxu0 0.0
    %631 = vmatpush1.msra.mxu0 0.0
    %632 = vmatprep.subr.mxu0 0.0
    %633 = vmatpush1.msra.mxu0 0.0
    %634 = vmatprep.subr.mxu0 0.0
    %635 = vmatpush1.msra.mxu0 0.0
    %636 = vmatprep.subr.mxu0 0.0
    %637 = vmatpush1.msra.mxu0 0.0
    %638 = vmatprep.subr.mxu0 0.0
    %639 = vmatpush1.msra.mxu0 0.0
    %640 = vmatprep.subr.mxu0 0.0
    %641 = vmatpush1.msra.mxu0 0.0
    %642 = vmatprep.subr.mxu0 0.0
    %643 = vmatpush1.msra.mxu0 0.0
    %644 = vmatprep.subr.mxu0 0.0
    %645 = vmatpush1.msra.mxu0 %v612
    %646 = vmatprep.subr.mxu0 0.0
    %647 = vmatpush1.msra.mxu0 %v611
    %648 = vmatprep.subr.mxu0 0.0
    %649 = vmatpush2.msra.mxu0 0.0
    %650 = vmatprep.subr.mxu0 0.0
    %651 = vmatpush2.msra.mxu0 0.0
    %652 = vmatprep.subr.mxu0 0.0
    %653 = vmatpush2.msra.mxu0 0.0
    %654 = vmatprep.subr.mxu0 0.0
    %655 = vmatpush2.msra.mxu0 0.0
    %656 = vmatprep.subr.mxu0 0.0
    %657 = vmatpush2.msra.mxu0 0.0
    %658 = vmatprep.subr.mxu0 0.0
    %659 = vmatpush2.msra.mxu0 0.0
    %660 = vmatprep.subr.mxu0 0.0
    %661 = vmatpush2.msra.mxu0 0.0
    %662 = vmatprep.subr.mxu0 0.0
    %663 = vmatpush2.msra.mxu0 0.0
    %664 = vmatprep.subr.mxu0 0.0
    %665 = vmatpush2.msra.mxu0 0.0
    %666 = vmatprep.subr.mxu0 0.0
    %667 = vmatpush2.msra.mxu0 0.0
    %668 = vmatprep.subr.mxu0 0.0
    %669 = vmatpush2.msra.mxu0 0.0
    %670 = vmatprep.subr.mxu0 0.0
    %671 = vmatpush2.msra.mxu0 0.0
    %672 = vmatprep.subr.mxu0 0.0
    %673 = vmatpush2.msra.mxu0 0.0
    %674 = vmatprep.subr.mxu0 0.0
    %675 = vmatpush2.msra.mxu0 0.0
    %676 = vmatprep.subr.mxu0 0.0
    %677 = vmatpush2.msra.mxu0 0.0
    %678 = vmatprep.subr.mxu0 0.0
    %679 = vmatpush2.msra.mxu0 0.0
    %680 = vmatprep.mubr.f32.mxu0 0.0
    %681 = vmatmul.mubr.f32.gmra.mxu0 %v614
    %v682 = vpop.f32.mrf.mxu0
    %v683 = vadd.f32 0.0, %v682
    %v684 = vpop.f32.mrf.mxu0
    %685 = vdwg.mxu0
    %v686 = vmax.f32 %v683, 0.0
    %v687 = vld [vmem:[%s11] sm:$0xff]
    %v688 = vld [vmem:[%s11 + $0x8] sm:$0xff]
    %v689 = vld [vmem:[%s11 + $0x10] sm:$0xff]
    %v690 = vld [vmem:[%s11 + $0x18] sm:$0xff]
    %v691 = vld [vmem:[%s12] sm:$0x1]
    %v693 = vlaneseq
    %v694 = vshrl.u32 %v693, 7
    %v695 = vsub.s32 0, %v694
    %v696 = vrot.slane %v691, %v695
    %v699 = vsel %vm143, %v686, 0
    %701 = vmatprep.subr.mxu0 0.0
    %702 = vmatpush1.msra.mxu0 0.0
    %703 = vmatprep.subr.mxu0 0.0
    %704 = vmatpush1.msra.mxu0 0.0
    %705 = vmatprep.subr.mxu0 0.0
    %706 = vmatpush1.msra.mxu0 0.0
    %707 = vmatprep.subr.mxu0 0.0
    %708 = vmatpush1.msra.mxu0 0.0
    %709 = vmatprep.subr.mxu0 0.0
    %710 = vmatpush1.msra.mxu0 0.0
    %711 = vmatprep.subr.mxu0 0.0
    %712 = vmatpush1.msra.mxu0 0.0
    %713 = vmatprep.subr.mxu0 0.0
    %714 = vmatpush1.msra.mxu0 0.0
    %715 = vmatprep.subr.mxu0 0.0
    %716 = vmatpush1.msra.mxu0 0.0
    %717 = vmatprep.subr.mxu0 0.0
    %718 = vmatpush1.msra.mxu0 0.0
    %719 = vmatprep.subr.mxu0 0.0
    %720 = vmatpush1.msra.mxu0 0.0
    %721 = vmatprep.subr.mxu0 0.0
    %722 = vmatpush1.msra.mxu0 0.0
    %723 = vmatprep.subr.mxu0 0.0
    %724 = vmatpush1.msra.mxu0 0.0
    %725 = vmatprep.subr.mxu0 0.0
    %726 = vmatpush1.msra.mxu0 %v690
    %727 = vmatprep.subr.mxu0 0.0
    %728 = vmatpush1.msra.mxu0 %v689
    %729 = vmatprep.subr.mxu0 0.0
    %730 = vmatpush1.msra.mxu0 %v688
    %731 = vmatprep.subr.mxu0 0.0
    %732 = vmatpush1.msra.mxu0 %v687
    %733 = vmatprep.subr.mxu0 0.0
    %734 = vmatpush2.msra.mxu0 0.0
    %735 = vmatprep.subr.mxu0 0.0
    %736 = vmatpush2.msra.mxu0 0.0
    %737 = vmatprep.subr.mxu0 0.0
    %738 = vmatpush2.msra.mxu0 0.0
    %739 = vmatprep.subr.mxu0 0.0
    %740 = vmatpush2.msra.mxu0 0.0
    %741 = vmatprep.subr.mxu0 0.0
    %742 = vmatpush2.msra.mxu0 0.0
    %743 = vmatprep.subr.mxu0 0.0
    %744 = vmatpush2.msra.mxu0 0.0
    %745 = vmatprep.subr.mxu0 0.0
    %746 = vmatpush2.msra.mxu0 0.0
    %747 = vmatprep.subr.mxu0 0.0
    %748 = vmatpush2.msra.mxu0 0.0
    %749 = vmatprep.subr.mxu0 0.0
    %750 = vmatpush2.msra.mxu0 0.0
    %751 = vmatprep.subr.mxu0 0.0
    %752 = vmatpush2.msra.mxu0 0.0
    %753 = vmatprep.subr.mxu0 0.0
    %754 = vmatpush2.msra.mxu0 0.0
    %755 = vmatprep.subr.mxu0 0.0
    %756 = vmatpush2.msra.mxu0 0.0
    %757 = vmatprep.subr.mxu0 0.0
    %758 = vmatpush2.msra.mxu0 0.0
    %759 = vmatprep.subr.mxu0 0.0
    %760 = vmatpush2.msra.mxu0 0.0
    %761 = vmatprep.subr.mxu0 0.0
    %762 = vmatpush2.msra.mxu0 0.0
    %763 = vmatprep.subr.mxu0 0.0
    %764 = vmatpush2.msra.mxu0 0.0
    %765 = vmatprep.mubr.f32.mxu0 0.0
    %766 = vmatmul.mubr.f32.gmra.mxu0 %v699
    %v767 = vpop.f32.mrf.mxu0
    %v768 = vadd.f32 %v696, %v767
    %v769 = vpop.f32.mrf.mxu0
    %770 = vdwg.mxu0
    %v772 = vsel %vm402, %v768, 0
    %774 = vmatprep.subr.mxu0 0.0
    %775 = vmatpush1.msra.mxu0 0.0
    %776 = vmatprep.subr.mxu0 0.0
    %777 = vmatpush1.msra.mxu0 0.0
    %778 = vmatprep.subr.mxu0 0.0
    %779 = vmatpush1.msra.mxu0 0.0
    %780 = vmatprep.subr.mxu0 0.0
    %781 = vmatpush1.msra.mxu0 0.0
    %782 = vmatprep.subr.mxu0 0.0
    %783 = vmatpush1.msra.mxu0 0.0
    %784 = vmatprep.subr.mxu0 0.0
    %785 = vmatpush1.msra.mxu0 0.0
    %786 = vmatprep.subr.mxu0 0.0
    %787 = vmatpush1.msra.mxu0 0.0
    %788 = vmatprep.subr.mxu0 0.0
    %789 = vmatpush1.msra.mxu0 0.0
    %790 = vmatprep.subr.mxu0 0.0
    %791 = vmatpush1.msra.mxu0 0.0
    %792 = vmatprep.subr.mxu0 0.0
    %793 = vmatpush1.msra.mxu0 0.0
    %794 = vmatprep.subr.mxu0 0.0
    %795 = vmatpush1.msra.mxu0 0.0
    %796 = vmatprep.subr.mxu0 0.0
    %797 = vmatpush1.msra.mxu0 0.0
    %798 = vmatprep.subr.mxu0 0.0
    %799 = vmatpush1.msra.mxu0 0.0
    %800 = vmatprep.subr.mxu0 0.0
    %801 = vmatpush1.msra.mxu0 0.0
    %802 = vmatprep.subr.mxu0 0.0
    %803 = vmatpush1.msra.mxu0 0.0
    %804 = vmatprep.subr.mxu0 0.0
    %805 = vmatpush1.msra.mxu0 %v772
    %806 = vmatprep.subr.mxu0 0.0
    %807 = vmatpush2.msra.mxu0 0.0
    %808 = vmatprep.subr.mxu0 0.0
    %809 = vmatpush2.msra.mxu0 0.0
    %810 = vmatprep.subr.mxu0 0.0
    %811 = vmatpush2.msra.mxu0 0.0
    %812 = vmatprep.subr.mxu0 0.0
    %813 = vmatpush2.msra.mxu0 0.0
    %814 = vmatprep.subr.mxu0 0.0
    %815 = vmatpush2.msra.mxu0 0.0
    %816 = vmatprep.subr.mxu0 0.0
    %817 = vmatpush2.msra.mxu0 0.0
    %818 = vmatprep.subr.mxu0 0.0
    %819 = vmatpush2.msra.mxu0 0.0
    %820 = vmatprep.subr.mxu0 0.0
    %821 = vmatpush2.msra.mxu0 0.0
    %822 = vmatprep.subr.mxu0 0.0
    %823 = vmatpush2.msra.mxu0 0.0
    %824 = vmatprep.subr.mxu0 0.0
    %825 = vmatpush2.msra.mxu0 0.0
    %826 = vmatprep.subr.mxu0 0.0
    %827 = vmatpush2.msra.mxu0 0.0
    %828 = vmatprep.subr.mxu0 0.0
    %829 = vmatpush2.msra.mxu0 0.0
    %830 = vmatprep.subr.mxu0 0.0
    %831 = vmatpush2.msra.mxu0 0.0
    %832 = vmatprep.subr.mxu0 0.0
    %833 = vmatpush2.msra.mxu0 0.0
    %834 = vmatprep.subr.mxu0 0.0
    %835 = vmatpush2.msra.mxu0 0.0
    %836 = vmatprep.subr.mxu0 0.0
    %837 = vmatpush2.msra.mxu0 0.0
    %838 = vmatprep.mubr.f32.mxu0 0.0
    %839 = vmatmul.mubr.f32.gmra.mxu0 %v397
    %v840 = vpop.f32.mrf.mxu0
    %v841 = vadd.f32 0.0, %v840
    %v842 = vpop.f32.mrf.mxu0
    %843 = vmatprep.mubr.f32.mxu0 0.0
    %844 = vmatmul.mubr.f32.gmra.mxu0 %v400
    %v845 = vpop.f32.mrf.mxu0
    %v846 = vadd.f32 0.0, %v845
    %v847 = vpop.f32.mrf.mxu0
    %848 = vdwg.mxu0
    %v849 = vsel %vm143, %v127, 0.0
    %850 = vadd.xlane.f32.xlu0 %v849
    %v851 = vpop.xlane.xlu0 %850
    %v852 = vsel %vm143, %v128, 0.0
    %853 = vadd.xlane.f32.xlu0 %v852
    %v854 = vpop.xlane.xlu0 %853
    %v855 = vrcp.pop 32.0
    %v856 = vmul.f32 %v851, %v855
    %v857 = vmul.f32 %v854, %v855
    %v858 = vsub.f32 %v127, %v856
    %v859 = vsub.f32 %v128, %v857
    %v860 = vmul.f32 %v858, %v858
    %v861 = vmul.f32 %v859, %v859
    %v862 = vsel %vm143, %v860, 0.0
    %863 = vadd.xlane.f32.xlu0 %v862
    %v864 = vpop.xlane.xlu0 %863
    %v865 = vsel %vm143, %v861, 0.0
    %866 = vadd.xlane.f32.xlu0 %v865
    %v867 = vpop.xlane.xlu0 %866
    %v868 = vmul.f32 %v864, %v855
    %v869 = vmul.f32 %v867, %v855
    %v870 = vadd.f32 %v868, 1e-06
    %v871 = vadd.f32 %v869, 1e-06
    %v872 = vrsqrt.pop %v870
    %v873 = vrsqrt.pop %v871
    %v874 = vmul.f32 %v858, %v872
    %v875 = vmul.f32 %v859, %v873
    %v876 = vadd.f32 %v841, 1.0
    %v877 = vadd.f32 %v846, 1.0
    %880 = vrot.lane.b32.xlu0 %v876, 96
    %v881 = vpop.permute.xlu0 %880
    %882 = vrot.lane.b32.xlu0 %v877, 96
    %v883 = vpop.permute.xlu0 %882
    %v886 = vmul.f32 %v874, %v881
    %v887 = vmul.f32 %v875, %v883
    %v888 = vadd.f32 %v886, %v841
    %v889 = vadd.f32 %v887, %v846
    %v890 = vld [vmem:[#allocation8] sm:$0x1f]
    %v891 = vrot.slane %v888, 6
    %v892 = vrot.slane %v889, 6
    %v893 = vlaneseq
    %v894 = vshrl.u32 %v893, 7
    %vm895 = vcmp.lt.s32.totalorder %v894, 2
    %v896 = vsel %vm895, %v891, %v892
    %v897 = vsel %vm895, %v892, %v891
    %v898 = vadd.f32 %v135, -2.0
    %v899 = vadd.f32 %v136, -2.0
    %vm900 = vcmp.ge.f32.partialorder %v898, 0.0
    %vm901 = vcmp.ge.f32.partialorder %v899, 0.0
    %vm902 = vcmp.le.f32.partialorder %v898, 7.0
    %vm903 = vcmp.le.f32.partialorder %v899, 7.0
    %vm904 = vmand %vm900, %vm902
    %vm905 = vmand %vm901, %vm903
    %v906 = vsel %vm904, 1, 0
    %v907 = vsel %vm905, 1, 0
    %v908 = vcvt.s32.f32 %v906
    %v909 = vcvt.s32.f32 %v907
    %911 = vset.pattern.permute.xlu0 0
    %912 = vperm.xlu0 %911, %v908
    %v913 = vpop.permute.xlu0 %912
    %916 = vset.pattern.permute.xlu0 0
    %917 = vperm.xlu0 %916, %v909
    %v918 = vpop.permute.xlu0 %917
    %v920 = vmul.f32 %v897, %v913
    %v921 = vmul.f32 %v896, %v918
    %v922 = vlaneseq
    %v923 = vshrl.u32 %v922, 7
    %v924 = vsub.s32 0, %v923
    %v925 = vrot.slane %v890, %v924
    %v926 = vmul.f32 %v920, %v925
    %v927 = vmul.f32 %v921, %v925
    %v928 = vadd.f32 %v926, 0.0
    %v929 = vadd.f32 %v927, 0.0
    %v930 = vrot.slane %v888, 7
    %v931 = vrot.slane %v889, 7
    %vm932 = vcmp.lt.s32.totalorder %v894, 1
    %v933 = vsel %vm932, %v930, %v931
    %v934 = vsel %vm932, %v931, %v930
    %v935 = vadd.f32 %v135, -1.0
    %v936 = vadd.f32 %v136, -1.0
    %vm937 = vcmp.ge.f32.partialorder %v935, 0.0
    %vm938 = vcmp.ge.f32.partialorder %v936, 0.0
    %vm939 = vcmp.le.f32.partialorder %v935, 7.0
    %vm940 = vcmp.le.f32.partialorder %v936, 7.0
    %vm941 = vmand %vm937, %vm939
    %vm942 = vmand %vm938, %vm940
    %v943 = vsel %vm941, 1, 0
    %v944 = vsel %vm942, 1, 0
    %v945 = vcvt.s32.f32 %v943
    %v946 = vcvt.s32.f32 %v944
    %948 = vset.pattern.permute.xlu0 0
    %949 = vperm.xlu0 %948, %v945
    %v950 = vpop.permute.xlu0 %949
    %953 = vset.pattern.permute.xlu0 0
    %954 = vperm.xlu0 %953, %v946
    %v955 = vpop.permute.xlu0 %954
    %v957 = vmul.f32 %v934, %v950
    %v958 = vmul.f32 %v933, %v955
    %v959 = vlaneseq
    %v960 = vshrl.u32 %v959, 7
    %v961 = vsub.s32 1, %v960
    %v962 = vrot.slane %v890, %v961
    %v963 = vmul.f32 %v957, %v962
    %v964 = vmul.f32 %v958, %v962
    %v965 = vadd.f32 %v928, %v963
    %v966 = vadd.f32 %v929, %v964
    %v967 = vlaneseq
    %v968 = vshrl.u32 %v967, 7
    %v969 = vsub.s32 2, %v968
    %v970 = vrot.slane %v890, %v969
    %v971 = vmul.f32 %v888, %v970
    %v972 = vmul.f32 %v889, %v970
    %v973 = vadd.f32 %v965, %v971
    %v974 = vadd.f32 %v966, %v972
    %v975 = vrot.slane %v888, 1
    %v976 = vrot.slane %v889, 1
    %vm977 = vcmp.lt.s32.totalorder %v894, 7
    %v978 = vsel %vm977, %v975, %v976
    %v979 = vsel %vm977, %v976, %v975
    %v980 = vadd.f32 %v135, 1.0
    %v981 = vadd.f32 %v136, 1.0
    %vm982 = vcmp.ge.f32.partialorder %v980, 0.0
    %vm983 = vcmp.ge.f32.partialorder %v981, 0.0
    %vm984 = vcmp.le.f32.partialorder %v980, 7.0
    %vm985 = vcmp.le.f32.partialorder %v981, 7.0
    %vm986 = vmand %vm982, %vm984
    %vm987 = vmand %vm983, %vm985
    %v988 = vsel %vm986, 1, 0
    %v989 = vsel %vm987, 1, 0
    %v990 = vcvt.s32.f32 %v988
    %v991 = vcvt.s32.f32 %v989
    %993 = vset.pattern.permute.xlu0 0
    %994 = vperm.xlu0 %993, %v990
    %v995 = vpop.permute.xlu0 %994
    %998 = vset.pattern.permute.xlu0 0
    %999 = vperm.xlu0 %998, %v991
    %v1000 = vpop.permute.xlu0 %999
    %v1002 = vmul.f32 %v978, %v995
    %v1003 = vmul.f32 %v979, %v1000
    %v1004 = vlaneseq
    %v1005 = vshrl.u32 %v1004, 7
    %v1006 = vsub.s32 3, %v1005
    %v1007 = vrot.slane %v890, %v1006
    %v1008 = vmul.f32 %v1002, %v1007
    %v1009 = vmul.f32 %v1003, %v1007
    %v1010 = vadd.f32 %v973, %v1008
    %v1011 = vadd.f32 %v974, %v1009
    %v1012 = vrot.slane %v888, 2
    %v1013 = vrot.slane %v889, 2
    %vm1014 = vcmp.lt.s32.totalorder %v894, 6
    %v1015 = vsel %vm1014, %v1012, %v1013
    %v1016 = vsel %vm1014, %v1013, %v1012
    %v1017 = vadd.f32 %v135, 2.0
    %v1018 = vadd.f32 %v136, 2.0
    %vm1019 = vcmp.ge.f32.partialorder %v1017, 0.0
    %vm1020 = vcmp.ge.f32.partialorder %v1018, 0.0
    %vm1021 = vcmp.le.f32.partialorder %v1017, 7.0
    %vm1022 = vcmp.le.f32.partialorder %v1018, 7.0
    %vm1023 = vmand %vm1019, %vm1021
    %vm1024 = vmand %vm1020, %vm1022
    %v1025 = vsel %vm1023, 1, 0
    %v1026 = vsel %vm1024, 1, 0
    %v1027 = vcvt.s32.f32 %v1025
    %v1028 = vcvt.s32.f32 %v1026
    %1030 = vset.pattern.permute.xlu0 0
    %1031 = vperm.xlu0 %1030, %v1027
    %v1032 = vpop.permute.xlu0 %1031
    %1035 = vset.pattern.permute.xlu0 0
    %1036 = vperm.xlu0 %1035, %v1028
    %v1037 = vpop.permute.xlu0 %1036
    %v1039 = vmul.f32 %v1015, %v1032
    %v1040 = vmul.f32 %v1016, %v1037
    %v1041 = vlaneseq
    %v1042 = vshrl.u32 %v1041, 7
    %v1043 = vsub.s32 4, %v1042
    %v1044 = vrot.slane %v890, %v1043
    %v1045 = vmul.f32 %v1039, %v1044
    %v1046 = vmul.f32 %v1040, %v1044
    %v1047 = vadd.f32 %v1010, %v1045
    %v1048 = vadd.f32 %v1011, %v1046
    %v1049 = vld [vmem:[%s17] sm:$0x1]
    %v1050 = vlaneseq
    %v1051 = vshrl.u32 %v1050, 7
    %v1052 = vsub.s32 0, %v1051
    %v1053 = vrot.slane %v1049, %v1052
    %v1054 = vadd.f32 %v1047, %v1053
    %v1055 = vadd.f32 %v1048, %v1053
    %v1056 = vmax.f32 %v1054, 0.0
    %v1057 = vmax.f32 %v1055, 0.0
    %v1058 = vadd.f32 %v1056, 0.0
    %v1059 = vadd.f32 %v1057, 0.0
    %v1060 = vld [vmem:[%s14] sm:$0xff]
    %v1061 = vld [vmem:[%s14 + $0x8] sm:$0x1]
    %v1062 = vrot.slane %v1056, 4
    %v1063 = vrot.slane %v1057, 4
    %vm1064 = vcmp.lt.s32.totalorder %v894, 4
    %v1065 = vsel %vm1064, %v1062, %v1063
    %v1066 = vsel %vm1064, %v1063, %v1062
    %v1067 = vadd.f32 %v135, -4.0
    %v1068 = vadd.f32 %v136, -4.0
    %vm1069 = vcmp.ge.f32.partialorder %v1067, 0.0
    %vm1070 = vcmp.ge.f32.partialorder %v1068, 0.0
    %vm1071 = vcmp.le.f32.partialorder %v1067, 7.0
    %vm1072 = vcmp.le.f32.partialorder %v1068, 7.0
    %vm1073 = vmand %vm1069, %vm1071
    %vm1074 = vmand %vm1070, %vm1072
    %v1075 = vsel %vm1073, 1, 0
    %v1076 = vsel %vm1074, 1, 0
    %v1077 = vcvt.s32.f32 %v1075
    %v1078 = vcvt.s32.f32 %v1076
    %1080 = vset.pattern.permute.xlu0 0
    %1081 = vperm.xlu0 %1080, %v1077
    %v1082 = vpop.permute.xlu0 %1081
    %1085 = vset.pattern.permute.xlu0 0
    %1086 = vperm.xlu0 %1085, %v1078
    %v1087 = vpop.permute.xlu0 %1086
    %v1089 = vmul.f32 %v1066, %v1082
    %v1090 = vmul.f32 %v1065, %v1087
    %v1091 = vlaneseq
    %v1092 = vshrl.u32 %v1091, 7
    %v1093 = vsub.s32 0, %v1092
    %v1094 = vrot.slane %v1060, %v1093
    %v1095 = vmul.f32 %v1089, %v1094
    %v1096 = vmul.f32 %v1090, %v1094
    %v1097 = vadd.f32 %v1095, 0.0
    %v1098 = vadd.f32 %v1096, 0.0
    %v1099 = vrot.slane %v1056, 5
    %v1100 = vrot.slane %v1057, 5
    %vm1101 = vcmp.lt.s32.totalorder %v894, 3
    %v1102 = vsel %vm1101, %v1099, %v1100
    %v1103 = vsel %vm1101, %v1100, %v1099
    %v1104 = vadd.f32 %v135, -3.0
    %v1105 = vadd.f32 %v136, -3.0
    %vm1106 = vcmp.ge.f32.partialorder %v1104, 0.0
    %vm1107 = vcmp.ge.f32.partialorder %v1105, 0.0
    %vm1108 = vcmp.le.f32.partialorder %v1104, 7.0
    %vm1109 = vcmp.le.f32.partialorder %v1105, 7.0
    %vm1110 = vmand %vm1106, %vm1108
    %vm1111 = vmand %vm1107, %vm1109
    %v1112 = vsel %vm1110, 1, 0
    %v1113 = vsel %vm1111, 1, 0
    %v1114 = vcvt.s32.f32 %v1112
    %v1115 = vcvt.s32.f32 %v1113
    %1117 = vset.pattern.permute.xlu0 0
    %1118 = vperm.xlu0 %1117, %v1114
    %v1119 = vpop.permute.xlu0 %1118
    %1122 = vset.pattern.permute.xlu0 0
    %1123 = vperm.xlu0 %1122, %v1115
    %v1124 = vpop.permute.xlu0 %1123
    %v1126 = vmul.f32 %v1103, %v1119
    %v1127 = vmul.f32 %v1102, %v1124
    %v1128 = vlaneseq
    %v1129 = vshrl.u32 %v1128, 7
    %v1130 = vsub.s32 1, %v1129
    %v1131 = vrot.slane %v1060, %v1130
    %v1132 = vmul.f32 %v1126, %v1131
    %v1133 = vmul.f32 %v1127, %v1131
    %v1134 = vadd.f32 %v1097, %v1132
    %v1135 = vadd.f32 %v1098, %v1133
    %v1136 = vrot.slane %v1056, 6
    %v1137 = vrot.slane %v1057, 6
    %v1138 = vsel %vm895, %v1136, %v1137
    %v1139 = vsel %vm895, %v1137, %v1136
    %v1140 = vmul.f32 %v1139, %v913
    %v1141 = vmul.f32 %v1138, %v918
    %v1142 = vlaneseq
    %v1143 = vshrl.u32 %v1142, 7
    %v1144 = vsub.s32 2, %v1143
    %v1145 = vrot.slane %v1060, %v1144
    %v1146 = vmul.f32 %v1140, %v1145
    %v1147 = vmul.f32 %v1141, %v1145
    %v1148 = vadd.f32 %v1134, %v1146
    %v1149 = vadd.f32 %v1135, %v1147
    %v1150 = vrot.slane %v1056, 7
    %v1151 = vrot.slane %v1057, 7
    %v1152 = vsel %vm932, %v1150, %v1151
    %v1153 = vsel %vm932, %v1151, %v1150
    %v1154 = vmul.f32 %v1153, %v950
    %v1155 = vmul.f32 %v1152, %v955
    %v1156 = vlaneseq
    %v1157 = vshrl.u32 %v1156, 7
    %v1158 = vsub.s32 3, %v1157
    %v1159 = vrot.slane %v1060, %v1158
    %v1160 = vmul.f32 %v1154, %v1159
    %v1161 = vmul.f32 %v1155, %v1159
    %v1162 = vadd.f32 %v1148, %v1160
    %v1163 = vadd.f32 %v1149, %v1161
    %v1164 = vlaneseq
    %v1165 = vshrl.u32 %v1164, 7
    %v1166 = vsub.s32 4, %v1165
    %v1167 = vrot.slane %v1060, %v1166
    %v1168 = vmul.f32 %v1056, %v1167
    %v1169 = vmul.f32 %v1057, %v1167
    %v1170 = vadd.f32 %v1162, %v1168
    %v1171 = vadd.f32 %v1163, %v1169
    %v1172 = vrot.slane %v1056, 1
    %v1173 = vrot.slane %v1057, 1
    %v1174 = vsel %vm977, %v1172, %v1173
    %v1175 = vsel %vm977, %v1173, %v1172
    %v1176 = vmul.f32 %v1174, %v995
    %v1177 = vmul.f32 %v1175, %v1000
    %v1178 = vlaneseq
    %v1179 = vshrl.u32 %v1178, 7
    %v1180 = vsub.s32 5, %v1179
    %v1181 = vrot.slane %v1060, %v1180
    %v1182 = vmul.f32 %v1176, %v1181
    %v1183 = vmul.f32 %v1177, %v1181
    %v1184 = vadd.f32 %v1170, %v1182
    %v1185 = vadd.f32 %v1171, %v1183
    %v1186 = vrot.slane %v1056, 2
    %v1187 = vrot.slane %v1057, 2
    %v1188 = vsel %vm1014, %v1186, %v1187
    %v1189 = vsel %vm1014, %v1187, %v1186
    %v1190 = vmul.f32 %v1188, %v1032
    %v1191 = vmul.f32 %v1189, %v1037
    %v1192 = vlaneseq
    %v1193 = vshrl.u32 %v1192, 7
    %v1194 = vsub.s32 6, %v1193
    %v1195 = vrot.slane %v1060, %v1194
    %v1196 = vmul.f32 %v1190, %v1195
    %v1197 = vmul.f32 %v1191, %v1195
    %v1198 = vadd.f32 %v1184, %v1196
    %v1199 = vadd.f32 %v1185, %v1197
    %v1200 = vrot.slane %v1056, 3
    %v1201 = vrot.slane %v1057, 3
    %vm1202 = vcmp.lt.s32.totalorder %v894, 5
    %v1203 = vsel %vm1202, %v1200, %v1201
    %v1204 = vsel %vm1202, %v1201, %v1200
    %v1205 = vadd.f32 %v135, 3.0
    %v1206 = vadd.f32 %v136, 3.0
    %vm1207 = vcmp.ge.f32.partialorder %v1205, 0.0
    %vm1208 = vcmp.ge.f32.partialorder %v1206, 0.0
    %vm1209 = vcmp.le.f32.partialorder %v1205, 7.0
    %vm1210 = vcmp.le.f32.partialorder %v1206, 7.0
    %vm1211 = vmand %vm1207, %vm1209
    %vm1212 = vmand %vm1208, %vm1210
    %v1213 = vsel %vm1211, 1, 0
    %v1214 = vsel %vm1212, 1, 0
    %v1215 = vcvt.s32.f32 %v1213
    %v1216 = vcvt.s32.f32 %v1214
    %1218 = vset.pattern.permute.xlu0 0
    %1219 = vperm.xlu0 %1218, %v1215
    %v1220 = vpop.permute.xlu0 %1219
    %1223 = vset.pattern.permute.xlu0 0
    %1224 = vperm.xlu0 %1223, %v1216
    %v1225 = vpop.permute.xlu0 %1224
    %v1227 = vmul.f32 %v1203, %v1220
    %v1228 = vmul.f32 %v1204, %v1225
    %v1229 = vlaneseq
    %v1230 = vshrl.u32 %v1229, 7
    %v1231 = vsub.s32 7, %v1230
    %v1232 = vrot.slane %v1060, %v1231
    %v1233 = vmul.f32 %v1227, %v1232
    %v1234 = vmul.f32 %v1228, %v1232
    %v1235 = vadd.f32 %v1198, %v1233
    %v1236 = vadd.f32 %v1199, %v1234
    %v1237 = vadd.f32 %v135, 4.0
    %v1238 = vadd.f32 %v136, 4.0
    %vm1239 = vcmp.ge.f32.partialorder %v1237, 0.0
    %vm1240 = vcmp.ge.f32.partialorder %v1238, 0.0
    %vm1241 = vcmp.le.f32.partialorder %v1237, 7.0
    %vm1242 = vcmp.le.f32.partialorder %v1238, 7.0
    %vm1243 = vmand %vm1239, %vm1241
    %vm1244 = vmand %vm1240, %vm1242
    %v1245 = vsel %vm1243, 1, 0
    %v1246 = vsel %vm1244, 1, 0
    %v1247 = vcvt.s32.f32 %v1245
    %v1248 = vcvt.s32.f32 %v1246
    %1250 = vset.pattern.permute.xlu0 0
    %1251 = vperm.xlu0 %1250, %v1247
    %v1252 = vpop.permute.xlu0 %1251
    %1255 = vset.pattern.permute.xlu0 0
    %1256 = vperm.xlu0 %1255, %v1248
    %v1257 = vpop.permute.xlu0 %1256
    %v1259 = vmul.f32 %v1065, %v1252
    %v1260 = vmul.f32 %v1066, %v1257
    %v1261 = vlaneseq
    %v1262 = vshrl.u32 %v1261, 7
    %v1263 = vsub.s32 0, %v1262
    %v1264 = vrot.slane %v1061, %v1263
    %v1265 = vmul.f32 %v1259, %v1264
    %v1266 = vmul.f32 %v1260, %v1264
    %v1267 = vadd.f32 %v1235, %v1265
    %v1268 = vadd.f32 %v1236, %v1266
    %v1269 = vld [vmem:[%s17 + $0x1] sm:$0x1]
    %v1270 = vlaneseq
    %v1271 = vshrl.u32 %v1270, 7
    %v1272 = vsub.s32 0, %v1271
    %v1273 = vrot.slane %v1269, %v1272
    %v1274 = vadd.f32 %v1267, %v1273
    %v1275 = vadd.f32 %v1268, %v1273
    %v1276 = vmax.f32 %v1274, 0.0
    %v1277 = vmax.f32 %v1275, 0.0
    %v1278 = vadd.f32 %v1058, %v1276
    %v1279 = vadd.f32 %v1059, %v1277
    %v1280 = vld [vmem:[%s15] sm:$0xff]
    %v1281 = vld [vmem:[%s15 + $0x8] sm:$0x1f]
    %v1282 = vrot.slane %v1276, 2
    %v1283 = vrot.slane %v1277, 2
    %v1284 = vsel %vm1014, %v1282, %v1283
    %v1285 = vsel %vm1014, %v1283, %v1282
    %v1286 = vadd.f32 %v135, -6.0
    %v1287 = vadd.f32 %v136, -6.0
    %vm1288 = vcmp.ge.f32.partialorder %v1286, 0.0
    %vm1289 = vcmp.ge.f32.partialorder %v1287, 0.0
    %vm1290 = vcmp.le.f32.partialorder %v1286, 7.0
    %vm1291 = vcmp.le.f32.partialorder %v1287, 7.0
    %vm1292 = vmand %vm1288, %vm1290
    %vm1293 = vmand %vm1289, %vm1291
    %v1294 = vsel %vm1292, 1, 0
    %v1295 = vsel %vm1293, 1, 0
    %v1296 = vcvt.s32.f32 %v1294
    %v1297 = vcvt.s32.f32 %v1295
    %1299 = vset.pattern.permute.xlu0 0
    %1300 = vperm.xlu0 %1299, %v1296
    %v1301 = vpop.permute.xlu0 %1300
    %1304 = vset.pattern.permute.xlu0 0
    %1305 = vperm.xlu0 %1304, %v1297
    %v1306 = vpop.permute.xlu0 %1305
    %v1308 = vmul.f32 %v1285, %v1301
    %v1309 = vmul.f32 %v1284, %v1306
    %v1310 = vlaneseq
    %v1311 = vshrl.u32 %v1310, 7
    %v1312 = vsub.s32 0, %v1311
    %v1313 = vrot.slane %v1280, %v1312
    %v1314 = vmul.f32 %v1308, %v1313
    %v1315 = vmul.f32 %v1309, %v1313
    %v1316 = vadd.f32 %v1314, 0.0
    %v1317 = vadd.f32 %v1315, 0.0
    %v1318 = vrot.slane %v1276, 3
    %v1319 = vrot.slane %v1277, 3
    %v1320 = vsel %vm1202, %v1318, %v1319
    %v1321 = vsel %vm1202, %v1319, %v1318
    %v1322 = vadd.f32 %v135, -5.0
    %v1323 = vadd.f32 %v136, -5.0
    %vm1324 = vcmp.ge.f32.partialorder %v1322, 0.0
    %vm1325 = vcmp.ge.f32.partialorder %v1323, 0.0
    %vm1326 = vcmp.le.f32.partialorder %v1322, 7.0
    %vm1327 = vcmp.le.f32.partialorder %v1323, 7.0
    %vm1328 = vmand %vm1324, %vm1326
    %vm1329 = vmand %vm1325, %vm1327
    %v1330 = vsel %vm1328, 1, 0
    %v1331 = vsel %vm1329, 1, 0
    %v1332 = vcvt.s32.f32 %v1330
    %v1333 = vcvt.s32.f32 %v1331
    %1335 = vset.pattern.permute.xlu0 0
    %1336 = vperm.xlu0 %1335, %v1332
    %v1337 = vpop.permute.xlu0 %1336
    %1340 = vset.pattern.permute.xlu0 0
    %1341 = vperm.xlu0 %1340, %v1333
    %v1342 = vpop.permute.xlu0 %1341
    %v1344 = vmul.f32 %v1321, %v1337
    %v1345 = vmul.f32 %v1320, %v1342
    %v1346 = vlaneseq
    %v1347 = vshrl.u32 %v1346, 7
    %v1348 = vsub.s32 1, %v1347
    %v1349 = vrot.slane %v1280, %v1348
    %v1350 = vmul.f32 %v1344, %v1349
    %v1351 = vmul.f32 %v1345, %v1349
    %v1352 = vadd.f32 %v1316, %v1350
    %v1353 = vadd.f32 %v1317, %v1351
    %v1354 = vrot.slane %v1276, 4
    %v1355 = vrot.slane %v1277, 4
    %v1356 = vsel %vm1064, %v1354, %v1355
    %v1357 = vsel %vm1064, %v1355, %v1354
    %v1358 = vmul.f32 %v1357, %v1082
    %v1359 = vmul.f32 %v1356, %v1087
    %v1360 = vlaneseq
    %v1361 = vshrl.u32 %v1360, 7
    %v1362 = vsub.s32 2, %v1361
    %v1363 = vrot.slane %v1280, %v1362
    %v1364 = vmul.f32 %v1358, %v1363
    %v1365 = vmul.f32 %v1359, %v1363
    %v1366 = vadd.f32 %v1352, %v1364
    %v1367 = vadd.f32 %v1353, %v1365
    %v1368 = vrot.slane %v1276, 5
    %v1369 = vrot.slane %v1277, 5
    %v1370 = vsel %vm1101, %v1368, %v1369
    %v1371 = vsel %vm1101, %v1369, %v1368
    %v1372 = vmul.f32 %v1371, %v1119
    %v1373 = vmul.f32 %v1370, %v1124
    %v1374 = vlaneseq
    %v1375 = vshrl.u32 %v1374, 7
    %v1376 = vsub.s32 3, %v1375
    %v1377 = vrot.slane %v1280, %v1376
    %v1378 = vmul.f32 %v1372, %v1377
    %v1379 = vmul.f32 %v1373, %v1377
    %v1380 = vadd.f32 %v1366, %v1378
    %v1381 = vadd.f32 %v1367, %v1379
    %v1382 = vrot.slane %v1276, 6
    %v1383 = vrot.slane %v1277, 6
    %v1384 = vsel %vm895, %v1382, %v1383
    %v1385 = vsel %vm895, %v1383, %v1382
    %v1386 = vmul.f32 %v1385, %v913
    %v1387 = vmul.f32 %v1384, %v918
    %v1388 = vlaneseq
    %v1389 = vshrl.u32 %v1388, 7
    %v1390 = vsub.s32 4, %v1389
    %v1391 = vrot.slane %v1280, %v1390
    %v1392 = vmul.f32 %v1386, %v1391
    %v1393 = vmul.f32 %v1387, %v1391
    %v1394 = vadd.f32 %v1380, %v1392
    %v1395 = vadd.f32 %v1381, %v1393
    %v1396 = vrot.slane %v1276, 7
    %v1397 = vrot.slane %v1277, 7
    %v1398 = vsel %vm932, %v1396, %v1397
    %v1399 = vsel %vm932, %v1397, %v1396
    %v1400 = vmul.f32 %v1399, %v950
    %v1401 = vmul.f32 %v1398, %v955
    %v1402 = vlaneseq
    %v1403 = vshrl.u32 %v1402, 7
    %v1404 = vsub.s32 5, %v1403
    %v1405 = vrot.slane %v1280, %v1404
    %v1406 = vmul.f32 %v1400, %v1405
    %v1407 = vmul.f32 %v1401, %v1405
    %v1408 = vadd.f32 %v1394, %v1406
    %v1409 = vadd.f32 %v1395, %v1407
    %v1410 = vlaneseq
    %v1411 = vshrl.u32 %v1410, 7
    %v1412 = vsub.s32 6, %v1411
    %v1413 = vrot.slane %v1280, %v1412
    %v1414 = vmul.f32 %v1276, %v1413
    %v1415 = vmul.f32 %v1277, %v1413
    %v1416 = vadd.f32 %v1408, %v1414
    %v1417 = vadd.f32 %v1409, %v1415
    %v1418 = vrot.slane %v1276, 1
    %v1419 = vrot.slane %v1277, 1
    %v1420 = vsel %vm977, %v1418, %v1419
    %v1421 = vsel %vm977, %v1419, %v1418
    %v1422 = vmul.f32 %v1420, %v995
    %v1423 = vmul.f32 %v1421, %v1000
    %v1424 = vlaneseq
    %v1425 = vshrl.u32 %v1424, 7
    %v1426 = vsub.s32 7, %v1425
    %v1427 = vrot.slane %v1280, %v1426
    %v1428 = vmul.f32 %v1422, %v1427
    %v1429 = vmul.f32 %v1423, %v1427
    %v1430 = vadd.f32 %v1416, %v1428
    %v1431 = vadd.f32 %v1417, %v1429
    %v1432 = vmul.f32 %v1284, %v1032
    %v1433 = vmul.f32 %v1285, %v1037
    %v1434 = vlaneseq
    %v1435 = vshrl.u32 %v1434, 7
    %v1436 = vsub.s32 0, %v1435
    %v1437 = vrot.slane %v1281, %v1436
    %v1438 = vmul.f32 %v1432, %v1437
    %v1439 = vmul.f32 %v1433, %v1437
    %v1440 = vadd.f32 %v1430, %v1438
    %v1441 = vadd.f32 %v1431, %v1439
    %v1442 = vmul.f32 %v1320, %v1220
    %v1443 = vmul.f32 %v1321, %v1225
    %v1444 = vlaneseq
    %v1445 = vshrl.u32 %v1444, 7
    %v1446 = vsub.s32 1, %v1445
    %v1447 = vrot.slane %v1281, %v1446
    %v1448 = vmul.f32 %v1442, %v1447
    %v1449 = vmul.f32 %v1443, %v1447
    %v1450 = vadd.f32 %v1440, %v1448
    %v1451 = vadd.f32 %v1441, %v1449
    %v1452 = vmul.f32 %v1356, %v1252
    %v1453 = vmul.f32 %v1357, %v1257
    %v1454 = vlaneseq
    %v1455 = vshrl.u32 %v1454, 7
    %v1456 = vsub.s32 2, %v1455
    %v1457 = vrot.slane %v1281, %v1456
    %v1458 = vmul.f32 %v1452, %v1457
    %v1459 = vmul.f32 %v1453, %v1457
    %v1460 = vadd.f32 %v1450, %v1458
    %v1461 = vadd.f32 %v1451, %v1459
    %v1462 = vadd.f32 %v135, 5.0
    %v1463 = vadd.f32 %v136, 5.0
    %vm1464 = vcmp.ge.f32.partialorder %v1462, 0.0
    %vm1465 = vcmp.ge.f32.partialorder %v1463, 0.0
    %vm1466 = vcmp.le.f32.partialorder %v1462, 7.0
    %vm1467 = vcmp.le.f32.partialorder %v1463, 7.0
    %vm1468 = vmand %vm1464, %vm1466
    %vm1469 = vmand %vm1465, %vm1467
    %v1470 = vsel %vm1468, 1, 0
    %v1471 = vsel %vm1469, 1, 0
    %v1472 = vcvt.s32.f32 %v1470
    %v1473 = vcvt.s32.f32 %v1471
    %1475 = vset.pattern.permute.xlu0 0
    %1476 = vperm.xlu0 %1475, %v1472
    %v1477 = vpop.permute.xlu0 %1476
    %1480 = vset.pattern.permute.xlu0 0
    %1481 = vperm.xlu0 %1480, %v1473
    %v1482 = vpop.permute.xlu0 %1481
    %v1484 = vmul.f32 %v1370, %v1477
    %v1485 = vmul.f32 %v1371, %v1482
    %v1486 = vlaneseq
    %v1487 = vshrl.u32 %v1486, 7
    %v1488 = vsub.s32 3, %v1487
    %v1489 = vrot.slane %v1281, %v1488
    %v1490 = vmul.f32 %v1484, %v1489
    %v1491 = vmul.f32 %v1485, %v1489
    %v1492 = vadd.f32 %v1460, %v1490
    %v1493 = vadd.f32 %v1461, %v1491
    %v1494 = vadd.f32 %v135, 6.0
    %v1495 = vadd.f32 %v136, 6.0
    %vm1496 = vcmp.ge.f32.partialorder %v1494, 0.0
    %vm1497 = vcmp.ge.f32.partialorder %v1495, 0.0
    %vm1498 = vcmp.le.f32.partialorder %v1494, 7.0
    %vm1499 = vcmp.le.f32.partialorder %v1495, 7.0
    %vm1500 = vmand %vm1496, %vm1498
    %vm1501 = vmand %vm1497, %vm1499
    %v1502 = vsel %vm1500, 1, 0
    %v1503 = vsel %vm1501, 1, 0
    %v1504 = vcvt.s32.f32 %v1502
    %v1505 = vcvt.s32.f32 %v1503
    %1507 = vset.pattern.permute.xlu0 0
    %1508 = vperm.xlu0 %1507, %v1504
    %v1509 = vpop.permute.xlu0 %1508
    %1512 = vset.pattern.permute.xlu0 0
    %1513 = vperm.xlu0 %1512, %v1505
    %v1514 = vpop.permute.xlu0 %1513
    %v1516 = vmul.f32 %v1384, %v1509
    %v1517 = vmul.f32 %v1385, %v1514
    %v1518 = vlaneseq
    %v1519 = vshrl.u32 %v1518, 7
    %v1520 = vsub.s32 4, %v1519
    %v1521 = vrot.slane %v1281, %v1520
    %v1522 = vmul.f32 %v1516, %v1521
    %v1523 = vmul.f32 %v1517, %v1521
    %v1524 = vadd.f32 %v1492, %v1522
    %v1525 = vadd.f32 %v1493, %v1523
    %v1526 = vld [vmem:[%s17 + $0x2] sm:$0x1]
    %v1527 = vlaneseq
    %v1528 = vshrl.u32 %v1527, 7
    %v1529 = vsub.s32 0, %v1528
    %v1530 = vrot.slane %v1526, %v1529
    %v1531 = vadd.f32 %v1524, %v1530
    %v1532 = vadd.f32 %v1525, %v1530
    %v1533 = vmax.f32 %v1531, 0.0
    %v1534 = vmax.f32 %v1532, 0.0
    %v1535 = vadd.f32 %v1278, %v1533
    %v1536 = vadd.f32 %v1279, %v1534
    %v1537 = vld [vmem:[%s16] sm:$0xff]
    %v1538 = vld [vmem:[%s16 + $0x8] sm:$0xff]
    %v1539 = vrot.slane %v1533, 1
    %v1540 = vrot.slane %v1534, 1
    %v1541 = vsel %vm977, %v1539, %v1540
    %v1542 = vsel %vm977, %v1540, %v1539
    %v1543 = vadd.f32 %v135, -7.0
    %v1544 = vadd.f32 %v136, -7.0
    %vm1545 = vcmp.ge.f32.partialorder %v1543, 0.0
    %vm1546 = vcmp.ge.f32.partialorder %v1544, 0.0
    %vm1547 = vcmp.le.f32.partialorder %v1543, 7.0
    %vm1548 = vcmp.le.f32.partialorder %v1544, 7.0
    %vm1549 = vmand %vm1545, %vm1547
    %vm1550 = vmand %vm1546, %vm1548
    %v1551 = vsel %vm1549, 1, 0
    %v1552 = vsel %vm1550, 1, 0
    %v1553 = vcvt.s32.f32 %v1551
    %v1554 = vcvt.s32.f32 %v1552
    %1556 = vset.pattern.permute.xlu0 0
    %1557 = vperm.xlu0 %1556, %v1553
    %v1558 = vpop.permute.xlu0 %1557
    %1561 = vset.pattern.permute.xlu0 0
    %1562 = vperm.xlu0 %1561, %v1554
    %v1563 = vpop.permute.xlu0 %1562
    %v1565 = vmul.f32 %v1542, %v1558
    %v1566 = vmul.f32 %v1541, %v1563
    %v1567 = vlaneseq
    %v1568 = vshrl.u32 %v1567, 7
    %v1569 = vsub.s32 1, %v1568
    %v1570 = vrot.slane %v1537, %v1569
    %v1571 = vmul.f32 %v1565, %v1570
    %v1572 = vmul.f32 %v1566, %v1570
    %v1573 = vadd.f32 %v1571, 0.0
    %v1574 = vadd.f32 %v1572, 0.0
    %v1575 = vrot.slane %v1533, 2
    %v1576 = vrot.slane %v1534, 2
    %v1577 = vsel %vm1014, %v1575, %v1576
    %v1578 = vsel %vm1014, %v1576, %v1575
    %v1579 = vmul.f32 %v1578, %v1301
    %v1580 = vmul.f32 %v1577, %v1306
    %v1581 = vlaneseq
    %v1582 = vshrl.u32 %v1581, 7
    %v1583 = vsub.s32 2, %v1582
    %v1584 = vrot.slane %v1537, %v1583
    %v1585 = vmul.f32 %v1579, %v1584
    %v1586 = vmul.f32 %v1580, %v1584
    %v1587 = vadd.f32 %v1573, %v1585
    %v1588 = vadd.f32 %v1574, %v1586
    %v1589 = vrot.slane %v1533, 3
    %v1590 = vrot.slane %v1534, 3
    %v1591 = vsel %vm1202, %v1589, %v1590
    %v1592 = vsel %vm1202, %v1590, %v1589
    %v1593 = vmul.f32 %v1592, %v1337
    %v1594 = vmul.f32 %v1591, %v1342
    %v1595 = vlaneseq
    %v1596 = vshrl.u32 %v1595, 7
    %v1597 = vsub.s32 3, %v1596
    %v1598 = vrot.slane %v1537, %v1597
    %v1599 = vmul.f32 %v1593, %v1598
    %v1600 = vmul.f32 %v1594, %v1598
    %v1601 = vadd.f32 %v1587, %v1599
    %v1602 = vadd.f32 %v1588, %v1600
    %v1603 = vrot.slane %v1533, 4
    %v1604 = vrot.slane %v1534, 4
    %v1605 = vsel %vm1064, %v1603, %v1604
    %v1606 = vsel %vm1064, %v1604, %v1603
    %v1607 = vmul.f32 %v1606, %v1082
    %v1608 = vmul.f32 %v1605, %v1087
    %v1609 = vlaneseq
    %v1610 = vshrl.u32 %v1609, 7
    %v1611 = vsub.s32 4, %v1610
    %v1612 = vrot.slane %v1537, %v1611
    %v1613 = vmul.f32 %v1607, %v1612
    %v1614 = vmul.f32 %v1608, %v1612
    %v1615 = vadd.f32 %v1601, %v1613
    %v1616 = vadd.f32 %v1602, %v1614
    %v1617 = vrot.slane %v1533, 5
    %v1618 = vrot.slane %v1534, 5
    %v1619 = vsel %vm1101, %v1617, %v1618
    %v1620 = vsel %vm1101, %v1618, %v1617
    %v1621 = vmul.f32 %v1620, %v1119
    %v1622 = vmul.f32 %v1619, %v1124
    %v1623 = vlaneseq
    %v1624 = vshrl.u32 %v1623, 7
    %v1625 = vsub.s32 5, %v1624
    %v1626 = vrot.slane %v1537, %v1625
    %v1627 = vmul.f32 %v1621, %v1626
    %v1628 = vmul.f32 %v1622, %v1626
    %v1629 = vadd.f32 %v1615, %v1627
    %v1630 = vadd.f32 %v1616, %v1628
    %v1631 = vrot.slane %v1533, 6
    %v1632 = vrot.slane %v1534, 6
    %v1633 = vsel %vm895, %v1631, %v1632
    %v1634 = vsel %vm895, %v1632, %v1631
    %v1635 = vmul.f32 %v1634, %v913
    %v1636 = vmul.f32 %v1633, %v918
    %v1637 = vlaneseq
    %v1638 = vshrl.u32 %v1637, 7
    %v1639 = vsub.s32 6, %v1638
    %v1640 = vrot.slane %v1537, %v1639
    %v1641 = vmul.f32 %v1635, %v1640
    %v1642 = vmul.f32 %v1636, %v1640
    %v1643 = vadd.f32 %v1629, %v1641
    %v1644 = vadd.f32 %v1630, %v1642
    %v1645 = vrot.slane %v1533, 7
    %v1646 = vrot.slane %v1534, 7
    %v1647 = vsel %vm932, %v1645, %v1646
    %v1648 = vsel %vm932, %v1646, %v1645
    %v1649 = vmul.f32 %v1648, %v950
    %v1650 = vmul.f32 %v1647, %v955
    %v1651 = vlaneseq
    %v1652 = vshrl.u32 %v1651, 7
    %v1653 = vsub.s32 7, %v1652
    %v1654 = vrot.slane %v1537, %v1653
    %v1655 = vmul.f32 %v1649, %v1654
    %v1656 = vmul.f32 %v1650, %v1654
    %v1657 = vadd.f32 %v1643, %v1655
    %v1658 = vadd.f32 %v1644, %v1656
    %v1659 = vlaneseq
    %v1660 = vshrl.u32 %v1659, 7
    %v1661 = vsub.s32 0, %v1660
    %v1662 = vrot.slane %v1538, %v1661
    %v1663 = vmul.f32 %v1533, %v1662
    %v1664 = vmul.f32 %v1534, %v1662
    %v1665 = vadd.f32 %v1657, %v1663
    %v1666 = vadd.f32 %v1658, %v1664
    %v1667 = vmul.f32 %v1541, %v995
    %v1668 = vmul.f32 %v1542, %v1000
    %v1669 = vlaneseq
    %v1670 = vshrl.u32 %v1669, 7
    %v1671 = vsub.s32 1, %v1670
    %v1672 = vrot.slane %v1538, %v1671
    %v1673 = vmul.f32 %v1667, %v1672
    %v1674 = vmul.f32 %v1668, %v1672
    %v1675 = vadd.f32 %v1665, %v1673
    %v1676 = vadd.f32 %v1666, %v1674
    %v1677 = vmul.f32 %v1577, %v1032
    %v1678 = vmul.f32 %v1578, %v1037
    %v1679 = vlaneseq
    %v1680 = vshrl.u32 %v1679, 7
    %v1681 = vsub.s32 2, %v1680
    %v1682 = vrot.slane %v1538, %v1681
    %v1683 = vmul.f32 %v1677, %v1682
    %v1684 = vmul.f32 %v1678, %v1682
    %v1685 = vadd.f32 %v1675, %v1683
    %v1686 = vadd.f32 %v1676, %v1684
    %v1687 = vmul.f32 %v1591, %v1220
    %v1688 = vmul.f32 %v1592, %v1225
    %v1689 = vlaneseq
    %v1690 = vshrl.u32 %v1689, 7
    %v1691 = vsub.s32 3, %v1690
    %v1692 = vrot.slane %v1538, %v1691
    %v1693 = vmul.f32 %v1687, %v1692
    %v1694 = vmul.f32 %v1688, %v1692
    %v1695 = vadd.f32 %v1685, %v1693
    %v1696 = vadd.f32 %v1686, %v1694
    %v1697 = vmul.f32 %v1605, %v1252
    %v1698 = vmul.f32 %v1606, %v1257
    %v1699 = vlaneseq
    %v1700 = vshrl.u32 %v1699, 7
    %v1701 = vsub.s32 4, %v1700
    %v1702 = vrot.slane %v1538, %v1701
    %v1703 = vmul.f32 %v1697, %v1702
    %v1704 = vmul.f32 %v1698, %v1702
    %v1705 = vadd.f32 %v1695, %v1703
    %v1706 = vadd.f32 %v1696, %v1704
    %v1707 = vmul.f32 %v1619, %v1477
    %v1708 = vmul.f32 %v1620, %v1482
    %v1709 = vlaneseq
    %v1710 = vshrl.u32 %v1709, 7
    %v1711 = vsub.s32 5, %v1710
    %v1712 = vrot.slane %v1538, %v1711
    %v1713 = vmul.f32 %v1707, %v1712
    %v1714 = vmul.f32 %v1708, %v1712
    %v1715 = vadd.f32 %v1705, %v1713
    %v1716 = vadd.f32 %v1706, %v1714
    %v1717 = vmul.f32 %v1633, %v1509
    %v1718 = vmul.f32 %v1634, %v1514
    %v1719 = vlaneseq
    %v1720 = vshrl.u32 %v1719, 7
    %v1721 = vsub.s32 6, %v1720
    %v1722 = vrot.slane %v1538, %v1721
    %v1723 = vmul.f32 %v1717, %v1722
    %v1724 = vmul.f32 %v1718, %v1722
    %v1725 = vadd.f32 %v1715, %v1723
    %v1726 = vadd.f32 %v1716, %v1724
    %v1727 = vadd.f32 %v135, 7.0
    %v1728 = vadd.f32 %v136, 7.0
    %vm1729 = vcmp.ge.f32.partialorder %v1727, 0.0
    %vm1730 = vcmp.ge.f32.partialorder %v1728, 0.0
    %vm1731 = vcmp.le.f32.partialorder %v1727, 7.0
    %vm1732 = vcmp.le.f32.partialorder %v1728, 7.0
    %vm1733 = vmand %vm1729, %vm1731
    %vm1734 = vmand %vm1730, %vm1732
    %v1735 = vsel %vm1733, 1, 0
    %v1736 = vsel %vm1734, 1, 0
    %v1737 = vcvt.s32.f32 %v1735
    %v1738 = vcvt.s32.f32 %v1736
    %1740 = vset.pattern.permute.xlu0 0
    %1741 = vperm.xlu0 %1740, %v1737
    %v1742 = vpop.permute.xlu0 %1741
    %1745 = vset.pattern.permute.xlu0 0
    %1746 = vperm.xlu0 %1745, %v1738
    %v1747 = vpop.permute.xlu0 %1746
    %v1749 = vmul.f32 %v1647, %v1742
    %v1750 = vmul.f32 %v1648, %v1747
    %v1751 = vlaneseq
    %v1752 = vshrl.u32 %v1751, 7
    %v1753 = vsub.s32 7, %v1752
    %v1754 = vrot.slane %v1538, %v1753
    %v1755 = vmul.f32 %v1749, %v1754
    %v1756 = vmul.f32 %v1750, %v1754
    %v1757 = vadd.f32 %v1725, %v1755
    %v1758 = vadd.f32 %v1726, %v1756
    %v1759 = vld [vmem:[%s17 + $0x3] sm:$0x1]
    %v1760 = vlaneseq
    %v1761 = vshrl.u32 %v1760, 7
    %v1762 = vsub.s32 0, %v1761
    %v1763 = vrot.slane %v1759, %v1762
    %v1764 = vadd.f32 %v1757, %v1763
    %v1765 = vadd.f32 %v1758, %v1763
    %v1766 = vmax.f32 %v1764, 0.0
    %v1767 = vmax.f32 %v1765, 0.0
    %v1768 = vadd.f32 %v1535, %v1766
    %v1769 = vadd.f32 %v1536, %v1767
    %v1770 = vld [vmem:[%s18] sm:$0xff]
    %v1771 = vld [vmem:[%s18 + $0x8] sm:$0xff]
    %v1772 = vld [vmem:[%s18 + $0x10] sm:$0xff]
    %v1773 = vld [vmem:[%s18 + $0x18] sm:$0xff]
    %v1774 = vld [vmem:[%s19] sm:$0x1]
    %v1776 = vlaneseq
    %v1777 = vshrl.u32 %v1776, 7
    %v1778 = vsub.s32 0, %v1777
    %v1779 = vrot.slane %v1774, %v1778
    %v1782 = vsel %vm143, %v1768, 0
    %v1785 = vsel %vm143, %v1769, 0
    %1787 = vmatprep.subr.mxu0 0.0
    %1788 = vmatpush1.msra.mxu0 0.0
    %1789 = vmatprep.subr.mxu0 0.0
    %1790 = vmatpush1.msra.mxu0 0.0
    %1791 = vmatprep.subr.mxu0 0.0
    %1792 = vmatpush1.msra.mxu0 0.0
    %1793 = vmatprep.subr.mxu0 0.0
    %1794 = vmatpush1.msra.mxu0 0.0
    %1795 = vmatprep.subr.mxu0 0.0
    %1796 = vmatpush1.msra.mxu0 0.0
    %1797 = vmatprep.subr.mxu0 0.0
    %1798 = vmatpush1.msra.mxu0 0.0
    %1799 = vmatprep.subr.mxu0 0.0
    %1800 = vmatpush1.msra.mxu0 0.0
    %1801 = vmatprep.subr.mxu0 0.0
    %1802 = vmatpush1.msra.mxu0 0.0
    %1803 = vmatprep.subr.mxu0 0.0
    %1804 = vmatpush1.msra.mxu0 0.0
    %1805 = vmatprep.subr.mxu0 0.0
    %1806 = vmatpush1.msra.mxu0 0.0
    %1807 = vmatprep.subr.mxu0 0.0
    %1808 = vmatpush1.msra.mxu0 0.0
    %1809 = vmatprep.subr.mxu0 0.0
    %1810 = vmatpush1.msra.mxu0 0.0
    %1811 = vmatprep.subr.mxu0 0.0
    %1812 = vmatpush1.msra.mxu0 %v1773
    %1813 = vmatprep.subr.mxu0 0.0
    %1814 = vmatpush1.msra.mxu0 %v1772
    %1815 = vmatprep.subr.mxu0 0.0
    %1816 = vmatpush1.msra.mxu0 %v1771
    %1817 = vmatprep.subr.mxu0 0.0
    %1818 = vmatpush1.msra.mxu0 %v1770
    %1819 = vmatprep.subr.mxu0 0.0
    %1820 = vmatpush2.msra.mxu0 0.0
    %1821 = vmatprep.subr.mxu0 0.0
    %1822 = vmatpush2.msra.mxu0 0.0
    %1823 = vmatprep.subr.mxu0 0.0
    %1824 = vmatpush2.msra.mxu0 0.0
    %1825 = vmatprep.subr.mxu0 0.0
    %1826 = vmatpush2.msra.mxu0 0.0
    %1827 = vmatprep.subr.mxu0 0.0
    %1828 = vmatpush2.msra.mxu0 0.0
    %1829 = vmatprep.subr.mxu0 0.0
    %1830 = vmatpush2.msra.mxu0 0.0
    %1831 = vmatprep.subr.mxu0 0.0
    %1832 = vmatpush2.msra.mxu0 0.0
    %1833 = vmatprep.subr.mxu0 0.0
    %1834 = vmatpush2.msra.mxu0 0.0
    %1835 = vmatprep.subr.mxu0 0.0
    %1836 = vmatpush2.msra.mxu0 0.0
    %1837 = vmatprep.subr.mxu0 0.0
    %1838 = vmatpush2.msra.mxu0 0.0
    %1839 = vmatprep.subr.mxu0 0.0
    %1840 = vmatpush2.msra.mxu0 0.0
    %1841 = vmatprep.subr.mxu0 0.0
    %1842 = vmatpush2.msra.mxu0 0.0
    %1843 = vmatprep.subr.mxu0 0.0
    %1844 = vmatpush2.msra.mxu0 0.0
    %1845 = vmatprep.subr.mxu0 0.0
    %1846 = vmatpush2.msra.mxu0 0.0
    %1847 = vmatprep.subr.mxu0 0.0
    %1848 = vmatpush2.msra.mxu0 0.0
    %1849 = vmatprep.subr.mxu0 0.0
    %1850 = vmatpush2.msra.mxu0 0.0
    %1851 = vmatprep.mubr.f32.mxu0 0.0
    %1852 = vmatmul.mubr.f32.gmra.mxu0 %v1782
    %v1853 = vpop.f32.mrf.mxu0
    %v1854 = vadd.f32 %v1779, %v1853
    %v1855 = vpop.f32.mrf.mxu0
    %1856 = vmatprep.mubr.f32.mxu0 0.0
    %1857 = vmatmul.mubr.f32.gmra.mxu0 %v1785
    %v1858 = vpop.f32.mrf.mxu0
    %v1859 = vadd.f32 %v1779, %v1858
    %v1860 = vpop.f32.mrf.mxu0
    %1861 = vdwg.mxu0
    %v1862 = vadd.f32 %v127, %v1854
    %v1863 = vadd.f32 %v128, %v1859
    %v1864 = vsel %vm143, %v1862, 0.0
    %1865 = vadd.xlane.f32.xlu0 %v1864
    %v1866 = vpop.xlane.xlu0 %1865
    %v1867 = vsel %vm143, %v1863, 0.0
    %1868 = vadd.xlane.f32.xlu0 %v1867
    %v1869 = vpop.xlane.xlu0 %1868
    %v1870 = vmul.f32 %v1866, %v855
    %v1871 = vmul.f32 %v1869, %v855
    %v1872 = vsub.f32 %v1862, %v1870
    %v1873 = vsub.f32 %v1863, %v1871
    %v1874 = vmul.f32 %v1872, %v1872
    %v1875 = vmul.f32 %v1873, %v1873
    %v1876 = vsel %vm143, %v1874, 0.0
    %1877 = vadd.xlane.f32.xlu0 %v1876
    %v1878 = vpop.xlane.xlu0 %1877
    %v1879 = vsel %vm143, %v1875, 0.0
    %1880 = vadd.xlane.f32.xlu0 %v1879
    %v1881 = vpop.xlane.xlu0 %1880
    %v1882 = vmul.f32 %v1878, %v855
    %v1883 = vmul.f32 %v1881, %v855
    %v1884 = vadd.f32 %v1882, 1e-06
    %v1885 = vadd.f32 %v1883, 1e-06
    %v1886 = vrsqrt.pop %v1884
    %v1887 = vrsqrt.pop %v1885
    %v1888 = vmul.f32 %v1872, %v1886
    %v1889 = vmul.f32 %v1873, %v1887
    %1890 = vrot.lane.b32.xlu0 %v876, 32
    %v1891 = vpop.permute.xlu0 %1890
    %1892 = vrot.lane.b32.xlu0 %v877, 32
    %v1893 = vpop.permute.xlu0 %1892
    %v1896 = vmul.f32 %v1888, %v1891
    %v1897 = vmul.f32 %v1889, %v1893
    %1900 = vrot.lane.b32.xlu0 %v841, 64
    %v1901 = vpop.permute.xlu0 %1900
    %1902 = vrot.lane.b32.xlu0 %v846, 64
    %v1903 = vpop.permute.xlu0 %1902
    %v1906 = vadd.f32 %v1896, %v1901
    %v1907 = vadd.f32 %v1897, %v1903
    %v1908 = vld [vmem:[%s20] sm:$0xff]
    %v1909 = vld [vmem:[%s20 + $0x8] sm:$0xff]
    %v1910 = vld [vmem:[%s20 + $0x10] sm:$0xff]
    %v1911 = vld [vmem:[%s20 + $0x18] sm:$0xff]
    %v1912 = vld [vmem:[%s21] sm:$0x1]
    %v1914 = vlaneseq
    %v1915 = vshrl.u32 %v1914, 7
    %v1916 = vsub.s32 0, %v1915
    %v1917 = vrot.slane %v1912, %v1916
    %v1920 = vsel %vm143, %v1906, 0
    %v1923 = vsel %vm143, %v1907, 0
    %1925 = vmatprep.subr.mxu0 0.0
    %1926 = vmatpush1.msra.mxu0 0.0
    %1927 = vmatprep.subr.mxu0 0.0
    %1928 = vmatpush1.msra.mxu0 0.0
    %1929 = vmatprep.subr.mxu0 0.0
    %1930 = vmatpush1.msra.mxu0 0.0
    %1931 = vmatprep.subr.mxu0 0.0
    %1932 = vmatpush1.msra.mxu0 0.0
    %1933 = vmatprep.subr.mxu0 0.0
    %1934 = vmatpush1.msra.mxu0 0.0
    %1935 = vmatprep.subr.mxu0 0.0
    %1936 = vmatpush1.msra.mxu0 0.0
    %1937 = vmatprep.subr.mxu0 0.0
    %1938 = vmatpush1.msra.mxu0 0.0
    %1939 = vmatprep.subr.mxu0 0.0
    %1940 = vmatpush1.msra.mxu0 0.0
    %1941 = vmatprep.subr.mxu0 0.0
    %1942 = vmatpush1.msra.mxu0 0.0
    %1943 = vmatprep.subr.mxu0 0.0
    %1944 = vmatpush1.msra.mxu0 0.0
    %1945 = vmatprep.subr.mxu0 0.0
    %1946 = vmatpush1.msra.mxu0 0.0
    %1947 = vmatprep.subr.mxu0 0.0
    %1948 = vmatpush1.msra.mxu0 0.0
    %1949 = vmatprep.subr.mxu0 0.0
    %1950 = vmatpush1.msra.mxu0 %v1911
    %1951 = vmatprep.subr.mxu0 0.0
    %1952 = vmatpush1.msra.mxu0 %v1910
    %1953 = vmatprep.subr.mxu0 0.0
    %1954 = vmatpush1.msra.mxu0 %v1909
    %1955 = vmatprep.subr.mxu0 0.0
    %1956 = vmatpush1.msra.mxu0 %v1908
    %1957 = vmatprep.subr.mxu0 0.0
    %1958 = vmatpush2.msra.mxu0 0.0
    %1959 = vmatprep.subr.mxu0 0.0
    %1960 = vmatpush2.msra.mxu0 0.0
    %1961 = vmatprep.subr.mxu0 0.0
    %1962 = vmatpush2.msra.mxu0 0.0
    %1963 = vmatprep.subr.mxu0 0.0
    %1964 = vmatpush2.msra.mxu0 0.0
    %1965 = vmatprep.subr.mxu0 0.0
    %1966 = vmatpush2.msra.mxu0 0.0
    %1967 = vmatprep.subr.mxu0 0.0
    %1968 = vmatpush2.msra.mxu0 0.0
    %1969 = vmatprep.subr.mxu0 0.0
    %1970 = vmatpush2.msra.mxu0 0.0
    %1971 = vmatprep.subr.mxu0 0.0
    %1972 = vmatpush2.msra.mxu0 0.0
    %1973 = vmatprep.subr.mxu0 0.0
    %1974 = vmatpush2.msra.mxu0 0.0
    %1975 = vmatprep.subr.mxu0 0.0
    %1976 = vmatpush2.msra.mxu0 0.0
    %1977 = vmatprep.subr.mxu0 0.0
    %1978 = vmatpush2.msra.mxu0 0.0
    %1979 = vmatprep.subr.mxu0 0.0
    %1980 = vmatpush2.msra.mxu0 0.0
    %1981 = vmatprep.subr.mxu0 0.0
    %1982 = vmatpush2.msra.mxu0 0.0
    %1983 = vmatprep.subr.mxu0 0.0
    %1984 = vmatpush2.msra.mxu0 0.0
    %1985 = vmatprep.subr.mxu0 0.0
    %1986 = vmatpush2.msra.mxu0 0.0
    %1987 = vmatprep.subr.mxu0 0.0
    %1988 = vmatpush2.msra.mxu0 0.0
    %1989 = vmatprep.mubr.f32.mxu0 0.0
    %1990 = vmatmul.mubr.f32.gmra.mxu0 %v1920
    %v1991 = vpop.f32.mrf.mxu0
    %v1992 = vadd.f32 %v1917, %v1991
    %v1993 = vpop.f32.mrf.mxu0
    %1994 = vmatprep.mubr.f32.mxu0 0.0
    %1995 = vmatmul.mubr.f32.gmra.mxu0 %v1923
    %v1996 = vpop.f32.mrf.mxu0
    %v1997 = vadd.f32 %v1917, %v1996
    %v1998 = vpop.f32.mrf.mxu0
    %1999 = vdwg.mxu0
    %v2000 = vmax.f32 %v1992, 0.0
    %v2001 = vmax.f32 %v1997, 0.0
    %v2002 = vld [vmem:[%s22] sm:$0xff]
    %v2003 = vld [vmem:[%s22 + $0x8] sm:$0xff]
    %v2004 = vld [vmem:[%s22 + $0x10] sm:$0xff]
    %v2005 = vld [vmem:[%s22 + $0x18] sm:$0xff]
    %v2006 = vld [vmem:[%s22 + $0x20] sm:$0xff]
    %v2007 = vld [vmem:[%s22 + $0x28] sm:$0xff]
    %v2008 = vld [vmem:[%s22 + $0x30] sm:$0xff]
    %v2009 = vld [vmem:[%s22 + $0x38] sm:$0xff]
    %v2010 = vld [vmem:[%s22 + $0x40] sm:$0xff]
    %v2011 = vld [vmem:[%s22 + $0x48] sm:$0xff]
    %v2012 = vld [vmem:[%s22 + $0x50] sm:$0xff]
    %v2013 = vld [vmem:[%s22 + $0x58] sm:$0xff]
    %v2014 = vld [vmem:[%s22 + $0x60] sm:$0xff]
    %v2015 = vld [vmem:[%s22 + $0x68] sm:$0xff]
    %v2016 = vld [vmem:[%s22 + $0x70] sm:$0xff]
    %v2017 = vld [vmem:[%s22 + $0x78] sm:$0xff]
    %v2018 = vld [vmem:[%s23] sm:$0x1]
    %v2020 = vlaneseq
    %v2021 = vshrl.u32 %v2020, 7
    %v2022 = vsub.s32 0, %v2021
    %v2023 = vrot.slane %v2018, %v2022
    %2025 = vmatprep.subr.mxu0 0.0
    %2026 = vmatpush1.msra.mxu0 %v2017
    %2027 = vmatprep.subr.mxu0 0.0
    %2028 = vmatpush1.msra.mxu0 %v2016
    %2029 = vmatprep.subr.mxu0 0.0
    %2030 = vmatpush1.msra.mxu0 %v2015
    %2031 = vmatprep.subr.mxu0 0.0
    %2032 = vmatpush1.msra.mxu0 %v2014
    %2033 = vmatprep.subr.mxu0 0.0
    %2034 = vmatpush1.msra.mxu0 %v2013
    %2035 = vmatprep.subr.mxu0 0.0
    %2036 = vmatpush1.msra.mxu0 %v2012
    %2037 = vmatprep.subr.mxu0 0.0
    %2038 = vmatpush1.msra.mxu0 %v2011
    %2039 = vmatprep.subr.mxu0 0.0
    %2040 = vmatpush1.msra.mxu0 %v2010
    %2041 = vmatprep.subr.mxu0 0.0
    %2042 = vmatpush1.msra.mxu0 %v2009
    %2043 = vmatprep.subr.mxu0 0.0
    %2044 = vmatpush1.msra.mxu0 %v2008
    %2045 = vmatprep.subr.mxu0 0.0
    %2046 = vmatpush1.msra.mxu0 %v2007
    %2047 = vmatprep.subr.mxu0 0.0
    %2048 = vmatpush1.msra.mxu0 %v2006
    %2049 = vmatprep.subr.mxu0 0.0
    %2050 = vmatpush1.msra.mxu0 %v2005
    %2051 = vmatprep.subr.mxu0 0.0
    %2052 = vmatpush1.msra.mxu0 %v2004
    %2053 = vmatprep.subr.mxu0 0.0
    %2054 = vmatpush1.msra.mxu0 %v2003
    %2055 = vmatprep.subr.mxu0 0.0
    %2056 = vmatpush1.msra.mxu0 %v2002
    %2057 = vmatprep.subr.mxu0 0.0
    %2058 = vmatpush2.msra.mxu0 0.0
    %2059 = vmatprep.subr.mxu0 0.0
    %2060 = vmatpush2.msra.mxu0 0.0
    %2061 = vmatprep.subr.mxu0 0.0
    %2062 = vmatpush2.msra.mxu0 0.0
    %2063 = vmatprep.subr.mxu0 0.0
    %2064 = vmatpush2.msra.mxu0 0.0
    %2065 = vmatprep.subr.mxu0 0.0
    %2066 = vmatpush2.msra.mxu0 0.0
    %2067 = vmatprep.subr.mxu0 0.0
    %2068 = vmatpush2.msra.mxu0 0.0
    %2069 = vmatprep.subr.mxu0 0.0
    %2070 = vmatpush2.msra.mxu0 0.0
    %2071 = vmatprep.subr.mxu0 0.0
    %2072 = vmatpush2.msra.mxu0 0.0
    %2073 = vmatprep.subr.mxu0 0.0
    %2074 = vmatpush2.msra.mxu0 0.0
    %2075 = vmatprep.subr.mxu0 0.0
    %2076 = vmatpush2.msra.mxu0 0.0
    %2077 = vmatprep.subr.mxu0 0.0
    %2078 = vmatpush2.msra.mxu0 0.0
    %2079 = vmatprep.subr.mxu0 0.0
    %2080 = vmatpush2.msra.mxu0 0.0
    %2081 = vmatprep.subr.mxu0 0.0
    %2082 = vmatpush2.msra.mxu0 0.0
    %2083 = vmatprep.subr.mxu0 0.0
    %2084 = vmatpush2.msra.mxu0 0.0
    %2085 = vmatprep.subr.mxu0 0.0
    %2086 = vmatpush2.msra.mxu0 0.0
    %2087 = vmatprep.subr.mxu0 0.0
    %2088 = vmatpush2.msra.mxu0 0.0
    %2089 = vmatprep.mubr.f32.mxu0 0.0
    %2090 = vmatmul.mubr.f32.gmra.mxu0 %v2000
    %v2091 = vpop.f32.mrf.mxu0
    %v2092 = vadd.f32 %v2023, %v2091
    %v2093 = vpop.f32.mrf.mxu0
    %2094 = vmatprep.mubr.f32.mxu0 0.0
    %2095 = vmatmul.mubr.f32.gmra.mxu0 %v2001
    %v2096 = vpop.f32.mrf.mxu0
    %v2097 = vadd.f32 %v2023, %v2096
    %v2098 = vpop.f32.mrf.mxu0
    %2099 = vdwg.mxu0
    %v2100 = vadd.f32 %v1862, %v2092
    %v2101 = vadd.f32 %v1863, %v2097
    %2102 = vst.msk [vmem:[#allocation10] sm:$0xff] %vm143, %v2100
    %2103 = vst.msk [vmem:[#allocation10 + $0x8] sm:$0xff] %vm143, %v2101
    // Predicated region
    $region114: #{tpu_custom_call.1} parent=1 // pred_check
      _
    $region115: #{tpu_custom_call.1} parent=1 // pred_check_branch
      %2105 = sbr.rel (0) target = $region117
    $region116: #{tpu_custom_call.1} parent=1 // pred_region
      %s2107 = ssub.s32 256, 256
      %2108 = vsyncadd [#allocation4], %s2107
      %s2109 = sshll.u32 [#allocation10], 4
      %s2110 = int_to_ptr.vmem [resolvable:$true] %s2109
      %2115 = dma.vmem_to_hbm [thread:$0]  %s2110, 256, %s24, [#allocation4], 128, 128, 8
    $region117: #{tpu_custom_call.1} parent=1 // pred_fallthru
      _
    // Predicated region
    $region118: #{tpu_custom_call.1} parent=1 // pred_check
      _
    $region119: #{tpu_custom_call.1} parent=1 // pred_check_branch
      %2117 = sbr.rel (0) target = $region121
    $region120: #{tpu_custom_call.1} parent=1 // pred_region
      %2118 = dma.done [#allocation4], 256
    $region121: #{tpu_custom_call.1} parent=1 // pred_fallthru
      _
    %2119 = vsyncpa [#allocation3], 1
    %2120 = vsyncpa [#allocation6], 1
    %2121 = vsyncpa [#allocation9], 1
    %2122 = vsyncpa [#allocation4], 1

// kernel: tpu_custom_call.1
$region0: #{tpu_custom_call.1}
  #allocation0 [shape = 'u32[]', space=smem, size = 0x4, offset = 0x4, fixed_abs, tag = 'smem constant byte address 0x4 - core index']
  #allocation1 [shape = 'u32[144,128]{1,0:T(1,128)}', space=vmem, size = 0x12000, scoped, tag = 'internal scratch']
  #allocation2 [shape = 'f32[32,32]{1,0:T(8,128)}', space=vmem, size = 0x4000, scoped, tag = 'scratch operand']
  %s0 = inlined_call_operand.vmem [shape: f32[16,32], index: 0, kind: input, shape index: {}]
  %s1 = inlined_call_operand.hbm [shape: f32[16,32], index: 1, kind: input, shape index: {}]
  %s2 = inlined_call_operand.vmem [shape: f32[16,1], index: 2, kind: input, shape index: {}]
  %s3 = inlined_call_operand.vmem [shape: f32[16,1], index: 3, kind: input, shape index: {}]
  %s4 = inlined_call_operand.vmem [shape: f32[16,1], index: 4, kind: input, shape index: {}]
  %s5 = inlined_call_operand.vmem [shape: f32[16,1], index: 5, kind: input, shape index: {}]
  %s6 = inlined_call_operand.hbm [shape: f32[2,16], index: 6, kind: input, shape index: {}]
  %s7 = inlined_call_operand.hbm [shape: f32[2,16], index: 7, kind: input, shape index: {}]
  %s8 = inlined_call_operand.vmem [shape: f32[16,2], index: 8, kind: input, shape index: {}]
  %s9 = inlined_call_operand.vmem [shape: f32[32,32], index: 9, kind: input, shape index: {}]
  %s10 = inlined_call_operand.vmem [shape: f32[32,32], index: 10, kind: input, shape index: {}]
  %s11 = inlined_call_operand.vmem [shape: f32[32,128], index: 11, kind: input, shape index: {}]
  %s12 = inlined_call_operand.vmem [shape: f32[1,128], index: 12, kind: input, shape index: {}]
  %s13 = inlined_call_operand.hbm [shape: f32[5,32], index: 13, kind: input, shape index: {}]
  %s14 = inlined_call_operand.vmem [shape: f32[9,32], index: 14, kind: input, shape index: {}]
  %s15 = inlined_call_operand.vmem [shape: f32[13,32], index: 15, kind: input, shape index: {}]
  %s16 = inlined_call_operand.vmem [shape: f32[17,32], index: 16, kind: input, shape index: {}]
  %s17 = inlined_call_operand.vmem [shape: f32[4,32], index: 17, kind: input, shape index: {}]
  %s18 = inlined_call_operand.vmem [shape: f32[32,32], index: 18, kind: input, shape index: {}]
  %s19 = inlined_call_operand.vmem [shape: f32[1,32], index: 19, kind: input, shape index: {}]
  %s20 = inlined_call_operand.vmem [shape: f32[32,128], index: 20, kind: input, shape index: {}]
  %s21 = inlined_call_operand.vmem [shape: f32[1,128], index: 21, kind: input, shape index: {}]
  %s22 = inlined_call_operand.vmem [shape: f32[128,32], index: 22, kind: input, shape index: {}]
  %s23 = inlined_call_operand.vmem [shape: f32[1,32], index: 23, kind: input, shape index: {}]
  %s24 = inlined_call_operand.hbm [shape: f32[16,32], index: 24, kind: output, shape index: {}]
  %s25 = sld [smem:[#allocation0]]
  $region122: #{tpu_custom_call.1} parent=0
    _
  %s27 = ssub.s32 1, %s25
  %s28 = scalar_select 0, %s27, %s25
  $region1: #{tpu_custom_call.1} parent=0
    #allocation3 [shape = 'u8[8192]{0}', space=vmem, size = 0x2000, scoped, tag = 'input window, operand 1, single buffered']
    #allocation4 [shape = 's32[1]{0}', space=sflag, size = 0x4, scoped, tag = 'scoped memory for tpu_custom_call.1']
    #allocation5 [shape = 's32[1]{0}', space=sflag, size = 0x4, scoped, tag = 'scoped memory for tpu_custom_call.1']
    #allocation6 [shape = 'u8[1024]{0}', space=vmem, size = 0x400, scoped, tag = 'input window, operand 6, single buffered']
    #allocation7 [shape = 's32[1]{0}', space=sflag, size = 0x4, scoped, tag = 'scoped memory for tpu_custom_call.1']
    #allocation8 [shape = 'u8[1024]{0}', space=vmem, size = 0x400, scoped, tag = 'input window, operand 7, single buffered']
    #allocation9 [shape = 'u8[4096]{0}', space=vmem, size = 0x1000, scoped, tag = 'input window, operand 13, single buffered']
    #allocation10 [shape = 's32[1]{0}', space=sflag, size = 0x4, scoped, tag = 'scoped memory for tpu_custom_call.1']
    #allocation11 [shape = 'u8[8192]{0}', space=vmem, size = 0x2000, scoped, tag = 'output window, operand 0, single buffered']
    %29 = vsyncpa [#allocation4], 0
    %30 = vsyncpa [#allocation7], 0
    %31 = vsyncpa [#allocation10], 0
    %32 = vsyncpa [#allocation5], 0
    // Predicated region
    $region2: #{tpu_custom_call.1} parent=1 // pred_check
      _
    $region3: #{tpu_custom_call.1} parent=1 // pred_check_branch
      %34 = sbr.rel (0) target = $region5
    $region4: #{tpu_custom_call.1} parent=1 // pred_region
      _
    $region5: #{tpu_custom_call.1} parent=1 // pred_fallthru
      _
    // Predicated region
    $region6: #{tpu_custom_call.1} parent=1 // pred_check
      _
    $region7: #{tpu_custom_call.1} parent=1 // pred_check_branch
      %36 = sbr.rel (0) target = $region9
    $region8: #{tpu_custom_call.1} parent=1 // pred_region
      %s38 = ssub.s32 256, 256
      %39 = vsyncadd [#allocation4], %s38
      %s40 = sshll.u32 [#allocation3], 4
      %s41 = int_to_ptr.vmem [resolvable:$true] %s40
      %46 = dma.hbm_to_vmem [thread:$0]  %s1, 256, %s41, [#allocation4], 128, 128, 8
    $region9: #{tpu_custom_call.1} parent=1 // pred_fallthru
      _
    // Predicated region
    $region10: #{tpu_custom_call.1} parent=1 // pred_check
      _
    $region11: #{tpu_custom_call.1} parent=1 // pred_check_branch
      %48 = sbr.rel (0) target = $region13
    $region12: #{tpu_custom_call.1} parent=1 // pred_region
      _
    $region13: #{tpu_custom_call.1} parent=1 // pred_fallthru
      _
    // Predicated region
    $region14: #{tpu_custom_call.1} parent=1 // pred_check
      _
    $region15: #{tpu_custom_call.1} parent=1 // pred_check_branch
      %50 = sbr.rel (0) target = $region17
    $region16: #{tpu_custom_call.1} parent=1 // pred_region
      _
    $region17: #{tpu_custom_call.1} parent=1 // pred_fallthru
      _
    // Predicated region
    $region18: #{tpu_custom_call.1} parent=1 // pred_check
      _
    $region19: #{tpu_custom_call.1} parent=1 // pred_check_branch
      %52 = sbr.rel (0) target = $region21
    $region20: #{tpu_custom_call.1} parent=1 // pred_region
      _
    $region21: #{tpu_custom_call.1} parent=1 // pred_fallthru
      _
    // Predicated region
    $region22: #{tpu_custom_call.1} parent=1 // pred_check
      _
    $region23: #{tpu_custom_call.1} parent=1 // pred_check_branch
      %54 = sbr.rel (0) target = $region25
    $region24: #{tpu_custom_call.1} parent=1 // pred_region
      _
    $region25: #{tpu_custom_call.1} parent=1 // pred_fallthru
      _
    // Predicated region
    $region26: #{tpu_custom_call.1} parent=1 // pred_check
      _
    $region27: #{tpu_custom_call.1} parent=1 // pred_check_branch
      %56 = sbr.rel (0) target = $region29
    $region28: #{tpu_custom_call.1} parent=1 // pred_region
      %s58 = ssub.s32 32, 32
      %59 = vsyncadd [#allocation7], %s58
      %s61 = sshll.u32 [#allocation6], 4
      %s62 = int_to_ptr.vmem [resolvable:$true] %s61
      %64 = dma.hbm_to_vmem [thread:$0]  %s6, 32, %s62, [#allocation7]
    $region29: #{tpu_custom_call.1} parent=1 // pred_fallthru
      _
    // Predicated region
    $region30: #{tpu_custom_call.1} parent=1 // pred_check
      _
    $region31: #{tpu_custom_call.1} parent=1 // pred_check_branch
      %66 = sbr.rel (0) target = $region33
    $region32: #{tpu_custom_call.1} parent=1 // pred_region
      %s68 = ssub.s32 32, 32
      %69 = vsyncadd [#allocation7], %s68
      %s71 = sshll.u32 [#allocation8], 4
      %s72 = int_to_ptr.vmem [resolvable:$true] %s71
      %74 = dma.hbm_to_vmem [thread:$0]  %s7, 32, %s72, [#allocation7]
    $region33: #{tpu_custom_call.1} parent=1 // pred_fallthru
      _
    // Predicated region
    $region34: #{tpu_custom_call.1} parent=1 // pred_check
      _
    $region35: #{tpu_custom_call.1} parent=1 // pred_check_branch
      %76 = sbr.rel (0) target = $region37
    $region36: #{tpu_custom_call.1} parent=1 // pred_region
      _
    $region37: #{tpu_custom_call.1} parent=1 // pred_fallthru
      _
    // Predicated region
    $region38: #{tpu_custom_call.1} parent=1 // pred_check
      _
    $region39: #{tpu_custom_call.1} parent=1 // pred_check_branch
      %78 = sbr.rel (0) target = $region41
    $region40: #{tpu_custom_call.1} parent=1 // pred_region
      _
    $region41: #{tpu_custom_call.1} parent=1 // pred_fallthru
      _
    // Predicated region
    $region42: #{tpu_custom_call.1} parent=1 // pred_check
      _
    $region43: #{tpu_custom_call.1} parent=1 // pred_check_branch
      %80 = sbr.rel (0) target = $region45
    $region44: #{tpu_custom_call.1} parent=1 // pred_region
      _
    $region45: #{tpu_custom_call.1} parent=1 // pred_fallthru
      _
    // Predicated region
    $region46: #{tpu_custom_call.1} parent=1 // pred_check
      _
    $region47: #{tpu_custom_call.1} parent=1 // pred_check_branch
      %82 = sbr.rel (0) target = $region49
    $region48: #{tpu_custom_call.1} parent=1 // pred_region
      _
    $region49: #{tpu_custom_call.1} parent=1 // pred_fallthru
      _
    // Predicated region
    $region50: #{tpu_custom_call.1} parent=1 // pred_check
      _
    $region51: #{tpu_custom_call.1} parent=1 // pred_check_branch
      %84 = sbr.rel (0) target = $region53
    $region52: #{tpu_custom_call.1} parent=1 // pred_region
      _
    $region53: #{tpu_custom_call.1} parent=1 // pred_fallthru
      _
    // Predicated region
    $region54: #{tpu_custom_call.1} parent=1 // pred_check
      _
    $region55: #{tpu_custom_call.1} parent=1 // pred_check_branch
      %86 = sbr.rel (0) target = $region57
    $region56: #{tpu_custom_call.1} parent=1 // pred_region
      %s88 = ssub.s32 128, 128
      %89 = vsyncadd [#allocation10], %s88
      %s91 = sshll.u32 [#allocation9], 4
      %s92 = int_to_ptr.vmem [resolvable:$true] %s91
      %94 = dma.hbm_to_vmem [thread:$0]  %s13, 128, %s92, [#allocation10]
    $region57: #{tpu_custom_call.1} parent=1 // pred_fallthru
      _
    // Predicated region
    $region58: #{tpu_custom_call.1} parent=1 // pred_check
      _
    $region59: #{tpu_custom_call.1} parent=1 // pred_check_branch
      %96 = sbr.rel (0) target = $region61
    $region60: #{tpu_custom_call.1} parent=1 // pred_region
      _
    $region61: #{tpu_custom_call.1} parent=1 // pred_fallthru
      _
    // Predicated region
    $region62: #{tpu_custom_call.1} parent=1 // pred_check
      _
    $region63: #{tpu_custom_call.1} parent=1 // pred_check_branch
      %98 = sbr.rel (0) target = $region65
    $region64: #{tpu_custom_call.1} parent=1 // pred_region
      _
    $region65: #{tpu_custom_call.1} parent=1 // pred_fallthru
      _
    // Predicated region
    $region66: #{tpu_custom_call.1} parent=1 // pred_check
      _
    $region67: #{tpu_custom_call.1} parent=1 // pred_check_branch
      %100 = sbr.rel (0) target = $region69
    $region68: #{tpu_custom_call.1} parent=1 // pred_region
      _
    $region69: #{tpu_custom_call.1} parent=1 // pred_fallthru
      _
    // Predicated region
    $region70: #{tpu_custom_call.1} parent=1 // pred_check
      _
    $region71: #{tpu_custom_call.1} parent=1 // pred_check_branch
      %102 = sbr.rel (0) target = $region73
    $region72: #{tpu_custom_call.1} parent=1 // pred_region
      _
    $region73: #{tpu_custom_call.1} parent=1 // pred_fallthru
      _
    // Predicated region
    $region74: #{tpu_custom_call.1} parent=1 // pred_check
      _
    $region75: #{tpu_custom_call.1} parent=1 // pred_check_branch
      %104 = sbr.rel (0) target = $region77
    $region76: #{tpu_custom_call.1} parent=1 // pred_region
      _
    $region77: #{tpu_custom_call.1} parent=1 // pred_fallthru
      _
    // Predicated region
    $region78: #{tpu_custom_call.1} parent=1 // pred_check
      _
    $region79: #{tpu_custom_call.1} parent=1 // pred_check_branch
      %106 = sbr.rel (0) target = $region81
    $region80: #{tpu_custom_call.1} parent=1 // pred_region
      _
    $region81: #{tpu_custom_call.1} parent=1 // pred_fallthru
      _
    // Predicated region
    $region82: #{tpu_custom_call.1} parent=1 // pred_check
      _
    $region83: #{tpu_custom_call.1} parent=1 // pred_check_branch
      %108 = sbr.rel (0) target = $region85
    $region84: #{tpu_custom_call.1} parent=1 // pred_region
      _
    $region85: #{tpu_custom_call.1} parent=1 // pred_fallthru
      _
    // Predicated region
    $region86: #{tpu_custom_call.1} parent=1 // pred_check
      _
    $region87: #{tpu_custom_call.1} parent=1 // pred_check_branch
      %110 = sbr.rel (0) target = $region89
    $region88: #{tpu_custom_call.1} parent=1 // pred_region
      _
    $region89: #{tpu_custom_call.1} parent=1 // pred_fallthru
      _
    // Predicated region
    $region90: #{tpu_custom_call.1} parent=1 // pred_check
      _
    $region91: #{tpu_custom_call.1} parent=1 // pred_check_branch
      %112 = sbr.rel (0) target = $region93
    $region92: #{tpu_custom_call.1} parent=1 // pred_region
      _
    $region93: #{tpu_custom_call.1} parent=1 // pred_fallthru
      _
    // Predicated region
    $region94: #{tpu_custom_call.1} parent=1 // pred_check
      _
    $region95: #{tpu_custom_call.1} parent=1 // pred_check_branch
      %114 = sbr.rel (0) target = $region97
    $region96: #{tpu_custom_call.1} parent=1 // pred_region
      _
    $region97: #{tpu_custom_call.1} parent=1 // pred_fallthru
      _
    // Predicated region
    $region98: #{tpu_custom_call.1} parent=1 // pred_check
      _
    $region99: #{tpu_custom_call.1} parent=1 // pred_check_branch
      %116 = sbr.rel (0) target = $region101
    $region100: #{tpu_custom_call.1} parent=1 // pred_region
      %117 = dma.done [#allocation4], 256
    $region101: #{tpu_custom_call.1} parent=1 // pred_fallthru
      _
    // Predicated region
    $region102: #{tpu_custom_call.1} parent=1 // pred_check
      _
    $region103: #{tpu_custom_call.1} parent=1 // pred_check_branch
      %119 = sbr.rel (0) target = $region105
    $region104: #{tpu_custom_call.1} parent=1 // pred_region
      %120 = dma.done [#allocation7], 32
    $region105: #{tpu_custom_call.1} parent=1 // pred_fallthru
      _
    // Predicated region
    $region106: #{tpu_custom_call.1} parent=1 // pred_check
      _
    $region107: #{tpu_custom_call.1} parent=1 // pred_check_branch
      %122 = sbr.rel (0) target = $region109
    $region108: #{tpu_custom_call.1} parent=1 // pred_region
      %123 = dma.done [#allocation7], 32
    $region109: #{tpu_custom_call.1} parent=1 // pred_fallthru
      _
    // Predicated region
    $region110: #{tpu_custom_call.1} parent=1 // pred_check
      _
    $region111: #{tpu_custom_call.1} parent=1 // pred_check_branch
      %125 = sbr.rel (0) target = $region113
    $region112: #{tpu_custom_call.1} parent=1 // pred_region
      %126 = dma.done [#allocation10], 128
    $region113: #{tpu_custom_call.1} parent=1 // pred_fallthru
      _
    %v127 = vld [vmem:[%s0] sm:$0xff]
    %v128 = vld [vmem:[%s0 + $0x8] sm:$0xff]
    %v129 = vld [vmem:[#allocation3] sm:$0xff]
    %v130 = vld [vmem:[#allocation3 + $0x8] sm:$0xff]
    %v131 = vld [vmem:[%s2] sm:$0xff]
    %v132 = vld [vmem:[%s2 + $0x8] sm:$0xff]
    %v133 = vld [vmem:[%s3] sm:$0xff]
    %v134 = vld [vmem:[%s3 + $0x8] sm:$0xff]
    %v135 = vld [vmem:[%s4] sm:$0xff]
    %v136 = vld [vmem:[%s4 + $0x8] sm:$0xff]
    %v137 = vld [vmem:[%s5] sm:$0xff]
    %v138 = vld [vmem:[%s5 + $0x8] sm:$0xff]
    %v139 = vld [vmem:[%s9] sm:$0xff]
    %v140 = vld [vmem:[%s9 + $0x8] sm:$0xff]
    %v141 = vld [vmem:[%s9 + $0x10] sm:$0xff]
    %v142 = vld [vmem:[%s9 + $0x18] sm:$0xff]
    %vm143 = vcmask 261120
    %v145 = vsel %vm143, %v127, 0
    %v148 = vsel %vm143, %v128, 0
    %150 = vmatprep.subr.mxu0 0.0
    %151 = vmatpush1.msra.mxu0 0.0
    %152 = vmatprep.subr.mxu0 0.0
    %153 = vmatpush1.msra.mxu0 0.0
    %154 = vmatprep.subr.mxu0 0.0
    %155 = vmatpush1.msra.mxu0 0.0
    %156 = vmatprep.subr.mxu0 0.0
    %157 = vmatpush1.msra.mxu0 0.0
    %158 = vmatprep.subr.mxu0 0.0
    %159 = vmatpush1.msra.mxu0 0.0
    %160 = vmatprep.subr.mxu0 0.0
    %161 = vmatpush1.msra.mxu0 0.0
    %162 = vmatprep.subr.mxu0 0.0
    %163 = vmatpush1.msra.mxu0 0.0
    %164 = vmatprep.subr.mxu0 0.0
    %165 = vmatpush1.msra.mxu0 0.0
    %166 = vmatprep.subr.mxu0 0.0
    %167 = vmatpush1.msra.mxu0 0.0
    %168 = vmatprep.subr.mxu0 0.0
    %169 = vmatpush1.msra.mxu0 0.0
    %170 = vmatprep.subr.mxu0 0.0
    %171 = vmatpush1.msra.mxu0 0.0
    %172 = vmatprep.subr.mxu0 0.0
    %173 = vmatpush1.msra.mxu0 0.0
    %174 = vmatprep.subr.mxu0 0.0
    %175 = vmatpush1.msra.mxu0 %v142
    %176 = vmatprep.subr.mxu0 0.0
    %177 = vmatpush1.msra.mxu0 %v141
    %178 = vmatprep.subr.mxu0 0.0
    %179 = vmatpush1.msra.mxu0 %v140
    %180 = vmatprep.subr.mxu0 0.0
    %181 = vmatpush1.msra.mxu0 %v139
    %182 = vmatprep.subr.mxu0 0.0
    %183 = vmatpush2.msra.mxu0 0.0
    %184 = vmatprep.subr.mxu0 0.0
    %185 = vmatpush2.msra.mxu0 0.0
    %186 = vmatprep.subr.mxu0 0.0
    %187 = vmatpush2.msra.mxu0 0.0
    %188 = vmatprep.subr.mxu0 0.0
    %189 = vmatpush2.msra.mxu0 0.0
    %190 = vmatprep.subr.mxu0 0.0
    %191 = vmatpush2.msra.mxu0 0.0
    %192 = vmatprep.subr.mxu0 0.0
    %193 = vmatpush2.msra.mxu0 0.0
    %194 = vmatprep.subr.mxu0 0.0
    %195 = vmatpush2.msra.mxu0 0.0
    %196 = vmatprep.subr.mxu0 0.0
    %197 = vmatpush2.msra.mxu0 0.0
    %198 = vmatprep.subr.mxu0 0.0
    %199 = vmatpush2.msra.mxu0 0.0
    %200 = vmatprep.subr.mxu0 0.0
    %201 = vmatpush2.msra.mxu0 0.0
    %202 = vmatprep.subr.mxu0 0.0
    %203 = vmatpush2.msra.mxu0 0.0
    %204 = vmatprep.subr.mxu0 0.0
    %205 = vmatpush2.msra.mxu0 0.0
    %206 = vmatprep.subr.mxu0 0.0
    %207 = vmatpush2.msra.mxu0 0.0
    %208 = vmatprep.subr.mxu0 0.0
    %209 = vmatpush2.msra.mxu0 0.0
    %210 = vmatprep.subr.mxu0 0.0
    %211 = vmatpush2.msra.mxu0 0.0
    %212 = vmatprep.subr.mxu0 0.0
    %213 = vmatpush2.msra.mxu0 0.0
    %214 = vmatprep.mubr.f32.mxu0 0.0
    %215 = vmatmul.mubr.f32.gmra.mxu0 %v145
    %v216 = vpop.f32.mrf.mxu0
    %v217 = vadd.f32 0.0, %v216
    %v218 = vpop.f32.mrf.mxu0
    %219 = vmatprep.mubr.f32.mxu0 0.0
    %220 = vmatmul.mubr.f32.gmra.mxu0 %v148
    %v221 = vpop.f32.mrf.mxu0
    %v222 = vadd.f32 0.0, %v221
    %v223 = vpop.f32.mrf.mxu0
    %224 = vdwg.mxu0
    %v225 = vld [vmem:[%s10] sm:$0xff]
    %v226 = vld [vmem:[%s10 + $0x8] sm:$0xff]
    %v227 = vld [vmem:[%s10 + $0x10] sm:$0xff]
    %v228 = vld [vmem:[%s10 + $0x18] sm:$0xff]
    %229 = vmatprep.subr.mxu0 0.0
    %230 = vmatpush1.msra.mxu0 0.0
    %231 = vmatprep.subr.mxu0 0.0
    %232 = vmatpush1.msra.mxu0 0.0
    %233 = vmatprep.subr.mxu0 0.0
    %234 = vmatpush1.msra.mxu0 0.0
    %235 = vmatprep.subr.mxu0 0.0
    %236 = vmatpush1.msra.mxu0 0.0
    %237 = vmatprep.subr.mxu0 0.0
    %238 = vmatpush1.msra.mxu0 0.0
    %239 = vmatprep.subr.mxu0 0.0
    %240 = vmatpush1.msra.mxu0 0.0
    %241 = vmatprep.subr.mxu0 0.0
    %242 = vmatpush1.msra.mxu0 0.0
    %243 = vmatprep.subr.mxu0 0.0
    %244 = vmatpush1.msra.mxu0 0.0
    %245 = vmatprep.subr.mxu0 0.0
    %246 = vmatpush1.msra.mxu0 0.0
    %247 = vmatprep.subr.mxu0 0.0
    %248 = vmatpush1.msra.mxu0 0.0
    %249 = vmatprep.subr.mxu0 0.0
    %250 = vmatpush1.msra.mxu0 0.0
    %251 = vmatprep.subr.mxu0 0.0
    %252 = vmatpush1.msra.mxu0 0.0
    %253 = vmatprep.subr.mxu0 0.0
    %254 = vmatpush1.msra.mxu0 %v228
    %255 = vmatprep.subr.mxu0 0.0
    %256 = vmatpush1.msra.mxu0 %v227
    %257 = vmatprep.subr.mxu0 0.0
    %258 = vmatpush1.msra.mxu0 %v226
    %259 = vmatprep.subr.mxu0 0.0
    %260 = vmatpush1.msra.mxu0 %v225
    %261 = vmatprep.subr.mxu0 0.0
    %262 = vmatpush2.msra.mxu0 0.0
    %263 = vmatprep.subr.mxu0 0.0
    %264 = vmatpush2.msra.mxu0 0.0
    %265 = vmatprep.subr.mxu0 0.0
    %266 = vmatpush2.msra.mxu0 0.0
    %267 = vmatprep.subr.mxu0 0.0
    %268 = vmatpush2.msra.mxu0 0.0
    %269 = vmatprep.subr.mxu0 0.0
    %270 = vmatpush2.msra.mxu0 0.0
    %271 = vmatprep.subr.mxu0 0.0
    %272 = vmatpush2.msra.mxu0 0.0
    %273 = vmatprep.subr.mxu0 0.0
    %274 = vmatpush2.msra.mxu0 0.0
    %275 = vmatprep.subr.mxu0 0.0
    %276 = vmatpush2.msra.mxu0 0.0
    %277 = vmatprep.subr.mxu0 0.0
    %278 = vmatpush2.msra.mxu0 0.0
    %279 = vmatprep.subr.mxu0 0.0
    %280 = vmatpush2.msra.mxu0 0.0
    %281 = vmatprep.subr.mxu0 0.0
    %282 = vmatpush2.msra.mxu0 0.0
    %283 = vmatprep.subr.mxu0 0.0
    %284 = vmatpush2.msra.mxu0 0.0
    %285 = vmatprep.subr.mxu0 0.0
    %286 = vmatpush2.msra.mxu0 0.0
    %287 = vmatprep.subr.mxu0 0.0
    %288 = vmatpush2.msra.mxu0 0.0
    %289 = vmatprep.subr.mxu0 0.0
    %290 = vmatpush2.msra.mxu0 0.0
    %291 = vmatprep.subr.mxu0 0.0
    %292 = vmatpush2.msra.mxu0 0.0
    %293 = vmatprep.mubr.f32.mxu0 0.0
    %294 = vmatmul.mubr.f32.gmra.mxu0 %v145
    %v295 = vpop.f32.mrf.mxu0
    %v296 = vadd.f32 0.0, %v295
    %v297 = vpop.f32.mrf.mxu0
    %298 = vmatprep.mubr.f32.mxu0 0.0
    %299 = vmatmul.mubr.f32.gmra.mxu0 %v148
    %v300 = vpop.f32.mrf.mxu0
    %v301 = vadd.f32 0.0, %v300
    %v302 = vpop.f32.mrf.mxu0
    %303 = vdwg.mxu0
    %v304 = vsub.f32 1.0, %v133
    %v305 = vsub.f32 1.0, %v134
    %v306 = vld [vmem:[#allocation8] sm:$0x3]
    %308 = vset.pattern.permute.xlu0 0
    %309 = vperm.xlu0 %308, %v304
    %v310 = vpop.permute.xlu0 %309
    %313 = vset.pattern.permute.xlu0 0
    %314 = vperm.xlu0 %313, %v305
    %v315 = vpop.permute.xlu0 %314
    %v317 = vmul.f32 %v129, %v310
    %v318 = vmul.f32 %v130, %v315
    %vm319 = vcmask 130048
    %v321 = vsel %vm319, %v306, 0
    %323 = vmatprep.subr.mxu0 0.0
    %324 = vmatpush1.msra.mxu0 0.0
    %325 = vmatprep.subr.mxu0 0.0
    %326 = vmatpush1.msra.mxu0 0.0
    %327 = vmatprep.subr.mxu0 0.0
    %328 = vmatpush1.msra.mxu0 0.0
    %329 = vmatprep.subr.mxu0 0.0
    %330 = vmatpush1.msra.mxu0 0.0
    %331 = vmatprep.subr.mxu0 0.0
    %332 = vmatpush1.msra.mxu0 0.0
    %333 = vmatprep.subr.mxu0 0.0
    %334 = vmatpush1.msra.mxu0 0.0
    %335 = vmatprep.subr.mxu0 0.0
    %336 = vmatpush1.msra.mxu0 0.0
    %337 = vmatprep.subr.mxu0 0.0
    %338 = vmatpush1.msra.mxu0 0.0
    %339 = vmatprep.subr.mxu0 0.0
    %340 = vmatpush1.msra.mxu0 0.0
    %341 = vmatprep.subr.mxu0 0.0
    %342 = vmatpush1.msra.mxu0 0.0
    %343 = vmatprep.subr.mxu0 0.0
    %344 = vmatpush1.msra.mxu0 0.0
    %345 = vmatprep.subr.mxu0 0.0
    %346 = vmatpush1.msra.mxu0 0.0
    %347 = vmatprep.subr.mxu0 0.0
    %348 = vmatpush1.msra.mxu0 0.0
    %349 = vmatprep.subr.mxu0 0.0
    %350 = vmatpush1.msra.mxu0 0.0
    %351 = vmatprep.subr.mxu0 0.0
    %352 = vmatpush1.msra.mxu0 %v318
    %353 = vmatprep.subr.mxu0 0.0
    %354 = vmatpush1.msra.mxu0 %v317
    %355 = vmatprep.subr.mxu0 0.0
    %356 = vmatpush2.msra.mxu0 0.0
    %357 = vmatprep.subr.mxu0 0.0
    %358 = vmatpush2.msra.mxu0 0.0
    %359 = vmatprep.subr.mxu0 0.0
    %360 = vmatpush2.msra.mxu0 0.0
    %361 = vmatprep.subr.mxu0 0.0
    %362 = vmatpush2.msra.mxu0 0.0
    %363 = vmatprep.subr.mxu0 0.0
    %364 = vmatpush2.msra.mxu0 0.0
    %365 = vmatprep.subr.mxu0 0.0
    %366 = vmatpush2.msra.mxu0 0.0
    %367 = vmatprep.subr.mxu0 0.0
    %368 = vmatpush2.msra.mxu0 0.0
    %369 = vmatprep.subr.mxu0 0.0
    %370 = vmatpush2.msra.mxu0 0.0
    %371 = vmatprep.subr.mxu0 0.0
    %372 = vmatpush2.msra.mxu0 0.0
    %373 = vmatprep.subr.mxu0 0.0
    %374 = vmatpush2.msra.mxu0 0.0
    %375 = vmatprep.subr.mxu0 0.0
    %376 = vmatpush2.msra.mxu0 0.0
    %377 = vmatprep.subr.mxu0 0.0
    %378 = vmatpush2.msra.mxu0 0.0
    %379 = vmatprep.subr.mxu0 0.0
    %380 = vmatpush2.msra.mxu0 0.0
    %381 = vmatprep.subr.mxu0 0.0
    %382 = vmatpush2.msra.mxu0 0.0
    %383 = vmatprep.subr.mxu0 0.0
    %384 = vmatpush2.msra.mxu0 0.0
    %385 = vmatprep.subr.mxu0 0.0
    %386 = vmatpush2.msra.mxu0 0.0
    %387 = vmatprep.mubr.f32.mxu0 0.0
    %388 = vmatmul.mubr.f32.gmra.mxu0 %v321
    %v389 = vpop.f32.mrf.mxu0
    %v390 = vadd.f32 0.0, %v389
    %v391 = vpop.f32.mrf.mxu0
    %392 = vdwg.mxu0
    %v393 = vld [vmem:[%s8] sm:$0xff]
    %v394 = vld [vmem:[%s8 + $0x8] sm:$0xff]
    %vm395 = vcmask 15360
    %v397 = vsel %vm395, %v393, 0
    %v400 = vsel %vm395, %v394, 0
    %vm402 = vcmask 1041408
    %v404 = vsel %vm402, %v390, 0
    %406 = vmatprep.subr.mxu0 0.0
    %407 = vmatpush1.msra.mxu0 0.0
    %408 = vmatprep.subr.mxu0 0.0
    %409 = vmatpush1.msra.mxu0 0.0
    %410 = vmatprep.subr.mxu0 0.0
    %411 = vmatpush1.msra.mxu0 0.0
    %412 = vmatprep.subr.mxu0 0.0
    %413 = vmatpush1.msra.mxu0 0.0
    %414 = vmatprep.subr.mxu0 0.0
    %415 = vmatpush1.msra.mxu0 0.0
    %416 = vmatprep.subr.mxu0 0.0
    %417 = vmatpush1.msra.mxu0 0.0
    %418 = vmatprep.subr.mxu0 0.0
    %419 = vmatpush1.msra.mxu0 0.0
    %420 = vmatprep.subr.mxu0 0.0
    %421 = vmatpush1.msra.mxu0 0.0
    %422 = vmatprep.subr.mxu0 0.0
    %423 = vmatpush1.msra.mxu0 0.0
    %424 = vmatprep.subr.mxu0 0.0
    %425 = vmatpush1.msra.mxu0 0.0
    %426 = vmatprep.subr.mxu0 0.0
    %427 = vmatpush1.msra.mxu0 0.0
    %428 = vmatprep.subr.mxu0 0.0
    %429 = vmatpush1.msra.mxu0 0.0
    %430 = vmatprep.subr.mxu0 0.0
    %431 = vmatpush1.msra.mxu0 0.0
    %432 = vmatprep.subr.mxu0 0.0
    %433 = vmatpush1.msra.mxu0 0.0
    %434 = vmatprep.subr.mxu0 0.0
    %435 = vmatpush1.msra.mxu0 0.0
    %436 = vmatprep.subr.mxu0 0.0
    %437 = vmatpush1.msra.mxu0 %v404
    %438 = vmatprep.subr.mxu0 0.0
    %439 = vmatpush2.msra.mxu0 0.0
    %440 = vmatprep.subr.mxu0 0.0
    %441 = vmatpush2.msra.mxu0 0.0
    %442 = vmatprep.subr.mxu0 0.0
    %443 = vmatpush2.msra.mxu0 0.0
    %444 = vmatprep.subr.mxu0 0.0
    %445 = vmatpush2.msra.mxu0 0.0
    %446 = vmatprep.subr.mxu0 0.0
    %447 = vmatpush2.msra.mxu0 0.0
    %448 = vmatprep.subr.mxu0 0.0
    %449 = vmatpush2.msra.mxu0 0.0
    %450 = vmatprep.subr.mxu0 0.0
    %451 = vmatpush2.msra.mxu0 0.0
    %452 = vmatprep.subr.mxu0 0.0
    %453 = vmatpush2.msra.mxu0 0.0
    %454 = vmatprep.subr.mxu0 0.0
    %455 = vmatpush2.msra.mxu0 0.0
    %456 = vmatprep.subr.mxu0 0.0
    %457 = vmatpush2.msra.mxu0 0.0
    %458 = vmatprep.subr.mxu0 0.0
    %459 = vmatpush2.msra.mxu0 0.0
    %460 = vmatprep.subr.mxu0 0.0
    %461 = vmatpush2.msra.mxu0 0.0
    %462 = vmatprep.subr.mxu0 0.0
    %463 = vmatpush2.msra.mxu0 0.0
    %464 = vmatprep.subr.mxu0 0.0
    %465 = vmatpush2.msra.mxu0 0.0
    %466 = vmatprep.subr.mxu0 0.0
    %467 = vmatpush2.msra.mxu0 0.0
    %468 = vmatprep.subr.mxu0 0.0
    %469 = vmatpush2.msra.mxu0 0.0
    %470 = vmatprep.mubr.f32.mxu0 0.0
    %471 = vmatmul.mubr.f32.gmra.mxu0 %v397
    %v472 = vpop.f32.mrf.mxu0
    %v473 = vadd.f32 0.0, %v472
    %v474 = vpop.f32.mrf.mxu0
    %475 = vmatprep.mubr.f32.mxu0 0.0
    %476 = vmatmul.mubr.f32.gmra.mxu0 %v400
    %v477 = vpop.f32.mrf.mxu0
    %v478 = vadd.f32 0.0, %v477
    %v479 = vpop.f32.mrf.mxu0
    %480 = vdwg.mxu0
    %vm481 = vcmp.eq.f32.partialorder %v137, 0.0
    %vm482 = vcmp.eq.f32.partialorder %v138, 0.0
    %v483 = vsel %vm481, 1, 0
    %v484 = vsel %vm482, 1, 0
    %v485 = vcvt.s32.f32 %v483
    %v486 = vcvt.s32.f32 %v484
    %vm487 = vcmp.eq.f32.partialorder %v137, 1.0
    %vm488 = vcmp.eq.f32.partialorder %v138, 1.0
    %v489 = vsel %vm487, 1, 0
    %v490 = vsel %vm488, 1, 0
    %v491 = vcvt.s32.f32 %v489
    %v492 = vcvt.s32.f32 %v490
    %vm493 = vcmask 7168
    %v494 = vsel %vm493, %v304, 0.0
    %v495 = vrot.slane %v494, 4
    %v496 = vadd.f32 %v494, %v495
    %v497 = vrot.slane %v496, 2
    %v498 = vadd.f32 %v496, %v497
    %v499 = vrot.slane %v498, 1
    %v500 = vadd.f32 %v498, %v499
    %v501 = vmul.f32 %v485, %v500
    %v502 = vmul.f32 %v486, %v500
    %v503 = vadd.f32 %v501, 0.0
    %v504 = vadd.f32 %v502, 0.0
    %v505 = vsel %vm493, %v305, 0.0
    %v506 = vrot.slane %v505, 4
    %v507 = vadd.f32 %v505, %v506
    %v508 = vrot.slane %v507, 2
    %v509 = vadd.f32 %v507, %v508
    %v510 = vrot.slane %v509, 1
    %v511 = vadd.f32 %v509, %v510
    %v512 = vmul.f32 %v491, %v511
    %v513 = vmul.f32 %v492, %v511
    %v514 = vadd.f32 %v503, %v512
    %v515 = vadd.f32 %v504, %v513
    %v516 = vmax.f32 %v514, 1.0
    %v517 = vmax.f32 %v515, 1.0
    %v518 = vrcp.pop %v516
    %v519 = vrcp.pop %v517
    %521 = vset.pattern.permute.xlu0 0
    %522 = vperm.xlu0 %521, %v518
    %v523 = vpop.permute.xlu0 %522
    %526 = vset.pattern.permute.xlu0 0
    %527 = vperm.xlu0 %526, %v519
    %v528 = vpop.permute.xlu0 %527
    %v530 = vmul.f32 %v473, %v523
    %v531 = vmul.f32 %v478, %v528
    %v532 = vmul.f32 %v296, %v530
    %v533 = vmul.f32 %v301, %v531
    %v534 = vsel %vm143, %v532, 0.0
    %535 = vadd.xlane.f32.xlu0 %v534
    %v536 = vpop.xlane.xlu0 %535
    %v537 = vsel %vm143, %v533, 0.0
    %538 = vadd.xlane.f32.xlu0 %v537
    %v539 = vpop.xlane.xlu0 %538
    %v540 = vmul.f32 %v536, 0.17677669
    %v541 = vmul.f32 %v539, 0.17677669
    %vm542 = vcmp.gt.f32.partialorder %v131, 0.5
    %vm543 = vcmp.gt.f32.partialorder %v132, 0.5
    %v544 = vsel %vm542, -1e+09, %v540
    %v545 = vsel %vm543, -1e+09, %v541
    %v546 = vsel %vm493, %v544, -inf
    %v547 = vrot.slane %v546, 4
    %v548 = vmax.f32 %v546, %v547
    %v549 = vrot.slane %v548, 2
    %v550 = vmax.f32 %v548, %v549
    %v551 = vrot.slane %v550, 1
    %v552 = vmax.f32 %v550, %v551
    %v553 = vmul.f32 %v485, %v552
    %v554 = vmul.f32 %v486, %v552
    %v555 = vadd.f32 %v553, 0.0
    %v556 = vadd.f32 %v554, 0.0
    %v557 = vsel %vm493, %v545, -inf
    %v558 = vrot.slane %v557, 4
    %v559 = vmax.f32 %v557, %v558
    %v560 = vrot.slane %v559, 2
    %v561 = vmax.f32 %v559, %v560
    %v562 = vrot.slane %v561, 1
    %v563 = vmax.f32 %v561, %v562
    %v564 = vmul.f32 %v491, %v563
    %v565 = vmul.f32 %v492, %v563
    %v566 = vadd.f32 %v555, %v564
    %v567 = vadd.f32 %v556, %v565
    %v568 = vsub.f32 %v544, %v566
    %v569 = vsub.f32 %v545, %v567
    %v570 = vmul.f32 %v568, 1.442695
    %v571 = vpow.pop %v570
    %v572 = vmul.f32 %v569, 1.442695
    %v573 = vpow.pop %v572
    %v574 = vsel %vm493, %v571, 0.0
    %v575 = vrot.slane %v574, 4
    %v576 = vadd.f32 %v574, %v575
    %v577 = vrot.slane %v576, 2
    %v578 = vadd.f32 %v576, %v577
    %v579 = vrot.slane %v578, 1
    %v580 = vadd.f32 %v578, %v579
    %v581 = vmul.f32 %v485, %v580
    %v582 = vmul.f32 %v486, %v580
    %v583 = vadd.f32 %v581, 0.0
    %v584 = vadd.f32 %v582, 0.0
    %v585 = vsel %vm493, %v573, 0.0
    %v586 = vrot.slane %v585, 4
    %v587 = vadd.f32 %v585, %v586
    %v588 = vrot.slane %v587, 2
    %v589 = vadd.f32 %v587, %v588
    %v590 = vrot.slane %v589, 1
    %v591 = vadd.f32 %v589, %v590
    %v592 = vmul.f32 %v491, %v591
    %v593 = vmul.f32 %v492, %v591
    %v594 = vadd.f32 %v583, %v592
    %v595 = vadd.f32 %v584, %v593
    %v596 = vrcp.pop %v594
    %v597 = vrcp.pop %v595
    %v598 = vmul.f32 %v571, %v596
    %v599 = vmul.f32 %v573, %v597
    %v600 = vld [vmem:[#allocation6] sm:$0x3]
    %602 = vset.pattern.permute.xlu0 0
    %603 = vperm.xlu0 %602, %v598
    %v604 = vpop.permute.xlu0 %603
    %607 = vset.pattern.permute.xlu0 0
    %608 = vperm.xlu0 %607, %v599
    %v609 = vpop.permute.xlu0 %608
    %v611 = vmul.f32 %v604, %v217
    %v612 = vmul.f32 %v609, %v222
    %v614 = vsel %vm319, %v600, 0
    %616 = vmatprep.subr.mxu0 0.0
    %617 = vmatpush1.msra.mxu0 0.0
    %618 = vmatprep.subr.mxu0 0.0
    %619 = vmatpush1.msra.mxu0 0.0
    %620 = vmatprep.subr.mxu0 0.0
    %621 = vmatpush1.msra.mxu0 0.0
    %622 = vmatprep.subr.mxu0 0.0
    %623 = vmatpush1.msra.mxu0 0.0
    %624 = vmatprep.subr.mxu0 0.0
    %625 = vmatpush1.msra.mxu0 0.0
    %626 = vmatprep.subr.mxu0 0.0
    %627 = vmatpush1.msra.mxu0 0.0
    %628 = vmatprep.subr.mxu0 0.0
    %629 = vmatpush1.msra.mxu0 0.0
    %630 = vmatprep.subr.mxu0 0.0
    %631 = vmatpush1.msra.mxu0 0.0
    %632 = vmatprep.subr.mxu0 0.0
    %633 = vmatpush1.msra.mxu0 0.0
    %634 = vmatprep.subr.mxu0 0.0
    %635 = vmatpush1.msra.mxu0 0.0
    %636 = vmatprep.subr.mxu0 0.0
    %637 = vmatpush1.msra.mxu0 0.0
    %638 = vmatprep.subr.mxu0 0.0
    %639 = vmatpush1.msra.mxu0 0.0
    %640 = vmatprep.subr.mxu0 0.0
    %641 = vmatpush1.msra.mxu0 0.0
    %642 = vmatprep.subr.mxu0 0.0
    %643 = vmatpush1.msra.mxu0 0.0
    %644 = vmatprep.subr.mxu0 0.0
    %645 = vmatpush1.msra.mxu0 %v612
    %646 = vmatprep.subr.mxu0 0.0
    %647 = vmatpush1.msra.mxu0 %v611
    %648 = vmatprep.subr.mxu0 0.0
    %649 = vmatpush2.msra.mxu0 0.0
    %650 = vmatprep.subr.mxu0 0.0
    %651 = vmatpush2.msra.mxu0 0.0
    %652 = vmatprep.subr.mxu0 0.0
    %653 = vmatpush2.msra.mxu0 0.0
    %654 = vmatprep.subr.mxu0 0.0
    %655 = vmatpush2.msra.mxu0 0.0
    %656 = vmatprep.subr.mxu0 0.0
    %657 = vmatpush2.msra.mxu0 0.0
    %658 = vmatprep.subr.mxu0 0.0
    %659 = vmatpush2.msra.mxu0 0.0
    %660 = vmatprep.subr.mxu0 0.0
    %661 = vmatpush2.msra.mxu0 0.0
    %662 = vmatprep.subr.mxu0 0.0
    %663 = vmatpush2.msra.mxu0 0.0
    %664 = vmatprep.subr.mxu0 0.0
    %665 = vmatpush2.msra.mxu0 0.0
    %666 = vmatprep.subr.mxu0 0.0
    %667 = vmatpush2.msra.mxu0 0.0
    %668 = vmatprep.subr.mxu0 0.0
    %669 = vmatpush2.msra.mxu0 0.0
    %670 = vmatprep.subr.mxu0 0.0
    %671 = vmatpush2.msra.mxu0 0.0
    %672 = vmatprep.subr.mxu0 0.0
    %673 = vmatpush2.msra.mxu0 0.0
    %674 = vmatprep.subr.mxu0 0.0
    %675 = vmatpush2.msra.mxu0 0.0
    %676 = vmatprep.subr.mxu0 0.0
    %677 = vmatpush2.msra.mxu0 0.0
    %678 = vmatprep.subr.mxu0 0.0
    %679 = vmatpush2.msra.mxu0 0.0
    %680 = vmatprep.mubr.f32.mxu0 0.0
    %681 = vmatmul.mubr.f32.gmra.mxu0 %v614
    %v682 = vpop.f32.mrf.mxu0
    %v683 = vadd.f32 0.0, %v682
    %v684 = vpop.f32.mrf.mxu0
    %685 = vdwg.mxu0
    %v686 = vmax.f32 %v683, 0.0
    %v687 = vld [vmem:[%s11] sm:$0xff]
    %v688 = vld [vmem:[%s11 + $0x8] sm:$0xff]
    %v689 = vld [vmem:[%s11 + $0x10] sm:$0xff]
    %v690 = vld [vmem:[%s11 + $0x18] sm:$0xff]
    %v691 = vld [vmem:[%s12] sm:$0x1]
    %v693 = vlaneseq
    %v694 = vshrl.u32 %v693, 7
    %v695 = vsub.s32 0, %v694
    %v696 = vrot.slane %v691, %v695
    %v699 = vsel %vm143, %v686, 0
    %701 = vmatprep.subr.mxu0 0.0
    %702 = vmatpush1.msra.mxu0 0.0
    %703 = vmatprep.subr.mxu0 0.0
    %704 = vmatpush1.msra.mxu0 0.0
    %705 = vmatprep.subr.mxu0 0.0
    %706 = vmatpush1.msra.mxu0 0.0
    %707 = vmatprep.subr.mxu0 0.0
    %708 = vmatpush1.msra.mxu0 0.0
    %709 = vmatprep.subr.mxu0 0.0
    %710 = vmatpush1.msra.mxu0 0.0
    %711 = vmatprep.subr.mxu0 0.0
    %712 = vmatpush1.msra.mxu0 0.0
    %713 = vmatprep.subr.mxu0 0.0
    %714 = vmatpush1.msra.mxu0 0.0
    %715 = vmatprep.subr.mxu0 0.0
    %716 = vmatpush1.msra.mxu0 0.0
    %717 = vmatprep.subr.mxu0 0.0
    %718 = vmatpush1.msra.mxu0 0.0
    %719 = vmatprep.subr.mxu0 0.0
    %720 = vmatpush1.msra.mxu0 0.0
    %721 = vmatprep.subr.mxu0 0.0
    %722 = vmatpush1.msra.mxu0 0.0
    %723 = vmatprep.subr.mxu0 0.0
    %724 = vmatpush1.msra.mxu0 0.0
    %725 = vmatprep.subr.mxu0 0.0
    %726 = vmatpush1.msra.mxu0 %v690
    %727 = vmatprep.subr.mxu0 0.0
    %728 = vmatpush1.msra.mxu0 %v689
    %729 = vmatprep.subr.mxu0 0.0
    %730 = vmatpush1.msra.mxu0 %v688
    %731 = vmatprep.subr.mxu0 0.0
    %732 = vmatpush1.msra.mxu0 %v687
    %733 = vmatprep.subr.mxu0 0.0
    %734 = vmatpush2.msra.mxu0 0.0
    %735 = vmatprep.subr.mxu0 0.0
    %736 = vmatpush2.msra.mxu0 0.0
    %737 = vmatprep.subr.mxu0 0.0
    %738 = vmatpush2.msra.mxu0 0.0
    %739 = vmatprep.subr.mxu0 0.0
    %740 = vmatpush2.msra.mxu0 0.0
    %741 = vmatprep.subr.mxu0 0.0
    %742 = vmatpush2.msra.mxu0 0.0
    %743 = vmatprep.subr.mxu0 0.0
    %744 = vmatpush2.msra.mxu0 0.0
    %745 = vmatprep.subr.mxu0 0.0
    %746 = vmatpush2.msra.mxu0 0.0
    %747 = vmatprep.subr.mxu0 0.0
    %748 = vmatpush2.msra.mxu0 0.0
    %749 = vmatprep.subr.mxu0 0.0
    %750 = vmatpush2.msra.mxu0 0.0
    %751 = vmatprep.subr.mxu0 0.0
    %752 = vmatpush2.msra.mxu0 0.0
    %753 = vmatprep.subr.mxu0 0.0
    %754 = vmatpush2.msra.mxu0 0.0
    %755 = vmatprep.subr.mxu0 0.0
    %756 = vmatpush2.msra.mxu0 0.0
    %757 = vmatprep.subr.mxu0 0.0
    %758 = vmatpush2.msra.mxu0 0.0
    %759 = vmatprep.subr.mxu0 0.0
    %760 = vmatpush2.msra.mxu0 0.0
    %761 = vmatprep.subr.mxu0 0.0
    %762 = vmatpush2.msra.mxu0 0.0
    %763 = vmatprep.subr.mxu0 0.0
    %764 = vmatpush2.msra.mxu0 0.0
    %765 = vmatprep.mubr.f32.mxu0 0.0
    %766 = vmatmul.mubr.f32.gmra.mxu0 %v699
    %v767 = vpop.f32.mrf.mxu0
    %v768 = vadd.f32 %v696, %v767
    %v769 = vpop.f32.mrf.mxu0
    %770 = vdwg.mxu0
    %v772 = vsel %vm402, %v768, 0
    %774 = vmatprep.subr.mxu0 0.0
    %775 = vmatpush1.msra.mxu0 0.0
    %776 = vmatprep.subr.mxu0 0.0
    %777 = vmatpush1.msra.mxu0 0.0
    %778 = vmatprep.subr.mxu0 0.0
    %779 = vmatpush1.msra.mxu0 0.0
    %780 = vmatprep.subr.mxu0 0.0
    %781 = vmatpush1.msra.mxu0 0.0
    %782 = vmatprep.subr.mxu0 0.0
    %783 = vmatpush1.msra.mxu0 0.0
    %784 = vmatprep.subr.mxu0 0.0
    %785 = vmatpush1.msra.mxu0 0.0
    %786 = vmatprep.subr.mxu0 0.0
    %787 = vmatpush1.msra.mxu0 0.0
    %788 = vmatprep.subr.mxu0 0.0
    %789 = vmatpush1.msra.mxu0 0.0
    %790 = vmatprep.subr.mxu0 0.0
    %791 = vmatpush1.msra.mxu0 0.0
    %792 = vmatprep.subr.mxu0 0.0
    %793 = vmatpush1.msra.mxu0 0.0
    %794 = vmatprep.subr.mxu0 0.0
    %795 = vmatpush1.msra.mxu0 0.0
    %796 = vmatprep.subr.mxu0 0.0
    %797 = vmatpush1.msra.mxu0 0.0
    %798 = vmatprep.subr.mxu0 0.0
    %799 = vmatpush1.msra.mxu0 0.0
    %800 = vmatprep.subr.mxu0 0.0
    %801 = vmatpush1.msra.mxu0 0.0
    %802 = vmatprep.subr.mxu0 0.0
    %803 = vmatpush1.msra.mxu0 0.0
    %804 = vmatprep.subr.mxu0 0.0
    %805 = vmatpush1.msra.mxu0 %v772
    %806 = vmatprep.subr.mxu0 0.0
    %807 = vmatpush2.msra.mxu0 0.0
    %808 = vmatprep.subr.mxu0 0.0
    %809 = vmatpush2.msra.mxu0 0.0
    %810 = vmatprep.subr.mxu0 0.0
    %811 = vmatpush2.msra.mxu0 0.0
    %812 = vmatprep.subr.mxu0 0.0
    %813 = vmatpush2.msra.mxu0 0.0
    %814 = vmatprep.subr.mxu0 0.0
    %815 = vmatpush2.msra.mxu0 0.0
    %816 = vmatprep.subr.mxu0 0.0
    %817 = vmatpush2.msra.mxu0 0.0
    %818 = vmatprep.subr.mxu0 0.0
    %819 = vmatpush2.msra.mxu0 0.0
    %820 = vmatprep.subr.mxu0 0.0
    %821 = vmatpush2.msra.mxu0 0.0
    %822 = vmatprep.subr.mxu0 0.0
    %823 = vmatpush2.msra.mxu0 0.0
    %824 = vmatprep.subr.mxu0 0.0
    %825 = vmatpush2.msra.mxu0 0.0
    %826 = vmatprep.subr.mxu0 0.0
    %827 = vmatpush2.msra.mxu0 0.0
    %828 = vmatprep.subr.mxu0 0.0
    %829 = vmatpush2.msra.mxu0 0.0
    %830 = vmatprep.subr.mxu0 0.0
    %831 = vmatpush2.msra.mxu0 0.0
    %832 = vmatprep.subr.mxu0 0.0
    %833 = vmatpush2.msra.mxu0 0.0
    %834 = vmatprep.subr.mxu0 0.0
    %835 = vmatpush2.msra.mxu0 0.0
    %836 = vmatprep.subr.mxu0 0.0
    %837 = vmatpush2.msra.mxu0 0.0
    %838 = vmatprep.mubr.f32.mxu0 0.0
    %839 = vmatmul.mubr.f32.gmra.mxu0 %v397
    %v840 = vpop.f32.mrf.mxu0
    %v841 = vadd.f32 0.0, %v840
    %v842 = vpop.f32.mrf.mxu0
    %843 = vmatprep.mubr.f32.mxu0 0.0
    %844 = vmatmul.mubr.f32.gmra.mxu0 %v400
    %v845 = vpop.f32.mrf.mxu0
    %v846 = vadd.f32 0.0, %v845
    %v847 = vpop.f32.mrf.mxu0
    %848 = vdwg.mxu0
    %v849 = vsel %vm143, %v127, 0.0
    %850 = vadd.xlane.f32.xlu0 %v849
    %v851 = vpop.xlane.xlu0 %850
    %v852 = vsel %vm143, %v128, 0.0
    %853 = vadd.xlane.f32.xlu0 %v852
    %v854 = vpop.xlane.xlu0 %853
    %v855 = vrcp.pop 32.0
    %v856 = vmul.f32 %v851, %v855
    %v857 = vmul.f32 %v854, %v855
    %v858 = vsub.f32 %v127, %v856
    %v859 = vsub.f32 %v128, %v857
    %v860 = vmul.f32 %v858, %v858
    %v861 = vmul.f32 %v859, %v859
    %v862 = vsel %vm143, %v860, 0.0
    %863 = vadd.xlane.f32.xlu0 %v862
    %v864 = vpop.xlane.xlu0 %863
    %v865 = vsel %vm143, %v861, 0.0
    %866 = vadd.xlane.f32.xlu0 %v865
    %v867 = vpop.xlane.xlu0 %866
    %v868 = vmul.f32 %v864, %v855
    %v869 = vmul.f32 %v867, %v855
    %v870 = vadd.f32 %v868, 1e-06
    %v871 = vadd.f32 %v869, 1e-06
    %v872 = vrsqrt.pop %v870
    %v873 = vrsqrt.pop %v871
    %v874 = vmul.f32 %v858, %v872
    %v875 = vmul.f32 %v859, %v873
    %v876 = vadd.f32 %v841, 1.0
    %v877 = vadd.f32 %v846, 1.0
    %880 = vrot.lane.b32.xlu0 %v876, 96
    %v881 = vpop.permute.xlu0 %880
    %882 = vrot.lane.b32.xlu0 %v877, 96
    %v883 = vpop.permute.xlu0 %882
    %v886 = vmul.f32 %v874, %v881
    %v887 = vmul.f32 %v875, %v883
    %v888 = vadd.f32 %v886, %v841
    %v889 = vadd.f32 %v887, %v846
    %890 = vst.msk [vmem:[#allocation2] sm:$0xff] %vm143, 0.0
    %891 = vst.msk [vmem:[#allocation2 + $0x8] sm:$0xff] %vm143, 0.0
    %892 = vst.msk [vmem:[#allocation2 + $0x10] sm:$0xff] %vm143, 0.0
    %893 = vst.msk [vmem:[#allocation2 + $0x18] sm:$0xff] %vm143, 0.0
    %894 = vst.msk [vmem:[#allocation2 + $0x8] sm:$0xff] %vm143, %v888
    %895 = vst.msk [vmem:[#allocation2 + $0x10] sm:$0xff] %vm143, %v889
    %v896 = vld [vmem:[#allocation2 + $0x6] sm:$0xff]
    %v897 = vld [vmem:[#allocation2 + $0xe] sm:$0xff]
    %v898 = vld [vmem:[#allocation9] sm:$0x1]
    %v899 = vadd.f32 %v135, -2.0
    %v900 = vadd.f32 %v136, -2.0
    %vm901 = vcmp.ge.f32.partialorder %v899, 0.0
    %vm902 = vcmp.ge.f32.partialorder %v900, 0.0
    %vm903 = vcmp.le.f32.partialorder %v899, 7.0
    %vm904 = vcmp.le.f32.partialorder %v900, 7.0
    %vm905 = vmand %vm901, %vm903
    %vm906 = vmand %vm902, %vm904
    %v907 = vsel %vm905, 1, 0
    %v908 = vsel %vm906, 1, 0
    %v909 = vcvt.s32.f32 %v907
    %v910 = vcvt.s32.f32 %v908
    %912 = vset.pattern.permute.xlu0 0
    %913 = vperm.xlu0 %912, %v909
    %v914 = vpop.permute.xlu0 %913
    %917 = vset.pattern.permute.xlu0 0
    %918 = vperm.xlu0 %917, %v910
    %v919 = vpop.permute.xlu0 %918
    %v921 = vmul.f32 %v896, %v914
    %v922 = vmul.f32 %v897, %v919
    %v923 = vlaneseq
    %v924 = vshrl.u32 %v923, 7
    %v925 = vsub.s32 0, %v924
    %v926 = vrot.slane %v898, %v925
    %v927 = vmul.f32 %v921, %v926
    %v928 = vmul.f32 %v922, %v926
    %v929 = vadd.f32 %v927, 0.0
    %v930 = vadd.f32 %v928, 0.0
    %v931 = vld [vmem:[#allocation2 + $0x7] sm:$0xff]
    %v932 = vld [vmem:[#allocation2 + $0xf] sm:$0xff]
    %v933 = vld [vmem:[#allocation9 + $0x1] sm:$0x1]
    %v934 = vadd.f32 %v135, -1.0
    %v935 = vadd.f32 %v136, -1.0
    %vm936 = vcmp.ge.f32.partialorder %v934, 0.0
    %vm937 = vcmp.ge.f32.partialorder %v935, 0.0
    %vm938 = vcmp.le.f32.partialorder %v934, 7.0
    %vm939 = vcmp.le.f32.partialorder %v935, 7.0
    %vm940 = vmand %vm936, %vm938
    %vm941 = vmand %vm937, %vm939
    %v942 = vsel %vm940, 1, 0
    %v943 = vsel %vm941, 1, 0
    %v944 = vcvt.s32.f32 %v942
    %v945 = vcvt.s32.f32 %v943
    %947 = vset.pattern.permute.xlu0 0
    %948 = vperm.xlu0 %947, %v944
    %v949 = vpop.permute.xlu0 %948
    %952 = vset.pattern.permute.xlu0 0
    %953 = vperm.xlu0 %952, %v945
    %v954 = vpop.permute.xlu0 %953
    %v956 = vmul.f32 %v931, %v949
    %v957 = vmul.f32 %v932, %v954
    %v958 = vlaneseq
    %v959 = vshrl.u32 %v958, 7
    %v960 = vsub.s32 0, %v959
    %v961 = vrot.slane %v933, %v960
    %v962 = vmul.f32 %v956, %v961
    %v963 = vmul.f32 %v957, %v961
    %v964 = vadd.f32 %v929, %v962
    %v965 = vadd.f32 %v930, %v963
    %v966 = vld [vmem:[#allocation2 + $0x8] sm:$0xff]
    %v967 = vld [vmem:[#allocation2 + $0x10] sm:$0xff]
    %v968 = vld [vmem:[#allocation9 + $0x2] sm:$0x1]
    %v969 = vlaneseq
    %v970 = vshrl.u32 %v969, 7
    %v971 = vsub.s32 0, %v970
    %v972 = vrot.slane %v968, %v971
    %v973 = vmul.f32 %v966, %v972
    %v974 = vmul.f32 %v967, %v972
    %v975 = vadd.f32 %v964, %v973
    %v976 = vadd.f32 %v965, %v974
    %v977 = vld [vmem:[#allocation2 + $0x9] sm:$0xff]
    %v978 = vld [vmem:[#allocation2 + $0x11] sm:$0xff]
    %v979 = vld [vmem:[#allocation9 + $0x3] sm:$0x1]
    %v980 = vadd.f32 %v135, 1.0
    %v981 = vadd.f32 %v136, 1.0
    %vm982 = vcmp.ge.f32.partialorder %v980, 0.0
    %vm983 = vcmp.ge.f32.partialorder %v981, 0.0
    %vm984 = vcmp.le.f32.partialorder %v980, 7.0
    %vm985 = vcmp.le.f32.partialorder %v981, 7.0
    %vm986 = vmand %vm982, %vm984
    %vm987 = vmand %vm983, %vm985
    %v988 = vsel %vm986, 1, 0
    %v989 = vsel %vm987, 1, 0
    %v990 = vcvt.s32.f32 %v988
    %v991 = vcvt.s32.f32 %v989
    %993 = vset.pattern.permute.xlu0 0
    %994 = vperm.xlu0 %993, %v990
    %v995 = vpop.permute.xlu0 %994
    %998 = vset.pattern.permute.xlu0 0
    %999 = vperm.xlu0 %998, %v991
    %v1000 = vpop.permute.xlu0 %999
    %v1002 = vmul.f32 %v977, %v995
    %v1003 = vmul.f32 %v978, %v1000
    %v1004 = vlaneseq
    %v1005 = vshrl.u32 %v1004, 7
    %v1006 = vsub.s32 0, %v1005
    %v1007 = vrot.slane %v979, %v1006
    %v1008 = vmul.f32 %v1002, %v1007
    %v1009 = vmul.f32 %v1003, %v1007
    %v1010 = vadd.f32 %v975, %v1008
    %v1011 = vadd.f32 %v976, %v1009
    %v1012 = vld [vmem:[#allocation2 + $0xa] sm:$0xff]
    %v1013 = vld [vmem:[#allocation2 + $0x12] sm:$0xff]
    %v1014 = vld [vmem:[#allocation9 + $0x4] sm:$0x1]
    %v1015 = vadd.f32 %v135, 2.0
    %v1016 = vadd.f32 %v136, 2.0
    %vm1017 = vcmp.ge.f32.partialorder %v1015, 0.0
    %vm1018 = vcmp.ge.f32.partialorder %v1016, 0.0
    %vm1019 = vcmp.le.f32.partialorder %v1015, 7.0
    %vm1020 = vcmp.le.f32.partialorder %v1016, 7.0
    %vm1021 = vmand %vm1017, %vm1019
    %vm1022 = vmand %vm1018, %vm1020
    %v1023 = vsel %vm1021, 1, 0
    %v1024 = vsel %vm1022, 1, 0
    %v1025 = vcvt.s32.f32 %v1023
    %v1026 = vcvt.s32.f32 %v1024
    %1028 = vset.pattern.permute.xlu0 0
    %1029 = vperm.xlu0 %1028, %v1025
    %v1030 = vpop.permute.xlu0 %1029
    %1033 = vset.pattern.permute.xlu0 0
    %1034 = vperm.xlu0 %1033, %v1026
    %v1035 = vpop.permute.xlu0 %1034
    %v1037 = vmul.f32 %v1012, %v1030
    %v1038 = vmul.f32 %v1013, %v1035
    %v1039 = vlaneseq
    %v1040 = vshrl.u32 %v1039, 7
    %v1041 = vsub.s32 0, %v1040
    %v1042 = vrot.slane %v1014, %v1041
    %v1043 = vmul.f32 %v1037, %v1042
    %v1044 = vmul.f32 %v1038, %v1042
    %v1045 = vadd.f32 %v1010, %v1043
    %v1046 = vadd.f32 %v1011, %v1044
    %v1047 = vld [vmem:[%s17] sm:$0x1]
    %v1048 = vlaneseq
    %v1049 = vshrl.u32 %v1048, 7
    %v1050 = vsub.s32 0, %v1049
    %v1051 = vrot.slane %v1047, %v1050
    %v1052 = vadd.f32 %v1045, %v1051
    %v1053 = vadd.f32 %v1046, %v1051
    %v1054 = vmax.f32 %v1052, 0.0
    %v1055 = vmax.f32 %v1053, 0.0
    %v1056 = vadd.f32 %v1054, 0.0
    %v1057 = vadd.f32 %v1055, 0.0
    %1058 = vst.msk [vmem:[#allocation2 + $0x8] sm:$0xff] %vm143, %v1054
    %1059 = vst.msk [vmem:[#allocation2 + $0x10] sm:$0xff] %vm143, %v1055
    %v1060 = vld [vmem:[#allocation2 + $0x4] sm:$0xff]
    %v1061 = vld [vmem:[#allocation2 + $0xc] sm:$0xff]
    %v1062 = vld [vmem:[%s14] sm:$0x1]
    %v1063 = vadd.f32 %v135, -4.0
    %v1064 = vadd.f32 %v136, -4.0
    %vm1065 = vcmp.ge.f32.partialorder %v1063, 0.0
    %vm1066 = vcmp.ge.f32.partialorder %v1064, 0.0
    %vm1067 = vcmp.le.f32.partialorder %v1063, 7.0
    %vm1068 = vcmp.le.f32.partialorder %v1064, 7.0
    %vm1069 = vmand %vm1065, %vm1067
    %vm1070 = vmand %vm1066, %vm1068
    %v1071 = vsel %vm1069, 1, 0
    %v1072 = vsel %vm1070, 1, 0
    %v1073 = vcvt.s32.f32 %v1071
    %v1074 = vcvt.s32.f32 %v1072
    %1076 = vset.pattern.permute.xlu0 0
    %1077 = vperm.xlu0 %1076, %v1073
    %v1078 = vpop.permute.xlu0 %1077
    %1081 = vset.pattern.permute.xlu0 0
    %1082 = vperm.xlu0 %1081, %v1074
    %v1083 = vpop.permute.xlu0 %1082
    %v1085 = vmul.f32 %v1060, %v1078
    %v1086 = vmul.f32 %v1061, %v1083
    %v1087 = vlaneseq
    %v1088 = vshrl.u32 %v1087, 7
    %v1089 = vsub.s32 0, %v1088
    %v1090 = vrot.slane %v1062, %v1089
    %v1091 = vmul.f32 %v1085, %v1090
    %v1092 = vmul.f32 %v1086, %v1090
    %v1093 = vadd.f32 %v1091, 0.0
    %v1094 = vadd.f32 %v1092, 0.0
    %v1095 = vld [vmem:[#allocation2 + $0x5] sm:$0xff]
    %v1096 = vld [vmem:[#allocation2 + $0xd] sm:$0xff]
    %v1097 = vld [vmem:[%s14 + $0x1] sm:$0x1]
    %v1098 = vadd.f32 %v135, -3.0
    %v1099 = vadd.f32 %v136, -3.0
    %vm1100 = vcmp.ge.f32.partialorder %v1098, 0.0
    %vm1101 = vcmp.ge.f32.partialorder %v1099, 0.0
    %vm1102 = vcmp.le.f32.partialorder %v1098, 7.0
    %vm1103 = vcmp.le.f32.partialorder %v1099, 7.0
    %vm1104 = vmand %vm1100, %vm1102
    %vm1105 = vmand %vm1101, %vm1103
    %v1106 = vsel %vm1104, 1, 0
    %v1107 = vsel %vm1105, 1, 0
    %v1108 = vcvt.s32.f32 %v1106
    %v1109 = vcvt.s32.f32 %v1107
    %1111 = vset.pattern.permute.xlu0 0
    %1112 = vperm.xlu0 %1111, %v1108
    %v1113 = vpop.permute.xlu0 %1112
    %1116 = vset.pattern.permute.xlu0 0
    %1117 = vperm.xlu0 %1116, %v1109
    %v1118 = vpop.permute.xlu0 %1117
    %v1120 = vmul.f32 %v1095, %v1113
    %v1121 = vmul.f32 %v1096, %v1118
    %v1122 = vlaneseq
    %v1123 = vshrl.u32 %v1122, 7
    %v1124 = vsub.s32 0, %v1123
    %v1125 = vrot.slane %v1097, %v1124
    %v1126 = vmul.f32 %v1120, %v1125
    %v1127 = vmul.f32 %v1121, %v1125
    %v1128 = vadd.f32 %v1093, %v1126
    %v1129 = vadd.f32 %v1094, %v1127
    %v1130 = vld [vmem:[#allocation2 + $0x6] sm:$0xff]
    %v1131 = vld [vmem:[#allocation2 + $0xe] sm:$0xff]
    %v1132 = vld [vmem:[%s14 + $0x2] sm:$0x1]
    %v1133 = vmul.f32 %v1130, %v914
    %v1134 = vmul.f32 %v1131, %v919
    %v1135 = vlaneseq
    %v1136 = vshrl.u32 %v1135, 7
    %v1137 = vsub.s32 0, %v1136
    %v1138 = vrot.slane %v1132, %v1137
    %v1139 = vmul.f32 %v1133, %v1138
    %v1140 = vmul.f32 %v1134, %v1138
    %v1141 = vadd.f32 %v1128, %v1139
    %v1142 = vadd.f32 %v1129, %v1140
    %v1143 = vld [vmem:[#allocation2 + $0x7] sm:$0xff]
    %v1144 = vld [vmem:[#allocation2 + $0xf] sm:$0xff]
    %v1145 = vld [vmem:[%s14 + $0x3] sm:$0x1]
    %v1146 = vmul.f32 %v1143, %v949
    %v1147 = vmul.f32 %v1144, %v954
    %v1148 = vlaneseq
    %v1149 = vshrl.u32 %v1148, 7
    %v1150 = vsub.s32 0, %v1149
    %v1151 = vrot.slane %v1145, %v1150
    %v1152 = vmul.f32 %v1146, %v1151
    %v1153 = vmul.f32 %v1147, %v1151
    %v1154 = vadd.f32 %v1141, %v1152
    %v1155 = vadd.f32 %v1142, %v1153
    %v1156 = vld [vmem:[#allocation2 + $0x8] sm:$0xff]
    %v1157 = vld [vmem:[#allocation2 + $0x10] sm:$0xff]
    %v1158 = vld [vmem:[%s14 + $0x4] sm:$0x1]
    %v1159 = vlaneseq
    %v1160 = vshrl.u32 %v1159, 7
    %v1161 = vsub.s32 0, %v1160
    %v1162 = vrot.slane %v1158, %v1161
    %v1163 = vmul.f32 %v1156, %v1162
    %v1164 = vmul.f32 %v1157, %v1162
    %v1165 = vadd.f32 %v1154, %v1163
    %v1166 = vadd.f32 %v1155, %v1164
    %v1167 = vld [vmem:[#allocation2 + $0x9] sm:$0xff]
    %v1168 = vld [vmem:[#allocation2 + $0x11] sm:$0xff]
    %v1169 = vld [vmem:[%s14 + $0x5] sm:$0x1]
    %v1170 = vmul.f32 %v1167, %v995
    %v1171 = vmul.f32 %v1168, %v1000
    %v1172 = vlaneseq
    %v1173 = vshrl.u32 %v1172, 7
    %v1174 = vsub.s32 0, %v1173
    %v1175 = vrot.slane %v1169, %v1174
    %v1176 = vmul.f32 %v1170, %v1175
    %v1177 = vmul.f32 %v1171, %v1175
    %v1178 = vadd.f32 %v1165, %v1176
    %v1179 = vadd.f32 %v1166, %v1177
    %v1180 = vld [vmem:[#allocation2 + $0xa] sm:$0xff]
    %v1181 = vld [vmem:[#allocation2 + $0x12] sm:$0xff]
    %v1182 = vld [vmem:[%s14 + $0x6] sm:$0x1]
    %v1183 = vmul.f32 %v1180, %v1030
    %v1184 = vmul.f32 %v1181, %v1035
    %v1185 = vlaneseq
    %v1186 = vshrl.u32 %v1185, 7
    %v1187 = vsub.s32 0, %v1186
    %v1188 = vrot.slane %v1182, %v1187
    %v1189 = vmul.f32 %v1183, %v1188
    %v1190 = vmul.f32 %v1184, %v1188
    %v1191 = vadd.f32 %v1178, %v1189
    %v1192 = vadd.f32 %v1179, %v1190
    %v1193 = vld [vmem:[#allocation2 + $0xb] sm:$0xff]
    %v1194 = vld [vmem:[#allocation2 + $0x13] sm:$0xff]
    %v1195 = vld [vmem:[%s14 + $0x7] sm:$0x1]
    %v1196 = vadd.f32 %v135, 3.0
    %v1197 = vadd.f32 %v136, 3.0
    %vm1198 = vcmp.ge.f32.partialorder %v1196, 0.0
    %vm1199 = vcmp.ge.f32.partialorder %v1197, 0.0
    %vm1200 = vcmp.le.f32.partialorder %v1196, 7.0
    %vm1201 = vcmp.le.f32.partialorder %v1197, 7.0
    %vm1202 = vmand %vm1198, %vm1200
    %vm1203 = vmand %vm1199, %vm1201
    %v1204 = vsel %vm1202, 1, 0
    %v1205 = vsel %vm1203, 1, 0
    %v1206 = vcvt.s32.f32 %v1204
    %v1207 = vcvt.s32.f32 %v1205
    %1209 = vset.pattern.permute.xlu0 0
    %1210 = vperm.xlu0 %1209, %v1206
    %v1211 = vpop.permute.xlu0 %1210
    %1214 = vset.pattern.permute.xlu0 0
    %1215 = vperm.xlu0 %1214, %v1207
    %v1216 = vpop.permute.xlu0 %1215
    %v1218 = vmul.f32 %v1193, %v1211
    %v1219 = vmul.f32 %v1194, %v1216
    %v1220 = vlaneseq
    %v1221 = vshrl.u32 %v1220, 7
    %v1222 = vsub.s32 0, %v1221
    %v1223 = vrot.slane %v1195, %v1222
    %v1224 = vmul.f32 %v1218, %v1223
    %v1225 = vmul.f32 %v1219, %v1223
    %v1226 = vadd.f32 %v1191, %v1224
    %v1227 = vadd.f32 %v1192, %v1225
    %v1228 = vld [vmem:[#allocation2 + $0xc] sm:$0xff]
    %v1229 = vld [vmem:[#allocation2 + $0x14] sm:$0xff]
    %v1230 = vld [vmem:[%s14 + $0x8] sm:$0x1]
    %v1231 = vadd.f32 %v135, 4.0
    %v1232 = vadd.f32 %v136, 4.0
    %vm1233 = vcmp.ge.f32.partialorder %v1231, 0.0
    %vm1234 = vcmp.ge.f32.partialorder %v1232, 0.0
    %vm1235 = vcmp.le.f32.partialorder %v1231, 7.0
    %vm1236 = vcmp.le.f32.partialorder %v1232, 7.0
    %vm1237 = vmand %vm1233, %vm1235
    %vm1238 = vmand %vm1234, %vm1236
    %v1239 = vsel %vm1237, 1, 0
    %v1240 = vsel %vm1238, 1, 0
    %v1241 = vcvt.s32.f32 %v1239
    %v1242 = vcvt.s32.f32 %v1240
    %1244 = vset.pattern.permute.xlu0 0
    %1245 = vperm.xlu0 %1244, %v1241
    %v1246 = vpop.permute.xlu0 %1245
    %1249 = vset.pattern.permute.xlu0 0
    %1250 = vperm.xlu0 %1249, %v1242
    %v1251 = vpop.permute.xlu0 %1250
    %v1253 = vmul.f32 %v1228, %v1246
    %v1254 = vmul.f32 %v1229, %v1251
    %v1255 = vlaneseq
    %v1256 = vshrl.u32 %v1255, 7
    %v1257 = vsub.s32 0, %v1256
    %v1258 = vrot.slane %v1230, %v1257
    %v1259 = vmul.f32 %v1253, %v1258
    %v1260 = vmul.f32 %v1254, %v1258
    %v1261 = vadd.f32 %v1226, %v1259
    %v1262 = vadd.f32 %v1227, %v1260
    %v1263 = vld [vmem:[%s17 + $0x1] sm:$0x1]
    %v1264 = vlaneseq
    %v1265 = vshrl.u32 %v1264, 7
    %v1266 = vsub.s32 0, %v1265
    %v1267 = vrot.slane %v1263, %v1266
    %v1268 = vadd.f32 %v1261, %v1267
    %v1269 = vadd.f32 %v1262, %v1267
    %v1270 = vmax.f32 %v1268, 0.0
    %v1271 = vmax.f32 %v1269, 0.0
    %v1272 = vadd.f32 %v1056, %v1270
    %v1273 = vadd.f32 %v1057, %v1271
    %1274 = vst.msk [vmem:[#allocation2 + $0x8] sm:$0xff] %vm143, %v1270
    %1275 = vst.msk [vmem:[#allocation2 + $0x10] sm:$0xff] %vm143, %v1271
    %v1276 = vld [vmem:[#allocation2 + $0x2] sm:$0xff]
    %v1277 = vld [vmem:[#allocation2 + $0xa] sm:$0xff]
    %v1278 = vld [vmem:[%s15] sm:$0x1]
    %v1279 = vadd.f32 %v135, -6.0
    %v1280 = vadd.f32 %v136, -6.0
    %vm1281 = vcmp.ge.f32.partialorder %v1279, 0.0
    %vm1282 = vcmp.ge.f32.partialorder %v1280, 0.0
    %vm1283 = vcmp.le.f32.partialorder %v1279, 7.0
    %vm1284 = vcmp.le.f32.partialorder %v1280, 7.0
    %vm1285 = vmand %vm1281, %vm1283
    %vm1286 = vmand %vm1282, %vm1284
    %v1287 = vsel %vm1285, 1, 0
    %v1288 = vsel %vm1286, 1, 0
    %v1289 = vcvt.s32.f32 %v1287
    %v1290 = vcvt.s32.f32 %v1288
    %1292 = vset.pattern.permute.xlu0 0
    %1293 = vperm.xlu0 %1292, %v1289
    %v1294 = vpop.permute.xlu0 %1293
    %1297 = vset.pattern.permute.xlu0 0
    %1298 = vperm.xlu0 %1297, %v1290
    %v1299 = vpop.permute.xlu0 %1298
    %v1301 = vmul.f32 %v1276, %v1294
    %v1302 = vmul.f32 %v1277, %v1299
    %v1303 = vlaneseq
    %v1304 = vshrl.u32 %v1303, 7
    %v1305 = vsub.s32 0, %v1304
    %v1306 = vrot.slane %v1278, %v1305
    %v1307 = vmul.f32 %v1301, %v1306
    %v1308 = vmul.f32 %v1302, %v1306
    %v1309 = vadd.f32 %v1307, 0.0
    %v1310 = vadd.f32 %v1308, 0.0
    %v1311 = vld [vmem:[#allocation2 + $0x3] sm:$0xff]
    %v1312 = vld [vmem:[#allocation2 + $0xb] sm:$0xff]
    %v1313 = vld [vmem:[%s15 + $0x1] sm:$0x1]
    %v1314 = vadd.f32 %v135, -5.0
    %v1315 = vadd.f32 %v136, -5.0
    %vm1316 = vcmp.ge.f32.partialorder %v1314, 0.0
    %vm1317 = vcmp.ge.f32.partialorder %v1315, 0.0
    %vm1318 = vcmp.le.f32.partialorder %v1314, 7.0
    %vm1319 = vcmp.le.f32.partialorder %v1315, 7.0
    %vm1320 = vmand %vm1316, %vm1318
    %vm1321 = vmand %vm1317, %vm1319
    %v1322 = vsel %vm1320, 1, 0
    %v1323 = vsel %vm1321, 1, 0
    %v1324 = vcvt.s32.f32 %v1322
    %v1325 = vcvt.s32.f32 %v1323
    %1327 = vset.pattern.permute.xlu0 0
    %1328 = vperm.xlu0 %1327, %v1324
    %v1329 = vpop.permute.xlu0 %1328
    %1332 = vset.pattern.permute.xlu0 0
    %1333 = vperm.xlu0 %1332, %v1325
    %v1334 = vpop.permute.xlu0 %1333
    %v1336 = vmul.f32 %v1311, %v1329
    %v1337 = vmul.f32 %v1312, %v1334
    %v1338 = vlaneseq
    %v1339 = vshrl.u32 %v1338, 7
    %v1340 = vsub.s32 0, %v1339
    %v1341 = vrot.slane %v1313, %v1340
    %v1342 = vmul.f32 %v1336, %v1341
    %v1343 = vmul.f32 %v1337, %v1341
    %v1344 = vadd.f32 %v1309, %v1342
    %v1345 = vadd.f32 %v1310, %v1343
    %v1346 = vld [vmem:[#allocation2 + $0x4] sm:$0xff]
    %v1347 = vld [vmem:[#allocation2 + $0xc] sm:$0xff]
    %v1348 = vld [vmem:[%s15 + $0x2] sm:$0x1]
    %v1349 = vmul.f32 %v1346, %v1078
    %v1350 = vmul.f32 %v1347, %v1083
    %v1351 = vlaneseq
    %v1352 = vshrl.u32 %v1351, 7
    %v1353 = vsub.s32 0, %v1352
    %v1354 = vrot.slane %v1348, %v1353
    %v1355 = vmul.f32 %v1349, %v1354
    %v1356 = vmul.f32 %v1350, %v1354
    %v1357 = vadd.f32 %v1344, %v1355
    %v1358 = vadd.f32 %v1345, %v1356
    %v1359 = vld [vmem:[#allocation2 + $0x5] sm:$0xff]
    %v1360 = vld [vmem:[#allocation2 + $0xd] sm:$0xff]
    %v1361 = vld [vmem:[%s15 + $0x3] sm:$0x1]
    %v1362 = vmul.f32 %v1359, %v1113
    %v1363 = vmul.f32 %v1360, %v1118
    %v1364 = vlaneseq
    %v1365 = vshrl.u32 %v1364, 7
    %v1366 = vsub.s32 0, %v1365
    %v1367 = vrot.slane %v1361, %v1366
    %v1368 = vmul.f32 %v1362, %v1367
    %v1369 = vmul.f32 %v1363, %v1367
    %v1370 = vadd.f32 %v1357, %v1368
    %v1371 = vadd.f32 %v1358, %v1369
    %v1372 = vld [vmem:[#allocation2 + $0x6] sm:$0xff]
    %v1373 = vld [vmem:[#allocation2 + $0xe] sm:$0xff]
    %v1374 = vld [vmem:[%s15 + $0x4] sm:$0x1]
    %v1375 = vmul.f32 %v1372, %v914
    %v1376 = vmul.f32 %v1373, %v919
    %v1377 = vlaneseq
    %v1378 = vshrl.u32 %v1377, 7
    %v1379 = vsub.s32 0, %v1378
    %v1380 = vrot.slane %v1374, %v1379
    %v1381 = vmul.f32 %v1375, %v1380
    %v1382 = vmul.f32 %v1376, %v1380
    %v1383 = vadd.f32 %v1370, %v1381
    %v1384 = vadd.f32 %v1371, %v1382
    %v1385 = vld [vmem:[#allocation2 + $0x7] sm:$0xff]
    %v1386 = vld [vmem:[#allocation2 + $0xf] sm:$0xff]
    %v1387 = vld [vmem:[%s15 + $0x5] sm:$0x1]
    %v1388 = vmul.f32 %v1385, %v949
    %v1389 = vmul.f32 %v1386, %v954
    %v1390 = vlaneseq
    %v1391 = vshrl.u32 %v1390, 7
    %v1392 = vsub.s32 0, %v1391
    %v1393 = vrot.slane %v1387, %v1392
    %v1394 = vmul.f32 %v1388, %v1393
    %v1395 = vmul.f32 %v1389, %v1393
    %v1396 = vadd.f32 %v1383, %v1394
    %v1397 = vadd.f32 %v1384, %v1395
    %v1398 = vld [vmem:[#allocation2 + $0x8] sm:$0xff]
    %v1399 = vld [vmem:[#allocation2 + $0x10] sm:$0xff]
    %v1400 = vld [vmem:[%s15 + $0x6] sm:$0x1]
    %v1401 = vlaneseq
    %v1402 = vshrl.u32 %v1401, 7
    %v1403 = vsub.s32 0, %v1402
    %v1404 = vrot.slane %v1400, %v1403
    %v1405 = vmul.f32 %v1398, %v1404
    %v1406 = vmul.f32 %v1399, %v1404
    %v1407 = vadd.f32 %v1396, %v1405
    %v1408 = vadd.f32 %v1397, %v1406
    %v1409 = vld [vmem:[#allocation2 + $0x9] sm:$0xff]
    %v1410 = vld [vmem:[#allocation2 + $0x11] sm:$0xff]
    %v1411 = vld [vmem:[%s15 + $0x7] sm:$0x1]
    %v1412 = vmul.f32 %v1409, %v995
    %v1413 = vmul.f32 %v1410, %v1000
    %v1414 = vlaneseq
    %v1415 = vshrl.u32 %v1414, 7
    %v1416 = vsub.s32 0, %v1415
    %v1417 = vrot.slane %v1411, %v1416
    %v1418 = vmul.f32 %v1412, %v1417
    %v1419 = vmul.f32 %v1413, %v1417
    %v1420 = vadd.f32 %v1407, %v1418
    %v1421 = vadd.f32 %v1408, %v1419
    %v1422 = vld [vmem:[#allocation2 + $0xa] sm:$0xff]
    %v1423 = vld [vmem:[#allocation2 + $0x12] sm:$0xff]
    %v1424 = vld [vmem:[%s15 + $0x8] sm:$0x1]
    %v1425 = vmul.f32 %v1422, %v1030
    %v1426 = vmul.f32 %v1423, %v1035
    %v1427 = vlaneseq
    %v1428 = vshrl.u32 %v1427, 7
    %v1429 = vsub.s32 0, %v1428
    %v1430 = vrot.slane %v1424, %v1429
    %v1431 = vmul.f32 %v1425, %v1430
    %v1432 = vmul.f32 %v1426, %v1430
    %v1433 = vadd.f32 %v1420, %v1431
    %v1434 = vadd.f32 %v1421, %v1432
    %v1435 = vld [vmem:[#allocation2 + $0xb] sm:$0xff]
    %v1436 = vld [vmem:[#allocation2 + $0x13] sm:$0xff]
    %v1437 = vld [vmem:[%s15 + $0x9] sm:$0x1]
    %v1438 = vmul.f32 %v1435, %v1211
    %v1439 = vmul.f32 %v1436, %v1216
    %v1440 = vlaneseq
    %v1441 = vshrl.u32 %v1440, 7
    %v1442 = vsub.s32 0, %v1441
    %v1443 = vrot.slane %v1437, %v1442
    %v1444 = vmul.f32 %v1438, %v1443
    %v1445 = vmul.f32 %v1439, %v1443
    %v1446 = vadd.f32 %v1433, %v1444
    %v1447 = vadd.f32 %v1434, %v1445
    %v1448 = vld [vmem:[#allocation2 + $0x14] sm:$0xff]
    %v1449 = vld [vmem:[%s15 + $0xa] sm:$0x1]
    %v1450 = vmul.f32 %v1347, %v1246
    %v1451 = vmul.f32 %v1448, %v1251
    %v1452 = vlaneseq
    %v1453 = vshrl.u32 %v1452, 7
    %v1454 = vsub.s32 0, %v1453
    %v1455 = vrot.slane %v1449, %v1454
    %v1456 = vmul.f32 %v1450, %v1455
    %v1457 = vmul.f32 %v1451, %v1455
    %v1458 = vadd.f32 %v1446, %v1456
    %v1459 = vadd.f32 %v1447, %v1457
    %v1460 = vld [vmem:[#allocation2 + $0x15] sm:$0xff]
    %v1461 = vld [vmem:[%s15 + $0xb] sm:$0x1]
    %v1462 = vadd.f32 %v135, 5.0
    %v1463 = vadd.f32 %v136, 5.0
    %vm1464 = vcmp.ge.f32.partialorder %v1462, 0.0
    %vm1465 = vcmp.ge.f32.partialorder %v1463, 0.0
    %vm1466 = vcmp.le.f32.partialorder %v1462, 7.0
    %vm1467 = vcmp.le.f32.partialorder %v1463, 7.0
    %vm1468 = vmand %vm1464, %vm1466
    %vm1469 = vmand %vm1465, %vm1467
    %v1470 = vsel %vm1468, 1, 0
    %v1471 = vsel %vm1469, 1, 0
    %v1472 = vcvt.s32.f32 %v1470
    %v1473 = vcvt.s32.f32 %v1471
    %1475 = vset.pattern.permute.xlu0 0
    %1476 = vperm.xlu0 %1475, %v1472
    %v1477 = vpop.permute.xlu0 %1476
    %1480 = vset.pattern.permute.xlu0 0
    %1481 = vperm.xlu0 %1480, %v1473
    %v1482 = vpop.permute.xlu0 %1481
    %v1484 = vmul.f32 %v1360, %v1477
    %v1485 = vmul.f32 %v1460, %v1482
    %v1486 = vlaneseq
    %v1487 = vshrl.u32 %v1486, 7
    %v1488 = vsub.s32 0, %v1487
    %v1489 = vrot.slane %v1461, %v1488
    %v1490 = vmul.f32 %v1484, %v1489
    %v1491 = vmul.f32 %v1485, %v1489
    %v1492 = vadd.f32 %v1458, %v1490
    %v1493 = vadd.f32 %v1459, %v1491
    %v1494 = vld [vmem:[#allocation2 + $0xe] sm:$0xff]
    %v1495 = vld [vmem:[#allocation2 + $0x16] sm:$0xff]
    %v1496 = vld [vmem:[%s15 + $0xc] sm:$0x1]
    %v1497 = vadd.f32 %v135, 6.0
    %v1498 = vadd.f32 %v136, 6.0
    %vm1499 = vcmp.ge.f32.partialorder %v1497, 0.0
    %vm1500 = vcmp.ge.f32.partialorder %v1498, 0.0
    %vm1501 = vcmp.le.f32.partialorder %v1497, 7.0
    %vm1502 = vcmp.le.f32.partialorder %v1498, 7.0
    %vm1503 = vmand %vm1499, %vm1501
    %vm1504 = vmand %vm1500, %vm1502
    %v1505 = vsel %vm1503, 1, 0
    %v1506 = vsel %vm1504, 1, 0
    %v1507 = vcvt.s32.f32 %v1505
    %v1508 = vcvt.s32.f32 %v1506
    %1510 = vset.pattern.permute.xlu0 0
    %1511 = vperm.xlu0 %1510, %v1507
    %v1512 = vpop.permute.xlu0 %1511
    %1515 = vset.pattern.permute.xlu0 0
    %1516 = vperm.xlu0 %1515, %v1508
    %v1517 = vpop.permute.xlu0 %1516
    %v1519 = vmul.f32 %v1494, %v1512
    %v1520 = vmul.f32 %v1495, %v1517
    %v1521 = vlaneseq
    %v1522 = vshrl.u32 %v1521, 7
    %v1523 = vsub.s32 0, %v1522
    %v1524 = vrot.slane %v1496, %v1523
    %v1525 = vmul.f32 %v1519, %v1524
    %v1526 = vmul.f32 %v1520, %v1524
    %v1527 = vadd.f32 %v1492, %v1525
    %v1528 = vadd.f32 %v1493, %v1526
    %v1529 = vld [vmem:[%s17 + $0x2] sm:$0x1]
    %v1530 = vlaneseq
    %v1531 = vshrl.u32 %v1530, 7
    %v1532 = vsub.s32 0, %v1531
    %v1533 = vrot.slane %v1529, %v1532
    %v1534 = vadd.f32 %v1527, %v1533
    %v1535 = vadd.f32 %v1528, %v1533
    %v1536 = vmax.f32 %v1534, 0.0
    %v1537 = vmax.f32 %v1535, 0.0
    %v1538 = vadd.f32 %v1272, %v1536
    %v1539 = vadd.f32 %v1273, %v1537
    %1540 = vst.msk [vmem:[#allocation2 + $0x8] sm:$0xff] %vm143, %v1536
    %1541 = vst.msk [vmem:[#allocation2 + $0x10] sm:$0xff] %vm143, %v1537
    %v1542 = vld [vmem:[#allocation2 + $0x1] sm:$0xff]
    %v1543 = vld [vmem:[#allocation2 + $0x9] sm:$0xff]
    %v1544 = vld [vmem:[%s16 + $0x1] sm:$0x1]
    %v1545 = vadd.f32 %v135, -7.0
    %v1546 = vadd.f32 %v136, -7.0
    %vm1547 = vcmp.ge.f32.partialorder %v1545, 0.0
    %vm1548 = vcmp.ge.f32.partialorder %v1546, 0.0
    %vm1549 = vcmp.le.f32.partialorder %v1545, 7.0
    %vm1550 = vcmp.le.f32.partialorder %v1546, 7.0
    %vm1551 = vmand %vm1547, %vm1549
    %vm1552 = vmand %vm1548, %vm1550
    %v1553 = vsel %vm1551, 1, 0
    %v1554 = vsel %vm1552, 1, 0
    %v1555 = vcvt.s32.f32 %v1553
    %v1556 = vcvt.s32.f32 %v1554
    %1558 = vset.pattern.permute.xlu0 0
    %1559 = vperm.xlu0 %1558, %v1555
    %v1560 = vpop.permute.xlu0 %1559
    %1563 = vset.pattern.permute.xlu0 0
    %1564 = vperm.xlu0 %1563, %v1556
    %v1565 = vpop.permute.xlu0 %1564
    %v1567 = vmul.f32 %v1542, %v1560
    %v1568 = vmul.f32 %v1543, %v1565
    %v1569 = vlaneseq
    %v1570 = vshrl.u32 %v1569, 7
    %v1571 = vsub.s32 0, %v1570
    %v1572 = vrot.slane %v1544, %v1571
    %v1573 = vmul.f32 %v1567, %v1572
    %v1574 = vmul.f32 %v1568, %v1572
    %v1575 = vadd.f32 %v1573, 0.0
    %v1576 = vadd.f32 %v1574, 0.0
    %v1577 = vld [vmem:[#allocation2 + $0x2] sm:$0xff]
    %v1578 = vld [vmem:[#allocation2 + $0xa] sm:$0xff]
    %v1579 = vld [vmem:[%s16 + $0x2] sm:$0x1]
    %v1580 = vmul.f32 %v1577, %v1294
    %v1581 = vmul.f32 %v1578, %v1299
    %v1582 = vlaneseq
    %v1583 = vshrl.u32 %v1582, 7
    %v1584 = vsub.s32 0, %v1583
    %v1585 = vrot.slane %v1579, %v1584
    %v1586 = vmul.f32 %v1580, %v1585
    %v1587 = vmul.f32 %v1581, %v1585
    %v1588 = vadd.f32 %v1575, %v1586
    %v1589 = vadd.f32 %v1576, %v1587
    %v1590 = vld [vmem:[#allocation2 + $0x3] sm:$0xff]
    %v1591 = vld [vmem:[#allocation2 + $0xb] sm:$0xff]
    %v1592 = vld [vmem:[%s16 + $0x3] sm:$0x1]
    %v1593 = vmul.f32 %v1590, %v1329
    %v1594 = vmul.f32 %v1591, %v1334
    %v1595 = vlaneseq
    %v1596 = vshrl.u32 %v1595, 7
    %v1597 = vsub.s32 0, %v1596
    %v1598 = vrot.slane %v1592, %v1597
    %v1599 = vmul.f32 %v1593, %v1598
    %v1600 = vmul.f32 %v1594, %v1598
    %v1601 = vadd.f32 %v1588, %v1599
    %v1602 = vadd.f32 %v1589, %v1600
    %v1603 = vld [vmem:[#allocation2 + $0x4] sm:$0xff]
    %v1604 = vld [vmem:[#allocation2 + $0xc] sm:$0xff]
    %v1605 = vld [vmem:[%s16 + $0x4] sm:$0x1]
    %v1606 = vmul.f32 %v1603, %v1078
    %v1607 = vmul.f32 %v1604, %v1083
    %v1608 = vlaneseq
    %v1609 = vshrl.u32 %v1608, 7
    %v1610 = vsub.s32 0, %v1609
    %v1611 = vrot.slane %v1605, %v1610
    %v1612 = vmul.f32 %v1606, %v1611
    %v1613 = vmul.f32 %v1607, %v1611
    %v1614 = vadd.f32 %v1601, %v1612
    %v1615 = vadd.f32 %v1602, %v1613
    %v1616 = vld [vmem:[#allocation2 + $0x5] sm:$0xff]
    %v1617 = vld [vmem:[#allocation2 + $0xd] sm:$0xff]
    %v1618 = vld [vmem:[%s16 + $0x5] sm:$0x1]
    %v1619 = vmul.f32 %v1616, %v1113
    %v1620 = vmul.f32 %v1617, %v1118
    %v1621 = vlaneseq
    %v1622 = vshrl.u32 %v1621, 7
    %v1623 = vsub.s32 0, %v1622
    %v1624 = vrot.slane %v1618, %v1623
    %v1625 = vmul.f32 %v1619, %v1624
    %v1626 = vmul.f32 %v1620, %v1624
    %v1627 = vadd.f32 %v1614, %v1625
    %v1628 = vadd.f32 %v1615, %v1626
    %v1629 = vld [vmem:[#allocation2 + $0x6] sm:$0xff]
    %v1630 = vld [vmem:[#allocation2 + $0xe] sm:$0xff]
    %v1631 = vld [vmem:[%s16 + $0x6] sm:$0x1]
    %v1632 = vmul.f32 %v1629, %v914
    %v1633 = vmul.f32 %v1630, %v919
    %v1634 = vlaneseq
    %v1635 = vshrl.u32 %v1634, 7
    %v1636 = vsub.s32 0, %v1635
    %v1637 = vrot.slane %v1631, %v1636
    %v1638 = vmul.f32 %v1632, %v1637
    %v1639 = vmul.f32 %v1633, %v1637
    %v1640 = vadd.f32 %v1627, %v1638
    %v1641 = vadd.f32 %v1628, %v1639
    %v1642 = vld [vmem:[#allocation2 + $0x7] sm:$0xff]
    %v1643 = vld [vmem:[#allocation2 + $0xf] sm:$0xff]
    %v1644 = vld [vmem:[%s16 + $0x7] sm:$0x1]
    %v1645 = vmul.f32 %v1642, %v949
    %v1646 = vmul.f32 %v1643, %v954
    %v1647 = vlaneseq
    %v1648 = vshrl.u32 %v1647, 7
    %v1649 = vsub.s32 0, %v1648
    %v1650 = vrot.slane %v1644, %v1649
    %v1651 = vmul.f32 %v1645, %v1650
    %v1652 = vmul.f32 %v1646, %v1650
    %v1653 = vadd.f32 %v1640, %v1651
    %v1654 = vadd.f32 %v1641, %v1652
    %v1655 = vld [vmem:[#allocation2 + $0x8] sm:$0xff]
    %v1656 = vld [vmem:[#allocation2 + $0x10] sm:$0xff]
    %v1657 = vld [vmem:[%s16 + $0x8] sm:$0x1]
    %v1658 = vlaneseq
    %v1659 = vshrl.u32 %v1658, 7
    %v1660 = vsub.s32 0, %v1659
    %v1661 = vrot.slane %v1657, %v1660
    %v1662 = vmul.f32 %v1655, %v1661
    %v1663 = vmul.f32 %v1656, %v1661
    %v1664 = vadd.f32 %v1653, %v1662
    %v1665 = vadd.f32 %v1654, %v1663
    %v1666 = vld [vmem:[#allocation2 + $0x9] sm:$0xff]
    %v1667 = vld [vmem:[#allocation2 + $0x11] sm:$0xff]
    %v1668 = vld [vmem:[%s16 + $0x9] sm:$0x1]
    %v1669 = vmul.f32 %v1666, %v995
    %v1670 = vmul.f32 %v1667, %v1000
    %v1671 = vlaneseq
    %v1672 = vshrl.u32 %v1671, 7
    %v1673 = vsub.s32 0, %v1672
    %v1674 = vrot.slane %v1668, %v1673
    %v1675 = vmul.f32 %v1669, %v1674
    %v1676 = vmul.f32 %v1670, %v1674
    %v1677 = vadd.f32 %v1664, %v1675
    %v1678 = vadd.f32 %v1665, %v1676
    %v1679 = vld [vmem:[#allocation2 + $0x12] sm:$0xff]
    %v1680 = vld [vmem:[%s16 + $0xa] sm:$0x1]
    %v1681 = vmul.f32 %v1578, %v1030
    %v1682 = vmul.f32 %v1679, %v1035
    %v1683 = vlaneseq
    %v1684 = vshrl.u32 %v1683, 7
    %v1685 = vsub.s32 0, %v1684
    %v1686 = vrot.slane %v1680, %v1685
    %v1687 = vmul.f32 %v1681, %v1686
    %v1688 = vmul.f32 %v1682, %v1686
    %v1689 = vadd.f32 %v1677, %v1687
    %v1690 = vadd.f32 %v1678, %v1688
    %v1691 = vld [vmem:[#allocation2 + $0x13] sm:$0xff]
    %v1692 = vld [vmem:[%s16 + $0xb] sm:$0x1]
    %v1693 = vmul.f32 %v1591, %v1211
    %v1694 = vmul.f32 %v1691, %v1216
    %v1695 = vlaneseq
    %v1696 = vshrl.u32 %v1695, 7
    %v1697 = vsub.s32 0, %v1696
    %v1698 = vrot.slane %v1692, %v1697
    %v1699 = vmul.f32 %v1693, %v1698
    %v1700 = vmul.f32 %v1694, %v1698
    %v1701 = vadd.f32 %v1689, %v1699
    %v1702 = vadd.f32 %v1690, %v1700
    %v1703 = vld [vmem:[#allocation2 + $0x14] sm:$0xff]
    %v1704 = vld [vmem:[%s16 + $0xc] sm:$0x1]
    %v1705 = vmul.f32 %v1604, %v1246
    %v1706 = vmul.f32 %v1703, %v1251
    %v1707 = vlaneseq
    %v1708 = vshrl.u32 %v1707, 7
    %v1709 = vsub.s32 0, %v1708
    %v1710 = vrot.slane %v1704, %v1709
    %v1711 = vmul.f32 %v1705, %v1710
    %v1712 = vmul.f32 %v1706, %v1710
    %v1713 = vadd.f32 %v1701, %v1711
    %v1714 = vadd.f32 %v1702, %v1712
    %v1715 = vld [vmem:[#allocation2 + $0x15] sm:$0xff]
    %v1716 = vld [vmem:[%s16 + $0xd] sm:$0x1]
    %v1717 = vmul.f32 %v1617, %v1477
    %v1718 = vmul.f32 %v1715, %v1482
    %v1719 = vlaneseq
    %v1720 = vshrl.u32 %v1719, 7
    %v1721 = vsub.s32 0, %v1720
    %v1722 = vrot.slane %v1716, %v1721
    %v1723 = vmul.f32 %v1717, %v1722
    %v1724 = vmul.f32 %v1718, %v1722
    %v1725 = vadd.f32 %v1713, %v1723
    %v1726 = vadd.f32 %v1714, %v1724
    %v1727 = vld [vmem:[#allocation2 + $0x16] sm:$0xff]
    %v1728 = vld [vmem:[%s16 + $0xe] sm:$0x1]
    %v1729 = vmul.f32 %v1630, %v1512
    %v1730 = vmul.f32 %v1727, %v1517
    %v1731 = vlaneseq
    %v1732 = vshrl.u32 %v1731, 7
    %v1733 = vsub.s32 0, %v1732
    %v1734 = vrot.slane %v1728, %v1733
    %v1735 = vmul.f32 %v1729, %v1734
    %v1736 = vmul.f32 %v1730, %v1734
    %v1737 = vadd.f32 %v1725, %v1735
    %v1738 = vadd.f32 %v1726, %v1736
    %v1739 = vld [vmem:[#allocation2 + $0x17] sm:$0xff]
    %v1740 = vld [vmem:[%s16 + $0xf] sm:$0x1]
    %v1741 = vadd.f32 %v135, 7.0
    %v1742 = vadd.f32 %v136, 7.0
    %vm1743 = vcmp.ge.f32.partialorder %v1741, 0.0
    %vm1744 = vcmp.ge.f32.partialorder %v1742, 0.0
    %vm1745 = vcmp.le.f32.partialorder %v1741, 7.0
    %vm1746 = vcmp.le.f32.partialorder %v1742, 7.0
    %vm1747 = vmand %vm1743, %vm1745
    %vm1748 = vmand %vm1744, %vm1746
    %v1749 = vsel %vm1747, 1, 0
    %v1750 = vsel %vm1748, 1, 0
    %v1751 = vcvt.s32.f32 %v1749
    %v1752 = vcvt.s32.f32 %v1750
    %1754 = vset.pattern.permute.xlu0 0
    %1755 = vperm.xlu0 %1754, %v1751
    %v1756 = vpop.permute.xlu0 %1755
    %1759 = vset.pattern.permute.xlu0 0
    %1760 = vperm.xlu0 %1759, %v1752
    %v1761 = vpop.permute.xlu0 %1760
    %v1763 = vmul.f32 %v1643, %v1756
    %v1764 = vmul.f32 %v1739, %v1761
    %v1765 = vlaneseq
    %v1766 = vshrl.u32 %v1765, 7
    %v1767 = vsub.s32 0, %v1766
    %v1768 = vrot.slane %v1740, %v1767
    %v1769 = vmul.f32 %v1763, %v1768
    %v1770 = vmul.f32 %v1764, %v1768
    %v1771 = vadd.f32 %v1737, %v1769
    %v1772 = vadd.f32 %v1738, %v1770
    %v1773 = vld [vmem:[%s17 + $0x3] sm:$0x1]
    %v1774 = vlaneseq
    %v1775 = vshrl.u32 %v1774, 7
    %v1776 = vsub.s32 0, %v1775
    %v1777 = vrot.slane %v1773, %v1776
    %v1778 = vadd.f32 %v1771, %v1777
    %v1779 = vadd.f32 %v1772, %v1777
    %v1780 = vmax.f32 %v1778, 0.0
    %v1781 = vmax.f32 %v1779, 0.0
    %v1782 = vadd.f32 %v1538, %v1780
    %v1783 = vadd.f32 %v1539, %v1781
    %v1784 = vld [vmem:[%s18] sm:$0xff]
    %v1785 = vld [vmem:[%s18 + $0x8] sm:$0xff]
    %v1786 = vld [vmem:[%s18 + $0x10] sm:$0xff]
    %v1787 = vld [vmem:[%s18 + $0x18] sm:$0xff]
    %v1788 = vld [vmem:[%s19] sm:$0x1]
    %v1790 = vlaneseq
    %v1791 = vshrl.u32 %v1790, 7
    %v1792 = vsub.s32 0, %v1791
    %v1793 = vrot.slane %v1788, %v1792
    %v1796 = vsel %vm143, %v1782, 0
    %v1799 = vsel %vm143, %v1783, 0
    %1801 = vmatprep.subr.mxu0 0.0
    %1802 = vmatpush1.msra.mxu0 0.0
    %1803 = vmatprep.subr.mxu0 0.0
    %1804 = vmatpush1.msra.mxu0 0.0
    %1805 = vmatprep.subr.mxu0 0.0
    %1806 = vmatpush1.msra.mxu0 0.0
    %1807 = vmatprep.subr.mxu0 0.0
    %1808 = vmatpush1.msra.mxu0 0.0
    %1809 = vmatprep.subr.mxu0 0.0
    %1810 = vmatpush1.msra.mxu0 0.0
    %1811 = vmatprep.subr.mxu0 0.0
    %1812 = vmatpush1.msra.mxu0 0.0
    %1813 = vmatprep.subr.mxu0 0.0
    %1814 = vmatpush1.msra.mxu0 0.0
    %1815 = vmatprep.subr.mxu0 0.0
    %1816 = vmatpush1.msra.mxu0 0.0
    %1817 = vmatprep.subr.mxu0 0.0
    %1818 = vmatpush1.msra.mxu0 0.0
    %1819 = vmatprep.subr.mxu0 0.0
    %1820 = vmatpush1.msra.mxu0 0.0
    %1821 = vmatprep.subr.mxu0 0.0
    %1822 = vmatpush1.msra.mxu0 0.0
    %1823 = vmatprep.subr.mxu0 0.0
    %1824 = vmatpush1.msra.mxu0 0.0
    %1825 = vmatprep.subr.mxu0 0.0
    %1826 = vmatpush1.msra.mxu0 %v1787
    %1827 = vmatprep.subr.mxu0 0.0
    %1828 = vmatpush1.msra.mxu0 %v1786
    %1829 = vmatprep.subr.mxu0 0.0
    %1830 = vmatpush1.msra.mxu0 %v1785
    %1831 = vmatprep.subr.mxu0 0.0
    %1832 = vmatpush1.msra.mxu0 %v1784
    %1833 = vmatprep.subr.mxu0 0.0
    %1834 = vmatpush2.msra.mxu0 0.0
    %1835 = vmatprep.subr.mxu0 0.0
    %1836 = vmatpush2.msra.mxu0 0.0
    %1837 = vmatprep.subr.mxu0 0.0
    %1838 = vmatpush2.msra.mxu0 0.0
    %1839 = vmatprep.subr.mxu0 0.0
    %1840 = vmatpush2.msra.mxu0 0.0
    %1841 = vmatprep.subr.mxu0 0.0
    %1842 = vmatpush2.msra.mxu0 0.0
    %1843 = vmatprep.subr.mxu0 0.0
    %1844 = vmatpush2.msra.mxu0 0.0
    %1845 = vmatprep.subr.mxu0 0.0
    %1846 = vmatpush2.msra.mxu0 0.0
    %1847 = vmatprep.subr.mxu0 0.0
    %1848 = vmatpush2.msra.mxu0 0.0
    %1849 = vmatprep.subr.mxu0 0.0
    %1850 = vmatpush2.msra.mxu0 0.0
    %1851 = vmatprep.subr.mxu0 0.0
    %1852 = vmatpush2.msra.mxu0 0.0
    %1853 = vmatprep.subr.mxu0 0.0
    %1854 = vmatpush2.msra.mxu0 0.0
    %1855 = vmatprep.subr.mxu0 0.0
    %1856 = vmatpush2.msra.mxu0 0.0
    %1857 = vmatprep.subr.mxu0 0.0
    %1858 = vmatpush2.msra.mxu0 0.0
    %1859 = vmatprep.subr.mxu0 0.0
    %1860 = vmatpush2.msra.mxu0 0.0
    %1861 = vmatprep.subr.mxu0 0.0
    %1862 = vmatpush2.msra.mxu0 0.0
    %1863 = vmatprep.subr.mxu0 0.0
    %1864 = vmatpush2.msra.mxu0 0.0
    %1865 = vmatprep.mubr.f32.mxu0 0.0
    %1866 = vmatmul.mubr.f32.gmra.mxu0 %v1796
    %v1867 = vpop.f32.mrf.mxu0
    %v1868 = vadd.f32 %v1793, %v1867
    %v1869 = vpop.f32.mrf.mxu0
    %1870 = vmatprep.mubr.f32.mxu0 0.0
    %1871 = vmatmul.mubr.f32.gmra.mxu0 %v1799
    %v1872 = vpop.f32.mrf.mxu0
    %v1873 = vadd.f32 %v1793, %v1872
    %v1874 = vpop.f32.mrf.mxu0
    %1875 = vdwg.mxu0
    %v1876 = vadd.f32 %v127, %v1868
    %v1877 = vadd.f32 %v128, %v1873
    %v1878 = vsel %vm143, %v1876, 0.0
    %1879 = vadd.xlane.f32.xlu0 %v1878
    %v1880 = vpop.xlane.xlu0 %1879
    %v1881 = vsel %vm143, %v1877, 0.0
    %1882 = vadd.xlane.f32.xlu0 %v1881
    %v1883 = vpop.xlane.xlu0 %1882
    %v1884 = vmul.f32 %v1880, %v855
    %v1885 = vmul.f32 %v1883, %v855
    %v1886 = vsub.f32 %v1876, %v1884
    %v1887 = vsub.f32 %v1877, %v1885
    %v1888 = vmul.f32 %v1886, %v1886
    %v1889 = vmul.f32 %v1887, %v1887
    %v1890 = vsel %vm143, %v1888, 0.0
    %1891 = vadd.xlane.f32.xlu0 %v1890
    %v1892 = vpop.xlane.xlu0 %1891
    %v1893 = vsel %vm143, %v1889, 0.0
    %1894 = vadd.xlane.f32.xlu0 %v1893
    %v1895 = vpop.xlane.xlu0 %1894
    %v1896 = vmul.f32 %v1892, %v855
    %v1897 = vmul.f32 %v1895, %v855
    %v1898 = vadd.f32 %v1896, 1e-06
    %v1899 = vadd.f32 %v1897, 1e-06
    %v1900 = vrsqrt.pop %v1898
    %v1901 = vrsqrt.pop %v1899
    %v1902 = vmul.f32 %v1886, %v1900
    %v1903 = vmul.f32 %v1887, %v1901
    %1904 = vrot.lane.b32.xlu0 %v876, 32
    %v1905 = vpop.permute.xlu0 %1904
    %1906 = vrot.lane.b32.xlu0 %v877, 32
    %v1907 = vpop.permute.xlu0 %1906
    %v1910 = vmul.f32 %v1902, %v1905
    %v1911 = vmul.f32 %v1903, %v1907
    %1914 = vrot.lane.b32.xlu0 %v841, 64
    %v1915 = vpop.permute.xlu0 %1914
    %1916 = vrot.lane.b32.xlu0 %v846, 64
    %v1917 = vpop.permute.xlu0 %1916
    %v1920 = vadd.f32 %v1910, %v1915
    %v1921 = vadd.f32 %v1911, %v1917
    %v1922 = vld [vmem:[%s20] sm:$0xff]
    %v1923 = vld [vmem:[%s20 + $0x8] sm:$0xff]
    %v1924 = vld [vmem:[%s20 + $0x10] sm:$0xff]
    %v1925 = vld [vmem:[%s20 + $0x18] sm:$0xff]
    %v1926 = vld [vmem:[%s21] sm:$0x1]
    %v1928 = vlaneseq
    %v1929 = vshrl.u32 %v1928, 7
    %v1930 = vsub.s32 0, %v1929
    %v1931 = vrot.slane %v1926, %v1930
    %v1934 = vsel %vm143, %v1920, 0
    %v1937 = vsel %vm143, %v1921, 0
    %1939 = vmatprep.subr.mxu0 0.0
    %1940 = vmatpush1.msra.mxu0 0.0
    %1941 = vmatprep.subr.mxu0 0.0
    %1942 = vmatpush1.msra.mxu0 0.0
    %1943 = vmatprep.subr.mxu0 0.0
    %1944 = vmatpush1.msra.mxu0 0.0
    %1945 = vmatprep.subr.mxu0 0.0
    %1946 = vmatpush1.msra.mxu0 0.0
    %1947 = vmatprep.subr.mxu0 0.0
    %1948 = vmatpush1.msra.mxu0 0.0
    %1949 = vmatprep.subr.mxu0 0.0
    %1950 = vmatpush1.msra.mxu0 0.0
    %1951 = vmatprep.subr.mxu0 0.0
    %1952 = vmatpush1.msra.mxu0 0.0
    %1953 = vmatprep.subr.mxu0 0.0
    %1954 = vmatpush1.msra.mxu0 0.0
    %1955 = vmatprep.subr.mxu0 0.0
    %1956 = vmatpush1.msra.mxu0 0.0
    %1957 = vmatprep.subr.mxu0 0.0
    %1958 = vmatpush1.msra.mxu0 0.0
    %1959 = vmatprep.subr.mxu0 0.0
    %1960 = vmatpush1.msra.mxu0 0.0
    %1961 = vmatprep.subr.mxu0 0.0
    %1962 = vmatpush1.msra.mxu0 0.0
    %1963 = vmatprep.subr.mxu0 0.0
    %1964 = vmatpush1.msra.mxu0 %v1925
    %1965 = vmatprep.subr.mxu0 0.0
    %1966 = vmatpush1.msra.mxu0 %v1924
    %1967 = vmatprep.subr.mxu0 0.0
    %1968 = vmatpush1.msra.mxu0 %v1923
    %1969 = vmatprep.subr.mxu0 0.0
    %1970 = vmatpush1.msra.mxu0 %v1922
    %1971 = vmatprep.subr.mxu0 0.0
    %1972 = vmatpush2.msra.mxu0 0.0
    %1973 = vmatprep.subr.mxu0 0.0
    %1974 = vmatpush2.msra.mxu0 0.0
    %1975 = vmatprep.subr.mxu0 0.0
    %1976 = vmatpush2.msra.mxu0 0.0
    %1977 = vmatprep.subr.mxu0 0.0
    %1978 = vmatpush2.msra.mxu0 0.0
    %1979 = vmatprep.subr.mxu0 0.0
    %1980 = vmatpush2.msra.mxu0 0.0
    %1981 = vmatprep.subr.mxu0 0.0
    %1982 = vmatpush2.msra.mxu0 0.0
    %1983 = vmatprep.subr.mxu0 0.0
    %1984 = vmatpush2.msra.mxu0 0.0
    %1985 = vmatprep.subr.mxu0 0.0
    %1986 = vmatpush2.msra.mxu0 0.0
    %1987 = vmatprep.subr.mxu0 0.0
    %1988 = vmatpush2.msra.mxu0 0.0
    %1989 = vmatprep.subr.mxu0 0.0
    %1990 = vmatpush2.msra.mxu0 0.0
    %1991 = vmatprep.subr.mxu0 0.0
    %1992 = vmatpush2.msra.mxu0 0.0
    %1993 = vmatprep.subr.mxu0 0.0
    %1994 = vmatpush2.msra.mxu0 0.0
    %1995 = vmatprep.subr.mxu0 0.0
    %1996 = vmatpush2.msra.mxu0 0.0
    %1997 = vmatprep.subr.mxu0 0.0
    %1998 = vmatpush2.msra.mxu0 0.0
    %1999 = vmatprep.subr.mxu0 0.0
    %2000 = vmatpush2.msra.mxu0 0.0
    %2001 = vmatprep.subr.mxu0 0.0
    %2002 = vmatpush2.msra.mxu0 0.0
    %2003 = vmatprep.mubr.f32.mxu0 0.0
    %2004 = vmatmul.mubr.f32.gmra.mxu0 %v1934
    %v2005 = vpop.f32.mrf.mxu0
    %v2006 = vadd.f32 %v1931, %v2005
    %v2007 = vpop.f32.mrf.mxu0
    %2008 = vmatprep.mubr.f32.mxu0 0.0
    %2009 = vmatmul.mubr.f32.gmra.mxu0 %v1937
    %v2010 = vpop.f32.mrf.mxu0
    %v2011 = vadd.f32 %v1931, %v2010
    %v2012 = vpop.f32.mrf.mxu0
    %2013 = vdwg.mxu0
    %v2014 = vmax.f32 %v2006, 0.0
    %v2015 = vmax.f32 %v2011, 0.0
    %v2016 = vld [vmem:[%s22] sm:$0xff]
    %v2017 = vld [vmem:[%s22 + $0x8] sm:$0xff]
    %v2018 = vld [vmem:[%s22 + $0x10] sm:$0xff]
    %v2019 = vld [vmem:[%s22 + $0x18] sm:$0xff]
    %v2020 = vld [vmem:[%s22 + $0x20] sm:$0xff]
    %v2021 = vld [vmem:[%s22 + $0x28] sm:$0xff]
    %v2022 = vld [vmem:[%s22 + $0x30] sm:$0xff]
    %v2023 = vld [vmem:[%s22 + $0x38] sm:$0xff]
    %v2024 = vld [vmem:[%s22 + $0x40] sm:$0xff]
    %v2025 = vld [vmem:[%s22 + $0x48] sm:$0xff]
    %v2026 = vld [vmem:[%s22 + $0x50] sm:$0xff]
    %v2027 = vld [vmem:[%s22 + $0x58] sm:$0xff]
    %v2028 = vld [vmem:[%s22 + $0x60] sm:$0xff]
    %v2029 = vld [vmem:[%s22 + $0x68] sm:$0xff]
    %v2030 = vld [vmem:[%s22 + $0x70] sm:$0xff]
    %v2031 = vld [vmem:[%s22 + $0x78] sm:$0xff]
    %v2032 = vld [vmem:[%s23] sm:$0x1]
    %v2034 = vlaneseq
    %v2035 = vshrl.u32 %v2034, 7
    %v2036 = vsub.s32 0, %v2035
    %v2037 = vrot.slane %v2032, %v2036
    %2039 = vmatprep.subr.mxu0 0.0
    %2040 = vmatpush1.msra.mxu0 %v2031
    %2041 = vmatprep.subr.mxu0 0.0
    %2042 = vmatpush1.msra.mxu0 %v2030
    %2043 = vmatprep.subr.mxu0 0.0
    %2044 = vmatpush1.msra.mxu0 %v2029
    %2045 = vmatprep.subr.mxu0 0.0
    %2046 = vmatpush1.msra.mxu0 %v2028
    %2047 = vmatprep.subr.mxu0 0.0
    %2048 = vmatpush1.msra.mxu0 %v2027
    %2049 = vmatprep.subr.mxu0 0.0
    %2050 = vmatpush1.msra.mxu0 %v2026
    %2051 = vmatprep.subr.mxu0 0.0
    %2052 = vmatpush1.msra.mxu0 %v2025
    %2053 = vmatprep.subr.mxu0 0.0
    %2054 = vmatpush1.msra.mxu0 %v2024
    %2055 = vmatprep.subr.mxu0 0.0
    %2056 = vmatpush1.msra.mxu0 %v2023
    %2057 = vmatprep.subr.mxu0 0.0
    %2058 = vmatpush1.msra.mxu0 %v2022
    %2059 = vmatprep.subr.mxu0 0.0
    %2060 = vmatpush1.msra.mxu0 %v2021
    %2061 = vmatprep.subr.mxu0 0.0
    %2062 = vmatpush1.msra.mxu0 %v2020
    %2063 = vmatprep.subr.mxu0 0.0
    %2064 = vmatpush1.msra.mxu0 %v2019
    %2065 = vmatprep.subr.mxu0 0.0
    %2066 = vmatpush1.msra.mxu0 %v2018
    %2067 = vmatprep.subr.mxu0 0.0
    %2068 = vmatpush1.msra.mxu0 %v2017
    %2069 = vmatprep.subr.mxu0 0.0
    %2070 = vmatpush1.msra.mxu0 %v2016
    %2071 = vmatprep.subr.mxu0 0.0
    %2072 = vmatpush2.msra.mxu0 0.0
    %2073 = vmatprep.subr.mxu0 0.0
    %2074 = vmatpush2.msra.mxu0 0.0
    %2075 = vmatprep.subr.mxu0 0.0
    %2076 = vmatpush2.msra.mxu0 0.0
    %2077 = vmatprep.subr.mxu0 0.0
    %2078 = vmatpush2.msra.mxu0 0.0
    %2079 = vmatprep.subr.mxu0 0.0
    %2080 = vmatpush2.msra.mxu0 0.0
    %2081 = vmatprep.subr.mxu0 0.0
    %2082 = vmatpush2.msra.mxu0 0.0
    %2083 = vmatprep.subr.mxu0 0.0
    %2084 = vmatpush2.msra.mxu0 0.0
    %2085 = vmatprep.subr.mxu0 0.0
    %2086 = vmatpush2.msra.mxu0 0.0
    %2087 = vmatprep.subr.mxu0 0.0
    %2088 = vmatpush2.msra.mxu0 0.0
    %2089 = vmatprep.subr.mxu0 0.0
    %2090 = vmatpush2.msra.mxu0 0.0
    %2091 = vmatprep.subr.mxu0 0.0
    %2092 = vmatpush2.msra.mxu0 0.0
    %2093 = vmatprep.subr.mxu0 0.0
    %2094 = vmatpush2.msra.mxu0 0.0
    %2095 = vmatprep.subr.mxu0 0.0
    %2096 = vmatpush2.msra.mxu0 0.0
    %2097 = vmatprep.subr.mxu0 0.0
    %2098 = vmatpush2.msra.mxu0 0.0
    %2099 = vmatprep.subr.mxu0 0.0
    %2100 = vmatpush2.msra.mxu0 0.0
    %2101 = vmatprep.subr.mxu0 0.0
    %2102 = vmatpush2.msra.mxu0 0.0
    %2103 = vmatprep.mubr.f32.mxu0 0.0
    %2104 = vmatmul.mubr.f32.gmra.mxu0 %v2014
    %v2105 = vpop.f32.mrf.mxu0
    %v2106 = vadd.f32 %v2037, %v2105
    %v2107 = vpop.f32.mrf.mxu0
    %2108 = vmatprep.mubr.f32.mxu0 0.0
    %2109 = vmatmul.mubr.f32.gmra.mxu0 %v2015
    %v2110 = vpop.f32.mrf.mxu0
    %v2111 = vadd.f32 %v2037, %v2110
    %v2112 = vpop.f32.mrf.mxu0
    %2113 = vdwg.mxu0
    %v2114 = vadd.f32 %v1876, %v2106
    %v2115 = vadd.f32 %v1877, %v2111
    %2116 = vst.msk [vmem:[#allocation11] sm:$0xff] %vm143, %v2114
    %2117 = vst.msk [vmem:[#allocation11 + $0x8] sm:$0xff] %vm143, %v2115
    // Predicated region
    $region114: #{tpu_custom_call.1} parent=1 // pred_check
      _
    $region115: #{tpu_custom_call.1} parent=1 // pred_check_branch
      %2119 = sbr.rel (0) target = $region117
    $region116: #{tpu_custom_call.1} parent=1 // pred_region
      %s2121 = ssub.s32 256, 256
      %2122 = vsyncadd [#allocation5], %s2121
      %s2123 = sshll.u32 [#allocation11], 4
      %s2124 = int_to_ptr.vmem [resolvable:$true] %s2123
      %2129 = dma.vmem_to_hbm [thread:$0]  %s2124, 256, %s24, [#allocation5], 128, 128, 8
    $region117: #{tpu_custom_call.1} parent=1 // pred_fallthru
      _
    // Predicated region
    $region118: #{tpu_custom_call.1} parent=1 // pred_check
      _
    $region119: #{tpu_custom_call.1} parent=1 // pred_check_branch
      %2131 = sbr.rel (0) target = $region121
    $region120: #{tpu_custom_call.1} parent=1 // pred_region
      %2132 = dma.done [#allocation5], 256
    $region121: #{tpu_custom_call.1} parent=1 // pred_fallthru
      _
    %2133 = vsyncpa [#allocation4], 1
    %2134 = vsyncpa [#allocation7], 1
    %2135 = vsyncpa [#allocation10], 1
    %2136 = vsyncpa [#allocation5], 1

</llo_original>
